<compile_context>
chip_gen: v6e
topology: v6e:2x2x1
jax: 0.10.0
libtpu: 0.0.40
codegen_flags: <defaults>
</compile_context>

<pallas_src>
import functools

import jax
import jax.numpy as jnp
import numpy as np
from jax.experimental import pallas as pl
from jax.experimental.pallas import tpu as pltpu

KSIZE = 5
PAD = 2            # conv 'same' padding
LEAD = 8           # sublane-aligned leading zero rows per batch item in the slab
NEG_SLOPE = 0.01
HEAD_PAD = 128     # lane-dense width of the fused head output
CMAX = 256         # widest channel count (layers 5/6)
NLAYERS = 6

# Per-layer packed lane widths: K padded to the 128-lane vreg width (256 only
# for layer 6); narrow layers' output channels padded to 128 so the writeback
# store is lane-dense (zero-padded BN scale/shift keeps pad channels at 0).
LAYER_CINP = (128, 128, 128, 128, 128, 256)
LAYER_COUTP = (128, 128, 128, 128, 256, 256)


# ----------------------------------------------------------------------------
# Fused Pallas kernel: entire network in one invocation, everything in VMEM.
# ----------------------------------------------------------------------------
def _fused_kernel(*refs, n, l, lpad):
    x_ref = refs[0]
    conv_refs = refs[1:1 + 3 * NLAYERS]                        # (w, scale, shift) x 6
    wh_ref, bh_ref, out_ref = refs[1 + 3 * NLAYERS:4 + 3 * NLAYERS]
    a_slab, w5_v, w6_v, dma_sem = refs[4 + 3 * NLAYERS:]

    m_rows = n * lpad
    off = LEAD - PAD                                           # first tap's row offset

    # Kick off HBM->VMEM prefetch of the two big late-layer weights first so the
    # DMA streams while the early layers compute.
    cp5 = pltpu.make_async_copy(conv_refs[3 * 4], w5_v, dma_sem.at[0])
    cp6 = pltpu.make_async_copy(conv_refs[3 * 5], w6_v, dma_sem.at[1])
    cp5.start()
    cp6.start()

    # Zero the padded activation slab once; pad rows / unused lanes stay zero.
    a_slab[...] = jnp.zeros_like(a_slab)

    # In-kernel "padding": drop the (n, l, 1) input into channel 0 of the slab.
    # TODO(synk): this is a 1-lane masked store (32 floats total) -- negligible,
    # kept in-kernel to avoid an extra XLA pad op + launch in the wrapper.
    for bi in range(n):
        r0 = bi * lpad + LEAD
        a_slab[r0:r0 + l, 0:1] = x_ref[bi]

    def conv_bn_lrelu(w_ref, scale_ref, shift_ref, cinp):
        # HetConv (grouped + pointwise pre-folded) as 5 shifted-view matmuls.
        acc = None
        for k in range(KSIZE):
            lhs = a_slab[off + k:off + k + m_rows, 0:cinp].astype(jnp.bfloat16)
            p = jnp.dot(lhs, w_ref[k], preferred_element_type=jnp.float32)
            acc = p if acc is None else acc + p
        y = acc * scale_ref[...] + shift_ref[...]              # eval-mode BatchNorm
        return jnp.where(y >= 0.0, y, NEG_SLOPE * y)           # LeakyReLU(0.01)

    def writeback(act, coutp):
        # Lane-dense, 8-sublane-aligned stores; zero-padded output channels
        # write zeros, keeping the slab consistent for the next layer's reads.
        for bi in range(n):
            r0 = bi * lpad + LEAD
            a_slab[r0:r0 + l, 0:coutp] = act[bi * lpad:bi * lpad + l, :]

    # Layers 1-4 (weights already in VMEM; K = 128 lanes, cout padded to 128).
    for li in range(4):
        w_ref, s_ref, t_ref = conv_refs[3 * li:3 * li + 3]
        act = conv_bn_lrelu(w_ref, s_ref, t_ref, cinp=128)
        writeback(act, coutp=128)

    # Layer 5 (cin=64 -> K=128, cout=256); weight arrives via the async DMA.
    cp5.wait()
    act = conv_bn_lrelu(w5_v, conv_refs[13], conv_refs[14], cinp=128)
    writeback(act, coutp=CMAX)

    # Layer 6 (cin=256, cout=256).
    cp6.wait()
    act = conv_bn_lrelu(w6_v, conv_refs[16], conv_refs[17], cinp=CMAX)

    # AdaptiveAvgPool1d(1) as an in-kernel sublane reduction over the l valid
    # rows, then the pre-folded fc+heads matmul.
    # TODO(synk): Dropout1d(0.5) is identity in eval/inference; training-mode
    # mask omitted.
    inv_l = 1.0 / l
    for bi in range(n):
        pooled = jnp.sum(act[bi * lpad:bi * lpad + l, :], axis=0,
                         keepdims=True) * inv_l                # (1, 256)
        row = jnp.dot(pooled.astype(jnp.bfloat16), wh_ref[...],
                      preferred_element_type=jnp.float32) + bh_ref[...]
        out_ref[bi:bi + 1, :] = row.astype(out_ref.dtype)      # lane-dense (1, 128)


@functools.partial(jax.jit, static_argnames=("out_sizes",))
def forward(x, packed, out_sizes):
    """x: (N, L, 1) f32 channels-last (PyTorch layout is (N, 1, L))."""
    conv_ws, scales, shifts, wh, bh = packed
    n, l, _ = x.shape
    lpad = LEAD + (-(-(l + PAD) // 8)) * 8        # per-item slab stride, 8-aligned
    m_rows = n * lpad

    vmem_spec = pl.BlockSpec(memory_space=pltpu.MemorySpace.VMEM)
    hbm_spec = pl.BlockSpec(memory_space=pl.ANY)

    inputs = [x]
    in_specs = [vmem_spec]
    for li in range(NLAYERS):
        inputs += [conv_ws[li], scales[li], shifts[li]]
        in_specs += [hbm_spec if li >= 4 else vmem_spec, vmem_spec, vmem_spec]
    inputs += [wh, bh]
    in_specs += [vmem_spec, vmem_spec]

    flops = sum(2 * m_rows * KSIZE * int(w.shape[1]) * int(w.shape[2])
                for w in conv_ws)
    flops += 2 * n * int(wh.shape[0]) * int(wh.shape[1])
    bytes_accessed = sum(int(np.prod(a.shape)) * a.dtype.itemsize for a in inputs)
    bytes_accessed += n * HEAD_PAD * 4

    kern = functools.partial(_fused_kernel, n=n, l=l, lpad=lpad)
    out = pl.pallas_call(
        kern,
        out_shape=jax.ShapeDtypeStruct((n, HEAD_PAD), jnp.float32),
        in_specs=in_specs,
        out_specs=pl.BlockSpec(memory_space=pltpu.MemorySpace.VMEM),
        scratch_shapes=[
            pltpu.VMEM((m_rows + 16, CMAX), jnp.float32),     # padded activation slab
            pltpu.VMEM((KSIZE, 128, CMAX), jnp.bfloat16),     # layer-5 weight staging
            pltpu.VMEM((KSIZE, CMAX, CMAX), jnp.bfloat16),    # layer-6 weight staging
            pltpu.SemaphoreType.DMA((2,)),
        ],
        cost_estimate=pl.CostEstimate(flops=int(flops), transcendentals=0,
                                      bytes_accessed=int(bytes_accessed)),
    )(*inputs)

    o0, o1, o2 = out_sizes
    return out[:, :o0], out[:, o0:o0 + o1], out[:, o0 + o1:o0 + o1 + o2]


# ----------------------------------------------------------------------------
# Parameter construction (deterministic, synthetic) and packing for the kernel.
# ----------------------------------------------------------------------------
def _q_bf16(a):
    """Round to bf16-representable values (kernel stores weights in bf16)."""
    return a.astype(jnp.bfloat16).astype(jnp.float32)


def make_hetconv_params(key, cin, cout, groups):
    """Combined dense (K, Cin, Cout): block-diagonal grouped conv + pointwise folded in."""
    kg, kp = jax.random.split(key)
    cin_g, cout_g = cin // groups, cout // groups
    wg = 0.1 * jax.random.normal(kg, (cout, cin_g, KSIZE), jnp.float32)   # grouped conv
    wp = 0.1 * jax.random.normal(kp, (cout, cin, 1), jnp.float32)         # 1x1 pointwise
    w = jnp.zeros((KSIZE, cin, cout), jnp.float32)
    for gi in range(groups):
        blk = wg[gi * cout_g:(gi + 1) * cout_g]          # (cout_g, cin_g, K)
        blk = jnp.transpose(blk, (2, 1, 0))              # (K, cin_g, cout_g)
        w = w.at[:, gi * cin_g:(gi + 1) * cin_g,
                 gi * cout_g:(gi + 1) * cout_g].set(blk)
    w = w.at[PAD].add(jnp.transpose(wp[:, :, 0]))        # pointwise = offset-0 tap
    return _q_bf16(w)


def make_bn_params(key, c, eps=1e-5):
    k1, k2, k3, k4 = jax.random.split(key, 4)
    gamma = 1.0 + 0.1 * jax.random.normal(k1, (c,), jnp.float32)
    beta = 0.1 * jax.random.normal(k2, (c,), jnp.float32)
    mean = 0.1 * jax.random.normal(k3, (c,), jnp.float32)
    var = jnp.abs(jax.random.normal(k4, (c,), jnp.float32)) + 0.5
    scale = gamma / jnp.sqrt(var + eps)
    shift = beta - mean * scale
    return scale.reshape(1, c), shift.reshape(1, c)


def make_linear(key, cin, cout):
    kw, kb = jax.random.split(key)
    w = _q_bf16(0.05 * jax.random.normal(kw, (cin, cout), jnp.float32))
    b = 0.05 * jax.random.normal(kb, (1, cout), jnp.float32)
    return w, b


def build_params(key, out_full, out_f1, out_f2, groups=4):
    keys = jax.random.split(key, 10)
    chans = [(1, 16, 1), (16, 16, groups), (16, 64, groups),
             (64, 64, groups), (64, 256, groups), (256, 256, groups)]
    convs = []
    for i, (ci, co, g) in enumerate(chans):
        kw, kbn = jax.random.split(keys[i])
        w = make_hetconv_params(kw, ci, co, g)
        scale, shift = make_bn_params(kbn, co)
        convs.append((w, scale, shift))
    fcw, fcb = make_linear(keys[6], 256, 512)
    wfull, bfull = make_linear(keys[7], 512, out_full)
    w1, b1 = make_linear(keys[8], 512, out_f1)
    w2, b2 = make_linear(keys[9], 512, out_f2)
    return {"convs": convs, "head": (fcw, fcb, wfull, bfull, w1, b1, w2, b2)}


def pack_params(params):
    """One-time (outside jit) weight repacking / bf16 quantization for the kernel."""
    convs = params["convs"]
    fcw, fcb, wfull, bfull, w1, b1, w2, b2 = params["head"]

    conv_ws, scales, shifts = [], [], []
    for (w, scale, shift), cinp, coutp in zip(convs, LAYER_CINP, LAYER_COUTP):
        k, cin, cout = w.shape
        wp = jnp.zeros((k, cinp, coutp), jnp.float32).at[:, :cin, :cout].set(w)
        conv_ws.append(wp.astype(jnp.bfloat16))
        scales.append(jnp.zeros((1, coutp), jnp.float32).at[:, :cout].set(scale))
        shifts.append(jnp.zeros((1, coutp), jnp.float32).at[:, :cout].set(shift))

    # Pre-fold fc and the three heads into one lane-dense (256, 128) matmul.
    # Exact in eval mode: Dropout1d is identity, no nonlinearity between them.
    wh_cat = jnp.concatenate([wfull, w1, w2], axis=1)            # (512, 20)
    bh_cat = jnp.concatenate([bfull, b1, b2], axis=1)            # (1, 20)
    whf = fcw @ wh_cat                                           # (256, 20)
    bhf = fcb @ wh_cat + bh_cat                                  # (1, 20)
    total = int(whf.shape[1])
    assert total <= HEAD_PAD
    wh = jnp.zeros((fcw.shape[0], HEAD_PAD), jnp.float32).at[:, :total].set(whf)
    bh = jnp.zeros((1, HEAD_PAD), jnp.float32).at[:, :total].set(bhf)
    return (tuple(conv_ws), tuple(scales), tuple(shifts),
            wh.astype(jnp.bfloat16), bh)


# ----------------------------------------------------------------------------
# Plain-JAX f32 reference (same bf16-representable weight values) for checking.
# ----------------------------------------------------------------------------
def reference(x, params):
    act = x
    for (w, scale, shift) in params["convs"]:
        N, L, _ = act.shape
        xp = jnp.pad(act, ((0, 0), (PAD, PAD), (0, 0)))
        acc = sum(jnp.einsum("nlc,cd->nld", xp[:, k:k + L, :], w[k])
                  for k in range(KSIZE))
        y = acc * scale + shift
        act = jnp.where(y >= 0, y, NEG_SLOPE * y)
    fcw, fcb, wfull, bfull, w1, b1, w2, b2 = params["head"]
    pooled = jnp.mean(act, axis=1)
    h = pooled @ fcw + fcb                                  # dropout = identity (eval)
    return (h @ wfull + bfull, h @ w1 + b1, h @ w2 + b2)


# ----------------------------------------------------------------------------
if __name__ == "__main__":
    N, L = 2, 16                       # batch, sequence length (input_size = 16)
    OUT_FULL, OUT_F1, OUT_F2 = 10, 4, 6

    key = jax.random.PRNGKey(0)
    kx, kp = jax.random.split(key)
    # PyTorch input is (N, C=1, L); our layout is channels-last (N, L, 1).
    x = jax.random.normal(kx, (N, L, 1), jnp.float32)
    params = build_params(kp, OUT_FULL, OUT_F1, OUT_F2, groups=4)
    packed = pack_params(params)

    outs = forward(x, packed, out_sizes=(OUT_FULL, OUT_F1, OUT_F2))
    outs = jax.block_until_ready(outs)
    refs_out = reference(x, params)

    assert outs[0].shape == (N, OUT_FULL)
    assert outs[1].shape == (N, OUT_F1)
    assert outs[2].shape == (N, OUT_F2)
    # Weights are bf16-representable in both paths; residual error is the
    # kernel's bf16 rounding of matmul activations (well under the tolerance).
    for got, want in zip(outs, refs_out):
        np.testing.assert_allclose(np.asarray(got), np.asarray(want),
                                   rtol=2e-2, atol=2e-2)

    print("KERNEL_OK")
</pallas_src>

<mosaic_0001>
module attributes {stable_mosaic.version = 11 : i64} {
  func.func @_fused_kernel(%arg0: memref<2x16x1xf32, #tpu.memory_space<vmem>>, %arg1: memref<5x128x128xbf16, #tpu.memory_space<vmem>>, %arg2: memref<1x128xf32, #tpu.memory_space<vmem>>, %arg3: memref<1x128xf32, #tpu.memory_space<vmem>>, %arg4: memref<5x128x128xbf16, #tpu.memory_space<vmem>>, %arg5: memref<1x128xf32, #tpu.memory_space<vmem>>, %arg6: memref<1x128xf32, #tpu.memory_space<vmem>>, %arg7: memref<5x128x128xbf16, #tpu.memory_space<vmem>>, %arg8: memref<1x128xf32, #tpu.memory_space<vmem>>, %arg9: memref<1x128xf32, #tpu.memory_space<vmem>>, %arg10: memref<5x128x128xbf16, #tpu.memory_space<vmem>>, %arg11: memref<1x128xf32, #tpu.memory_space<vmem>>, %arg12: memref<1x128xf32, #tpu.memory_space<vmem>>, %arg13: memref<5x128x256xbf16, #tpu.memory_space<any>>, %arg14: memref<1x256xf32, #tpu.memory_space<vmem>>, %arg15: memref<1x256xf32, #tpu.memory_space<vmem>>, %arg16: memref<5x256x256xbf16, #tpu.memory_space<any>>, %arg17: memref<1x256xf32, #tpu.memory_space<vmem>>, %arg18: memref<1x256xf32, #tpu.memory_space<vmem>>, %arg19: memref<256x128xbf16, #tpu.memory_space<vmem>>, %arg20: memref<1x128xf32, #tpu.memory_space<vmem>>, %arg21: memref<2x128xf32, #tpu.memory_space<vmem>>, %arg22: memref<80x256xf32, #tpu.memory_space<vmem>>, %arg23: memref<5x128x256xbf16, #tpu.memory_space<vmem>>, %arg24: memref<5x256x256xbf16, #tpu.memory_space<vmem>>, %arg25: memref<2x!tpu.dma_semaphore, #tpu.memory_space<semaphore_mem>>) attributes {dimension_semantics = [], scalar_prefetch = 0 : i64, scratch_operands = 4 : i64, tpu.core_type = #tpu.core_type<tc>} {
    %c0_i32 = arith.constant 0 : i32
    %0 = tpu.memref_slice %arg25[%c0_i32] : memref<2x!tpu.dma_semaphore, #tpu.memory_space<semaphore_mem>> -> memref<1x!tpu.dma_semaphore, #tpu.memory_space<semaphore_mem>>
    %1 = tpu.memref_squeeze %0 : memref<1x!tpu.dma_semaphore, #tpu.memory_space<semaphore_mem>> -> memref<!tpu.dma_semaphore, #tpu.memory_space<semaphore_mem>>
    tpu.enqueue_dma source(%arg13 : memref<5x128x256xbf16, #tpu.memory_space<any>>) target(%arg23 : memref<5x128x256xbf16, #tpu.memory_space<vmem>>) target_semaphore(%1 : memref<!tpu.dma_semaphore, #tpu.memory_space<semaphore_mem>>)
    %c1_i32 = arith.constant 1 : i32
    %2 = tpu.memref_slice %arg25[%c1_i32] : memref<2x!tpu.dma_semaphore, #tpu.memory_space<semaphore_mem>> -> memref<1x!tpu.dma_semaphore, #tpu.memory_space<semaphore_mem>>
    %3 = tpu.memref_squeeze %2 : memref<1x!tpu.dma_semaphore, #tpu.memory_space<semaphore_mem>> -> memref<!tpu.dma_semaphore, #tpu.memory_space<semaphore_mem>>
    tpu.enqueue_dma source(%arg16 : memref<5x256x256xbf16, #tpu.memory_space<any>>) target(%arg24 : memref<5x256x256xbf16, #tpu.memory_space<vmem>>) target_semaphore(%3 : memref<!tpu.dma_semaphore, #tpu.memory_space<semaphore_mem>>)
    %cst = arith.constant 0.000000e+00 : f32
    %4 = vector.broadcast %cst : f32 to vector<80x256xf32>
    %c0 = arith.constant 0 : index
    %c0_0 = arith.constant 0 : index
    %5 = vector.load %arg22[%c0, %c0_0] : memref<80x256xf32, #tpu.memory_space<vmem>>, vector<80x256xf32>
    tpu.vector_store %arg22[%c0, %c0_0], %4 {strides = array<i32>} : memref<80x256xf32, #tpu.memory_space<vmem>>, vector<80x256xf32>,
    %c0_1 = arith.constant 0 : index
    %c0_2 = arith.constant 0 : index
    %c0_3 = arith.constant 0 : index
    %6 = vector.load %arg0[%c0_1, %c0_2, %c0_3] : memref<2x16x1xf32, #tpu.memory_space<vmem>>, vector<1x16x1xf32>
    %7 = vector.shape_cast %6 : vector<1x16x1xf32> to vector<16x1xf32>
    %c8 = arith.constant 8 : index
    %c0_4 = arith.constant 0 : index
    %8 = vector.load %arg22[%c8, %c0_4] : memref<80x256xf32, #tpu.memory_space<vmem>>, vector<16x1xf32>
    tpu.vector_store %arg22[%c8, %c0_4], %7 {strides = array<i32>} : memref<80x256xf32, #tpu.memory_space<vmem>>, vector<16x1xf32>,
    %c1 = arith.constant 1 : index
    %c0_5 = arith.constant 0 : index
    %c0_6 = arith.constant 0 : index
    %9 = vector.load %arg0[%c1, %c0_5, %c0_6] : memref<2x16x1xf32, #tpu.memory_space<vmem>>, vector<1x16x1xf32>
    %10 = vector.shape_cast %9 : vector<1x16x1xf32> to vector<16x1xf32>
    %c40 = arith.constant 40 : index
    %c0_7 = arith.constant 0 : index
    %11 = vector.load %arg22[%c40, %c0_7] : memref<80x256xf32, #tpu.memory_space<vmem>>, vector<16x1xf32>
    tpu.vector_store %arg22[%c40, %c0_7], %10 {strides = array<i32>} : memref<80x256xf32, #tpu.memory_space<vmem>>, vector<16x1xf32>,
    %c6 = arith.constant 6 : index
    %c0_8 = arith.constant 0 : index
    %12 = vector.load %arg22[%c6, %c0_8] : memref<80x256xf32, #tpu.memory_space<vmem>>, vector<64x128xf32>
    %13 = arith.truncf %12 : vector<64x128xf32> to vector<64x128xbf16>
    %c0_9 = arith.constant 0 : index
    %c0_10 = arith.constant 0 : index
    %c0_11 = arith.constant 0 : index
    %14 = vector.load %arg1[%c0_9, %c0_10, %c0_11] : memref<5x128x128xbf16, #tpu.memory_space<vmem>>, vector<1x128x128xbf16>
    %15 = vector.shape_cast %14 : vector<1x128x128xbf16> to vector<128x128xbf16>
    %cst_12 = arith.constant dense<0.000000e+00> : vector<64x128xf32>
    %16 = tpu.matmul %13, %15, %cst_12 {dimension_numbers = #tpu.dot_dimension_numbers<[1], [0], [0], [1], [0, 0, 1, 1], [], []>} : vector<64x128xbf16>, vector<128x128xbf16>, vector<64x128xf32> -> vector<64x128xf32>
    %c7 = arith.constant 7 : index
    %c0_13 = arith.constant 0 : index
    %17 = vector.load %arg22[%c7, %c0_13] : memref<80x256xf32, #tpu.memory_space<vmem>>, vector<64x128xf32>
    %18 = arith.truncf %17 : vector<64x128xf32> to vector<64x128xbf16>
    %c1_14 = arith.constant 1 : index
    %c0_15 = arith.constant 0 : index
    %c0_16 = arith.constant 0 : index
    %19 = vector.load %arg1[%c1_14, %c0_15, %c0_16] : memref<5x128x128xbf16, #tpu.memory_space<vmem>>, vector<1x128x128xbf16>
    %20 = vector.shape_cast %19 : vector<1x128x128xbf16> to vector<128x128xbf16>
    %cst_17 = arith.constant dense<0.000000e+00> : vector<64x128xf32>
    %21 = tpu.matmul %18, %20, %cst_17 {dimension_numbers = #tpu.dot_dimension_numbers<[1], [0], [0], [1], [0, 0, 1, 1], [], []>} : vector<64x128xbf16>, vector<128x128xbf16>, vector<64x128xf32> -> vector<64x128xf32>
    %22 = arith.addf %16, %21 : vector<64x128xf32>
    %c8_18 = arith.constant 8 : index
    %c0_19 = arith.constant 0 : index
    %23 = vector.load %arg22[%c8_18, %c0_19] : memref<80x256xf32, #tpu.memory_space<vmem>>, vector<64x128xf32>
    %24 = arith.truncf %23 : vector<64x128xf32> to vector<64x128xbf16>
    %c2 = arith.constant 2 : index
    %c0_20 = arith.constant 0 : index
    %c0_21 = arith.constant 0 : index
    %25 = vector.load %arg1[%c2, %c0_20, %c0_21] : memref<5x128x128xbf16, #tpu.memory_space<vmem>>, vector<1x128x128xbf16>
    %26 = vector.shape_cast %25 : vector<1x128x128xbf16> to vector<128x128xbf16>
    %cst_22 = arith.constant dense<0.000000e+00> : vector<64x128xf32>
    %27 = tpu.matmul %24, %26, %cst_22 {dimension_numbers = #tpu.dot_dimension_numbers<[1], [0], [0], [1], [0, 0, 1, 1], [], []>} : vector<64x128xbf16>, vector<128x128xbf16>, vector<64x128xf32> -> vector<64x128xf32>
    %28 = arith.addf %22, %27 : vector<64x128xf32>
    %c9 = arith.constant 9 : index
    %c0_23 = arith.constant 0 : index
    %29 = vector.load %arg22[%c9, %c0_23] : memref<80x256xf32, #tpu.memory_space<vmem>>, vector<64x128xf32>
    %30 = arith.truncf %29 : vector<64x128xf32> to vector<64x128xbf16>
    %c3 = arith.constant 3 : index
    %c0_24 = arith.constant 0 : index
    %c0_25 = arith.constant 0 : index
    %31 = vector.load %arg1[%c3, %c0_24, %c0_25] : memref<5x128x128xbf16, #tpu.memory_space<vmem>>, vector<1x128x128xbf16>
    %32 = vector.shape_cast %31 : vector<1x128x128xbf16> to vector<128x128xbf16>
    %cst_26 = arith.constant dense<0.000000e+00> : vector<64x128xf32>
    %33 = tpu.matmul %30, %32, %cst_26 {dimension_numbers = #tpu.dot_dimension_numbers<[1], [0], [0], [1], [0, 0, 1, 1], [], []>} : vector<64x128xbf16>, vector<128x128xbf16>, vector<64x128xf32> -> vector<64x128xf32>
    %34 = arith.addf %28, %33 : vector<64x128xf32>
    %c10 = arith.constant 10 : index
    %c0_27 = arith.constant 0 : index
    %35 = vector.load %arg22[%c10, %c0_27] : memref<80x256xf32, #tpu.memory_space<vmem>>, vector<64x128xf32>
    %36 = arith.truncf %35 : vector<64x128xf32> to vector<64x128xbf16>
    %c4 = arith.constant 4 : index
    %c0_28 = arith.constant 0 : index
    %c0_29 = arith.constant 0 : index
    %37 = vector.load %arg1[%c4, %c0_28, %c0_29] : memref<5x128x128xbf16, #tpu.memory_space<vmem>>, vector<1x128x128xbf16>
    %38 = vector.shape_cast %37 : vector<1x128x128xbf16> to vector<128x128xbf16>
    %cst_30 = arith.constant dense<0.000000e+00> : vector<64x128xf32>
    %39 = tpu.matmul %36, %38, %cst_30 {dimension_numbers = #tpu.dot_dimension_numbers<[1], [0], [0], [1], [0, 0, 1, 1], [], []>} : vector<64x128xbf16>, vector<128x128xbf16>, vector<64x128xf32> -> vector<64x128xf32>
    %40 = arith.addf %34, %39 : vector<64x128xf32>
    %c0_31 = arith.constant 0 : index
    %c0_32 = arith.constant 0 : index
    %41 = vector.load %arg2[%c0_31, %c0_32] : memref<1x128xf32, #tpu.memory_space<vmem>>, vector<1x128xf32>
    %42 = vector.broadcast %41 : vector<1x128xf32> to vector<64x128xf32>
    %43 = arith.mulf %40, %42 : vector<64x128xf32>
    %c0_33 = arith.constant 0 : index
    %c0_34 = arith.constant 0 : index
    %44 = vector.load %arg3[%c0_33, %c0_34] : memref<1x128xf32, #tpu.memory_space<vmem>>, vector<1x128xf32>
    %45 = vector.broadcast %44 : vector<1x128xf32> to vector<64x128xf32>
    %46 = arith.addf %43, %45 : vector<64x128xf32>
    %cst_35 = arith.constant 0.000000e+00 : f32
    %47 = vector.broadcast %cst_35 : f32 to vector<64x128xf32>
    %48 = arith.cmpf oge, %46, %47 : vector<64x128xf32>
    %cst_36 = arith.constant 0.00999999977 : f32
    %49 = vector.broadcast %cst_36 : f32 to vector<64x128xf32>
    %50 = arith.mulf %49, %46 : vector<64x128xf32>
    %51 = arith.select %48, %46, %50 : vector<64x128xi1>, vector<64x128xf32>
    %52 = vector.extract_strided_slice %51 {offsets = [0, 0], sizes = [16, 128], strides = [1, 1]} : vector<64x128xf32> to vector<16x128xf32>
    %c8_37 = arith.constant 8 : index
    %c0_38 = arith.constant 0 : index
    %53 = vector.load %arg22[%c8_37, %c0_38] : memref<80x256xf32, #tpu.memory_space<vmem>>, vector<16x128xf32>
    tpu.vector_store %arg22[%c8_37, %c0_38], %52 {strides = array<i32>} : memref<80x256xf32, #tpu.memory_space<vmem>>, vector<16x128xf32>,
    %54 = vector.extract_strided_slice %51 {offsets = [32, 0], sizes = [16, 128], strides = [1, 1]} : vector<64x128xf32> to vector<16x128xf32>
    %c40_39 = arith.constant 40 : index
    %c0_40 = arith.constant 0 : index
    %55 = vector.load %arg22[%c40_39, %c0_40] : memref<80x256xf32, #tpu.memory_space<vmem>>, vector<16x128xf32>
    tpu.vector_store %arg22[%c40_39, %c0_40], %54 {strides = array<i32>} : memref<80x256xf32, #tpu.memory_space<vmem>>, vector<16x128xf32>,
    %c6_41 = arith.constant 6 : index
    %c0_42 = arith.constant 0 : index
    %56 = vector.load %arg22[%c6_41, %c0_42] : memref<80x256xf32, #tpu.memory_space<vmem>>, vector<64x128xf32>
    %57 = arith.truncf %56 : vector<64x128xf32> to vector<64x128xbf16>
    %c0_43 = arith.constant 0 : index
    %c0_44 = arith.constant 0 : index
    %c0_45 = arith.constant 0 : index
    %58 = vector.load %arg4[%c0_43, %c0_44, %c0_45] : memref<5x128x128xbf16, #tpu.memory_space<vmem>>, vector<1x128x128xbf16>
    %59 = vector.shape_cast %58 : vector<1x128x128xbf16> to vector<128x128xbf16>
    %cst_46 = arith.constant dense<0.000000e+00> : vector<64x128xf32>
    %60 = tpu.matmul %57, %59, %cst_46 {dimension_numbers = #tpu.dot_dimension_numbers<[1], [0], [0], [1], [0, 0, 1, 1], [], []>} : vector<64x128xbf16>, vector<128x128xbf16>, vector<64x128xf32> -> vector<64x128xf32>
    %c7_47 = arith.constant 7 : index
    %c0_48 = arith.constant 0 : index
    %61 = vector.load %arg22[%c7_47, %c0_48] : memref<80x256xf32, #tpu.memory_space<vmem>>, vector<64x128xf32>
    %62 = arith.truncf %61 : vector<64x128xf32> to vector<64x128xbf16>
    %c1_49 = arith.constant 1 : index
    %c0_50 = arith.constant 0 : index
    %c0_51 = arith.constant 0 : index
    %63 = vector.load %arg4[%c1_49, %c0_50, %c0_51] : memref<5x128x128xbf16, #tpu.memory_space<vmem>>, vector<1x128x128xbf16>
    %64 = vector.shape_cast %63 : vector<1x128x128xbf16> to vector<128x128xbf16>
    %cst_52 = arith.constant dense<0.000000e+00> : vector<64x128xf32>
    %65 = tpu.matmul %62, %64, %cst_52 {dimension_numbers = #tpu.dot_dimension_numbers<[1], [0], [0], [1], [0, 0, 1, 1], [], []>} : vector<64x128xbf16>, vector<128x128xbf16>, vector<64x128xf32> -> vector<64x128xf32>
    %66 = arith.addf %60, %65 : vector<64x128xf32>
    %c8_53 = arith.constant 8 : index
    %c0_54 = arith.constant 0 : index
    %67 = vector.load %arg22[%c8_53, %c0_54] : memref<80x256xf32, #tpu.memory_space<vmem>>, vector<64x128xf32>
    %68 = arith.truncf %67 : vector<64x128xf32> to vector<64x128xbf16>
    %c2_55 = arith.constant 2 : index
    %c0_56 = arith.constant 0 : index
    %c0_57 = arith.constant 0 : index
    %69 = vector.load %arg4[%c2_55, %c0_56, %c0_57] : memref<5x128x128xbf16, #tpu.memory_space<vmem>>, vector<1x128x128xbf16>
    %70 = vector.shape_cast %69 : vector<1x128x128xbf16> to vector<128x128xbf16>
    %cst_58 = arith.constant dense<0.000000e+00> : vector<64x128xf32>
    %71 = tpu.matmul %68, %70, %cst_58 {dimension_numbers = #tpu.dot_dimension_numbers<[1], [0], [0], [1], [0, 0, 1, 1], [], []>} : vector<64x128xbf16>, vector<128x128xbf16>, vector<64x128xf32> -> vector<64x128xf32>
    %72 = arith.addf %66, %71 : vector<64x128xf32>
    %c9_59 = arith.constant 9 : index
    %c0_60 = arith.constant 0 : index
    %73 = vector.load %arg22[%c9_59, %c0_60] : memref<80x256xf32, #tpu.memory_space<vmem>>, vector<64x128xf32>
    %74 = arith.truncf %73 : vector<64x128xf32> to vector<64x128xbf16>
    %c3_61 = arith.constant 3 : index
    %c0_62 = arith.constant 0 : index
    %c0_63 = arith.constant 0 : index
    %75 = vector.load %arg4[%c3_61, %c0_62, %c0_63] : memref<5x128x128xbf16, #tpu.memory_space<vmem>>, vector<1x128x128xbf16>
    %76 = vector.shape_cast %75 : vector<1x128x128xbf16> to vector<128x128xbf16>
    %cst_64 = arith.constant dense<0.000000e+00> : vector<64x128xf32>
    %77 = tpu.matmul %74, %76, %cst_64 {dimension_numbers = #tpu.dot_dimension_numbers<[1], [0], [0], [1], [0, 0, 1, 1], [], []>} : vector<64x128xbf16>, vector<128x128xbf16>, vector<64x128xf32> -> vector<64x128xf32>
    %78 = arith.addf %72, %77 : vector<64x128xf32>
    %c10_65 = arith.constant 10 : index
    %c0_66 = arith.constant 0 : index
    %79 = vector.load %arg22[%c10_65, %c0_66] : memref<80x256xf32, #tpu.memory_space<vmem>>, vector<64x128xf32>
    %80 = arith.truncf %79 : vector<64x128xf32> to vector<64x128xbf16>
    %c4_67 = arith.constant 4 : index
    %c0_68 = arith.constant 0 : index
    %c0_69 = arith.constant 0 : index
    %81 = vector.load %arg4[%c4_67, %c0_68, %c0_69] : memref<5x128x128xbf16, #tpu.memory_space<vmem>>, vector<1x128x128xbf16>
    %82 = vector.shape_cast %81 : vector<1x128x128xbf16> to vector<128x128xbf16>
    %cst_70 = arith.constant dense<0.000000e+00> : vector<64x128xf32>
    %83 = tpu.matmul %80, %82, %cst_70 {dimension_numbers = #tpu.dot_dimension_numbers<[1], [0], [0], [1], [0, 0, 1, 1], [], []>} : vector<64x128xbf16>, vector<128x128xbf16>, vector<64x128xf32> -> vector<64x128xf32>
    %84 = arith.addf %78, %83 : vector<64x128xf32>
    %c0_71 = arith.constant 0 : index
    %c0_72 = arith.constant 0 : index
    %85 = vector.load %arg5[%c0_71, %c0_72] : memref<1x128xf32, #tpu.memory_space<vmem>>, vector<1x128xf32>
    %86 = vector.broadcast %85 : vector<1x128xf32> to vector<64x128xf32>
    %87 = arith.mulf %84, %86 : vector<64x128xf32>
    %c0_73 = arith.constant 0 : index
    %c0_74 = arith.constant 0 : index
    %88 = vector.load %arg6[%c0_73, %c0_74] : memref<1x128xf32, #tpu.memory_space<vmem>>, vector<1x128xf32>
    %89 = vector.broadcast %88 : vector<1x128xf32> to vector<64x128xf32>
    %90 = arith.addf %87, %89 : vector<64x128xf32>
    %cst_75 = arith.constant 0.000000e+00 : f32
    %91 = vector.broadcast %cst_75 : f32 to vector<64x128xf32>
    %92 = arith.cmpf oge, %90, %91 : vector<64x128xf32>
    %cst_76 = arith.constant 0.00999999977 : f32
    %93 = vector.broadcast %cst_76 : f32 to vector<64x128xf32>
    %94 = arith.mulf %93, %90 : vector<64x128xf32>
    %95 = arith.select %92, %90, %94 : vector<64x128xi1>, vector<64x128xf32>
    %96 = vector.extract_strided_slice %95 {offsets = [0, 0], sizes = [16, 128], strides = [1, 1]} : vector<64x128xf32> to vector<16x128xf32>
    %c8_77 = arith.constant 8 : index
    %c0_78 = arith.constant 0 : index
    %97 = vector.load %arg22[%c8_77, %c0_78] : memref<80x256xf32, #tpu.memory_space<vmem>>, vector<16x128xf32>
    tpu.vector_store %arg22[%c8_77, %c0_78], %96 {strides = array<i32>} : memref<80x256xf32, #tpu.memory_space<vmem>>, vector<16x128xf32>,
    %98 = vector.extract_strided_slice %95 {offsets = [32, 0], sizes = [16, 128], strides = [1, 1]} : vector<64x128xf32> to vector<16x128xf32>
    %c40_79 = arith.constant 40 : index
    %c0_80 = arith.constant 0 : index
    %99 = vector.load %arg22[%c40_79, %c0_80] : memref<80x256xf32, #tpu.memory_space<vmem>>, vector<16x128xf32>
    tpu.vector_store %arg22[%c40_79, %c0_80], %98 {strides = array<i32>} : memref<80x256xf32, #tpu.memory_space<vmem>>, vector<16x128xf32>,
    %c6_81 = arith.constant 6 : index
    %c0_82 = arith.constant 0 : index
    %100 = vector.load %arg22[%c6_81, %c0_82] : memref<80x256xf32, #tpu.memory_space<vmem>>, vector<64x128xf32>
    %101 = arith.truncf %100 : vector<64x128xf32> to vector<64x128xbf16>
    %c0_83 = arith.constant 0 : index
    %c0_84 = arith.constant 0 : index
    %c0_85 = arith.constant 0 : index
    %102 = vector.load %arg7[%c0_83, %c0_84, %c0_85] : memref<5x128x128xbf16, #tpu.memory_space<vmem>>, vector<1x128x128xbf16>
    %103 = vector.shape_cast %102 : vector<1x128x128xbf16> to vector<128x128xbf16>
    %cst_86 = arith.constant dense<0.000000e+00> : vector<64x128xf32>
    %104 = tpu.matmul %101, %103, %cst_86 {dimension_numbers = #tpu.dot_dimension_numbers<[1], [0], [0], [1], [0, 0, 1, 1], [], []>} : vector<64x128xbf16>, vector<128x128xbf16>, vector<64x128xf32> -> vector<64x128xf32>
    %c7_87 = arith.constant 7 : index
    %c0_88 = arith.constant 0 : index
    %105 = vector.load %arg22[%c7_87, %c0_88] : memref<80x256xf32, #tpu.memory_space<vmem>>, vector<64x128xf32>
    %106 = arith.truncf %105 : vector<64x128xf32> to vector<64x128xbf16>
    %c1_89 = arith.constant 1 : index
    %c0_90 = arith.constant 0 : index
    %c0_91 = arith.constant 0 : index
    %107 = vector.load %arg7[%c1_89, %c0_90, %c0_91] : memref<5x128x128xbf16, #tpu.memory_space<vmem>>, vector<1x128x128xbf16>
    %108 = vector.shape_cast %107 : vector<1x128x128xbf16> to vector<128x128xbf16>
    %cst_92 = arith.constant dense<0.000000e+00> : vector<64x128xf32>
    %109 = tpu.matmul %106, %108, %cst_92 {dimension_numbers = #tpu.dot_dimension_numbers<[1], [0], [0], [1], [0, 0, 1, 1], [], []>} : vector<64x128xbf16>, vector<128x128xbf16>, vector<64x128xf32> -> vector<64x128xf32>
    %110 = arith.addf %104, %109 : vector<64x128xf32>
    %c8_93 = arith.constant 8 : index
    %c0_94 = arith.constant 0 : index
    %111 = vector.load %arg22[%c8_93, %c0_94] : memref<80x256xf32, #tpu.memory_space<vmem>>, vector<64x128xf32>
    %112 = arith.truncf %111 : vector<64x128xf32> to vector<64x128xbf16>
    %c2_95 = arith.constant 2 : index
    %c0_96 = arith.constant 0 : index
    %c0_97 = arith.constant 0 : index
    %113 = vector.load %arg7[%c2_95, %c0_96, %c0_97] : memref<5x128x128xbf16, #tpu.memory_space<vmem>>, vector<1x128x128xbf16>
    %114 = vector.shape_cast %113 : vector<1x128x128xbf16> to vector<128x128xbf16>
    %cst_98 = arith.constant dense<0.000000e+00> : vector<64x128xf32>
    %115 = tpu.matmul %112, %114, %cst_98 {dimension_numbers = #tpu.dot_dimension_numbers<[1], [0], [0], [1], [0, 0, 1, 1], [], []>} : vector<64x128xbf16>, vector<128x128xbf16>, vector<64x128xf32> -> vector<64x128xf32>
    %116 = arith.addf %110, %115 : vector<64x128xf32>
    %c9_99 = arith.constant 9 : index
    %c0_100 = arith.constant 0 : index
    %117 = vector.load %arg22[%c9_99, %c0_100] : memref<80x256xf32, #tpu.memory_space<vmem>>, vector<64x128xf32>
    %118 = arith.truncf %117 : vector<64x128xf32> to vector<64x128xbf16>
    %c3_101 = arith.constant 3 : index
    %c0_102 = arith.constant 0 : index
    %c0_103 = arith.constant 0 : index
    %119 = vector.load %arg7[%c3_101, %c0_102, %c0_103] : memref<5x128x128xbf16, #tpu.memory_space<vmem>>, vector<1x128x128xbf16>
    %120 = vector.shape_cast %119 : vector<1x128x128xbf16> to vector<128x128xbf16>
    %cst_104 = arith.constant dense<0.000000e+00> : vector<64x128xf32>
    %121 = tpu.matmul %118, %120, %cst_104 {dimension_numbers = #tpu.dot_dimension_numbers<[1], [0], [0], [1], [0, 0, 1, 1], [], []>} : vector<64x128xbf16>, vector<128x128xbf16>, vector<64x128xf32> -> vector<64x128xf32>
    %122 = arith.addf %116, %121 : vector<64x128xf32>
    %c10_105 = arith.constant 10 : index
    %c0_106 = arith.constant 0 : index
    %123 = vector.load %arg22[%c10_105, %c0_106] : memref<80x256xf32, #tpu.memory_space<vmem>>, vector<64x128xf32>
    %124 = arith.truncf %123 : vector<64x128xf32> to vector<64x128xbf16>
    %c4_107 = arith.constant 4 : index
    %c0_108 = arith.constant 0 : index
    %c0_109 = arith.constant 0 : index
    %125 = vector.load %arg7[%c4_107, %c0_108, %c0_109] : memref<5x128x128xbf16, #tpu.memory_space<vmem>>, vector<1x128x128xbf16>
    %126 = vector.shape_cast %125 : vector<1x128x128xbf16> to vector<128x128xbf16>
    %cst_110 = arith.constant dense<0.000000e+00> : vector<64x128xf32>
    %127 = tpu.matmul %124, %126, %cst_110 {dimension_numbers = #tpu.dot_dimension_numbers<[1], [0], [0], [1], [0, 0, 1, 1], [], []>} : vector<64x128xbf16>, vector<128x128xbf16>, vector<64x128xf32> -> vector<64x128xf32>
    %128 = arith.addf %122, %127 : vector<64x128xf32>
    %c0_111 = arith.constant 0 : index
    %c0_112 = arith.constant 0 : index
    %129 = vector.load %arg8[%c0_111, %c0_112] : memref<1x128xf32, #tpu.memory_space<vmem>>, vector<1x128xf32>
    %130 = vector.broadcast %129 : vector<1x128xf32> to vector<64x128xf32>
    %131 = arith.mulf %128, %130 : vector<64x128xf32>
    %c0_113 = arith.constant 0 : index
    %c0_114 = arith.constant 0 : index
    %132 = vector.load %arg9[%c0_113, %c0_114] : memref<1x128xf32, #tpu.memory_space<vmem>>, vector<1x128xf32>
    %133 = vector.broadcast %132 : vector<1x128xf32> to vector<64x128xf32>
    %134 = arith.addf %131, %133 : vector<64x128xf32>
    %cst_115 = arith.constant 0.000000e+00 : f32
    %135 = vector.broadcast %cst_115 : f32 to vector<64x128xf32>
    %136 = arith.cmpf oge, %134, %135 : vector<64x128xf32>
    %cst_116 = arith.constant 0.00999999977 : f32
    %137 = vector.broadcast %cst_116 : f32 to vector<64x128xf32>
    %138 = arith.mulf %137, %134 : vector<64x128xf32>
    %139 = arith.select %136, %134, %138 : vector<64x128xi1>, vector<64x128xf32>
    %140 = vector.extract_strided_slice %139 {offsets = [0, 0], sizes = [16, 128], strides = [1, 1]} : vector<64x128xf32> to vector<16x128xf32>
    %c8_117 = arith.constant 8 : index
    %c0_118 = arith.constant 0 : index
    %141 = vector.load %arg22[%c8_117, %c0_118] : memref<80x256xf32, #tpu.memory_space<vmem>>, vector<16x128xf32>
    tpu.vector_store %arg22[%c8_117, %c0_118], %140 {strides = array<i32>} : memref<80x256xf32, #tpu.memory_space<vmem>>, vector<16x128xf32>,
    %142 = vector.extract_strided_slice %139 {offsets = [32, 0], sizes = [16, 128], strides = [1, 1]} : vector<64x128xf32> to vector<16x128xf32>
    %c40_119 = arith.constant 40 : index
    %c0_120 = arith.constant 0 : index
    %143 = vector.load %arg22[%c40_119, %c0_120] : memref<80x256xf32, #tpu.memory_space<vmem>>, vector<16x128xf32>
    tpu.vector_store %arg22[%c40_119, %c0_120], %142 {strides = array<i32>} : memref<80x256xf32, #tpu.memory_space<vmem>>, vector<16x128xf32>,
    %c6_121 = arith.constant 6 : index
    %c0_122 = arith.constant 0 : index
    %144 = vector.load %arg22[%c6_121, %c0_122] : memref<80x256xf32, #tpu.memory_space<vmem>>, vector<64x128xf32>
    %145 = arith.truncf %144 : vector<64x128xf32> to vector<64x128xbf16>
    %c0_123 = arith.constant 0 : index
    %c0_124 = arith.constant 0 : index
    %c0_125 = arith.constant 0 : index
    %146 = vector.load %arg10[%c0_123, %c0_124, %c0_125] : memref<5x128x128xbf16, #tpu.memory_space<vmem>>, vector<1x128x128xbf16>
    %147 = vector.shape_cast %146 : vector<1x128x128xbf16> to vector<128x128xbf16>
    %cst_126 = arith.constant dense<0.000000e+00> : vector<64x128xf32>
    %148 = tpu.matmul %145, %147, %cst_126 {dimension_numbers = #tpu.dot_dimension_numbers<[1], [0], [0], [1], [0, 0, 1, 1], [], []>} : vector<64x128xbf16>, vector<128x128xbf16>, vector<64x128xf32> -> vector<64x128xf32>
    %c7_127 = arith.constant 7 : index
    %c0_128 = arith.constant 0 : index
    %149 = vector.load %arg22[%c7_127, %c0_128] : memref<80x256xf32, #tpu.memory_space<vmem>>, vector<64x128xf32>
    %150 = arith.truncf %149 : vector<64x128xf32> to vector<64x128xbf16>
    %c1_129 = arith.constant 1 : index
    %c0_130 = arith.constant 0 : index
    %c0_131 = arith.constant 0 : index
    %151 = vector.load %arg10[%c1_129, %c0_130, %c0_131] : memref<5x128x128xbf16, #tpu.memory_space<vmem>>, vector<1x128x128xbf16>
    %152 = vector.shape_cast %151 : vector<1x128x128xbf16> to vector<128x128xbf16>
    %cst_132 = arith.constant dense<0.000000e+00> : vector<64x128xf32>
    %153 = tpu.matmul %150, %152, %cst_132 {dimension_numbers = #tpu.dot_dimension_numbers<[1], [0], [0], [1], [0, 0, 1, 1], [], []>} : vector<64x128xbf16>, vector<128x128xbf16>, vector<64x128xf32> -> vector<64x128xf32>
    %154 = arith.addf %148, %153 : vector<64x128xf32>
    %c8_133 = arith.constant 8 : index
    %c0_134 = arith.constant 0 : index
    %155 = vector.load %arg22[%c8_133, %c0_134] : memref<80x256xf32, #tpu.memory_space<vmem>>, vector<64x128xf32>
    %156 = arith.truncf %155 : vector<64x128xf32> to vector<64x128xbf16>
    %c2_135 = arith.constant 2 : index
    %c0_136 = arith.constant 0 : index
    %c0_137 = arith.constant 0 : index
    %157 = vector.load %arg10[%c2_135, %c0_136, %c0_137] : memref<5x128x128xbf16, #tpu.memory_space<vmem>>, vector<1x128x128xbf16>
    %158 = vector.shape_cast %157 : vector<1x128x128xbf16> to vector<128x128xbf16>
    %cst_138 = arith.constant dense<0.000000e+00> : vector<64x128xf32>
    %159 = tpu.matmul %156, %158, %cst_138 {dimension_numbers = #tpu.dot_dimension_numbers<[1], [0], [0], [1], [0, 0, 1, 1], [], []>} : vector<64x128xbf16>, vector<128x128xbf16>, vector<64x128xf32> -> vector<64x128xf32>
    %160 = arith.addf %154, %159 : vector<64x128xf32>
    %c9_139 = arith.constant 9 : index
    %c0_140 = arith.constant 0 : index
    %161 = vector.load %arg22[%c9_139, %c0_140] : memref<80x256xf32, #tpu.memory_space<vmem>>, vector<64x128xf32>
    %162 = arith.truncf %161 : vector<64x128xf32> to vector<64x128xbf16>
    %c3_141 = arith.constant 3 : index
    %c0_142 = arith.constant 0 : index
    %c0_143 = arith.constant 0 : index
    %163 = vector.load %arg10[%c3_141, %c0_142, %c0_143] : memref<5x128x128xbf16, #tpu.memory_space<vmem>>, vector<1x128x128xbf16>
    %164 = vector.shape_cast %163 : vector<1x128x128xbf16> to vector<128x128xbf16>
    %cst_144 = arith.constant dense<0.000000e+00> : vector<64x128xf32>
    %165 = tpu.matmul %162, %164, %cst_144 {dimension_numbers = #tpu.dot_dimension_numbers<[1], [0], [0], [1], [0, 0, 1, 1], [], []>} : vector<64x128xbf16>, vector<128x128xbf16>, vector<64x128xf32> -> vector<64x128xf32>
    %166 = arith.addf %160, %165 : vector<64x128xf32>
    %c10_145 = arith.constant 10 : index
    %c0_146 = arith.constant 0 : index
    %167 = vector.load %arg22[%c10_145, %c0_146] : memref<80x256xf32, #tpu.memory_space<vmem>>, vector<64x128xf32>
    %168 = arith.truncf %167 : vector<64x128xf32> to vector<64x128xbf16>
    %c4_147 = arith.constant 4 : index
    %c0_148 = arith.constant 0 : index
    %c0_149 = arith.constant 0 : index
    %169 = vector.load %arg10[%c4_147, %c0_148, %c0_149] : memref<5x128x128xbf16, #tpu.memory_space<vmem>>, vector<1x128x128xbf16>
    %170 = vector.shape_cast %169 : vector<1x128x128xbf16> to vector<128x128xbf16>
    %cst_150 = arith.constant dense<0.000000e+00> : vector<64x128xf32>
    %171 = tpu.matmul %168, %170, %cst_150 {dimension_numbers = #tpu.dot_dimension_numbers<[1], [0], [0], [1], [0, 0, 1, 1], [], []>} : vector<64x128xbf16>, vector<128x128xbf16>, vector<64x128xf32> -> vector<64x128xf32>
    %172 = arith.addf %166, %171 : vector<64x128xf32>
    %c0_151 = arith.constant 0 : index
    %c0_152 = arith.constant 0 : index
    %173 = vector.load %arg11[%c0_151, %c0_152] : memref<1x128xf32, #tpu.memory_space<vmem>>, vector<1x128xf32>
    %174 = vector.broadcast %173 : vector<1x128xf32> to vector<64x128xf32>
    %175 = arith.mulf %172, %174 : vector<64x128xf32>
    %c0_153 = arith.constant 0 : index
    %c0_154 = arith.constant 0 : index
    %176 = vector.load %arg12[%c0_153, %c0_154] : memref<1x128xf32, #tpu.memory_space<vmem>>, vector<1x128xf32>
    %177 = vector.broadcast %176 : vector<1x128xf32> to vector<64x128xf32>
    %178 = arith.addf %175, %177 : vector<64x128xf32>
    %cst_155 = arith.constant 0.000000e+00 : f32
    %179 = vector.broadcast %cst_155 : f32 to vector<64x128xf32>
    %180 = arith.cmpf oge, %178, %179 : vector<64x128xf32>
    %cst_156 = arith.constant 0.00999999977 : f32
    %181 = vector.broadcast %cst_156 : f32 to vector<64x128xf32>
    %182 = arith.mulf %181, %178 : vector<64x128xf32>
    %183 = arith.select %180, %178, %182 : vector<64x128xi1>, vector<64x128xf32>
    %184 = vector.extract_strided_slice %183 {offsets = [0, 0], sizes = [16, 128], strides = [1, 1]} : vector<64x128xf32> to vector<16x128xf32>
    %c8_157 = arith.constant 8 : index
    %c0_158 = arith.constant 0 : index
    %185 = vector.load %arg22[%c8_157, %c0_158] : memref<80x256xf32, #tpu.memory_space<vmem>>, vector<16x128xf32>
    tpu.vector_store %arg22[%c8_157, %c0_158], %184 {strides = array<i32>} : memref<80x256xf32, #tpu.memory_space<vmem>>, vector<16x128xf32>,
    %186 = vector.extract_strided_slice %183 {offsets = [32, 0], sizes = [16, 128], strides = [1, 1]} : vector<64x128xf32> to vector<16x128xf32>
    %c40_159 = arith.constant 40 : index
    %c0_160 = arith.constant 0 : index
    %187 = vector.load %arg22[%c40_159, %c0_160] : memref<80x256xf32, #tpu.memory_space<vmem>>, vector<16x128xf32>
    tpu.vector_store %arg22[%c40_159, %c0_160], %186 {strides = array<i32>} : memref<80x256xf32, #tpu.memory_space<vmem>>, vector<16x128xf32>,
    %c0_i32_161 = arith.constant 0 : i32
    %188 = tpu.memref_slice %arg25[%c0_i32_161] : memref<2x!tpu.dma_semaphore, #tpu.memory_space<semaphore_mem>> -> memref<1x!tpu.dma_semaphore, #tpu.memory_space<semaphore_mem>>
    %189 = tpu.memref_squeeze %188 : memref<1x!tpu.dma_semaphore, #tpu.memory_space<semaphore_mem>> -> memref<!tpu.dma_semaphore, #tpu.memory_space<semaphore_mem>>
    tpu.wait_dma2 semaphore(%189 : memref<!tpu.dma_semaphore, #tpu.memory_space<semaphore_mem>>) src(%arg13 : memref<5x128x256xbf16, #tpu.memory_space<any>>) dst(%arg23 : memref<5x128x256xbf16, #tpu.memory_space<vmem>>)
    %c6_162 = arith.constant 6 : index
    %c0_163 = arith.constant 0 : index
    %190 = vector.load %arg22[%c6_162, %c0_163] : memref<80x256xf32, #tpu.memory_space<vmem>>, vector<64x128xf32>
    %191 = arith.truncf %190 : vector<64x128xf32> to vector<64x128xbf16>
    %c0_164 = arith.constant 0 : index
    %c0_165 = arith.constant 0 : index
    %c0_166 = arith.constant 0 : index
    %192 = vector.load %arg23[%c0_164, %c0_165, %c0_166] : memref<5x128x256xbf16, #tpu.memory_space<vmem>>, vector<1x128x256xbf16>
    %193 = vector.shape_cast %192 : vector<1x128x256xbf16> to vector<128x256xbf16>
    %cst_167 = arith.constant dense<0.000000e+00> : vector<64x256xf32>
    %194 = tpu.matmul %191, %193, %cst_167 {dimension_numbers = #tpu.dot_dimension_numbers<[1], [0], [0], [1], [0, 0, 1, 1], [], []>} : vector<64x128xbf16>, vector<128x256xbf16>, vector<64x256xf32> -> vector<64x256xf32>
    %c7_168 = arith.constant 7 : index
    %c0_169 = arith.constant 0 : index
    %195 = vector.load %arg22[%c7_168, %c0_169] : memref<80x256xf32, #tpu.memory_space<vmem>>, vector<64x128xf32>
    %196 = arith.truncf %195 : vector<64x128xf32> to vector<64x128xbf16>
    %c1_170 = arith.constant 1 : index
    %c0_171 = arith.constant 0 : index
    %c0_172 = arith.constant 0 : index
    %197 = vector.load %arg23[%c1_170, %c0_171, %c0_172] : memref<5x128x256xbf16, #tpu.memory_space<vmem>>, vector<1x128x256xbf16>
    %198 = vector.shape_cast %197 : vector<1x128x256xbf16> to vector<128x256xbf16>
    %cst_173 = arith.constant dense<0.000000e+00> : vector<64x256xf32>
    %199 = tpu.matmul %196, %198, %cst_173 {dimension_numbers = #tpu.dot_dimension_numbers<[1], [0], [0], [1], [0, 0, 1, 1], [], []>} : vector<64x128xbf16>, vector<128x256xbf16>, vector<64x256xf32> -> vector<64x256xf32>
    %200 = arith.addf %194, %199 : vector<64x256xf32>
    %c8_174 = arith.constant 8 : index
    %c0_175 = arith.constant 0 : index
    %201 = vector.load %arg22[%c8_174, %c0_175] : memref<80x256xf32, #tpu.memory_space<vmem>>, vector<64x128xf32>
    %202 = arith.truncf %201 : vector<64x128xf32> to vector<64x128xbf16>
    %c2_176 = arith.constant 2 : index
    %c0_177 = arith.constant 0 : index
    %c0_178 = arith.constant 0 : index
    %203 = vector.load %arg23[%c2_176, %c0_177, %c0_178] : memref<5x128x256xbf16, #tpu.memory_space<vmem>>, vector<1x128x256xbf16>
    %204 = vector.shape_cast %203 : vector<1x128x256xbf16> to vector<128x256xbf16>
    %cst_179 = arith.constant dense<0.000000e+00> : vector<64x256xf32>
    %205 = tpu.matmul %202, %204, %cst_179 {dimension_numbers = #tpu.dot_dimension_numbers<[1], [0], [0], [1], [0, 0, 1, 1], [], []>} : vector<64x128xbf16>, vector<128x256xbf16>, vector<64x256xf32> -> vector<64x256xf32>
    %206 = arith.addf %200, %205 : vector<64x256xf32>
    %c9_180 = arith.constant 9 : index
    %c0_181 = arith.constant 0 : index
    %207 = vector.load %arg22[%c9_180, %c0_181] : memref<80x256xf32, #tpu.memory_space<vmem>>, vector<64x128xf32>
    %208 = arith.truncf %207 : vector<64x128xf32> to vector<64x128xbf16>
    %c3_182 = arith.constant 3 : index
    %c0_183 = arith.constant 0 : index
    %c0_184 = arith.constant 0 : index
    %209 = vector.load %arg23[%c3_182, %c0_183, %c0_184] : memref<5x128x256xbf16, #tpu.memory_space<vmem>>, vector<1x128x256xbf16>
    %210 = vector.shape_cast %209 : vector<1x128x256xbf16> to vector<128x256xbf16>
    %cst_185 = arith.constant dense<0.000000e+00> : vector<64x256xf32>
    %211 = tpu.matmul %208, %210, %cst_185 {dimension_numbers = #tpu.dot_dimension_numbers<[1], [0], [0], [1], [0, 0, 1, 1], [], []>} : vector<64x128xbf16>, vector<128x256xbf16>, vector<64x256xf32> -> vector<64x256xf32>
    %212 = arith.addf %206, %211 : vector<64x256xf32>
    %c10_186 = arith.constant 10 : index
    %c0_187 = arith.constant 0 : index
    %213 = vector.load %arg22[%c10_186, %c0_187] : memref<80x256xf32, #tpu.memory_space<vmem>>, vector<64x128xf32>
    %214 = arith.truncf %213 : vector<64x128xf32> to vector<64x128xbf16>
    %c4_188 = arith.constant 4 : index
    %c0_189 = arith.constant 0 : index
    %c0_190 = arith.constant 0 : index
    %215 = vector.load %arg23[%c4_188, %c0_189, %c0_190] : memref<5x128x256xbf16, #tpu.memory_space<vmem>>, vector<1x128x256xbf16>
    %216 = vector.shape_cast %215 : vector<1x128x256xbf16> to vector<128x256xbf16>
    %cst_191 = arith.constant dense<0.000000e+00> : vector<64x256xf32>
    %217 = tpu.matmul %214, %216, %cst_191 {dimension_numbers = #tpu.dot_dimension_numbers<[1], [0], [0], [1], [0, 0, 1, 1], [], []>} : vector<64x128xbf16>, vector<128x256xbf16>, vector<64x256xf32> -> vector<64x256xf32>
    %218 = arith.addf %212, %217 : vector<64x256xf32>
    %c0_192 = arith.constant 0 : index
    %c0_193 = arith.constant 0 : index
    %219 = vector.load %arg14[%c0_192, %c0_193] : memref<1x256xf32, #tpu.memory_space<vmem>>, vector<1x256xf32>
    %220 = vector.broadcast %219 : vector<1x256xf32> to vector<64x256xf32>
    %221 = arith.mulf %218, %220 : vector<64x256xf32>
    %c0_194 = arith.constant 0 : index
    %c0_195 = arith.constant 0 : index
    %222 = vector.load %arg15[%c0_194, %c0_195] : memref<1x256xf32, #tpu.memory_space<vmem>>, vector<1x256xf32>
    %223 = vector.broadcast %222 : vector<1x256xf32> to vector<64x256xf32>
    %224 = arith.addf %221, %223 : vector<64x256xf32>
    %cst_196 = arith.constant 0.000000e+00 : f32
    %225 = vector.broadcast %cst_196 : f32 to vector<64x256xf32>
    %226 = arith.cmpf oge, %224, %225 : vector<64x256xf32>
    %cst_197 = arith.constant 0.00999999977 : f32
    %227 = vector.broadcast %cst_197 : f32 to vector<64x256xf32>
    %228 = arith.mulf %227, %224 : vector<64x256xf32>
    %229 = arith.select %226, %224, %228 : vector<64x256xi1>, vector<64x256xf32>
    %230 = vector.extract_strided_slice %229 {offsets = [0, 0], sizes = [16, 256], strides = [1, 1]} : vector<64x256xf32> to vector<16x256xf32>
    %c8_198 = arith.constant 8 : index
    %c0_199 = arith.constant 0 : index
    %231 = vector.load %arg22[%c8_198, %c0_199] : memref<80x256xf32, #tpu.memory_space<vmem>>, vector<16x256xf32>
    tpu.vector_store %arg22[%c8_198, %c0_199], %230 {strides = array<i32>} : memref<80x256xf32, #tpu.memory_space<vmem>>, vector<16x256xf32>,
    %232 = vector.extract_strided_slice %229 {offsets = [32, 0], sizes = [16, 256], strides = [1, 1]} : vector<64x256xf32> to vector<16x256xf32>
    %c40_200 = arith.constant 40 : index
    %c0_201 = arith.constant 0 : index
    %233 = vector.load %arg22[%c40_200, %c0_201] : memref<80x256xf32, #tpu.memory_space<vmem>>, vector<16x256xf32>
    tpu.vector_store %arg22[%c40_200, %c0_201], %232 {strides = array<i32>} : memref<80x256xf32, #tpu.memory_space<vmem>>, vector<16x256xf32>,
    %c1_i32_202 = arith.constant 1 : i32
    %234 = tpu.memref_slice %arg25[%c1_i32_202] : memref<2x!tpu.dma_semaphore, #tpu.memory_space<semaphore_mem>> -> memref<1x!tpu.dma_semaphore, #tpu.memory_space<semaphore_mem>>
    %235 = tpu.memref_squeeze %234 : memref<1x!tpu.dma_semaphore, #tpu.memory_space<semaphore_mem>> -> memref<!tpu.dma_semaphore, #tpu.memory_space<semaphore_mem>>
    tpu.wait_dma2 semaphore(%235 : memref<!tpu.dma_semaphore, #tpu.memory_space<semaphore_mem>>) src(%arg16 : memref<5x256x256xbf16, #tpu.memory_space<any>>) dst(%arg24 : memref<5x256x256xbf16, #tpu.memory_space<vmem>>)
    %c6_203 = arith.constant 6 : index
    %c0_204 = arith.constant 0 : index
    %236 = vector.load %arg22[%c6_203, %c0_204] : memref<80x256xf32, #tpu.memory_space<vmem>>, vector<64x256xf32>
    %237 = arith.truncf %236 : vector<64x256xf32> to vector<64x256xbf16>
    %c0_205 = arith.constant 0 : index
    %c0_206 = arith.constant 0 : index
    %c0_207 = arith.constant 0 : index
    %238 = vector.load %arg24[%c0_205, %c0_206, %c0_207] : memref<5x256x256xbf16, #tpu.memory_space<vmem>>, vector<1x256x256xbf16>
    %239 = vector.shape_cast %238 : vector<1x256x256xbf16> to vector<256x256xbf16>
    %cst_208 = arith.constant dense<0.000000e+00> : vector<64x256xf32>
    %240 = tpu.matmul %237, %239, %cst_208 {dimension_numbers = #tpu.dot_dimension_numbers<[1], [0], [0], [1], [0, 0, 1, 1], [], []>} : vector<64x256xbf16>, vector<256x256xbf16>, vector<64x256xf32> -> vector<64x256xf32>
    %c7_209 = arith.constant 7 : index
    %c0_210 = arith.constant 0 : index
    %241 = vector.load %arg22[%c7_209, %c0_210] : memref<80x256xf32, #tpu.memory_space<vmem>>, vector<64x256xf32>
    %242 = arith.truncf %241 : vector<64x256xf32> to vector<64x256xbf16>
    %c1_211 = arith.constant 1 : index
    %c0_212 = arith.constant 0 : index
    %c0_213 = arith.constant 0 : index
    %243 = vector.load %arg24[%c1_211, %c0_212, %c0_213] : memref<5x256x256xbf16, #tpu.memory_space<vmem>>, vector<1x256x256xbf16>
    %244 = vector.shape_cast %243 : vector<1x256x256xbf16> to vector<256x256xbf16>
    %cst_214 = arith.constant dense<0.000000e+00> : vector<64x256xf32>
    %245 = tpu.matmul %242, %244, %cst_214 {dimension_numbers = #tpu.dot_dimension_numbers<[1], [0], [0], [1], [0, 0, 1, 1], [], []>} : vector<64x256xbf16>, vector<256x256xbf16>, vector<64x256xf32> -> vector<64x256xf32>
    %246 = arith.addf %240, %245 : vector<64x256xf32>
    %c8_215 = arith.constant 8 : index
    %c0_216 = arith.constant 0 : index
    %247 = vector.load %arg22[%c8_215, %c0_216] : memref<80x256xf32, #tpu.memory_space<vmem>>, vector<64x256xf32>
    %248 = arith.truncf %247 : vector<64x256xf32> to vector<64x256xbf16>
    %c2_217 = arith.constant 2 : index
    %c0_218 = arith.constant 0 : index
    %c0_219 = arith.constant 0 : index
    %249 = vector.load %arg24[%c2_217, %c0_218, %c0_219] : memref<5x256x256xbf16, #tpu.memory_space<vmem>>, vector<1x256x256xbf16>
    %250 = vector.shape_cast %249 : vector<1x256x256xbf16> to vector<256x256xbf16>
    %cst_220 = arith.constant dense<0.000000e+00> : vector<64x256xf32>
    %251 = tpu.matmul %248, %250, %cst_220 {dimension_numbers = #tpu.dot_dimension_numbers<[1], [0], [0], [1], [0, 0, 1, 1], [], []>} : vector<64x256xbf16>, vector<256x256xbf16>, vector<64x256xf32> -> vector<64x256xf32>
    %252 = arith.addf %246, %251 : vector<64x256xf32>
    %c9_221 = arith.constant 9 : index
    %c0_222 = arith.constant 0 : index
    %253 = vector.load %arg22[%c9_221, %c0_222] : memref<80x256xf32, #tpu.memory_space<vmem>>, vector<64x256xf32>
    %254 = arith.truncf %253 : vector<64x256xf32> to vector<64x256xbf16>
    %c3_223 = arith.constant 3 : index
    %c0_224 = arith.constant 0 : index
    %c0_225 = arith.constant 0 : index
    %255 = vector.load %arg24[%c3_223, %c0_224, %c0_225] : memref<5x256x256xbf16, #tpu.memory_space<vmem>>, vector<1x256x256xbf16>
    %256 = vector.shape_cast %255 : vector<1x256x256xbf16> to vector<256x256xbf16>
    %cst_226 = arith.constant dense<0.000000e+00> : vector<64x256xf32>
    %257 = tpu.matmul %254, %256, %cst_226 {dimension_numbers = #tpu.dot_dimension_numbers<[1], [0], [0], [1], [0, 0, 1, 1], [], []>} : vector<64x256xbf16>, vector<256x256xbf16>, vector<64x256xf32> -> vector<64x256xf32>
    %258 = arith.addf %252, %257 : vector<64x256xf32>
    %c10_227 = arith.constant 10 : index
    %c0_228 = arith.constant 0 : index
    %259 = vector.load %arg22[%c10_227, %c0_228] : memref<80x256xf32, #tpu.memory_space<vmem>>, vector<64x256xf32>
    %260 = arith.truncf %259 : vector<64x256xf32> to vector<64x256xbf16>
    %c4_229 = arith.constant 4 : index
    %c0_230 = arith.constant 0 : index
    %c0_231 = arith.constant 0 : index
    %261 = vector.load %arg24[%c4_229, %c0_230, %c0_231] : memref<5x256x256xbf16, #tpu.memory_space<vmem>>, vector<1x256x256xbf16>
    %262 = vector.shape_cast %261 : vector<1x256x256xbf16> to vector<256x256xbf16>
    %cst_232 = arith.constant dense<0.000000e+00> : vector<64x256xf32>
    %263 = tpu.matmul %260, %262, %cst_232 {dimension_numbers = #tpu.dot_dimension_numbers<[1], [0], [0], [1], [0, 0, 1, 1], [], []>} : vector<64x256xbf16>, vector<256x256xbf16>, vector<64x256xf32> -> vector<64x256xf32>
    %264 = arith.addf %258, %263 : vector<64x256xf32>
    %c0_233 = arith.constant 0 : index
    %c0_234 = arith.constant 0 : index
    %265 = vector.load %arg17[%c0_233, %c0_234] : memref<1x256xf32, #tpu.memory_space<vmem>>, vector<1x256xf32>
    %266 = vector.broadcast %265 : vector<1x256xf32> to vector<64x256xf32>
    %267 = arith.mulf %264, %266 : vector<64x256xf32>
    %c0_235 = arith.constant 0 : index
    %c0_236 = arith.constant 0 : index
    %268 = vector.load %arg18[%c0_235, %c0_236] : memref<1x256xf32, #tpu.memory_space<vmem>>, vector<1x256xf32>
    %269 = vector.broadcast %268 : vector<1x256xf32> to vector<64x256xf32>
    %270 = arith.addf %267, %269 : vector<64x256xf32>
    %cst_237 = arith.constant 0.000000e+00 : f32
    %271 = vector.broadcast %cst_237 : f32 to vector<64x256xf32>
    %272 = arith.cmpf oge, %270, %271 : vector<64x256xf32>
    %cst_238 = arith.constant 0.00999999977 : f32
    %273 = vector.broadcast %cst_238 : f32 to vector<64x256xf32>
    %274 = arith.mulf %273, %270 : vector<64x256xf32>
    %275 = arith.select %272, %270, %274 : vector<64x256xi1>, vector<64x256xf32>
    %276 = vector.extract_strided_slice %275 {offsets = [0, 0], sizes = [16, 256], strides = [1, 1]} : vector<64x256xf32> to vector<16x256xf32>
    %cst_239 = arith.constant dense<0.000000e+00> : vector<256xf32>
    %277 = vector.multi_reduction <add>, %276, %cst_239 [0] : vector<16x256xf32> to vector<256xf32>
    %278 = vector.shape_cast %277 : vector<256xf32> to vector<1x256xf32>
    %cst_240 = arith.constant 6.250000e-02 : f32
    %279 = vector.broadcast %cst_240 : f32 to vector<1x256xf32>
    %280 = arith.mulf %278, %279 : vector<1x256xf32>
    %281 = arith.truncf %280 : vector<1x256xf32> to vector<1x256xbf16>
    %c0_241 = arith.constant 0 : index
    %c0_242 = arith.constant 0 : index
    %282 = vector.load %arg19[%c0_241, %c0_242] : memref<256x128xbf16, #tpu.memory_space<vmem>>, vector<256x128xbf16>
    %cst_243 = arith.constant dense<0.000000e+00> : vector<1x128xf32>
    %283 = tpu.matmul %281, %282, %cst_243 {dimension_numbers = #tpu.dot_dimension_numbers<[1], [0], [0], [1], [0, 0, 1, 1], [], []>} : vector<1x256xbf16>, vector<256x128xbf16>, vector<1x128xf32> -> vector<1x128xf32>
    %c0_244 = arith.constant 0 : index
    %c0_245 = arith.constant 0 : index
    %284 = vector.load %arg20[%c0_244, %c0_245] : memref<1x128xf32, #tpu.memory_space<vmem>>, vector<1x128xf32>
    %285 = arith.addf %283, %284 : vector<1x128xf32>
    %c0_246 = arith.constant 0 : index
    %c0_247 = arith.constant 0 : index
    %286 = vector.load %arg21[%c0_246, %c0_247] : memref<2x128xf32, #tpu.memory_space<vmem>>, vector<1x128xf32>
    tpu.vector_store %arg21[%c0_246, %c0_247], %285 {strides = array<i32>} : memref<2x128xf32, #tpu.memory_space<vmem>>, vector<1x128xf32>,
    %287 = vector.extract_strided_slice %275 {offsets = [32, 0], sizes = [16, 256], strides = [1, 1]} : vector<64x256xf32> to vector<16x256xf32>
    %cst_248 = arith.constant dense<0.000000e+00> : vector<256xf32>
    %288 = vector.multi_reduction <add>, %287, %cst_248 [0] : vector<16x256xf32> to vector<256xf32>
    %289 = vector.shape_cast %288 : vector<256xf32> to vector<1x256xf32>
    %cst_249 = arith.constant 6.250000e-02 : f32
    %290 = vector.broadcast %cst_249 : f32 to vector<1x256xf32>
    %291 = arith.mulf %289, %290 : vector<1x256xf32>
    %292 = arith.truncf %291 : vector<1x256xf32> to vector<1x256xbf16>
    %c0_250 = arith.constant 0 : index
    %c0_251 = arith.constant 0 : index
    %293 = vector.load %arg19[%c0_250, %c0_251] : memref<256x128xbf16, #tpu.memory_space<vmem>>, vector<256x128xbf16>
    %cst_252 = arith.constant dense<0.000000e+00> : vector<1x128xf32>
    %294 = tpu.matmul %292, %293, %cst_252 {dimension_numbers = #tpu.dot_dimension_numbers<[1], [0], [0], [1], [0, 0, 1, 1], [], []>} : vector<1x256xbf16>, vector<256x128xbf16>, vector<1x128xf32> -> vector<1x128xf32>
    %c0_253 = arith.constant 0 : index
    %c0_254 = arith.constant 0 : index
    %295 = vector.load %arg20[%c0_253, %c0_254] : memref<1x128xf32, #tpu.memory_space<vmem>>, vector<1x128xf32>
    %296 = arith.addf %294, %295 : vector<1x128xf32>
    %c1_255 = arith.constant 1 : index
    %c0_256 = arith.constant 0 : index
    %297 = vector.load %arg21[%c1_255, %c0_256] : memref<2x128xf32, #tpu.memory_space<vmem>>, vector<1x128xf32>
    tpu.vector_store %arg21[%c1_255, %c0_256], %296 {strides = array<i32>} : memref<2x128xf32, #tpu.memory_space<vmem>>, vector<1x128xf32>,
    return
  }
}

</mosaic_0001>

<llo_original>
// kernel: forward.1
$region0: #{forward.1}
  #allocation0 [shape = 'u32[]', space=smem, size = 0x4, offset = 0x4, fixed_abs, tag = 'smem constant byte address 0x4 - core index']
  #allocation1 [shape = 'u32[144,128]{1,0:T(1,128)}', space=vmem, size = 0x12000, scoped, tag = 'internal scratch']
  #allocation2 [shape = 'f32[80,256]{1,0:T(8,128)}', space=vmem, size = 0x14000, scoped, tag = 'scratch operand']
  #allocation3 [shape = 'bf16[5,128,256]{2,1,0:T(8,128)(2,1)}', space=vmem, size = 0x50000, scoped, tag = 'scratch operand']
  #allocation4 [shape = 'bf16[5,256,256]{2,1,0:T(8,128)(2,1)}', space=vmem, size = 0xa0000, scoped, tag = 'scratch operand']
  #allocation5 [shape = 's32[2]{0}', space=sflag, size = 0x8, scoped, tag = 'scratch operand']
  #allocation14 [shape = 's32[]', space=sflag, size = 0x4, offset = 0, fixed_abs, tag = 'sflag constant byte address 0x0 - dummy sync flag']
  #allocation15 [shape = 's32[]', space=sflag, size = 0x4, offset = 0, fixed_abs, tag = 'sflag constant byte address 0x0 - dummy sync flag']
  #allocation16 [shape = 'u32[]', space=smem, size = 0x4, offset = 0x44, fixed_abs, tag = 'smem constant byte address 0x44 - assertion arg 0']
  #allocation17 [shape = 'u32[]', space=smem, size = 0x4, offset = 0x48, fixed_abs, tag = 'smem constant byte address 0x48 - assertion arg 1']
  #allocation18 [shape = 's32[]', space=sflag, size = 0x4, offset = 0, fixed_abs, tag = 'sflag constant byte address 0x0 - dummy sync flag']
  #allocation19 [shape = 's32[]', space=sflag, size = 0x4, offset = 0, fixed_abs, tag = 'sflag constant byte address 0x0 - dummy sync flag']
  %s0 = inlined_call_operand.vmem [shape: f32[2,16,1], index: 0, kind: input, shape index: {}]
  %s1 = inlined_call_operand.hbm [shape: bf16[5,128,128], index: 1, kind: input, shape index: {}]
  %s2 = inlined_call_operand.vmem [shape: f32[1,128], index: 2, kind: input, shape index: {}]
  %s3 = inlined_call_operand.vmem [shape: f32[1,128], index: 3, kind: input, shape index: {}]
  %s4 = inlined_call_operand.hbm [shape: bf16[5,128,128], index: 4, kind: input, shape index: {}]
  %s5 = inlined_call_operand.vmem [shape: f32[1,128], index: 5, kind: input, shape index: {}]
  %s6 = inlined_call_operand.vmem [shape: f32[1,128], index: 6, kind: input, shape index: {}]
  %s7 = inlined_call_operand.hbm [shape: bf16[5,128,128], index: 7, kind: input, shape index: {}]
  %s8 = inlined_call_operand.vmem [shape: f32[1,128], index: 8, kind: input, shape index: {}]
  %s9 = inlined_call_operand.vmem [shape: f32[1,128], index: 9, kind: input, shape index: {}]
  %s10 = inlined_call_operand.hbm [shape: bf16[5,128,128], index: 10, kind: input, shape index: {}]
  %s11 = inlined_call_operand.vmem [shape: f32[1,128], index: 11, kind: input, shape index: {}]
  %s12 = inlined_call_operand.vmem [shape: f32[1,128], index: 12, kind: input, shape index: {}]
  %s13 = inlined_call_operand.hbm [shape: bf16[5,128,256], index: 13, kind: input, shape index: {}]
  %s14 = inlined_call_operand.vmem [shape: f32[1,256], index: 14, kind: input, shape index: {}]
  %s15 = inlined_call_operand.vmem [shape: f32[1,256], index: 15, kind: input, shape index: {}]
  %s16 = inlined_call_operand.hbm [shape: bf16[5,256,256], index: 16, kind: input, shape index: {}]
  %s17 = inlined_call_operand.vmem [shape: f32[1,256], index: 17, kind: input, shape index: {}]
  %s18 = inlined_call_operand.vmem [shape: f32[1,256], index: 18, kind: input, shape index: {}]
  %s19 = inlined_call_operand.hbm [shape: bf16[256,128], index: 19, kind: input, shape index: {}]
  %s20 = inlined_call_operand.vmem [shape: f32[1,128], index: 20, kind: input, shape index: {}]
  %s21 = inlined_call_operand.vmem [shape: f32[2,128], index: 21, kind: output, shape index: {}]
  %s22 = sld [smem:[#allocation0]]
  $region114: #{forward.1} parent=0
    _
  %s24 = ssub.s32 1, %s22
  %s25 = scalar_select 0, %s24, %s22
  $region1: #{forward.1} parent=0
    #allocation6 [shape = 'u8[163840]{0}', space=vmem, size = 0x28000, scoped, tag = 'input window, operand 1, single buffered']
    #allocation7 [shape = 's32[1]{0}', space=sflag, size = 0x4, scoped, tag = 'scoped memory for forward.1']
    #allocation8 [shape = 'u8[163840]{0}', space=vmem, size = 0x28000, scoped, tag = 'input window, operand 4, single buffered']
    #allocation9 [shape = 's32[1]{0}', space=sflag, size = 0x4, scoped, tag = 'scoped memory for forward.1']
    #allocation10 [shape = 'u8[163840]{0}', space=vmem, size = 0x28000, scoped, tag = 'input window, operand 7, single buffered']
    #allocation11 [shape = 'u8[163840]{0}', space=vmem, size = 0x28000, scoped, tag = 'input window, operand 10, single buffered']
    #allocation12 [shape = 's32[1]{0}', space=sflag, size = 0x4, scoped, tag = 'scoped memory for forward.1']
    #allocation13 [shape = 'u8[65536]{0}', space=vmem, size = 0x10000, scoped, tag = 'input window, operand 19, single buffered']
    %26 = vsyncpa [#allocation7], 0
    %27 = vsyncpa [#allocation9], 0
    %28 = vsyncpa [#allocation12], 0
    // Predicated region
    $region2: #{forward.1} parent=1 // pred_check
      _
    $region3: #{forward.1} parent=1 // pred_check_branch
      %30 = sbr.rel (0) target = $region5
    $region4: #{forward.1} parent=1 // pred_region
      _
    $region5: #{forward.1} parent=1 // pred_fallthru
      _
    // Predicated region
    $region6: #{forward.1} parent=1 // pred_check
      _
    $region7: #{forward.1} parent=1 // pred_check_branch
      %32 = sbr.rel (0) target = $region9
    $region8: #{forward.1} parent=1 // pred_region
      %s34 = ssub.s32 5120, 5120
      %35 = vsyncadd [#allocation7], %s34
      %s36 = sshll.u32 [#allocation6], 4
      %s37 = int_to_ptr.vmem [resolvable:$true] %s36
      %42 = dma.hbm_to_vmem [thread:$0]  %s1, 5120, %s37, [#allocation7], 64, 64, 4
    $region9: #{forward.1} parent=1 // pred_fallthru
      _
    // Predicated region
    $region10: #{forward.1} parent=1 // pred_check
      _
    $region11: #{forward.1} parent=1 // pred_check_branch
      %44 = sbr.rel (0) target = $region13
    $region12: #{forward.1} parent=1 // pred_region
      _
    $region13: #{forward.1} parent=1 // pred_fallthru
      _
    // Predicated region
    $region14: #{forward.1} parent=1 // pred_check
      _
    $region15: #{forward.1} parent=1 // pred_check_branch
      %46 = sbr.rel (0) target = $region17
    $region16: #{forward.1} parent=1 // pred_region
      _
    $region17: #{forward.1} parent=1 // pred_fallthru
      _
    // Predicated region
    $region18: #{forward.1} parent=1 // pred_check
      _
    $region19: #{forward.1} parent=1 // pred_check_branch
      %48 = sbr.rel (0) target = $region21
    $region20: #{forward.1} parent=1 // pred_region
      %s50 = ssub.s32 5120, 5120
      %51 = vsyncadd [#allocation9], %s50
      %s52 = sshll.u32 [#allocation8], 4
      %s53 = int_to_ptr.vmem [resolvable:$true] %s52
      %58 = dma.hbm_to_vmem [thread:$0]  %s4, 5120, %s53, [#allocation9], 64, 64, 4
    $region21: #{forward.1} parent=1 // pred_fallthru
      _
    // Predicated region
    $region22: #{forward.1} parent=1 // pred_check
      _
    $region23: #{forward.1} parent=1 // pred_check_branch
      %60 = sbr.rel (0) target = $region25
    $region24: #{forward.1} parent=1 // pred_region
      _
    $region25: #{forward.1} parent=1 // pred_fallthru
      _
    // Predicated region
    $region26: #{forward.1} parent=1 // pred_check
      _
    $region27: #{forward.1} parent=1 // pred_check_branch
      %62 = sbr.rel (0) target = $region29
    $region28: #{forward.1} parent=1 // pred_region
      _
    $region29: #{forward.1} parent=1 // pred_fallthru
      _
    // Predicated region
    $region30: #{forward.1} parent=1 // pred_check
      _
    $region31: #{forward.1} parent=1 // pred_check_branch
      %64 = sbr.rel (0) target = $region33
    $region32: #{forward.1} parent=1 // pred_region
      %s66 = ssub.s32 5120, 5120
      %67 = vsyncadd [#allocation9], %s66
      %s68 = sshll.u32 [#allocation10], 4
      %s69 = int_to_ptr.vmem [resolvable:$true] %s68
      %74 = dma.hbm_to_vmem [thread:$0]  %s7, 5120, %s69, [#allocation9], 64, 64, 4
    $region33: #{forward.1} parent=1 // pred_fallthru
      _
    // Predicated region
    $region34: #{forward.1} parent=1 // pred_check
      _
    $region35: #{forward.1} parent=1 // pred_check_branch
      %76 = sbr.rel (0) target = $region37
    $region36: #{forward.1} parent=1 // pred_region
      _
    $region37: #{forward.1} parent=1 // pred_fallthru
      _
    // Predicated region
    $region38: #{forward.1} parent=1 // pred_check
      _
    $region39: #{forward.1} parent=1 // pred_check_branch
      %78 = sbr.rel (0) target = $region41
    $region40: #{forward.1} parent=1 // pred_region
      _
    $region41: #{forward.1} parent=1 // pred_fallthru
      _
    // Predicated region
    $region42: #{forward.1} parent=1 // pred_check
      _
    $region43: #{forward.1} parent=1 // pred_check_branch
      %80 = sbr.rel (0) target = $region45
    $region44: #{forward.1} parent=1 // pred_region
      %s82 = ssub.s32 5120, 5120
      %83 = vsyncadd [#allocation12], %s82
      %s84 = sshll.u32 [#allocation11], 4
      %s85 = int_to_ptr.vmem [resolvable:$true] %s84
      %90 = dma.hbm_to_vmem [thread:$0]  %s10, 5120, %s85, [#allocation12], 64, 64, 4
    $region45: #{forward.1} parent=1 // pred_fallthru
      _
    // Predicated region
    $region46: #{forward.1} parent=1 // pred_check
      _
    $region47: #{forward.1} parent=1 // pred_check_branch
      %92 = sbr.rel (0) target = $region49
    $region48: #{forward.1} parent=1 // pred_region
      _
    $region49: #{forward.1} parent=1 // pred_fallthru
      _
    // Predicated region
    $region50: #{forward.1} parent=1 // pred_check
      _
    $region51: #{forward.1} parent=1 // pred_check_branch
      %94 = sbr.rel (0) target = $region53
    $region52: #{forward.1} parent=1 // pred_region
      _
    $region53: #{forward.1} parent=1 // pred_fallthru
      _
    // Predicated region
    $region54: #{forward.1} parent=1 // pred_check
      _
    $region55: #{forward.1} parent=1 // pred_check_branch
      %96 = sbr.rel (0) target = $region57
    $region56: #{forward.1} parent=1 // pred_region
      _
    $region57: #{forward.1} parent=1 // pred_fallthru
      _
    // Predicated region
    $region58: #{forward.1} parent=1 // pred_check
      _
    $region59: #{forward.1} parent=1 // pred_check_branch
      %98 = sbr.rel (0) target = $region61
    $region60: #{forward.1} parent=1 // pred_region
      _
    $region61: #{forward.1} parent=1 // pred_fallthru
      _
    // Predicated region
    $region62: #{forward.1} parent=1 // pred_check
      _
    $region63: #{forward.1} parent=1 // pred_check_branch
      %100 = sbr.rel (0) target = $region65
    $region64: #{forward.1} parent=1 // pred_region
      _
    $region65: #{forward.1} parent=1 // pred_fallthru
      _
    // Predicated region
    $region66: #{forward.1} parent=1 // pred_check
      _
    $region67: #{forward.1} parent=1 // pred_check_branch
      %102 = sbr.rel (0) target = $region69
    $region68: #{forward.1} parent=1 // pred_region
      _
    $region69: #{forward.1} parent=1 // pred_fallthru
      _
    // Predicated region
    $region70: #{forward.1} parent=1 // pred_check
      _
    $region71: #{forward.1} parent=1 // pred_check_branch
      %104 = sbr.rel (0) target = $region73
    $region72: #{forward.1} parent=1 // pred_region
      %s106 = ssub.s32 2048, 2048
      %107 = vsyncadd [#allocation12], %s106
      %s108 = sshll.u32 [#allocation13], 4
      %s109 = int_to_ptr.vmem [resolvable:$true] %s108
      %114 = dma.hbm_to_vmem [thread:$0]  %s19, 2048, %s109, [#allocation12], 64, 64, 4
    $region73: #{forward.1} parent=1 // pred_fallthru
      _
    // Predicated region
    $region74: #{forward.1} parent=1 // pred_check
      _
    $region75: #{forward.1} parent=1 // pred_check_branch
      %116 = sbr.rel (0) target = $region77
    $region76: #{forward.1} parent=1 // pred_region
      _
    $region77: #{forward.1} parent=1 // pred_fallthru
      _
    // Predicated region
    $region78: #{forward.1} parent=1 // pred_check
      _
    $region79: #{forward.1} parent=1 // pred_check_branch
      %118 = sbr.rel (0) target = $region81
    $region80: #{forward.1} parent=1 // pred_region
      %119 = dma.done [#allocation7], 5120
    $region81: #{forward.1} parent=1 // pred_fallthru
      _
    // Predicated region
    $region82: #{forward.1} parent=1 // pred_check
      _
    $region83: #{forward.1} parent=1 // pred_check_branch
      %121 = sbr.rel (0) target = $region85
    $region84: #{forward.1} parent=1 // pred_region
      %122 = dma.done [#allocation9], 5120
    $region85: #{forward.1} parent=1 // pred_fallthru
      _
    // Predicated region
    $region86: #{forward.1} parent=1 // pred_check
      _
    $region87: #{forward.1} parent=1 // pred_check_branch
      %124 = sbr.rel (0) target = $region89
    $region88: #{forward.1} parent=1 // pred_region
      %125 = dma.done [#allocation9], 5120
    $region89: #{forward.1} parent=1 // pred_fallthru
      _
    // Predicated region
    $region90: #{forward.1} parent=1 // pred_check
      _
    $region91: #{forward.1} parent=1 // pred_check_branch
      %127 = sbr.rel (0) target = $region93
    $region92: #{forward.1} parent=1 // pred_region
      %128 = dma.done [#allocation12], 5120
    $region93: #{forward.1} parent=1 // pred_fallthru
      _
    // Predicated region
    $region94: #{forward.1} parent=1 // pred_check
      _
    $region95: #{forward.1} parent=1 // pred_check_branch
      %130 = sbr.rel (0) target = $region97
    $region96: #{forward.1} parent=1 // pred_region
      %131 = dma.done [#allocation12], 2048
    $region97: #{forward.1} parent=1 // pred_fallthru
      _
    // Predicated region
    $region98: #{forward.1} parent=1 // pred_check
      _
    $region99: #{forward.1} parent=1 // pred_check_branch
      %134 = sbr.rel target = $region101
    $region100: #{forward.1} parent=1 // pred_region
      %135 = sst [smem:[#allocation16]] [#allocation15]
      %136 = sst [smem:[#allocation17]] [#allocation14]
    $region101: #{forward.1} parent=1 // pred_fallthru
      _
    %138 = shalt.err (0)
    %s140 = sshll.u32 [#allocation3], 4
    %s141 = int_to_ptr.vmem [resolvable:$true] %s140
    %143 = dma.hbm_to_vmem [thread:$0]  %s13, 10240, %s141, [#allocation5]
    %s144 = scalar_lea.sflag [#allocation5], 1
    // Predicated region
    $region102: #{forward.1} parent=1 // pred_check
      _
    $region103: #{forward.1} parent=1 // pred_check_branch
      %146 = sbr.rel target = $region105
    $region104: #{forward.1} parent=1 // pred_region
      %147 = sst [smem:[#allocation16]] [#allocation19]
      %148 = sst [smem:[#allocation17]] [#allocation18]
    $region105: #{forward.1} parent=1 // pred_fallthru
      _
    %150 = shalt.err (0)
    %s152 = sshll.u32 [#allocation4], 4
    %s153 = int_to_ptr.vmem [resolvable:$true] %s152
    %155 = dma.hbm_to_vmem [thread:$0]  %s16, 20480, %s153, %s144
    %156 = vst [vmem:[#allocation2] sm:$0xff] 0.0
    %157 = vst [vmem:[#allocation2 + $0x8] sm:$0xff] 0.0
    %158 = vst [vmem:[#allocation2 + $0x10] sm:$0xff] 0.0
    %159 = vst [vmem:[#allocation2 + $0x18] sm:$0xff] 0.0
    %160 = vst [vmem:[#allocation2 + $0x20] sm:$0xff] 0.0
    %161 = vst [vmem:[#allocation2 + $0x28] sm:$0xff] 0.0
    %162 = vst [vmem:[#allocation2 + $0x30] sm:$0xff] 0.0
    %163 = vst [vmem:[#allocation2 + $0x38] sm:$0xff] 0.0
    %164 = vst [vmem:[#allocation2 + $0x40] sm:$0xff] 0.0
    %165 = vst [vmem:[#allocation2 + $0x48] sm:$0xff] 0.0
    %166 = vst [vmem:[#allocation2 + $0x50] sm:$0xff] 0.0
    %167 = vst [vmem:[#allocation2 + $0x58] sm:$0xff] 0.0
    %168 = vst [vmem:[#allocation2 + $0x60] sm:$0xff] 0.0
    %169 = vst [vmem:[#allocation2 + $0x68] sm:$0xff] 0.0
    %170 = vst [vmem:[#allocation2 + $0x70] sm:$0xff] 0.0
    %171 = vst [vmem:[#allocation2 + $0x78] sm:$0xff] 0.0
    %172 = vst [vmem:[#allocation2 + $0x80] sm:$0xff] 0.0
    %173 = vst [vmem:[#allocation2 + $0x88] sm:$0xff] 0.0
    %174 = vst [vmem:[#allocation2 + $0x90] sm:$0xff] 0.0
    %175 = vst [vmem:[#allocation2 + $0x98] sm:$0xff] 0.0
    %v176 = vld [vmem:[%s0] sm:$0xff]
    %v177 = vld [vmem:[%s0 + $0x8] sm:$0xff]
    %vm178 = vcmask 7168
    %179 = vst.msk [vmem:[#allocation2 + $0x10] sm:$0xff] %vm178, %v176
    %180 = vst.msk [vmem:[#allocation2 + $0x20] sm:$0xff] %vm178, %v177
    %s181 = scalar_lea.vmem %s0, 16
    %v182 = vld [vmem:[%s181] sm:$0xff]
    %v183 = vld [vmem:[%s181 + $0x8] sm:$0xff]
    %184 = vst.msk [vmem:[#allocation2 + $0x50] sm:$0xff] %vm178, %v182
    %185 = vst.msk [vmem:[#allocation2 + $0x60] sm:$0xff] %vm178, %v183
    %v186 = vld [vmem:[#allocation2] sm:$0xc0]
    %v187 = vld [vmem:[#allocation2 + $0x10] sm:$0xff]
    %v188 = vld [vmem:[#allocation2 + $0x20] sm:$0xff]
    %v189 = vld [vmem:[#allocation2 + $0x30] sm:$0xff]
    %v190 = vld [vmem:[#allocation2 + $0x40] sm:$0xff]
    %v191 = vld [vmem:[#allocation2 + $0x50] sm:$0xff]
    %v192 = vld [vmem:[#allocation2 + $0x60] sm:$0xff]
    %v193 = vld [vmem:[#allocation2 + $0x70] sm:$0xff]
    %v194 = vld [vmem:[#allocation2 + $0x80] sm:$0x3f]
    %v195 = vpack.c.bf16 %v187, %v186
    %v196 = vpack.c.bf16 %v189, %v188
    %v197 = vpack.c.bf16 %v191, %v190
    %v198 = vpack.c.bf16 %v193, %v192
    %v199 = vpack.c.bf16 %v194, %v194
    %v200 = vld [vmem:[#allocation6] sm:$0xf]
    %v201 = vld [vmem:[#allocation6 + $0x4] sm:$0xf]
    %v202 = vld [vmem:[#allocation6 + $0x8] sm:$0xf]
    %v203 = vld [vmem:[#allocation6 + $0xc] sm:$0xf]
    %v204 = vld [vmem:[#allocation6 + $0x10] sm:$0xf]
    %v205 = vld [vmem:[#allocation6 + $0x14] sm:$0xf]
    %v206 = vld [vmem:[#allocation6 + $0x18] sm:$0xf]
    %v207 = vld [vmem:[#allocation6 + $0x1c] sm:$0xf]
    %v208 = vld [vmem:[#allocation6 + $0x20] sm:$0xf]
    %v209 = vld [vmem:[#allocation6 + $0x24] sm:$0xf]
    %v210 = vld [vmem:[#allocation6 + $0x28] sm:$0xf]
    %v211 = vld [vmem:[#allocation6 + $0x2c] sm:$0xf]
    %v212 = vld [vmem:[#allocation6 + $0x30] sm:$0xf]
    %v213 = vld [vmem:[#allocation6 + $0x34] sm:$0xf]
    %v214 = vld [vmem:[#allocation6 + $0x38] sm:$0xf]
    %v215 = vld [vmem:[#allocation6 + $0x3c] sm:$0xf]
    %v216 = vld [vmem:[#allocation2] sm:$0x80]
    %v217 = vld [vmem:[#allocation2 + $0x80] sm:$0x7f]
    %v218 = vpack.c.bf16 %v187, %v216
    %v219 = vpack.c.bf16 %v217, %v217
    %s220 = scalar_lea.vmem [#allocation6], 64
    %v221 = vld [vmem:[%s220] sm:$0xf]
    %v222 = vld [vmem:[%s220 + $0x4] sm:$0xf]
    %v223 = vld [vmem:[%s220 + $0x8] sm:$0xf]
    %v224 = vld [vmem:[%s220 + $0xc] sm:$0xf]
    %v225 = vld [vmem:[%s220 + $0x10] sm:$0xf]
    %v226 = vld [vmem:[%s220 + $0x14] sm:$0xf]
    %v227 = vld [vmem:[%s220 + $0x18] sm:$0xf]
    %v228 = vld [vmem:[%s220 + $0x1c] sm:$0xf]
    %v229 = vld [vmem:[%s220 + $0x20] sm:$0xf]
    %v230 = vld [vmem:[%s220 + $0x24] sm:$0xf]
    %v231 = vld [vmem:[%s220 + $0x28] sm:$0xf]
    %v232 = vld [vmem:[%s220 + $0x2c] sm:$0xf]
    %v233 = vld [vmem:[%s220 + $0x30] sm:$0xf]
    %v234 = vld [vmem:[%s220 + $0x34] sm:$0xf]
    %v235 = vld [vmem:[%s220 + $0x38] sm:$0xf]
    %v236 = vld [vmem:[%s220 + $0x3c] sm:$0xf]
    %vm237 = vsmask.f32 4352
    %v239 = vshrl.u32 %v218, 16
    %v241 = vrot.slane %v239, 3
    %v242 = vshll.u32 %v218, 16
    %v244 = vrot.slane %v242, 4
    %v245 = vor.u32 %v241, %v244
    %v247 = vshrl.u32 %v196, 16
    %v249 = vrot.slane %v247, 3
    %v250 = vshll.u32 %v196, 16
    %v252 = vrot.slane %v250, 4
    %v253 = vor.u32 %v249, %v252
    %v254 = vsel %vm237, %v245, %v253
    %v256 = vshrl.u32 %v197, 16
    %v258 = vrot.slane %v256, 3
    %v259 = vshll.u32 %v197, 16
    %v261 = vrot.slane %v259, 4
    %v262 = vor.u32 %v258, %v261
    %v263 = vsel %vm237, %v253, %v262
    %v265 = vshrl.u32 %v198, 16
    %v267 = vrot.slane %v265, 3
    %v268 = vshll.u32 %v198, 16
    %v270 = vrot.slane %v268, 4
    %v271 = vor.u32 %v267, %v270
    %v272 = vsel %vm237, %v262, %v271
    %v274 = vshrl.u32 %v219, 16
    %v276 = vrot.slane %v274, 3
    %v277 = vshll.u32 %v219, 16
    %v279 = vrot.slane %v277, 4
    %v280 = vor.u32 %v276, %v279
    %v281 = vsel %vm237, %v271, %v280
    %v302 = vunpack.c.l.b16 %v221
    %v303 = vunpack.c.l.b16 %v222
    %v304 = vunpack.c.l.b16 %v223
    %v305 = vunpack.c.l.b16 %v224
    %v306 = vunpack.c.l.b16 %v225
    %v307 = vunpack.c.l.b16 %v226
    %v308 = vunpack.c.l.b16 %v227
    %v309 = vunpack.c.l.b16 %v228
    %v310 = vunpack.c.l.b16 %v229
    %v311 = vunpack.c.l.b16 %v230
    %v312 = vunpack.c.l.b16 %v231
    %v313 = vunpack.c.l.b16 %v232
    %v314 = vunpack.c.l.b16 %v233
    %v315 = vunpack.c.l.b16 %v234
    %v316 = vunpack.c.l.b16 %v235
    %v317 = vunpack.c.l.b16 %v236
    %v318 = vpack.c.b16 %v303, %v302
    %v319 = vpack.c.b16 %v305, %v304
    %v320 = vpack.c.b16 %v307, %v306
    %v321 = vpack.c.b16 %v309, %v308
    %v322 = vpack.c.b16 %v311, %v310
    %v323 = vpack.c.b16 %v313, %v312
    %v324 = vpack.c.b16 %v315, %v314
    %v325 = vpack.c.b16 %v317, %v316
    %334 = vmatprep.subr.bf16.mxu0 0
    %335 = vmatpush1.bf16.msra.mxu0 %v325
    %336 = vmatprep.subr.bf16.mxu0 0
    %337 = vmatpush1.bf16.msra.mxu0 %v324
    %338 = vmatprep.subr.bf16.mxu0 0
    %339 = vmatpush1.bf16.msra.mxu0 %v323
    %340 = vmatprep.subr.bf16.mxu0 0
    %341 = vmatpush1.bf16.msra.mxu0 %v322
    %342 = vmatprep.subr.bf16.mxu0 0
    %343 = vmatpush1.bf16.msra.mxu0 %v321
    %344 = vmatprep.subr.bf16.mxu0 0
    %345 = vmatpush1.bf16.msra.mxu0 %v320
    %346 = vmatprep.subr.bf16.mxu0 0
    %347 = vmatpush1.bf16.msra.mxu0 %v319
    %348 = vmatprep.subr.bf16.mxu0 0
    %349 = vmatpush1.bf16.msra.mxu0 %v318
    %350 = vmatprep.subr.bf16.mxu0 0
    %351 = vmatpush2.bf16.msra.mxu0 0
    %352 = vmatprep.subr.bf16.mxu0 0
    %353 = vmatpush2.bf16.msra.mxu0 0
    %354 = vmatprep.subr.bf16.mxu0 0
    %355 = vmatpush2.bf16.msra.mxu0 0
    %356 = vmatprep.subr.bf16.mxu0 0
    %357 = vmatpush2.bf16.msra.mxu0 0
    %358 = vmatprep.subr.bf16.mxu0 0
    %359 = vmatpush2.bf16.msra.mxu0 0
    %360 = vmatprep.subr.bf16.mxu0 0
    %361 = vmatpush2.bf16.msra.mxu0 0
    %362 = vmatprep.subr.bf16.mxu0 0
    %363 = vmatpush2.bf16.msra.mxu0 0
    %364 = vmatprep.subr.bf16.mxu0 0
    %365 = vmatpush2.bf16.msra.mxu0 0
    %366 = vmatprep.mubr.bf16.mxu0 0
    %367 = vmatmul.mubr.bf16.gmra.mxu0 %v254
    %v368 = vpop.f32.mrf.mxu0
    %v369 = vadd.f32 0.0, %v368
    %v370 = vpop.f32.mrf.mxu0
    %v371 = vpop.f32.mrf.mxu0
    %v372 = vadd.f32 0.0, %v371
    %v373 = vpop.f32.mrf.mxu0
    %374 = vmatprep.mubr.bf16.mxu0 0
    %375 = vmatmul.mubr.bf16.gmra.mxu0 %v263
    %v376 = vpop.f32.mrf.mxu0
    %v377 = vpop.f32.mrf.mxu0
    %v378 = vpop.f32.mrf.mxu0
    %v379 = vpop.f32.mrf.mxu0
    %380 = vmatprep.mubr.bf16.mxu0 0
    %381 = vmatmul.mubr.bf16.gmra.mxu0 %v272
    %v382 = vpop.f32.mrf.mxu0
    %v383 = vadd.f32 0.0, %v382
    %v384 = vpop.f32.mrf.mxu0
    %v385 = vpop.f32.mrf.mxu0
    %v386 = vadd.f32 0.0, %v385
    %v387 = vpop.f32.mrf.mxu0
    %388 = vmatprep.mubr.bf16.mxu0 0
    %389 = vmatmul.mubr.bf16.gmra.mxu0 %v281
    %v390 = vpop.f32.mrf.mxu0
    %v391 = vpop.f32.mrf.mxu0
    %v392 = vpop.f32.mrf.mxu0
    %v393 = vpop.f32.mrf.mxu0
    %394 = vdwg.mxu0
    %vm400 = vcmask 1044480
    %v401 = vrot.slane %v195, 3
    %v402 = vrot.slane %v196, 3
    %v403 = vsel %vm400, %v401, %v402
    %v404 = vrot.slane %v197, 3
    %v405 = vsel %vm400, %v402, %v404
    %v406 = vrot.slane %v198, 3
    %v407 = vsel %vm400, %v404, %v406
    %v408 = vrot.slane %v199, 3
    %v409 = vsel %vm400, %v406, %v408
    %v430 = vunpack.c.l.b16 %v200
    %v431 = vunpack.c.l.b16 %v201
    %v432 = vunpack.c.l.b16 %v202
    %v433 = vunpack.c.l.b16 %v203
    %v434 = vunpack.c.l.b16 %v204
    %v435 = vunpack.c.l.b16 %v205
    %v436 = vunpack.c.l.b16 %v206
    %v437 = vunpack.c.l.b16 %v207
    %v438 = vunpack.c.l.b16 %v208
    %v439 = vunpack.c.l.b16 %v209
    %v440 = vunpack.c.l.b16 %v210
    %v441 = vunpack.c.l.b16 %v211
    %v442 = vunpack.c.l.b16 %v212
    %v443 = vunpack.c.l.b16 %v213
    %v444 = vunpack.c.l.b16 %v214
    %v445 = vunpack.c.l.b16 %v215
    %v446 = vpack.c.b16 %v431, %v430
    %v447 = vpack.c.b16 %v433, %v432
    %v448 = vpack.c.b16 %v435, %v434
    %v449 = vpack.c.b16 %v437, %v436
    %v450 = vpack.c.b16 %v439, %v438
    %v451 = vpack.c.b16 %v441, %v440
    %v452 = vpack.c.b16 %v443, %v442
    %v453 = vpack.c.b16 %v445, %v444
    %462 = vmatprep.subr.bf16.mxu0 0
    %463 = vmatpush1.bf16.msra.mxu0 %v453
    %464 = vmatprep.subr.bf16.mxu0 0
    %465 = vmatpush1.bf16.msra.mxu0 %v452
    %466 = vmatprep.subr.bf16.mxu0 0
    %467 = vmatpush1.bf16.msra.mxu0 %v451
    %468 = vmatprep.subr.bf16.mxu0 0
    %469 = vmatpush1.bf16.msra.mxu0 %v450
    %470 = vmatprep.subr.bf16.mxu0 0
    %471 = vmatpush1.bf16.msra.mxu0 %v449
    %472 = vmatprep.subr.bf16.mxu0 0
    %473 = vmatpush1.bf16.msra.mxu0 %v448
    %474 = vmatprep.subr.bf16.mxu0 0
    %475 = vmatpush1.bf16.msra.mxu0 %v447
    %476 = vmatprep.subr.bf16.mxu0 0
    %477 = vmatpush1.bf16.msra.mxu0 %v446
    %478 = vmatprep.subr.bf16.mxu0 0
    %479 = vmatpush2.bf16.msra.mxu0 0
    %480 = vmatprep.subr.bf16.mxu0 0
    %481 = vmatpush2.bf16.msra.mxu0 0
    %482 = vmatprep.subr.bf16.mxu0 0
    %483 = vmatpush2.bf16.msra.mxu0 0
    %484 = vmatprep.subr.bf16.mxu0 0
    %485 = vmatpush2.bf16.msra.mxu0 0
    %486 = vmatprep.subr.bf16.mxu0 0
    %487 = vmatpush2.bf16.msra.mxu0 0
    %488 = vmatprep.subr.bf16.mxu0 0
    %489 = vmatpush2.bf16.msra.mxu0 0
    %490 = vmatprep.subr.bf16.mxu0 0
    %491 = vmatpush2.bf16.msra.mxu0 0
    %492 = vmatprep.subr.bf16.mxu0 0
    %493 = vmatpush2.bf16.msra.mxu0 0
    %494 = vmatprep.mubr.bf16.mxu0 0
    %495 = vmatmul.mubr.bf16.gmra.mxu0 %v403
    %v496 = vpop.f32.mrf.mxu0
    %v497 = vadd.f32 %v369, %v496
    %v498 = vpop.f32.mrf.mxu0
    %v499 = vpop.f32.mrf.mxu0
    %v500 = vadd.f32 %v372, %v499
    %v501 = vpop.f32.mrf.mxu0
    %502 = vmatprep.mubr.bf16.mxu0 0
    %503 = vmatmul.mubr.bf16.gmra.mxu0 %v405
    %v504 = vpop.f32.mrf.mxu0
    %v505 = vpop.f32.mrf.mxu0
    %v506 = vpop.f32.mrf.mxu0
    %v507 = vpop.f32.mrf.mxu0
    %508 = vmatprep.mubr.bf16.mxu0 0
    %509 = vmatmul.mubr.bf16.gmra.mxu0 %v407
    %v510 = vpop.f32.mrf.mxu0
    %v511 = vadd.f32 %v383, %v510
    %v512 = vpop.f32.mrf.mxu0
    %v513 = vpop.f32.mrf.mxu0
    %v514 = vadd.f32 %v386, %v513
    %v515 = vpop.f32.mrf.mxu0
    %516 = vmatprep.mubr.bf16.mxu0 0
    %517 = vmatmul.mubr.bf16.gmra.mxu0 %v409
    %v518 = vpop.f32.mrf.mxu0
    %v519 = vpop.f32.mrf.mxu0
    %v520 = vpop.f32.mrf.mxu0
    %v521 = vpop.f32.mrf.mxu0
    %522 = vdwg.mxu0
    %v523 = vld [vmem:[#allocation2 + $0x80] sm:$0xff]
    %v524 = vpack.c.bf16 %v188, %v187
    %v525 = vpack.c.bf16 %v190, %v189
    %v526 = vpack.c.bf16 %v192, %v191
    %v527 = vpack.c.bf16 %v523, %v193
    %s528 = scalar_lea.vmem [#allocation6], 128
    %v529 = vld [vmem:[%s528] sm:$0xf]
    %v530 = vld [vmem:[%s528 + $0x4] sm:$0xf]
    %v531 = vld [vmem:[%s528 + $0x8] sm:$0xf]
    %v532 = vld [vmem:[%s528 + $0xc] sm:$0xf]
    %v533 = vld [vmem:[%s528 + $0x10] sm:$0xf]
    %v534 = vld [vmem:[%s528 + $0x14] sm:$0xf]
    %v535 = vld [vmem:[%s528 + $0x18] sm:$0xf]
    %v536 = vld [vmem:[%s528 + $0x1c] sm:$0xf]
    %v537 = vld [vmem:[%s528 + $0x20] sm:$0xf]
    %v538 = vld [vmem:[%s528 + $0x24] sm:$0xf]
    %v539 = vld [vmem:[%s528 + $0x28] sm:$0xf]
    %v540 = vld [vmem:[%s528 + $0x2c] sm:$0xf]
    %v541 = vld [vmem:[%s528 + $0x30] sm:$0xf]
    %v542 = vld [vmem:[%s528 + $0x34] sm:$0xf]
    %v543 = vld [vmem:[%s528 + $0x38] sm:$0xf]
    %v544 = vld [vmem:[%s528 + $0x3c] sm:$0xf]
    %v561 = vunpack.c.l.b16 %v529
    %v562 = vunpack.c.l.b16 %v530
    %v563 = vunpack.c.l.b16 %v531
    %v564 = vunpack.c.l.b16 %v532
    %v565 = vunpack.c.l.b16 %v533
    %v566 = vunpack.c.l.b16 %v534
    %v567 = vunpack.c.l.b16 %v535
    %v568 = vunpack.c.l.b16 %v536
    %v569 = vunpack.c.l.b16 %v537
    %v570 = vunpack.c.l.b16 %v538
    %v571 = vunpack.c.l.b16 %v539
    %v572 = vunpack.c.l.b16 %v540
    %v573 = vunpack.c.l.b16 %v541
    %v574 = vunpack.c.l.b16 %v542
    %v575 = vunpack.c.l.b16 %v543
    %v576 = vunpack.c.l.b16 %v544
    %v577 = vpack.c.b16 %v562, %v561
    %v578 = vpack.c.b16 %v564, %v563
    %v579 = vpack.c.b16 %v566, %v565
    %v580 = vpack.c.b16 %v568, %v567
    %v581 = vpack.c.b16 %v570, %v569
    %v582 = vpack.c.b16 %v572, %v571
    %v583 = vpack.c.b16 %v574, %v573
    %v584 = vpack.c.b16 %v576, %v575
    %593 = vmatprep.subr.bf16.mxu0 0
    %594 = vmatpush1.bf16.msra.mxu0 %v584
    %595 = vmatprep.subr.bf16.mxu0 0
    %596 = vmatpush1.bf16.msra.mxu0 %v583
    %597 = vmatprep.subr.bf16.mxu0 0
    %598 = vmatpush1.bf16.msra.mxu0 %v582
    %599 = vmatprep.subr.bf16.mxu0 0
    %600 = vmatpush1.bf16.msra.mxu0 %v581
    %601 = vmatprep.subr.bf16.mxu0 0
    %602 = vmatpush1.bf16.msra.mxu0 %v580
    %603 = vmatprep.subr.bf16.mxu0 0
    %604 = vmatpush1.bf16.msra.mxu0 %v579
    %605 = vmatprep.subr.bf16.mxu0 0
    %606 = vmatpush1.bf16.msra.mxu0 %v578
    %607 = vmatprep.subr.bf16.mxu0 0
    %608 = vmatpush1.bf16.msra.mxu0 %v577
    %609 = vmatprep.subr.bf16.mxu0 0
    %610 = vmatpush2.bf16.msra.mxu0 0
    %611 = vmatprep.subr.bf16.mxu0 0
    %612 = vmatpush2.bf16.msra.mxu0 0
    %613 = vmatprep.subr.bf16.mxu0 0
    %614 = vmatpush2.bf16.msra.mxu0 0
    %615 = vmatprep.subr.bf16.mxu0 0
    %616 = vmatpush2.bf16.msra.mxu0 0
    %617 = vmatprep.subr.bf16.mxu0 0
    %618 = vmatpush2.bf16.msra.mxu0 0
    %619 = vmatprep.subr.bf16.mxu0 0
    %620 = vmatpush2.bf16.msra.mxu0 0
    %621 = vmatprep.subr.bf16.mxu0 0
    %622 = vmatpush2.bf16.msra.mxu0 0
    %623 = vmatprep.subr.bf16.mxu0 0
    %624 = vmatpush2.bf16.msra.mxu0 0
    %625 = vmatprep.mubr.bf16.mxu0 0
    %626 = vmatmul.mubr.bf16.gmra.mxu0 %v524
    %v627 = vpop.f32.mrf.mxu0
    %v628 = vadd.f32 0.0, %v627
    %v629 = vpop.f32.mrf.mxu0
    %v630 = vpop.f32.mrf.mxu0
    %v631 = vadd.f32 0.0, %v630
    %v632 = vpop.f32.mrf.mxu0
    %633 = vmatprep.mubr.bf16.mxu0 0
    %634 = vmatmul.mubr.bf16.gmra.mxu0 %v525
    %v635 = vpop.f32.mrf.mxu0
    %v636 = vpop.f32.mrf.mxu0
    %v637 = vpop.f32.mrf.mxu0
    %v638 = vpop.f32.mrf.mxu0
    %639 = vmatprep.mubr.bf16.mxu0 0
    %640 = vmatmul.mubr.bf16.gmra.mxu0 %v526
    %v641 = vpop.f32.mrf.mxu0
    %v642 = vadd.f32 0.0, %v641
    %v643 = vpop.f32.mrf.mxu0
    %v644 = vpop.f32.mrf.mxu0
    %v645 = vadd.f32 0.0, %v644
    %v646 = vpop.f32.mrf.mxu0
    %647 = vmatprep.mubr.bf16.mxu0 0
    %648 = vmatmul.mubr.bf16.gmra.mxu0 %v527
    %v649 = vpop.f32.mrf.mxu0
    %v650 = vpop.f32.mrf.mxu0
    %v651 = vpop.f32.mrf.mxu0
    %v652 = vpop.f32.mrf.mxu0
    %653 = vdwg.mxu0
    %v654 = vadd.f32 %v497, %v628
    %v655 = vadd.f32 %v500, %v631
    %v656 = vadd.f32 %v511, %v642
    %v657 = vadd.f32 %v514, %v645
    %v658 = vld [vmem:[#allocation2 + $0x10] sm:$0xfe]
    %v659 = vld [vmem:[#allocation2 + $0x20] sm:$0xff]
    %v660 = vld [vmem:[#allocation2 + $0x30] sm:$0xff]
    %v661 = vld [vmem:[#allocation2 + $0x40] sm:$0xff]
    %v662 = vld [vmem:[#allocation2 + $0x50] sm:$0xff]
    %v663 = vld [vmem:[#allocation2 + $0x60] sm:$0xff]
    %v664 = vld [vmem:[#allocation2 + $0x70] sm:$0xff]
    %v665 = vld [vmem:[#allocation2 + $0x80] sm:$0xff]
    %v666 = vld [vmem:[#allocation2 + $0x90] sm:$0x1]
    %v667 = vpack.c.bf16 %v659, %v658
    %v668 = vpack.c.bf16 %v661, %v660
    %v669 = vpack.c.bf16 %v663, %v662
    %v670 = vpack.c.bf16 %v665, %v664
    %v671 = vpack.c.bf16 %v666, %v666
    %s672 = scalar_lea.vmem [#allocation6], 192
    %v673 = vld [vmem:[%s672] sm:$0xf]
    %v674 = vld [vmem:[%s672 + $0x4] sm:$0xf]
    %v675 = vld [vmem:[%s672 + $0x8] sm:$0xf]
    %v676 = vld [vmem:[%s672 + $0xc] sm:$0xf]
    %v677 = vld [vmem:[%s672 + $0x10] sm:$0xf]
    %v678 = vld [vmem:[%s672 + $0x14] sm:$0xf]
    %v679 = vld [vmem:[%s672 + $0x18] sm:$0xf]
    %v680 = vld [vmem:[%s672 + $0x1c] sm:$0xf]
    %v681 = vld [vmem:[%s672 + $0x20] sm:$0xf]
    %v682 = vld [vmem:[%s672 + $0x24] sm:$0xf]
    %v683 = vld [vmem:[%s672 + $0x28] sm:$0xf]
    %v684 = vld [vmem:[%s672 + $0x2c] sm:$0xf]
    %v685 = vld [vmem:[%s672 + $0x30] sm:$0xf]
    %v686 = vld [vmem:[%s672 + $0x34] sm:$0xf]
    %v687 = vld [vmem:[%s672 + $0x38] sm:$0xf]
    %v688 = vld [vmem:[%s672 + $0x3c] sm:$0xf]
    %vm689 = vsmask.f32 7424
    %v691 = vshrl.u32 %v667, 16
    %v693 = vshll.u32 %v667, 16
    %v695 = vrot.slane %v693, 1
    %v696 = vor.u32 %v691, %v695
    %v698 = vshll.u32 %v668, 16
    %v700 = vrot.slane %v698, 1
    %v701 = vsel %vm689, %v696, %v700
    %v702 = vshrl.u32 %v668, 16
    %v704 = vor.u32 %v702, %v700
    %v706 = vshll.u32 %v669, 16
    %v708 = vrot.slane %v706, 1
    %v709 = vsel %vm689, %v704, %v708
    %v710 = vshrl.u32 %v669, 16
    %v712 = vor.u32 %v710, %v708
    %v714 = vshll.u32 %v670, 16
    %v716 = vrot.slane %v714, 1
    %v717 = vsel %vm689, %v712, %v716
    %v718 = vshrl.u32 %v670, 16
    %v720 = vor.u32 %v718, %v716
    %v722 = vshll.u32 %v671, 16
    %v724 = vrot.slane %v722, 1
    %v725 = vsel %vm689, %v720, %v724
    %v746 = vunpack.c.l.b16 %v673
    %v747 = vunpack.c.l.b16 %v674
    %v748 = vunpack.c.l.b16 %v675
    %v749 = vunpack.c.l.b16 %v676
    %v750 = vunpack.c.l.b16 %v677
    %v751 = vunpack.c.l.b16 %v678
    %v752 = vunpack.c.l.b16 %v679
    %v753 = vunpack.c.l.b16 %v680
    %v754 = vunpack.c.l.b16 %v681
    %v755 = vunpack.c.l.b16 %v682
    %v756 = vunpack.c.l.b16 %v683
    %v757 = vunpack.c.l.b16 %v684
    %v758 = vunpack.c.l.b16 %v685
    %v759 = vunpack.c.l.b16 %v686
    %v760 = vunpack.c.l.b16 %v687
    %v761 = vunpack.c.l.b16 %v688
    %v762 = vpack.c.b16 %v747, %v746
    %v763 = vpack.c.b16 %v749, %v748
    %v764 = vpack.c.b16 %v751, %v750
    %v765 = vpack.c.b16 %v753, %v752
    %v766 = vpack.c.b16 %v755, %v754
    %v767 = vpack.c.b16 %v757, %v756
    %v768 = vpack.c.b16 %v759, %v758
    %v769 = vpack.c.b16 %v761, %v760
    %778 = vmatprep.subr.bf16.mxu0 0
    %779 = vmatpush1.bf16.msra.mxu0 %v769
    %780 = vmatprep.subr.bf16.mxu0 0
    %781 = vmatpush1.bf16.msra.mxu0 %v768
    %782 = vmatprep.subr.bf16.mxu0 0
    %783 = vmatpush1.bf16.msra.mxu0 %v767
    %784 = vmatprep.subr.bf16.mxu0 0
    %785 = vmatpush1.bf16.msra.mxu0 %v766
    %786 = vmatprep.subr.bf16.mxu0 0
    %787 = vmatpush1.bf16.msra.mxu0 %v765
    %788 = vmatprep.subr.bf16.mxu0 0
    %789 = vmatpush1.bf16.msra.mxu0 %v764
    %790 = vmatprep.subr.bf16.mxu0 0
    %791 = vmatpush1.bf16.msra.mxu0 %v763
    %792 = vmatprep.subr.bf16.mxu0 0
    %793 = vmatpush1.bf16.msra.mxu0 %v762
    %794 = vmatprep.subr.bf16.mxu0 0
    %795 = vmatpush2.bf16.msra.mxu0 0
    %796 = vmatprep.subr.bf16.mxu0 0
    %797 = vmatpush2.bf16.msra.mxu0 0
    %798 = vmatprep.subr.bf16.mxu0 0
    %799 = vmatpush2.bf16.msra.mxu0 0
    %800 = vmatprep.subr.bf16.mxu0 0
    %801 = vmatpush2.bf16.msra.mxu0 0
    %802 = vmatprep.subr.bf16.mxu0 0
    %803 = vmatpush2.bf16.msra.mxu0 0
    %804 = vmatprep.subr.bf16.mxu0 0
    %805 = vmatpush2.bf16.msra.mxu0 0
    %806 = vmatprep.subr.bf16.mxu0 0
    %807 = vmatpush2.bf16.msra.mxu0 0
    %808 = vmatprep.subr.bf16.mxu0 0
    %809 = vmatpush2.bf16.msra.mxu0 0
    %810 = vmatprep.mubr.bf16.mxu0 0
    %811 = vmatmul.mubr.bf16.gmra.mxu0 %v701
    %v812 = vpop.f32.mrf.mxu0
    %v813 = vadd.f32 0.0, %v812
    %v814 = vpop.f32.mrf.mxu0
    %v815 = vpop.f32.mrf.mxu0
    %v816 = vadd.f32 0.0, %v815
    %v817 = vpop.f32.mrf.mxu0
    %818 = vmatprep.mubr.bf16.mxu0 0
    %819 = vmatmul.mubr.bf16.gmra.mxu0 %v709
    %v820 = vpop.f32.mrf.mxu0
    %v821 = vpop.f32.mrf.mxu0
    %v822 = vpop.f32.mrf.mxu0
    %v823 = vpop.f32.mrf.mxu0
    %824 = vmatprep.mubr.bf16.mxu0 0
    %825 = vmatmul.mubr.bf16.gmra.mxu0 %v717
    %v826 = vpop.f32.mrf.mxu0
    %v827 = vadd.f32 0.0, %v826
    %v828 = vpop.f32.mrf.mxu0
    %v829 = vpop.f32.mrf.mxu0
    %v830 = vadd.f32 0.0, %v829
    %v831 = vpop.f32.mrf.mxu0
    %832 = vmatprep.mubr.bf16.mxu0 0
    %833 = vmatmul.mubr.bf16.gmra.mxu0 %v725
    %v834 = vpop.f32.mrf.mxu0
    %v835 = vpop.f32.mrf.mxu0
    %v836 = vpop.f32.mrf.mxu0
    %v837 = vpop.f32.mrf.mxu0
    %838 = vdwg.mxu0
    %v839 = vadd.f32 %v654, %v813
    %v840 = vadd.f32 %v655, %v816
    %v841 = vadd.f32 %v656, %v827
    %v842 = vadd.f32 %v657, %v830
    %v843 = vld [vmem:[#allocation2 + $0x10] sm:$0xfc]
    %v844 = vld [vmem:[#allocation2 + $0x90] sm:$0x3]
    %v845 = vpack.c.bf16 %v659, %v843
    %v846 = vpack.c.bf16 %v844, %v844
    %s847 = scalar_lea.vmem [#allocation6], 256
    %v848 = vld [vmem:[%s847] sm:$0xf]
    %v849 = vld [vmem:[%s847 + $0x4] sm:$0xf]
    %v850 = vld [vmem:[%s847 + $0x8] sm:$0xf]
    %v851 = vld [vmem:[%s847 + $0xc] sm:$0xf]
    %v852 = vld [vmem:[%s847 + $0x10] sm:$0xf]
    %v853 = vld [vmem:[%s847 + $0x14] sm:$0xf]
    %v854 = vld [vmem:[%s847 + $0x18] sm:$0xf]
    %v855 = vld [vmem:[%s847 + $0x1c] sm:$0xf]
    %v856 = vld [vmem:[%s847 + $0x20] sm:$0xf]
    %v857 = vld [vmem:[%s847 + $0x24] sm:$0xf]
    %v858 = vld [vmem:[%s847 + $0x28] sm:$0xf]
    %v859 = vld [vmem:[%s847 + $0x2c] sm:$0xf]
    %v860 = vld [vmem:[%s847 + $0x30] sm:$0xf]
    %v861 = vld [vmem:[%s847 + $0x34] sm:$0xf]
    %v862 = vld [vmem:[%s847 + $0x38] sm:$0xf]
    %v863 = vld [vmem:[%s847 + $0x3c] sm:$0xf]
    %vm869 = vcmask 1046528
    %v870 = vrot.slane %v845, 1
    %v871 = vrot.slane %v668, 1
    %v872 = vsel %vm869, %v870, %v871
    %v873 = vrot.slane %v669, 1
    %v874 = vsel %vm869, %v871, %v873
    %v875 = vrot.slane %v670, 1
    %v876 = vsel %vm869, %v873, %v875
    %v877 = vrot.slane %v846, 1
    %v878 = vsel %vm869, %v875, %v877
    %v899 = vunpack.c.l.b16 %v848
    %v900 = vunpack.c.l.b16 %v849
    %v901 = vunpack.c.l.b16 %v850
    %v902 = vunpack.c.l.b16 %v851
    %v903 = vunpack.c.l.b16 %v852
    %v904 = vunpack.c.l.b16 %v853
    %v905 = vunpack.c.l.b16 %v854
    %v906 = vunpack.c.l.b16 %v855
    %v907 = vunpack.c.l.b16 %v856
    %v908 = vunpack.c.l.b16 %v857
    %v909 = vunpack.c.l.b16 %v858
    %v910 = vunpack.c.l.b16 %v859
    %v911 = vunpack.c.l.b16 %v860
    %v912 = vunpack.c.l.b16 %v861
    %v913 = vunpack.c.l.b16 %v862
    %v914 = vunpack.c.l.b16 %v863
    %v915 = vpack.c.b16 %v900, %v899
    %v916 = vpack.c.b16 %v902, %v901
    %v917 = vpack.c.b16 %v904, %v903
    %v918 = vpack.c.b16 %v906, %v905
    %v919 = vpack.c.b16 %v908, %v907
    %v920 = vpack.c.b16 %v910, %v909
    %v921 = vpack.c.b16 %v912, %v911
    %v922 = vpack.c.b16 %v914, %v913
    %931 = vmatprep.subr.bf16.mxu0 0
    %932 = vmatpush1.bf16.msra.mxu0 %v922
    %933 = vmatprep.subr.bf16.mxu0 0
    %934 = vmatpush1.bf16.msra.mxu0 %v921
    %935 = vmatprep.subr.bf16.mxu0 0
    %936 = vmatpush1.bf16.msra.mxu0 %v920
    %937 = vmatprep.subr.bf16.mxu0 0
    %938 = vmatpush1.bf16.msra.mxu0 %v919
    %939 = vmatprep.subr.bf16.mxu0 0
    %940 = vmatpush1.bf16.msra.mxu0 %v918
    %941 = vmatprep.subr.bf16.mxu0 0
    %942 = vmatpush1.bf16.msra.mxu0 %v917
    %943 = vmatprep.subr.bf16.mxu0 0
    %944 = vmatpush1.bf16.msra.mxu0 %v916
    %945 = vmatprep.subr.bf16.mxu0 0
    %946 = vmatpush1.bf16.msra.mxu0 %v915
    %947 = vmatprep.subr.bf16.mxu0 0
    %948 = vmatpush2.bf16.msra.mxu0 0
    %949 = vmatprep.subr.bf16.mxu0 0
    %950 = vmatpush2.bf16.msra.mxu0 0
    %951 = vmatprep.subr.bf16.mxu0 0
    %952 = vmatpush2.bf16.msra.mxu0 0
    %953 = vmatprep.subr.bf16.mxu0 0
    %954 = vmatpush2.bf16.msra.mxu0 0
    %955 = vmatprep.subr.bf16.mxu0 0
    %956 = vmatpush2.bf16.msra.mxu0 0
    %957 = vmatprep.subr.bf16.mxu0 0
    %958 = vmatpush2.bf16.msra.mxu0 0
    %959 = vmatprep.subr.bf16.mxu0 0
    %960 = vmatpush2.bf16.msra.mxu0 0
    %961 = vmatprep.subr.bf16.mxu0 0
    %962 = vmatpush2.bf16.msra.mxu0 0
    %963 = vmatprep.mubr.bf16.mxu0 0
    %964 = vmatmul.mubr.bf16.gmra.mxu0 %v872
    %v965 = vpop.f32.mrf.mxu0
    %v966 = vadd.f32 0.0, %v965
    %v967 = vpop.f32.mrf.mxu0
    %v968 = vpop.f32.mrf.mxu0
    %v969 = vadd.f32 0.0, %v968
    %v970 = vpop.f32.mrf.mxu0
    %971 = vmatprep.mubr.bf16.mxu0 0
    %972 = vmatmul.mubr.bf16.gmra.mxu0 %v874
    %v973 = vpop.f32.mrf.mxu0
    %v974 = vpop.f32.mrf.mxu0
    %v975 = vpop.f32.mrf.mxu0
    %v976 = vpop.f32.mrf.mxu0
    %977 = vmatprep.mubr.bf16.mxu0 0
    %978 = vmatmul.mubr.bf16.gmra.mxu0 %v876
    %v979 = vpop.f32.mrf.mxu0
    %v980 = vadd.f32 0.0, %v979
    %v981 = vpop.f32.mrf.mxu0
    %v982 = vpop.f32.mrf.mxu0
    %v983 = vadd.f32 0.0, %v982
    %v984 = vpop.f32.mrf.mxu0
    %985 = vmatprep.mubr.bf16.mxu0 0
    %986 = vmatmul.mubr.bf16.gmra.mxu0 %v878
    %v987 = vpop.f32.mrf.mxu0
    %v988 = vpop.f32.mrf.mxu0
    %v989 = vpop.f32.mrf.mxu0
    %v990 = vpop.f32.mrf.mxu0
    %991 = vdwg.mxu0
    %v992 = vadd.f32 %v839, %v966
    %v993 = vadd.f32 %v840, %v969
    %v994 = vadd.f32 %v841, %v980
    %v995 = vadd.f32 %v842, %v983
    %v996 = vld [vmem:[%s2] sm:$0x1]
    %v998 = vlaneseq
    %v999 = vshrl.u32 %v998, 7
    %v1000 = vsub.s32 0, %v999
    %v1001 = vrot.slane %v996, %v1000
    %v1003 = vmul.f32 %v992, %v1001
    %v1004 = vmul.f32 %v993, %v1001
    %v1005 = vmul.f32 %v994, %v1001
    %v1006 = vmul.f32 %v995, %v1001
    %v1007 = vld [vmem:[%s3] sm:$0x1]
    %v1009 = vlaneseq
    %v1010 = vshrl.u32 %v1009, 7
    %v1011 = vsub.s32 0, %v1010
    %v1012 = vrot.slane %v1007, %v1011
    %v1014 = vadd.f32 %v1003, %v1012
    %v1015 = vadd.f32 %v1004, %v1012
    %v1016 = vadd.f32 %v1005, %v1012
    %v1017 = vadd.f32 %v1006, %v1012
    %vm1018 = vcmp.ge.f32.partialorder %v1014, 0.0
    %vm1019 = vcmp.ge.f32.partialorder %v1015, 0.0
    %vm1020 = vcmp.ge.f32.partialorder %v1016, 0.0
    %vm1021 = vcmp.ge.f32.partialorder %v1017, 0.0
    %v1022 = vmul.f32 %v1014, 0.01
    %v1023 = vmul.f32 %v1015, 0.01
    %v1024 = vmul.f32 %v1016, 0.01
    %v1025 = vmul.f32 %v1017, 0.01
    %v1026 = vsel %vm1018, %v1014, %v1022
    %v1027 = vsel %vm1019, %v1015, %v1023
    %v1028 = vsel %vm1020, %v1016, %v1024
    %v1029 = vsel %vm1021, %v1017, %v1025
    %1030 = vst [vmem:[#allocation2 + $0x10] sm:$0xff] %v1026
    %1031 = vst [vmem:[#allocation2 + $0x20] sm:$0xff] %v1027
    %1032 = vst [vmem:[#allocation2 + $0x50] sm:$0xff] %v1028
    %1033 = vst [vmem:[#allocation2 + $0x60] sm:$0xff] %v1029
    %v1034 = vld [vmem:[#allocation2] sm:$0xc0]
    %v1035 = vld [vmem:[#allocation2 + $0x10] sm:$0xff]
    %v1036 = vld [vmem:[#allocation2 + $0x20] sm:$0xff]
    %v1037 = vld [vmem:[#allocation2 + $0x30] sm:$0xff]
    %v1038 = vld [vmem:[#allocation2 + $0x40] sm:$0xff]
    %v1039 = vld [vmem:[#allocation2 + $0x50] sm:$0xff]
    %v1040 = vld [vmem:[#allocation2 + $0x60] sm:$0xff]
    %v1041 = vld [vmem:[#allocation2 + $0x70] sm:$0xff]
    %v1042 = vld [vmem:[#allocation2 + $0x80] sm:$0x3f]
    %v1043 = vpack.c.bf16 %v1035, %v1034
    %v1044 = vpack.c.bf16 %v1037, %v1036
    %v1045 = vpack.c.bf16 %v1039, %v1038
    %v1046 = vpack.c.bf16 %v1041, %v1040
    %v1047 = vpack.c.bf16 %v1042, %v1042
    %v1048 = vld [vmem:[#allocation8] sm:$0xf]
    %v1049 = vld [vmem:[#allocation8 + $0x4] sm:$0xf]
    %v1050 = vld [vmem:[#allocation8 + $0x8] sm:$0xf]
    %v1051 = vld [vmem:[#allocation8 + $0xc] sm:$0xf]
    %v1052 = vld [vmem:[#allocation8 + $0x10] sm:$0xf]
    %v1053 = vld [vmem:[#allocation8 + $0x14] sm:$0xf]
    %v1054 = vld [vmem:[#allocation8 + $0x18] sm:$0xf]
    %v1055 = vld [vmem:[#allocation8 + $0x1c] sm:$0xf]
    %v1056 = vld [vmem:[#allocation8 + $0x20] sm:$0xf]
    %v1057 = vld [vmem:[#allocation8 + $0x24] sm:$0xf]
    %v1058 = vld [vmem:[#allocation8 + $0x28] sm:$0xf]
    %v1059 = vld [vmem:[#allocation8 + $0x2c] sm:$0xf]
    %v1060 = vld [vmem:[#allocation8 + $0x30] sm:$0xf]
    %v1061 = vld [vmem:[#allocation8 + $0x34] sm:$0xf]
    %v1062 = vld [vmem:[#allocation8 + $0x38] sm:$0xf]
    %v1063 = vld [vmem:[#allocation8 + $0x3c] sm:$0xf]
    %v1064 = vld [vmem:[#allocation2] sm:$0x80]
    %v1065 = vld [vmem:[#allocation2 + $0x80] sm:$0x7f]
    %v1066 = vpack.c.bf16 %v1035, %v1064
    %v1067 = vpack.c.bf16 %v1065, %v1065
    %s1068 = scalar_lea.vmem [#allocation8], 64
    %v1069 = vld [vmem:[%s1068] sm:$0xf]
    %v1070 = vld [vmem:[%s1068 + $0x4] sm:$0xf]
    %v1071 = vld [vmem:[%s1068 + $0x8] sm:$0xf]
    %v1072 = vld [vmem:[%s1068 + $0xc] sm:$0xf]
    %v1073 = vld [vmem:[%s1068 + $0x10] sm:$0xf]
    %v1074 = vld [vmem:[%s1068 + $0x14] sm:$0xf]
    %v1075 = vld [vmem:[%s1068 + $0x18] sm:$0xf]
    %v1076 = vld [vmem:[%s1068 + $0x1c] sm:$0xf]
    %v1077 = vld [vmem:[%s1068 + $0x20] sm:$0xf]
    %v1078 = vld [vmem:[%s1068 + $0x24] sm:$0xf]
    %v1079 = vld [vmem:[%s1068 + $0x28] sm:$0xf]
    %v1080 = vld [vmem:[%s1068 + $0x2c] sm:$0xf]
    %v1081 = vld [vmem:[%s1068 + $0x30] sm:$0xf]
    %v1082 = vld [vmem:[%s1068 + $0x34] sm:$0xf]
    %v1083 = vld [vmem:[%s1068 + $0x38] sm:$0xf]
    %v1084 = vld [vmem:[%s1068 + $0x3c] sm:$0xf]
    %v1086 = vshrl.u32 %v1066, 16
    %v1088 = vrot.slane %v1086, 3
    %v1089 = vshll.u32 %v1066, 16
    %v1091 = vrot.slane %v1089, 4
    %v1092 = vor.u32 %v1088, %v1091
    %v1094 = vshrl.u32 %v1044, 16
    %v1096 = vrot.slane %v1094, 3
    %v1097 = vshll.u32 %v1044, 16
    %v1099 = vrot.slane %v1097, 4
    %v1100 = vor.u32 %v1096, %v1099
    %v1101 = vsel %vm237, %v1092, %v1100
    %v1103 = vshrl.u32 %v1045, 16
    %v1105 = vrot.slane %v1103, 3
    %v1106 = vshll.u32 %v1045, 16
    %v1108 = vrot.slane %v1106, 4
    %v1109 = vor.u32 %v1105, %v1108
    %v1110 = vsel %vm237, %v1100, %v1109
    %v1112 = vshrl.u32 %v1046, 16
    %v1114 = vrot.slane %v1112, 3
    %v1115 = vshll.u32 %v1046, 16
    %v1117 = vrot.slane %v1115, 4
    %v1118 = vor.u32 %v1114, %v1117
    %v1119 = vsel %vm237, %v1109, %v1118
    %v1121 = vshrl.u32 %v1067, 16
    %v1123 = vrot.slane %v1121, 3
    %v1124 = vshll.u32 %v1067, 16
    %v1126 = vrot.slane %v1124, 4
    %v1127 = vor.u32 %v1123, %v1126
    %v1128 = vsel %vm237, %v1118, %v1127
    %v1149 = vunpack.c.l.b16 %v1069
    %v1150 = vunpack.c.l.b16 %v1070
    %v1151 = vunpack.c.l.b16 %v1071
    %v1152 = vunpack.c.l.b16 %v1072
    %v1153 = vunpack.c.l.b16 %v1073
    %v1154 = vunpack.c.l.b16 %v1074
    %v1155 = vunpack.c.l.b16 %v1075
    %v1156 = vunpack.c.l.b16 %v1076
    %v1157 = vunpack.c.l.b16 %v1077
    %v1158 = vunpack.c.l.b16 %v1078
    %v1159 = vunpack.c.l.b16 %v1079
    %v1160 = vunpack.c.l.b16 %v1080
    %v1161 = vunpack.c.l.b16 %v1081
    %v1162 = vunpack.c.l.b16 %v1082
    %v1163 = vunpack.c.l.b16 %v1083
    %v1164 = vunpack.c.l.b16 %v1084
    %v1165 = vpack.c.b16 %v1150, %v1149
    %v1166 = vpack.c.b16 %v1152, %v1151
    %v1167 = vpack.c.b16 %v1154, %v1153
    %v1168 = vpack.c.b16 %v1156, %v1155
    %v1169 = vpack.c.b16 %v1158, %v1157
    %v1170 = vpack.c.b16 %v1160, %v1159
    %v1171 = vpack.c.b16 %v1162, %v1161
    %v1172 = vpack.c.b16 %v1164, %v1163
    %1181 = vmatprep.subr.bf16.mxu0 0
    %1182 = vmatpush1.bf16.msra.mxu0 %v1172
    %1183 = vmatprep.subr.bf16.mxu0 0
    %1184 = vmatpush1.bf16.msra.mxu0 %v1171
    %1185 = vmatprep.subr.bf16.mxu0 0
    %1186 = vmatpush1.bf16.msra.mxu0 %v1170
    %1187 = vmatprep.subr.bf16.mxu0 0
    %1188 = vmatpush1.bf16.msra.mxu0 %v1169
    %1189 = vmatprep.subr.bf16.mxu0 0
    %1190 = vmatpush1.bf16.msra.mxu0 %v1168
    %1191 = vmatprep.subr.bf16.mxu0 0
    %1192 = vmatpush1.bf16.msra.mxu0 %v1167
    %1193 = vmatprep.subr.bf16.mxu0 0
    %1194 = vmatpush1.bf16.msra.mxu0 %v1166
    %1195 = vmatprep.subr.bf16.mxu0 0
    %1196 = vmatpush1.bf16.msra.mxu0 %v1165
    %1197 = vmatprep.subr.bf16.mxu0 0
    %1198 = vmatpush2.bf16.msra.mxu0 0
    %1199 = vmatprep.subr.bf16.mxu0 0
    %1200 = vmatpush2.bf16.msra.mxu0 0
    %1201 = vmatprep.subr.bf16.mxu0 0
    %1202 = vmatpush2.bf16.msra.mxu0 0
    %1203 = vmatprep.subr.bf16.mxu0 0
    %1204 = vmatpush2.bf16.msra.mxu0 0
    %1205 = vmatprep.subr.bf16.mxu0 0
    %1206 = vmatpush2.bf16.msra.mxu0 0
    %1207 = vmatprep.subr.bf16.mxu0 0
    %1208 = vmatpush2.bf16.msra.mxu0 0
    %1209 = vmatprep.subr.bf16.mxu0 0
    %1210 = vmatpush2.bf16.msra.mxu0 0
    %1211 = vmatprep.subr.bf16.mxu0 0
    %1212 = vmatpush2.bf16.msra.mxu0 0
    %1213 = vmatprep.mubr.bf16.mxu0 0
    %1214 = vmatmul.mubr.bf16.gmra.mxu0 %v1101
    %v1215 = vpop.f32.mrf.mxu0
    %v1216 = vadd.f32 0.0, %v1215
    %v1217 = vpop.f32.mrf.mxu0
    %v1218 = vpop.f32.mrf.mxu0
    %v1219 = vadd.f32 0.0, %v1218
    %v1220 = vpop.f32.mrf.mxu0
    %1221 = vmatprep.mubr.bf16.mxu0 0
    %1222 = vmatmul.mubr.bf16.gmra.mxu0 %v1110
    %v1223 = vpop.f32.mrf.mxu0
    %v1224 = vpop.f32.mrf.mxu0
    %v1225 = vpop.f32.mrf.mxu0
    %v1226 = vpop.f32.mrf.mxu0
    %1227 = vmatprep.mubr.bf16.mxu0 0
    %1228 = vmatmul.mubr.bf16.gmra.mxu0 %v1119
    %v1229 = vpop.f32.mrf.mxu0
    %v1230 = vadd.f32 0.0, %v1229
    %v1231 = vpop.f32.mrf.mxu0
    %v1232 = vpop.f32.mrf.mxu0
    %v1233 = vadd.f32 0.0, %v1232
    %v1234 = vpop.f32.mrf.mxu0
    %1235 = vmatprep.mubr.bf16.mxu0 0
    %1236 = vmatmul.mubr.bf16.gmra.mxu0 %v1128
    %v1237 = vpop.f32.mrf.mxu0
    %v1238 = vpop.f32.mrf.mxu0
    %v1239 = vpop.f32.mrf.mxu0
    %v1240 = vpop.f32.mrf.mxu0
    %1241 = vdwg.mxu0
    %v1247 = vrot.slane %v1043, 3
    %v1248 = vrot.slane %v1044, 3
    %v1249 = vsel %vm400, %v1247, %v1248
    %v1250 = vrot.slane %v1045, 3
    %v1251 = vsel %vm400, %v1248, %v1250
    %v1252 = vrot.slane %v1046, 3
    %v1253 = vsel %vm400, %v1250, %v1252
    %v1254 = vrot.slane %v1047, 3
    %v1255 = vsel %vm400, %v1252, %v1254
    %v1276 = vunpack.c.l.b16 %v1048
    %v1277 = vunpack.c.l.b16 %v1049
    %v1278 = vunpack.c.l.b16 %v1050
    %v1279 = vunpack.c.l.b16 %v1051
    %v1280 = vunpack.c.l.b16 %v1052
    %v1281 = vunpack.c.l.b16 %v1053
    %v1282 = vunpack.c.l.b16 %v1054
    %v1283 = vunpack.c.l.b16 %v1055
    %v1284 = vunpack.c.l.b16 %v1056
    %v1285 = vunpack.c.l.b16 %v1057
    %v1286 = vunpack.c.l.b16 %v1058
    %v1287 = vunpack.c.l.b16 %v1059
    %v1288 = vunpack.c.l.b16 %v1060
    %v1289 = vunpack.c.l.b16 %v1061
    %v1290 = vunpack.c.l.b16 %v1062
    %v1291 = vunpack.c.l.b16 %v1063
    %v1292 = vpack.c.b16 %v1277, %v1276
    %v1293 = vpack.c.b16 %v1279, %v1278
    %v1294 = vpack.c.b16 %v1281, %v1280
    %v1295 = vpack.c.b16 %v1283, %v1282
    %v1296 = vpack.c.b16 %v1285, %v1284
    %v1297 = vpack.c.b16 %v1287, %v1286
    %v1298 = vpack.c.b16 %v1289, %v1288
    %v1299 = vpack.c.b16 %v1291, %v1290
    %1308 = vmatprep.subr.bf16.mxu0 0
    %1309 = vmatpush1.bf16.msra.mxu0 %v1299
    %1310 = vmatprep.subr.bf16.mxu0 0
    %1311 = vmatpush1.bf16.msra.mxu0 %v1298
    %1312 = vmatprep.subr.bf16.mxu0 0
    %1313 = vmatpush1.bf16.msra.mxu0 %v1297
    %1314 = vmatprep.subr.bf16.mxu0 0
    %1315 = vmatpush1.bf16.msra.mxu0 %v1296
    %1316 = vmatprep.subr.bf16.mxu0 0
    %1317 = vmatpush1.bf16.msra.mxu0 %v1295
    %1318 = vmatprep.subr.bf16.mxu0 0
    %1319 = vmatpush1.bf16.msra.mxu0 %v1294
    %1320 = vmatprep.subr.bf16.mxu0 0
    %1321 = vmatpush1.bf16.msra.mxu0 %v1293
    %1322 = vmatprep.subr.bf16.mxu0 0
    %1323 = vmatpush1.bf16.msra.mxu0 %v1292
    %1324 = vmatprep.subr.bf16.mxu0 0
    %1325 = vmatpush2.bf16.msra.mxu0 0
    %1326 = vmatprep.subr.bf16.mxu0 0
    %1327 = vmatpush2.bf16.msra.mxu0 0
    %1328 = vmatprep.subr.bf16.mxu0 0
    %1329 = vmatpush2.bf16.msra.mxu0 0
    %1330 = vmatprep.subr.bf16.mxu0 0
    %1331 = vmatpush2.bf16.msra.mxu0 0
    %1332 = vmatprep.subr.bf16.mxu0 0
    %1333 = vmatpush2.bf16.msra.mxu0 0
    %1334 = vmatprep.subr.bf16.mxu0 0
    %1335 = vmatpush2.bf16.msra.mxu0 0
    %1336 = vmatprep.subr.bf16.mxu0 0
    %1337 = vmatpush2.bf16.msra.mxu0 0
    %1338 = vmatprep.subr.bf16.mxu0 0
    %1339 = vmatpush2.bf16.msra.mxu0 0
    %1340 = vmatprep.mubr.bf16.mxu0 0
    %1341 = vmatmul.mubr.bf16.gmra.mxu0 %v1249
    %v1342 = vpop.f32.mrf.mxu0
    %v1343 = vadd.f32 %v1216, %v1342
    %v1344 = vpop.f32.mrf.mxu0
    %v1345 = vpop.f32.mrf.mxu0
    %v1346 = vadd.f32 %v1219, %v1345
    %v1347 = vpop.f32.mrf.mxu0
    %1348 = vmatprep.mubr.bf16.mxu0 0
    %1349 = vmatmul.mubr.bf16.gmra.mxu0 %v1251
    %v1350 = vpop.f32.mrf.mxu0
    %v1351 = vpop.f32.mrf.mxu0
    %v1352 = vpop.f32.mrf.mxu0
    %v1353 = vpop.f32.mrf.mxu0
    %1354 = vmatprep.mubr.bf16.mxu0 0
    %1355 = vmatmul.mubr.bf16.gmra.mxu0 %v1253
    %v1356 = vpop.f32.mrf.mxu0
    %v1357 = vadd.f32 %v1230, %v1356
    %v1358 = vpop.f32.mrf.mxu0
    %v1359 = vpop.f32.mrf.mxu0
    %v1360 = vadd.f32 %v1233, %v1359
    %v1361 = vpop.f32.mrf.mxu0
    %1362 = vmatprep.mubr.bf16.mxu0 0
    %1363 = vmatmul.mubr.bf16.gmra.mxu0 %v1255
    %v1364 = vpop.f32.mrf.mxu0
    %v1365 = vpop.f32.mrf.mxu0
    %v1366 = vpop.f32.mrf.mxu0
    %v1367 = vpop.f32.mrf.mxu0
    %1368 = vdwg.mxu0
    %v1369 = vld [vmem:[#allocation2 + $0x80] sm:$0xff]
    %v1370 = vpack.c.bf16 %v1036, %v1035
    %v1371 = vpack.c.bf16 %v1038, %v1037
    %v1372 = vpack.c.bf16 %v1040, %v1039
    %v1373 = vpack.c.bf16 %v1369, %v1041
    %s1374 = scalar_lea.vmem [#allocation8], 128
    %v1375 = vld [vmem:[%s1374] sm:$0xf]
    %v1376 = vld [vmem:[%s1374 + $0x4] sm:$0xf]
    %v1377 = vld [vmem:[%s1374 + $0x8] sm:$0xf]
    %v1378 = vld [vmem:[%s1374 + $0xc] sm:$0xf]
    %v1379 = vld [vmem:[%s1374 + $0x10] sm:$0xf]
    %v1380 = vld [vmem:[%s1374 + $0x14] sm:$0xf]
    %v1381 = vld [vmem:[%s1374 + $0x18] sm:$0xf]
    %v1382 = vld [vmem:[%s1374 + $0x1c] sm:$0xf]
    %v1383 = vld [vmem:[%s1374 + $0x20] sm:$0xf]
    %v1384 = vld [vmem:[%s1374 + $0x24] sm:$0xf]
    %v1385 = vld [vmem:[%s1374 + $0x28] sm:$0xf]
    %v1386 = vld [vmem:[%s1374 + $0x2c] sm:$0xf]
    %v1387 = vld [vmem:[%s1374 + $0x30] sm:$0xf]
    %v1388 = vld [vmem:[%s1374 + $0x34] sm:$0xf]
    %v1389 = vld [vmem:[%s1374 + $0x38] sm:$0xf]
    %v1390 = vld [vmem:[%s1374 + $0x3c] sm:$0xf]
    %v1407 = vunpack.c.l.b16 %v1375
    %v1408 = vunpack.c.l.b16 %v1376
    %v1409 = vunpack.c.l.b16 %v1377
    %v1410 = vunpack.c.l.b16 %v1378
    %v1411 = vunpack.c.l.b16 %v1379
    %v1412 = vunpack.c.l.b16 %v1380
    %v1413 = vunpack.c.l.b16 %v1381
    %v1414 = vunpack.c.l.b16 %v1382
    %v1415 = vunpack.c.l.b16 %v1383
    %v1416 = vunpack.c.l.b16 %v1384
    %v1417 = vunpack.c.l.b16 %v1385
    %v1418 = vunpack.c.l.b16 %v1386
    %v1419 = vunpack.c.l.b16 %v1387
    %v1420 = vunpack.c.l.b16 %v1388
    %v1421 = vunpack.c.l.b16 %v1389
    %v1422 = vunpack.c.l.b16 %v1390
    %v1423 = vpack.c.b16 %v1408, %v1407
    %v1424 = vpack.c.b16 %v1410, %v1409
    %v1425 = vpack.c.b16 %v1412, %v1411
    %v1426 = vpack.c.b16 %v1414, %v1413
    %v1427 = vpack.c.b16 %v1416, %v1415
    %v1428 = vpack.c.b16 %v1418, %v1417
    %v1429 = vpack.c.b16 %v1420, %v1419
    %v1430 = vpack.c.b16 %v1422, %v1421
    %1439 = vmatprep.subr.bf16.mxu0 0
    %1440 = vmatpush1.bf16.msra.mxu0 %v1430
    %1441 = vmatprep.subr.bf16.mxu0 0
    %1442 = vmatpush1.bf16.msra.mxu0 %v1429
    %1443 = vmatprep.subr.bf16.mxu0 0
    %1444 = vmatpush1.bf16.msra.mxu0 %v1428
    %1445 = vmatprep.subr.bf16.mxu0 0
    %1446 = vmatpush1.bf16.msra.mxu0 %v1427
    %1447 = vmatprep.subr.bf16.mxu0 0
    %1448 = vmatpush1.bf16.msra.mxu0 %v1426
    %1449 = vmatprep.subr.bf16.mxu0 0
    %1450 = vmatpush1.bf16.msra.mxu0 %v1425
    %1451 = vmatprep.subr.bf16.mxu0 0
    %1452 = vmatpush1.bf16.msra.mxu0 %v1424
    %1453 = vmatprep.subr.bf16.mxu0 0
    %1454 = vmatpush1.bf16.msra.mxu0 %v1423
    %1455 = vmatprep.subr.bf16.mxu0 0
    %1456 = vmatpush2.bf16.msra.mxu0 0
    %1457 = vmatprep.subr.bf16.mxu0 0
    %1458 = vmatpush2.bf16.msra.mxu0 0
    %1459 = vmatprep.subr.bf16.mxu0 0
    %1460 = vmatpush2.bf16.msra.mxu0 0
    %1461 = vmatprep.subr.bf16.mxu0 0
    %1462 = vmatpush2.bf16.msra.mxu0 0
    %1463 = vmatprep.subr.bf16.mxu0 0
    %1464 = vmatpush2.bf16.msra.mxu0 0
    %1465 = vmatprep.subr.bf16.mxu0 0
    %1466 = vmatpush2.bf16.msra.mxu0 0
    %1467 = vmatprep.subr.bf16.mxu0 0
    %1468 = vmatpush2.bf16.msra.mxu0 0
    %1469 = vmatprep.subr.bf16.mxu0 0
    %1470 = vmatpush2.bf16.msra.mxu0 0
    %1471 = vmatprep.mubr.bf16.mxu0 0
    %1472 = vmatmul.mubr.bf16.gmra.mxu0 %v1370
    %v1473 = vpop.f32.mrf.mxu0
    %v1474 = vadd.f32 0.0, %v1473
    %v1475 = vpop.f32.mrf.mxu0
    %v1476 = vpop.f32.mrf.mxu0
    %v1477 = vadd.f32 0.0, %v1476
    %v1478 = vpop.f32.mrf.mxu0
    %1479 = vmatprep.mubr.bf16.mxu0 0
    %1480 = vmatmul.mubr.bf16.gmra.mxu0 %v1371
    %v1481 = vpop.f32.mrf.mxu0
    %v1482 = vpop.f32.mrf.mxu0
    %v1483 = vpop.f32.mrf.mxu0
    %v1484 = vpop.f32.mrf.mxu0
    %1485 = vmatprep.mubr.bf16.mxu0 0
    %1486 = vmatmul.mubr.bf16.gmra.mxu0 %v1372
    %v1487 = vpop.f32.mrf.mxu0
    %v1488 = vadd.f32 0.0, %v1487
    %v1489 = vpop.f32.mrf.mxu0
    %v1490 = vpop.f32.mrf.mxu0
    %v1491 = vadd.f32 0.0, %v1490
    %v1492 = vpop.f32.mrf.mxu0
    %1493 = vmatprep.mubr.bf16.mxu0 0
    %1494 = vmatmul.mubr.bf16.gmra.mxu0 %v1373
    %v1495 = vpop.f32.mrf.mxu0
    %v1496 = vpop.f32.mrf.mxu0
    %v1497 = vpop.f32.mrf.mxu0
    %v1498 = vpop.f32.mrf.mxu0
    %1499 = vdwg.mxu0
    %v1500 = vadd.f32 %v1343, %v1474
    %v1501 = vadd.f32 %v1346, %v1477
    %v1502 = vadd.f32 %v1357, %v1488
    %v1503 = vadd.f32 %v1360, %v1491
    %v1504 = vld [vmem:[#allocation2 + $0x10] sm:$0xfe]
    %v1505 = vld [vmem:[#allocation2 + $0x20] sm:$0xff]
    %v1506 = vld [vmem:[#allocation2 + $0x30] sm:$0xff]
    %v1507 = vld [vmem:[#allocation2 + $0x40] sm:$0xff]
    %v1508 = vld [vmem:[#allocation2 + $0x50] sm:$0xff]
    %v1509 = vld [vmem:[#allocation2 + $0x60] sm:$0xff]
    %v1510 = vld [vmem:[#allocation2 + $0x70] sm:$0xff]
    %v1511 = vld [vmem:[#allocation2 + $0x80] sm:$0xff]
    %v1512 = vld [vmem:[#allocation2 + $0x90] sm:$0x1]
    %v1513 = vpack.c.bf16 %v1505, %v1504
    %v1514 = vpack.c.bf16 %v1507, %v1506
    %v1515 = vpack.c.bf16 %v1509, %v1508
    %v1516 = vpack.c.bf16 %v1511, %v1510
    %v1517 = vpack.c.bf16 %v1512, %v1512
    %s1518 = scalar_lea.vmem [#allocation8], 192
    %v1519 = vld [vmem:[%s1518] sm:$0xf]
    %v1520 = vld [vmem:[%s1518 + $0x4] sm:$0xf]
    %v1521 = vld [vmem:[%s1518 + $0x8] sm:$0xf]
    %v1522 = vld [vmem:[%s1518 + $0xc] sm:$0xf]
    %v1523 = vld [vmem:[%s1518 + $0x10] sm:$0xf]
    %v1524 = vld [vmem:[%s1518 + $0x14] sm:$0xf]
    %v1525 = vld [vmem:[%s1518 + $0x18] sm:$0xf]
    %v1526 = vld [vmem:[%s1518 + $0x1c] sm:$0xf]
    %v1527 = vld [vmem:[%s1518 + $0x20] sm:$0xf]
    %v1528 = vld [vmem:[%s1518 + $0x24] sm:$0xf]
    %v1529 = vld [vmem:[%s1518 + $0x28] sm:$0xf]
    %v1530 = vld [vmem:[%s1518 + $0x2c] sm:$0xf]
    %v1531 = vld [vmem:[%s1518 + $0x30] sm:$0xf]
    %v1532 = vld [vmem:[%s1518 + $0x34] sm:$0xf]
    %v1533 = vld [vmem:[%s1518 + $0x38] sm:$0xf]
    %v1534 = vld [vmem:[%s1518 + $0x3c] sm:$0xf]
    %v1536 = vshrl.u32 %v1513, 16
    %v1538 = vshll.u32 %v1513, 16
    %v1540 = vrot.slane %v1538, 1
    %v1541 = vor.u32 %v1536, %v1540
    %v1543 = vshll.u32 %v1514, 16
    %v1545 = vrot.slane %v1543, 1
    %v1546 = vsel %vm689, %v1541, %v1545
    %v1547 = vshrl.u32 %v1514, 16
    %v1549 = vor.u32 %v1547, %v1545
    %v1551 = vshll.u32 %v1515, 16
    %v1553 = vrot.slane %v1551, 1
    %v1554 = vsel %vm689, %v1549, %v1553
    %v1555 = vshrl.u32 %v1515, 16
    %v1557 = vor.u32 %v1555, %v1553
    %v1559 = vshll.u32 %v1516, 16
    %v1561 = vrot.slane %v1559, 1
    %v1562 = vsel %vm689, %v1557, %v1561
    %v1563 = vshrl.u32 %v1516, 16
    %v1565 = vor.u32 %v1563, %v1561
    %v1567 = vshll.u32 %v1517, 16
    %v1569 = vrot.slane %v1567, 1
    %v1570 = vsel %vm689, %v1565, %v1569
    %v1591 = vunpack.c.l.b16 %v1519
    %v1592 = vunpack.c.l.b16 %v1520
    %v1593 = vunpack.c.l.b16 %v1521
    %v1594 = vunpack.c.l.b16 %v1522
    %v1595 = vunpack.c.l.b16 %v1523
    %v1596 = vunpack.c.l.b16 %v1524
    %v1597 = vunpack.c.l.b16 %v1525
    %v1598 = vunpack.c.l.b16 %v1526
    %v1599 = vunpack.c.l.b16 %v1527
    %v1600 = vunpack.c.l.b16 %v1528
    %v1601 = vunpack.c.l.b16 %v1529
    %v1602 = vunpack.c.l.b16 %v1530
    %v1603 = vunpack.c.l.b16 %v1531
    %v1604 = vunpack.c.l.b16 %v1532
    %v1605 = vunpack.c.l.b16 %v1533
    %v1606 = vunpack.c.l.b16 %v1534
    %v1607 = vpack.c.b16 %v1592, %v1591
    %v1608 = vpack.c.b16 %v1594, %v1593
    %v1609 = vpack.c.b16 %v1596, %v1595
    %v1610 = vpack.c.b16 %v1598, %v1597
    %v1611 = vpack.c.b16 %v1600, %v1599
    %v1612 = vpack.c.b16 %v1602, %v1601
    %v1613 = vpack.c.b16 %v1604, %v1603
    %v1614 = vpack.c.b16 %v1606, %v1605
    %1623 = vmatprep.subr.bf16.mxu0 0
    %1624 = vmatpush1.bf16.msra.mxu0 %v1614
    %1625 = vmatprep.subr.bf16.mxu0 0
    %1626 = vmatpush1.bf16.msra.mxu0 %v1613
    %1627 = vmatprep.subr.bf16.mxu0 0
    %1628 = vmatpush1.bf16.msra.mxu0 %v1612
    %1629 = vmatprep.subr.bf16.mxu0 0
    %1630 = vmatpush1.bf16.msra.mxu0 %v1611
    %1631 = vmatprep.subr.bf16.mxu0 0
    %1632 = vmatpush1.bf16.msra.mxu0 %v1610
    %1633 = vmatprep.subr.bf16.mxu0 0
    %1634 = vmatpush1.bf16.msra.mxu0 %v1609
    %1635 = vmatprep.subr.bf16.mxu0 0
    %1636 = vmatpush1.bf16.msra.mxu0 %v1608
    %1637 = vmatprep.subr.bf16.mxu0 0
    %1638 = vmatpush1.bf16.msra.mxu0 %v1607
    %1639 = vmatprep.subr.bf16.mxu0 0
    %1640 = vmatpush2.bf16.msra.mxu0 0
    %1641 = vmatprep.subr.bf16.mxu0 0
    %1642 = vmatpush2.bf16.msra.mxu0 0
    %1643 = vmatprep.subr.bf16.mxu0 0
    %1644 = vmatpush2.bf16.msra.mxu0 0
    %1645 = vmatprep.subr.bf16.mxu0 0
    %1646 = vmatpush2.bf16.msra.mxu0 0
    %1647 = vmatprep.subr.bf16.mxu0 0
    %1648 = vmatpush2.bf16.msra.mxu0 0
    %1649 = vmatprep.subr.bf16.mxu0 0
    %1650 = vmatpush2.bf16.msra.mxu0 0
    %1651 = vmatprep.subr.bf16.mxu0 0
    %1652 = vmatpush2.bf16.msra.mxu0 0
    %1653 = vmatprep.subr.bf16.mxu0 0
    %1654 = vmatpush2.bf16.msra.mxu0 0
    %1655 = vmatprep.mubr.bf16.mxu0 0
    %1656 = vmatmul.mubr.bf16.gmra.mxu0 %v1546
    %v1657 = vpop.f32.mrf.mxu0
    %v1658 = vadd.f32 0.0, %v1657
    %v1659 = vpop.f32.mrf.mxu0
    %v1660 = vpop.f32.mrf.mxu0
    %v1661 = vadd.f32 0.0, %v1660
    %v1662 = vpop.f32.mrf.mxu0
    %1663 = vmatprep.mubr.bf16.mxu0 0
    %1664 = vmatmul.mubr.bf16.gmra.mxu0 %v1554
    %v1665 = vpop.f32.mrf.mxu0
    %v1666 = vpop.f32.mrf.mxu0
    %v1667 = vpop.f32.mrf.mxu0
    %v1668 = vpop.f32.mrf.mxu0
    %1669 = vmatprep.mubr.bf16.mxu0 0
    %1670 = vmatmul.mubr.bf16.gmra.mxu0 %v1562
    %v1671 = vpop.f32.mrf.mxu0
    %v1672 = vadd.f32 0.0, %v1671
    %v1673 = vpop.f32.mrf.mxu0
    %v1674 = vpop.f32.mrf.mxu0
    %v1675 = vadd.f32 0.0, %v1674
    %v1676 = vpop.f32.mrf.mxu0
    %1677 = vmatprep.mubr.bf16.mxu0 0
    %1678 = vmatmul.mubr.bf16.gmra.mxu0 %v1570
    %v1679 = vpop.f32.mrf.mxu0
    %v1680 = vpop.f32.mrf.mxu0
    %v1681 = vpop.f32.mrf.mxu0
    %v1682 = vpop.f32.mrf.mxu0
    %1683 = vdwg.mxu0
    %v1684 = vadd.f32 %v1500, %v1658
    %v1685 = vadd.f32 %v1501, %v1661
    %v1686 = vadd.f32 %v1502, %v1672
    %v1687 = vadd.f32 %v1503, %v1675
    %v1688 = vld [vmem:[#allocation2 + $0x10] sm:$0xfc]
    %v1689 = vld [vmem:[#allocation2 + $0x90] sm:$0x3]
    %v1690 = vpack.c.bf16 %v1505, %v1688
    %v1691 = vpack.c.bf16 %v1689, %v1689
    %s1692 = scalar_lea.vmem [#allocation8], 256
    %v1693 = vld [vmem:[%s1692] sm:$0xf]
    %v1694 = vld [vmem:[%s1692 + $0x4] sm:$0xf]
    %v1695 = vld [vmem:[%s1692 + $0x8] sm:$0xf]
    %v1696 = vld [vmem:[%s1692 + $0xc] sm:$0xf]
    %v1697 = vld [vmem:[%s1692 + $0x10] sm:$0xf]
    %v1698 = vld [vmem:[%s1692 + $0x14] sm:$0xf]
    %v1699 = vld [vmem:[%s1692 + $0x18] sm:$0xf]
    %v1700 = vld [vmem:[%s1692 + $0x1c] sm:$0xf]
    %v1701 = vld [vmem:[%s1692 + $0x20] sm:$0xf]
    %v1702 = vld [vmem:[%s1692 + $0x24] sm:$0xf]
    %v1703 = vld [vmem:[%s1692 + $0x28] sm:$0xf]
    %v1704 = vld [vmem:[%s1692 + $0x2c] sm:$0xf]
    %v1705 = vld [vmem:[%s1692 + $0x30] sm:$0xf]
    %v1706 = vld [vmem:[%s1692 + $0x34] sm:$0xf]
    %v1707 = vld [vmem:[%s1692 + $0x38] sm:$0xf]
    %v1708 = vld [vmem:[%s1692 + $0x3c] sm:$0xf]
    %v1714 = vrot.slane %v1690, 1
    %v1715 = vrot.slane %v1514, 1
    %v1716 = vsel %vm869, %v1714, %v1715
    %v1717 = vrot.slane %v1515, 1
    %v1718 = vsel %vm869, %v1715, %v1717
    %v1719 = vrot.slane %v1516, 1
    %v1720 = vsel %vm869, %v1717, %v1719
    %v1721 = vrot.slane %v1691, 1
    %v1722 = vsel %vm869, %v1719, %v1721
    %v1743 = vunpack.c.l.b16 %v1693
    %v1744 = vunpack.c.l.b16 %v1694
    %v1745 = vunpack.c.l.b16 %v1695
    %v1746 = vunpack.c.l.b16 %v1696
    %v1747 = vunpack.c.l.b16 %v1697
    %v1748 = vunpack.c.l.b16 %v1698
    %v1749 = vunpack.c.l.b16 %v1699
    %v1750 = vunpack.c.l.b16 %v1700
    %v1751 = vunpack.c.l.b16 %v1701
    %v1752 = vunpack.c.l.b16 %v1702
    %v1753 = vunpack.c.l.b16 %v1703
    %v1754 = vunpack.c.l.b16 %v1704
    %v1755 = vunpack.c.l.b16 %v1705
    %v1756 = vunpack.c.l.b16 %v1706
    %v1757 = vunpack.c.l.b16 %v1707
    %v1758 = vunpack.c.l.b16 %v1708
    %v1759 = vpack.c.b16 %v1744, %v1743
    %v1760 = vpack.c.b16 %v1746, %v1745
    %v1761 = vpack.c.b16 %v1748, %v1747
    %v1762 = vpack.c.b16 %v1750, %v1749
    %v1763 = vpack.c.b16 %v1752, %v1751
    %v1764 = vpack.c.b16 %v1754, %v1753
    %v1765 = vpack.c.b16 %v1756, %v1755
    %v1766 = vpack.c.b16 %v1758, %v1757
    %1775 = vmatprep.subr.bf16.mxu0 0
    %1776 = vmatpush1.bf16.msra.mxu0 %v1766
    %1777 = vmatprep.subr.bf16.mxu0 0
    %1778 = vmatpush1.bf16.msra.mxu0 %v1765
    %1779 = vmatprep.subr.bf16.mxu0 0
    %1780 = vmatpush1.bf16.msra.mxu0 %v1764
    %1781 = vmatprep.subr.bf16.mxu0 0
    %1782 = vmatpush1.bf16.msra.mxu0 %v1763
    %1783 = vmatprep.subr.bf16.mxu0 0
    %1784 = vmatpush1.bf16.msra.mxu0 %v1762
    %1785 = vmatprep.subr.bf16.mxu0 0
    %1786 = vmatpush1.bf16.msra.mxu0 %v1761
    %1787 = vmatprep.subr.bf16.mxu0 0
    %1788 = vmatpush1.bf16.msra.mxu0 %v1760
    %1789 = vmatprep.subr.bf16.mxu0 0
    %1790 = vmatpush1.bf16.msra.mxu0 %v1759
    %1791 = vmatprep.subr.bf16.mxu0 0
    %1792 = vmatpush2.bf16.msra.mxu0 0
    %1793 = vmatprep.subr.bf16.mxu0 0
    %1794 = vmatpush2.bf16.msra.mxu0 0
    %1795 = vmatprep.subr.bf16.mxu0 0
    %1796 = vmatpush2.bf16.msra.mxu0 0
    %1797 = vmatprep.subr.bf16.mxu0 0
    %1798 = vmatpush2.bf16.msra.mxu0 0
    %1799 = vmatprep.subr.bf16.mxu0 0
    %1800 = vmatpush2.bf16.msra.mxu0 0
    %1801 = vmatprep.subr.bf16.mxu0 0
    %1802 = vmatpush2.bf16.msra.mxu0 0
    %1803 = vmatprep.subr.bf16.mxu0 0
    %1804 = vmatpush2.bf16.msra.mxu0 0
    %1805 = vmatprep.subr.bf16.mxu0 0
    %1806 = vmatpush2.bf16.msra.mxu0 0
    %1807 = vmatprep.mubr.bf16.mxu0 0
    %1808 = vmatmul.mubr.bf16.gmra.mxu0 %v1716
    %v1809 = vpop.f32.mrf.mxu0
    %v1810 = vadd.f32 0.0, %v1809
    %v1811 = vpop.f32.mrf.mxu0
    %v1812 = vpop.f32.mrf.mxu0
    %v1813 = vadd.f32 0.0, %v1812
    %v1814 = vpop.f32.mrf.mxu0
    %1815 = vmatprep.mubr.bf16.mxu0 0
    %1816 = vmatmul.mubr.bf16.gmra.mxu0 %v1718
    %v1817 = vpop.f32.mrf.mxu0
    %v1818 = vpop.f32.mrf.mxu0
    %v1819 = vpop.f32.mrf.mxu0
    %v1820 = vpop.f32.mrf.mxu0
    %1821 = vmatprep.mubr.bf16.mxu0 0
    %1822 = vmatmul.mubr.bf16.gmra.mxu0 %v1720
    %v1823 = vpop.f32.mrf.mxu0
    %v1824 = vadd.f32 0.0, %v1823
    %v1825 = vpop.f32.mrf.mxu0
    %v1826 = vpop.f32.mrf.mxu0
    %v1827 = vadd.f32 0.0, %v1826
    %v1828 = vpop.f32.mrf.mxu0
    %1829 = vmatprep.mubr.bf16.mxu0 0
    %1830 = vmatmul.mubr.bf16.gmra.mxu0 %v1722
    %v1831 = vpop.f32.mrf.mxu0
    %v1832 = vpop.f32.mrf.mxu0
    %v1833 = vpop.f32.mrf.mxu0
    %v1834 = vpop.f32.mrf.mxu0
    %1835 = vdwg.mxu0
    %v1836 = vadd.f32 %v1684, %v1810
    %v1837 = vadd.f32 %v1685, %v1813
    %v1838 = vadd.f32 %v1686, %v1824
    %v1839 = vadd.f32 %v1687, %v1827
    %v1840 = vld [vmem:[%s5] sm:$0x1]
    %v1842 = vlaneseq
    %v1843 = vshrl.u32 %v1842, 7
    %v1844 = vsub.s32 0, %v1843
    %v1845 = vrot.slane %v1840, %v1844
    %v1847 = vmul.f32 %v1836, %v1845
    %v1848 = vmul.f32 %v1837, %v1845
    %v1849 = vmul.f32 %v1838, %v1845
    %v1850 = vmul.f32 %v1839, %v1845
    %v1851 = vld [vmem:[%s6] sm:$0x1]
    %v1853 = vlaneseq
    %v1854 = vshrl.u32 %v1853, 7
    %v1855 = vsub.s32 0, %v1854
    %v1856 = vrot.slane %v1851, %v1855
    %v1858 = vadd.f32 %v1847, %v1856
    %v1859 = vadd.f32 %v1848, %v1856
    %v1860 = vadd.f32 %v1849, %v1856
    %v1861 = vadd.f32 %v1850, %v1856
    %vm1862 = vcmp.ge.f32.partialorder %v1858, 0.0
    %vm1863 = vcmp.ge.f32.partialorder %v1859, 0.0
    %vm1864 = vcmp.ge.f32.partialorder %v1860, 0.0
    %vm1865 = vcmp.ge.f32.partialorder %v1861, 0.0
    %v1866 = vmul.f32 %v1858, 0.01
    %v1867 = vmul.f32 %v1859, 0.01
    %v1868 = vmul.f32 %v1860, 0.01
    %v1869 = vmul.f32 %v1861, 0.01
    %v1870 = vsel %vm1862, %v1858, %v1866
    %v1871 = vsel %vm1863, %v1859, %v1867
    %v1872 = vsel %vm1864, %v1860, %v1868
    %v1873 = vsel %vm1865, %v1861, %v1869
    %1874 = vst [vmem:[#allocation2 + $0x10] sm:$0xff] %v1870
    %1875 = vst [vmem:[#allocation2 + $0x20] sm:$0xff] %v1871
    %1876 = vst [vmem:[#allocation2 + $0x50] sm:$0xff] %v1872
    %1877 = vst [vmem:[#allocation2 + $0x60] sm:$0xff] %v1873
    %v1878 = vld [vmem:[#allocation2] sm:$0xc0]
    %v1879 = vld [vmem:[#allocation2 + $0x10] sm:$0xff]
    %v1880 = vld [vmem:[#allocation2 + $0x20] sm:$0xff]
    %v1881 = vld [vmem:[#allocation2 + $0x30] sm:$0xff]
    %v1882 = vld [vmem:[#allocation2 + $0x40] sm:$0xff]
    %v1883 = vld [vmem:[#allocation2 + $0x50] sm:$0xff]
    %v1884 = vld [vmem:[#allocation2 + $0x60] sm:$0xff]
    %v1885 = vld [vmem:[#allocation2 + $0x70] sm:$0xff]
    %v1886 = vld [vmem:[#allocation2 + $0x80] sm:$0x3f]
    %v1887 = vpack.c.bf16 %v1879, %v1878
    %v1888 = vpack.c.bf16 %v1881, %v1880
    %v1889 = vpack.c.bf16 %v1883, %v1882
    %v1890 = vpack.c.bf16 %v1885, %v1884
    %v1891 = vpack.c.bf16 %v1886, %v1886
    %v1892 = vld [vmem:[#allocation10] sm:$0xf]
    %v1893 = vld [vmem:[#allocation10 + $0x4] sm:$0xf]
    %v1894 = vld [vmem:[#allocation10 + $0x8] sm:$0xf]
    %v1895 = vld [vmem:[#allocation10 + $0xc] sm:$0xf]
    %v1896 = vld [vmem:[#allocation10 + $0x10] sm:$0xf]
    %v1897 = vld [vmem:[#allocation10 + $0x14] sm:$0xf]
    %v1898 = vld [vmem:[#allocation10 + $0x18] sm:$0xf]
    %v1899 = vld [vmem:[#allocation10 + $0x1c] sm:$0xf]
    %v1900 = vld [vmem:[#allocation10 + $0x20] sm:$0xf]
    %v1901 = vld [vmem:[#allocation10 + $0x24] sm:$0xf]
    %v1902 = vld [vmem:[#allocation10 + $0x28] sm:$0xf]
    %v1903 = vld [vmem:[#allocation10 + $0x2c] sm:$0xf]
    %v1904 = vld [vmem:[#allocation10 + $0x30] sm:$0xf]
    %v1905 = vld [vmem:[#allocation10 + $0x34] sm:$0xf]
    %v1906 = vld [vmem:[#allocation10 + $0x38] sm:$0xf]
    %v1907 = vld [vmem:[#allocation10 + $0x3c] sm:$0xf]
    %v1908 = vld [vmem:[#allocation2] sm:$0x80]
    %v1909 = vld [vmem:[#allocation2 + $0x80] sm:$0x7f]
    %v1910 = vpack.c.bf16 %v1879, %v1908
    %v1911 = vpack.c.bf16 %v1909, %v1909
    %s1912 = scalar_lea.vmem [#allocation10], 64
    %v1913 = vld [vmem:[%s1912] sm:$0xf]
    %v1914 = vld [vmem:[%s1912 + $0x4] sm:$0xf]
    %v1915 = vld [vmem:[%s1912 + $0x8] sm:$0xf]
    %v1916 = vld [vmem:[%s1912 + $0xc] sm:$0xf]
    %v1917 = vld [vmem:[%s1912 + $0x10] sm:$0xf]
    %v1918 = vld [vmem:[%s1912 + $0x14] sm:$0xf]
    %v1919 = vld [vmem:[%s1912 + $0x18] sm:$0xf]
    %v1920 = vld [vmem:[%s1912 + $0x1c] sm:$0xf]
    %v1921 = vld [vmem:[%s1912 + $0x20] sm:$0xf]
    %v1922 = vld [vmem:[%s1912 + $0x24] sm:$0xf]
    %v1923 = vld [vmem:[%s1912 + $0x28] sm:$0xf]
    %v1924 = vld [vmem:[%s1912 + $0x2c] sm:$0xf]
    %v1925 = vld [vmem:[%s1912 + $0x30] sm:$0xf]
    %v1926 = vld [vmem:[%s1912 + $0x34] sm:$0xf]
    %v1927 = vld [vmem:[%s1912 + $0x38] sm:$0xf]
    %v1928 = vld [vmem:[%s1912 + $0x3c] sm:$0xf]
    %v1930 = vshrl.u32 %v1910, 16
    %v1932 = vrot.slane %v1930, 3
    %v1933 = vshll.u32 %v1910, 16
    %v1935 = vrot.slane %v1933, 4
    %v1936 = vor.u32 %v1932, %v1935
    %v1938 = vshrl.u32 %v1888, 16
    %v1940 = vrot.slane %v1938, 3
    %v1941 = vshll.u32 %v1888, 16
    %v1943 = vrot.slane %v1941, 4
    %v1944 = vor.u32 %v1940, %v1943
    %v1945 = vsel %vm237, %v1936, %v1944
    %v1947 = vshrl.u32 %v1889, 16
    %v1949 = vrot.slane %v1947, 3
    %v1950 = vshll.u32 %v1889, 16
    %v1952 = vrot.slane %v1950, 4
    %v1953 = vor.u32 %v1949, %v1952
    %v1954 = vsel %vm237, %v1944, %v1953
    %v1956 = vshrl.u32 %v1890, 16
    %v1958 = vrot.slane %v1956, 3
    %v1959 = vshll.u32 %v1890, 16
    %v1961 = vrot.slane %v1959, 4
    %v1962 = vor.u32 %v1958, %v1961
    %v1963 = vsel %vm237, %v1953, %v1962
    %v1965 = vshrl.u32 %v1911, 16
    %v1967 = vrot.slane %v1965, 3
    %v1968 = vshll.u32 %v1911, 16
    %v1970 = vrot.slane %v1968, 4
    %v1971 = vor.u32 %v1967, %v1970
    %v1972 = vsel %vm237, %v1962, %v1971
    %v1993 = vunpack.c.l.b16 %v1913
    %v1994 = vunpack.c.l.b16 %v1914
    %v1995 = vunpack.c.l.b16 %v1915
    %v1996 = vunpack.c.l.b16 %v1916
    %v1997 = vunpack.c.l.b16 %v1917
    %v1998 = vunpack.c.l.b16 %v1918
    %v1999 = vunpack.c.l.b16 %v1919
    %v2000 = vunpack.c.l.b16 %v1920
    %v2001 = vunpack.c.l.b16 %v1921
    %v2002 = vunpack.c.l.b16 %v1922
    %v2003 = vunpack.c.l.b16 %v1923
    %v2004 = vunpack.c.l.b16 %v1924
    %v2005 = vunpack.c.l.b16 %v1925
    %v2006 = vunpack.c.l.b16 %v1926
    %v2007 = vunpack.c.l.b16 %v1927
    %v2008 = vunpack.c.l.b16 %v1928
    %v2009 = vpack.c.b16 %v1994, %v1993
    %v2010 = vpack.c.b16 %v1996, %v1995
    %v2011 = vpack.c.b16 %v1998, %v1997
    %v2012 = vpack.c.b16 %v2000, %v1999
    %v2013 = vpack.c.b16 %v2002, %v2001
    %v2014 = vpack.c.b16 %v2004, %v2003
    %v2015 = vpack.c.b16 %v2006, %v2005
    %v2016 = vpack.c.b16 %v2008, %v2007
    %2025 = vmatprep.subr.bf16.mxu0 0
    %2026 = vmatpush1.bf16.msra.mxu0 %v2016
    %2027 = vmatprep.subr.bf16.mxu0 0
    %2028 = vmatpush1.bf16.msra.mxu0 %v2015
    %2029 = vmatprep.subr.bf16.mxu0 0
    %2030 = vmatpush1.bf16.msra.mxu0 %v2014
    %2031 = vmatprep.subr.bf16.mxu0 0
    %2032 = vmatpush1.bf16.msra.mxu0 %v2013
    %2033 = vmatprep.subr.bf16.mxu0 0
    %2034 = vmatpush1.bf16.msra.mxu0 %v2012
    %2035 = vmatprep.subr.bf16.mxu0 0
    %2036 = vmatpush1.bf16.msra.mxu0 %v2011
    %2037 = vmatprep.subr.bf16.mxu0 0
    %2038 = vmatpush1.bf16.msra.mxu0 %v2010
    %2039 = vmatprep.subr.bf16.mxu0 0
    %2040 = vmatpush1.bf16.msra.mxu0 %v2009
    %2041 = vmatprep.subr.bf16.mxu0 0
    %2042 = vmatpush2.bf16.msra.mxu0 0
    %2043 = vmatprep.subr.bf16.mxu0 0
    %2044 = vmatpush2.bf16.msra.mxu0 0
    %2045 = vmatprep.subr.bf16.mxu0 0
    %2046 = vmatpush2.bf16.msra.mxu0 0
    %2047 = vmatprep.subr.bf16.mxu0 0
    %2048 = vmatpush2.bf16.msra.mxu0 0
    %2049 = vmatprep.subr.bf16.mxu0 0
    %2050 = vmatpush2.bf16.msra.mxu0 0
    %2051 = vmatprep.subr.bf16.mxu0 0
    %2052 = vmatpush2.bf16.msra.mxu0 0
    %2053 = vmatprep.subr.bf16.mxu0 0
    %2054 = vmatpush2.bf16.msra.mxu0 0
    %2055 = vmatprep.subr.bf16.mxu0 0
    %2056 = vmatpush2.bf16.msra.mxu0 0
    %2057 = vmatprep.mubr.bf16.mxu0 0
    %2058 = vmatmul.mubr.bf16.gmra.mxu0 %v1945
    %v2059 = vpop.f32.mrf.mxu0
    %v2060 = vadd.f32 0.0, %v2059
    %v2061 = vpop.f32.mrf.mxu0
    %v2062 = vpop.f32.mrf.mxu0
    %v2063 = vadd.f32 0.0, %v2062
    %v2064 = vpop.f32.mrf.mxu0
    %2065 = vmatprep.mubr.bf16.mxu0 0
    %2066 = vmatmul.mubr.bf16.gmra.mxu0 %v1954
    %v2067 = vpop.f32.mrf.mxu0
    %v2068 = vpop.f32.mrf.mxu0
    %v2069 = vpop.f32.mrf.mxu0
    %v2070 = vpop.f32.mrf.mxu0
    %2071 = vmatprep.mubr.bf16.mxu0 0
    %2072 = vmatmul.mubr.bf16.gmra.mxu0 %v1963
    %v2073 = vpop.f32.mrf.mxu0
    %v2074 = vadd.f32 0.0, %v2073
    %v2075 = vpop.f32.mrf.mxu0
    %v2076 = vpop.f32.mrf.mxu0
    %v2077 = vadd.f32 0.0, %v2076
    %v2078 = vpop.f32.mrf.mxu0
    %2079 = vmatprep.mubr.bf16.mxu0 0
    %2080 = vmatmul.mubr.bf16.gmra.mxu0 %v1972
    %v2081 = vpop.f32.mrf.mxu0
    %v2082 = vpop.f32.mrf.mxu0
    %v2083 = vpop.f32.mrf.mxu0
    %v2084 = vpop.f32.mrf.mxu0
    %2085 = vdwg.mxu0
    %v2091 = vrot.slane %v1887, 3
    %v2092 = vrot.slane %v1888, 3
    %v2093 = vsel %vm400, %v2091, %v2092
    %v2094 = vrot.slane %v1889, 3
    %v2095 = vsel %vm400, %v2092, %v2094
    %v2096 = vrot.slane %v1890, 3
    %v2097 = vsel %vm400, %v2094, %v2096
    %v2098 = vrot.slane %v1891, 3
    %v2099 = vsel %vm400, %v2096, %v2098
    %v2120 = vunpack.c.l.b16 %v1892
    %v2121 = vunpack.c.l.b16 %v1893
    %v2122 = vunpack.c.l.b16 %v1894
    %v2123 = vunpack.c.l.b16 %v1895
    %v2124 = vunpack.c.l.b16 %v1896
    %v2125 = vunpack.c.l.b16 %v1897
    %v2126 = vunpack.c.l.b16 %v1898
    %v2127 = vunpack.c.l.b16 %v1899
    %v2128 = vunpack.c.l.b16 %v1900
    %v2129 = vunpack.c.l.b16 %v1901
    %v2130 = vunpack.c.l.b16 %v1902
    %v2131 = vunpack.c.l.b16 %v1903
    %v2132 = vunpack.c.l.b16 %v1904
    %v2133 = vunpack.c.l.b16 %v1905
    %v2134 = vunpack.c.l.b16 %v1906
    %v2135 = vunpack.c.l.b16 %v1907
    %v2136 = vpack.c.b16 %v2121, %v2120
    %v2137 = vpack.c.b16 %v2123, %v2122
    %v2138 = vpack.c.b16 %v2125, %v2124
    %v2139 = vpack.c.b16 %v2127, %v2126
    %v2140 = vpack.c.b16 %v2129, %v2128
    %v2141 = vpack.c.b16 %v2131, %v2130
    %v2142 = vpack.c.b16 %v2133, %v2132
    %v2143 = vpack.c.b16 %v2135, %v2134
    %2152 = vmatprep.subr.bf16.mxu0 0
    %2153 = vmatpush1.bf16.msra.mxu0 %v2143
    %2154 = vmatprep.subr.bf16.mxu0 0
    %2155 = vmatpush1.bf16.msra.mxu0 %v2142
    %2156 = vmatprep.subr.bf16.mxu0 0
    %2157 = vmatpush1.bf16.msra.mxu0 %v2141
    %2158 = vmatprep.subr.bf16.mxu0 0
    %2159 = vmatpush1.bf16.msra.mxu0 %v2140
    %2160 = vmatprep.subr.bf16.mxu0 0
    %2161 = vmatpush1.bf16.msra.mxu0 %v2139
    %2162 = vmatprep.subr.bf16.mxu0 0
    %2163 = vmatpush1.bf16.msra.mxu0 %v2138
    %2164 = vmatprep.subr.bf16.mxu0 0
    %2165 = vmatpush1.bf16.msra.mxu0 %v2137
    %2166 = vmatprep.subr.bf16.mxu0 0
    %2167 = vmatpush1.bf16.msra.mxu0 %v2136
    %2168 = vmatprep.subr.bf16.mxu0 0
    %2169 = vmatpush2.bf16.msra.mxu0 0
    %2170 = vmatprep.subr.bf16.mxu0 0
    %2171 = vmatpush2.bf16.msra.mxu0 0
    %2172 = vmatprep.subr.bf16.mxu0 0
    %2173 = vmatpush2.bf16.msra.mxu0 0
    %2174 = vmatprep.subr.bf16.mxu0 0
    %2175 = vmatpush2.bf16.msra.mxu0 0
    %2176 = vmatprep.subr.bf16.mxu0 0
    %2177 = vmatpush2.bf16.msra.mxu0 0
    %2178 = vmatprep.subr.bf16.mxu0 0
    %2179 = vmatpush2.bf16.msra.mxu0 0
    %2180 = vmatprep.subr.bf16.mxu0 0
    %2181 = vmatpush2.bf16.msra.mxu0 0
    %2182 = vmatprep.subr.bf16.mxu0 0
    %2183 = vmatpush2.bf16.msra.mxu0 0
    %2184 = vmatprep.mubr.bf16.mxu0 0
    %2185 = vmatmul.mubr.bf16.gmra.mxu0 %v2093
    %v2186 = vpop.f32.mrf.mxu0
    %v2187 = vadd.f32 %v2060, %v2186
    %v2188 = vpop.f32.mrf.mxu0
    %v2189 = vpop.f32.mrf.mxu0
    %v2190 = vadd.f32 %v2063, %v2189
    %v2191 = vpop.f32.mrf.mxu0
    %2192 = vmatprep.mubr.bf16.mxu0 0
    %2193 = vmatmul.mubr.bf16.gmra.mxu0 %v2095
    %v2194 = vpop.f32.mrf.mxu0
    %v2195 = vpop.f32.mrf.mxu0
    %v2196 = vpop.f32.mrf.mxu0
    %v2197 = vpop.f32.mrf.mxu0
    %2198 = vmatprep.mubr.bf16.mxu0 0
    %2199 = vmatmul.mubr.bf16.gmra.mxu0 %v2097
    %v2200 = vpop.f32.mrf.mxu0
    %v2201 = vadd.f32 %v2074, %v2200
    %v2202 = vpop.f32.mrf.mxu0
    %v2203 = vpop.f32.mrf.mxu0
    %v2204 = vadd.f32 %v2077, %v2203
    %v2205 = vpop.f32.mrf.mxu0
    %2206 = vmatprep.mubr.bf16.mxu0 0
    %2207 = vmatmul.mubr.bf16.gmra.mxu0 %v2099
    %v2208 = vpop.f32.mrf.mxu0
    %v2209 = vpop.f32.mrf.mxu0
    %v2210 = vpop.f32.mrf.mxu0
    %v2211 = vpop.f32.mrf.mxu0
    %2212 = vdwg.mxu0
    %v2213 = vld [vmem:[#allocation2 + $0x80] sm:$0xff]
    %v2214 = vpack.c.bf16 %v1880, %v1879
    %v2215 = vpack.c.bf16 %v1882, %v1881
    %v2216 = vpack.c.bf16 %v1884, %v1883
    %v2217 = vpack.c.bf16 %v2213, %v1885
    %s2218 = scalar_lea.vmem [#allocation10], 128
    %v2219 = vld [vmem:[%s2218] sm:$0xf]
    %v2220 = vld [vmem:[%s2218 + $0x4] sm:$0xf]
    %v2221 = vld [vmem:[%s2218 + $0x8] sm:$0xf]
    %v2222 = vld [vmem:[%s2218 + $0xc] sm:$0xf]
    %v2223 = vld [vmem:[%s2218 + $0x10] sm:$0xf]
    %v2224 = vld [vmem:[%s2218 + $0x14] sm:$0xf]
    %v2225 = vld [vmem:[%s2218 + $0x18] sm:$0xf]
    %v2226 = vld [vmem:[%s2218 + $0x1c] sm:$0xf]
    %v2227 = vld [vmem:[%s2218 + $0x20] sm:$0xf]
    %v2228 = vld [vmem:[%s2218 + $0x24] sm:$0xf]
    %v2229 = vld [vmem:[%s2218 + $0x28] sm:$0xf]
    %v2230 = vld [vmem:[%s2218 + $0x2c] sm:$0xf]
    %v2231 = vld [vmem:[%s2218 + $0x30] sm:$0xf]
    %v2232 = vld [vmem:[%s2218 + $0x34] sm:$0xf]
    %v2233 = vld [vmem:[%s2218 + $0x38] sm:$0xf]
    %v2234 = vld [vmem:[%s2218 + $0x3c] sm:$0xf]
    %v2251 = vunpack.c.l.b16 %v2219
    %v2252 = vunpack.c.l.b16 %v2220
    %v2253 = vunpack.c.l.b16 %v2221
    %v2254 = vunpack.c.l.b16 %v2222
    %v2255 = vunpack.c.l.b16 %v2223
    %v2256 = vunpack.c.l.b16 %v2224
    %v2257 = vunpack.c.l.b16 %v2225
    %v2258 = vunpack.c.l.b16 %v2226
    %v2259 = vunpack.c.l.b16 %v2227
    %v2260 = vunpack.c.l.b16 %v2228
    %v2261 = vunpack.c.l.b16 %v2229
    %v2262 = vunpack.c.l.b16 %v2230
    %v2263 = vunpack.c.l.b16 %v2231
    %v2264 = vunpack.c.l.b16 %v2232
    %v2265 = vunpack.c.l.b16 %v2233
    %v2266 = vunpack.c.l.b16 %v2234
    %v2267 = vpack.c.b16 %v2252, %v2251
    %v2268 = vpack.c.b16 %v2254, %v2253
    %v2269 = vpack.c.b16 %v2256, %v2255
    %v2270 = vpack.c.b16 %v2258, %v2257
    %v2271 = vpack.c.b16 %v2260, %v2259
    %v2272 = vpack.c.b16 %v2262, %v2261
    %v2273 = vpack.c.b16 %v2264, %v2263
    %v2274 = vpack.c.b16 %v2266, %v2265
    %2283 = vmatprep.subr.bf16.mxu0 0
    %2284 = vmatpush1.bf16.msra.mxu0 %v2274
    %2285 = vmatprep.subr.bf16.mxu0 0
    %2286 = vmatpush1.bf16.msra.mxu0 %v2273
    %2287 = vmatprep.subr.bf16.mxu0 0
    %2288 = vmatpush1.bf16.msra.mxu0 %v2272
    %2289 = vmatprep.subr.bf16.mxu0 0
    %2290 = vmatpush1.bf16.msra.mxu0 %v2271
    %2291 = vmatprep.subr.bf16.mxu0 0
    %2292 = vmatpush1.bf16.msra.mxu0 %v2270
    %2293 = vmatprep.subr.bf16.mxu0 0
    %2294 = vmatpush1.bf16.msra.mxu0 %v2269
    %2295 = vmatprep.subr.bf16.mxu0 0
    %2296 = vmatpush1.bf16.msra.mxu0 %v2268
    %2297 = vmatprep.subr.bf16.mxu0 0
    %2298 = vmatpush1.bf16.msra.mxu0 %v2267
    %2299 = vmatprep.subr.bf16.mxu0 0
    %2300 = vmatpush2.bf16.msra.mxu0 0
    %2301 = vmatprep.subr.bf16.mxu0 0
    %2302 = vmatpush2.bf16.msra.mxu0 0
    %2303 = vmatprep.subr.bf16.mxu0 0
    %2304 = vmatpush2.bf16.msra.mxu0 0
    %2305 = vmatprep.subr.bf16.mxu0 0
    %2306 = vmatpush2.bf16.msra.mxu0 0
    %2307 = vmatprep.subr.bf16.mxu0 0
    %2308 = vmatpush2.bf16.msra.mxu0 0
    %2309 = vmatprep.subr.bf16.mxu0 0
    %2310 = vmatpush2.bf16.msra.mxu0 0
    %2311 = vmatprep.subr.bf16.mxu0 0
    %2312 = vmatpush2.bf16.msra.mxu0 0
    %2313 = vmatprep.subr.bf16.mxu0 0
    %2314 = vmatpush2.bf16.msra.mxu0 0
    %2315 = vmatprep.mubr.bf16.mxu0 0
    %2316 = vmatmul.mubr.bf16.gmra.mxu0 %v2214
    %v2317 = vpop.f32.mrf.mxu0
    %v2318 = vadd.f32 0.0, %v2317
    %v2319 = vpop.f32.mrf.mxu0
    %v2320 = vpop.f32.mrf.mxu0
    %v2321 = vadd.f32 0.0, %v2320
    %v2322 = vpop.f32.mrf.mxu0
    %2323 = vmatprep.mubr.bf16.mxu0 0
    %2324 = vmatmul.mubr.bf16.gmra.mxu0 %v2215
    %v2325 = vpop.f32.mrf.mxu0
    %v2326 = vpop.f32.mrf.mxu0
    %v2327 = vpop.f32.mrf.mxu0
    %v2328 = vpop.f32.mrf.mxu0
    %2329 = vmatprep.mubr.bf16.mxu0 0
    %2330 = vmatmul.mubr.bf16.gmra.mxu0 %v2216
    %v2331 = vpop.f32.mrf.mxu0
    %v2332 = vadd.f32 0.0, %v2331
    %v2333 = vpop.f32.mrf.mxu0
    %v2334 = vpop.f32.mrf.mxu0
    %v2335 = vadd.f32 0.0, %v2334
    %v2336 = vpop.f32.mrf.mxu0
    %2337 = vmatprep.mubr.bf16.mxu0 0
    %2338 = vmatmul.mubr.bf16.gmra.mxu0 %v2217
    %v2339 = vpop.f32.mrf.mxu0
    %v2340 = vpop.f32.mrf.mxu0
    %v2341 = vpop.f32.mrf.mxu0
    %v2342 = vpop.f32.mrf.mxu0
    %2343 = vdwg.mxu0
    %v2344 = vadd.f32 %v2187, %v2318
    %v2345 = vadd.f32 %v2190, %v2321
    %v2346 = vadd.f32 %v2201, %v2332
    %v2347 = vadd.f32 %v2204, %v2335
    %v2348 = vld [vmem:[#allocation2 + $0x10] sm:$0xfe]
    %v2349 = vld [vmem:[#allocation2 + $0x20] sm:$0xff]
    %v2350 = vld [vmem:[#allocation2 + $0x30] sm:$0xff]
    %v2351 = vld [vmem:[#allocation2 + $0x40] sm:$0xff]
    %v2352 = vld [vmem:[#allocation2 + $0x50] sm:$0xff]
    %v2353 = vld [vmem:[#allocation2 + $0x60] sm:$0xff]
    %v2354 = vld [vmem:[#allocation2 + $0x70] sm:$0xff]
    %v2355 = vld [vmem:[#allocation2 + $0x80] sm:$0xff]
    %v2356 = vld [vmem:[#allocation2 + $0x90] sm:$0x1]
    %v2357 = vpack.c.bf16 %v2349, %v2348
    %v2358 = vpack.c.bf16 %v2351, %v2350
    %v2359 = vpack.c.bf16 %v2353, %v2352
    %v2360 = vpack.c.bf16 %v2355, %v2354
    %v2361 = vpack.c.bf16 %v2356, %v2356
    %s2362 = scalar_lea.vmem [#allocation10], 192
    %v2363 = vld [vmem:[%s2362] sm:$0xf]
    %v2364 = vld [vmem:[%s2362 + $0x4] sm:$0xf]
    %v2365 = vld [vmem:[%s2362 + $0x8] sm:$0xf]
    %v2366 = vld [vmem:[%s2362 + $0xc] sm:$0xf]
    %v2367 = vld [vmem:[%s2362 + $0x10] sm:$0xf]
    %v2368 = vld [vmem:[%s2362 + $0x14] sm:$0xf]
    %v2369 = vld [vmem:[%s2362 + $0x18] sm:$0xf]
    %v2370 = vld [vmem:[%s2362 + $0x1c] sm:$0xf]
    %v2371 = vld [vmem:[%s2362 + $0x20] sm:$0xf]
    %v2372 = vld [vmem:[%s2362 + $0x24] sm:$0xf]
    %v2373 = vld [vmem:[%s2362 + $0x28] sm:$0xf]
    %v2374 = vld [vmem:[%s2362 + $0x2c] sm:$0xf]
    %v2375 = vld [vmem:[%s2362 + $0x30] sm:$0xf]
    %v2376 = vld [vmem:[%s2362 + $0x34] sm:$0xf]
    %v2377 = vld [vmem:[%s2362 + $0x38] sm:$0xf]
    %v2378 = vld [vmem:[%s2362 + $0x3c] sm:$0xf]
    %v2380 = vshrl.u32 %v2357, 16
    %v2382 = vshll.u32 %v2357, 16
    %v2384 = vrot.slane %v2382, 1
    %v2385 = vor.u32 %v2380, %v2384
    %v2387 = vshll.u32 %v2358, 16
    %v2389 = vrot.slane %v2387, 1
    %v2390 = vsel %vm689, %v2385, %v2389
    %v2391 = vshrl.u32 %v2358, 16
    %v2393 = vor.u32 %v2391, %v2389
    %v2395 = vshll.u32 %v2359, 16
    %v2397 = vrot.slane %v2395, 1
    %v2398 = vsel %vm689, %v2393, %v2397
    %v2399 = vshrl.u32 %v2359, 16
    %v2401 = vor.u32 %v2399, %v2397
    %v2403 = vshll.u32 %v2360, 16
    %v2405 = vrot.slane %v2403, 1
    %v2406 = vsel %vm689, %v2401, %v2405
    %v2407 = vshrl.u32 %v2360, 16
    %v2409 = vor.u32 %v2407, %v2405
    %v2411 = vshll.u32 %v2361, 16
    %v2413 = vrot.slane %v2411, 1
    %v2414 = vsel %vm689, %v2409, %v2413
    %v2435 = vunpack.c.l.b16 %v2363
    %v2436 = vunpack.c.l.b16 %v2364
    %v2437 = vunpack.c.l.b16 %v2365
    %v2438 = vunpack.c.l.b16 %v2366
    %v2439 = vunpack.c.l.b16 %v2367
    %v2440 = vunpack.c.l.b16 %v2368
    %v2441 = vunpack.c.l.b16 %v2369
    %v2442 = vunpack.c.l.b16 %v2370
    %v2443 = vunpack.c.l.b16 %v2371
    %v2444 = vunpack.c.l.b16 %v2372
    %v2445 = vunpack.c.l.b16 %v2373
    %v2446 = vunpack.c.l.b16 %v2374
    %v2447 = vunpack.c.l.b16 %v2375
    %v2448 = vunpack.c.l.b16 %v2376
    %v2449 = vunpack.c.l.b16 %v2377
    %v2450 = vunpack.c.l.b16 %v2378
    %v2451 = vpack.c.b16 %v2436, %v2435
    %v2452 = vpack.c.b16 %v2438, %v2437
    %v2453 = vpack.c.b16 %v2440, %v2439
    %v2454 = vpack.c.b16 %v2442, %v2441
    %v2455 = vpack.c.b16 %v2444, %v2443
    %v2456 = vpack.c.b16 %v2446, %v2445
    %v2457 = vpack.c.b16 %v2448, %v2447
    %v2458 = vpack.c.b16 %v2450, %v2449
    %2467 = vmatprep.subr.bf16.mxu0 0
    %2468 = vmatpush1.bf16.msra.mxu0 %v2458
    %2469 = vmatprep.subr.bf16.mxu0 0
    %2470 = vmatpush1.bf16.msra.mxu0 %v2457
    %2471 = vmatprep.subr.bf16.mxu0 0
    %2472 = vmatpush1.bf16.msra.mxu0 %v2456
    %2473 = vmatprep.subr.bf16.mxu0 0
    %2474 = vmatpush1.bf16.msra.mxu0 %v2455
    %2475 = vmatprep.subr.bf16.mxu0 0
    %2476 = vmatpush1.bf16.msra.mxu0 %v2454
    %2477 = vmatprep.subr.bf16.mxu0 0
    %2478 = vmatpush1.bf16.msra.mxu0 %v2453
    %2479 = vmatprep.subr.bf16.mxu0 0
    %2480 = vmatpush1.bf16.msra.mxu0 %v2452
    %2481 = vmatprep.subr.bf16.mxu0 0
    %2482 = vmatpush1.bf16.msra.mxu0 %v2451
    %2483 = vmatprep.subr.bf16.mxu0 0
    %2484 = vmatpush2.bf16.msra.mxu0 0
    %2485 = vmatprep.subr.bf16.mxu0 0
    %2486 = vmatpush2.bf16.msra.mxu0 0
    %2487 = vmatprep.subr.bf16.mxu0 0
    %2488 = vmatpush2.bf16.msra.mxu0 0
    %2489 = vmatprep.subr.bf16.mxu0 0
    %2490 = vmatpush2.bf16.msra.mxu0 0
    %2491 = vmatprep.subr.bf16.mxu0 0
    %2492 = vmatpush2.bf16.msra.mxu0 0
    %2493 = vmatprep.subr.bf16.mxu0 0
    %2494 = vmatpush2.bf16.msra.mxu0 0
    %2495 = vmatprep.subr.bf16.mxu0 0
    %2496 = vmatpush2.bf16.msra.mxu0 0
    %2497 = vmatprep.subr.bf16.mxu0 0
    %2498 = vmatpush2.bf16.msra.mxu0 0
    %2499 = vmatprep.mubr.bf16.mxu0 0
    %2500 = vmatmul.mubr.bf16.gmra.mxu0 %v2390
    %v2501 = vpop.f32.mrf.mxu0
    %v2502 = vadd.f32 0.0, %v2501
    %v2503 = vpop.f32.mrf.mxu0
    %v2504 = vpop.f32.mrf.mxu0
    %v2505 = vadd.f32 0.0, %v2504
    %v2506 = vpop.f32.mrf.mxu0
    %2507 = vmatprep.mubr.bf16.mxu0 0
    %2508 = vmatmul.mubr.bf16.gmra.mxu0 %v2398
    %v2509 = vpop.f32.mrf.mxu0
    %v2510 = vpop.f32.mrf.mxu0
    %v2511 = vpop.f32.mrf.mxu0
    %v2512 = vpop.f32.mrf.mxu0
    %2513 = vmatprep.mubr.bf16.mxu0 0
    %2514 = vmatmul.mubr.bf16.gmra.mxu0 %v2406
    %v2515 = vpop.f32.mrf.mxu0
    %v2516 = vadd.f32 0.0, %v2515
    %v2517 = vpop.f32.mrf.mxu0
    %v2518 = vpop.f32.mrf.mxu0
    %v2519 = vadd.f32 0.0, %v2518
    %v2520 = vpop.f32.mrf.mxu0
    %2521 = vmatprep.mubr.bf16.mxu0 0
    %2522 = vmatmul.mubr.bf16.gmra.mxu0 %v2414
    %v2523 = vpop.f32.mrf.mxu0
    %v2524 = vpop.f32.mrf.mxu0
    %v2525 = vpop.f32.mrf.mxu0
    %v2526 = vpop.f32.mrf.mxu0
    %2527 = vdwg.mxu0
    %v2528 = vadd.f32 %v2344, %v2502
    %v2529 = vadd.f32 %v2345, %v2505
    %v2530 = vadd.f32 %v2346, %v2516
    %v2531 = vadd.f32 %v2347, %v2519
    %v2532 = vld [vmem:[#allocation2 + $0x10] sm:$0xfc]
    %v2533 = vld [vmem:[#allocation2 + $0x90] sm:$0x3]
    %v2534 = vpack.c.bf16 %v2349, %v2532
    %v2535 = vpack.c.bf16 %v2533, %v2533
    %s2536 = scalar_lea.vmem [#allocation10], 256
    %v2537 = vld [vmem:[%s2536] sm:$0xf]
    %v2538 = vld [vmem:[%s2536 + $0x4] sm:$0xf]
    %v2539 = vld [vmem:[%s2536 + $0x8] sm:$0xf]
    %v2540 = vld [vmem:[%s2536 + $0xc] sm:$0xf]
    %v2541 = vld [vmem:[%s2536 + $0x10] sm:$0xf]
    %v2542 = vld [vmem:[%s2536 + $0x14] sm:$0xf]
    %v2543 = vld [vmem:[%s2536 + $0x18] sm:$0xf]
    %v2544 = vld [vmem:[%s2536 + $0x1c] sm:$0xf]
    %v2545 = vld [vmem:[%s2536 + $0x20] sm:$0xf]
    %v2546 = vld [vmem:[%s2536 + $0x24] sm:$0xf]
    %v2547 = vld [vmem:[%s2536 + $0x28] sm:$0xf]
    %v2548 = vld [vmem:[%s2536 + $0x2c] sm:$0xf]
    %v2549 = vld [vmem:[%s2536 + $0x30] sm:$0xf]
    %v2550 = vld [vmem:[%s2536 + $0x34] sm:$0xf]
    %v2551 = vld [vmem:[%s2536 + $0x38] sm:$0xf]
    %v2552 = vld [vmem:[%s2536 + $0x3c] sm:$0xf]
    %v2558 = vrot.slane %v2534, 1
    %v2559 = vrot.slane %v2358, 1
    %v2560 = vsel %vm869, %v2558, %v2559
    %v2561 = vrot.slane %v2359, 1
    %v2562 = vsel %vm869, %v2559, %v2561
    %v2563 = vrot.slane %v2360, 1
    %v2564 = vsel %vm869, %v2561, %v2563
    %v2565 = vrot.slane %v2535, 1
    %v2566 = vsel %vm869, %v2563, %v2565
    %v2587 = vunpack.c.l.b16 %v2537
    %v2588 = vunpack.c.l.b16 %v2538
    %v2589 = vunpack.c.l.b16 %v2539
    %v2590 = vunpack.c.l.b16 %v2540
    %v2591 = vunpack.c.l.b16 %v2541
    %v2592 = vunpack.c.l.b16 %v2542
    %v2593 = vunpack.c.l.b16 %v2543
    %v2594 = vunpack.c.l.b16 %v2544
    %v2595 = vunpack.c.l.b16 %v2545
    %v2596 = vunpack.c.l.b16 %v2546
    %v2597 = vunpack.c.l.b16 %v2547
    %v2598 = vunpack.c.l.b16 %v2548
    %v2599 = vunpack.c.l.b16 %v2549
    %v2600 = vunpack.c.l.b16 %v2550
    %v2601 = vunpack.c.l.b16 %v2551
    %v2602 = vunpack.c.l.b16 %v2552
    %v2603 = vpack.c.b16 %v2588, %v2587
    %v2604 = vpack.c.b16 %v2590, %v2589
    %v2605 = vpack.c.b16 %v2592, %v2591
    %v2606 = vpack.c.b16 %v2594, %v2593
    %v2607 = vpack.c.b16 %v2596, %v2595
    %v2608 = vpack.c.b16 %v2598, %v2597
    %v2609 = vpack.c.b16 %v2600, %v2599
    %v2610 = vpack.c.b16 %v2602, %v2601
    %2619 = vmatprep.subr.bf16.mxu0 0
    %2620 = vmatpush1.bf16.msra.mxu0 %v2610
    %2621 = vmatprep.subr.bf16.mxu0 0
    %2622 = vmatpush1.bf16.msra.mxu0 %v2609
    %2623 = vmatprep.subr.bf16.mxu0 0
    %2624 = vmatpush1.bf16.msra.mxu0 %v2608
    %2625 = vmatprep.subr.bf16.mxu0 0
    %2626 = vmatpush1.bf16.msra.mxu0 %v2607
    %2627 = vmatprep.subr.bf16.mxu0 0
    %2628 = vmatpush1.bf16.msra.mxu0 %v2606
    %2629 = vmatprep.subr.bf16.mxu0 0
    %2630 = vmatpush1.bf16.msra.mxu0 %v2605
    %2631 = vmatprep.subr.bf16.mxu0 0
    %2632 = vmatpush1.bf16.msra.mxu0 %v2604
    %2633 = vmatprep.subr.bf16.mxu0 0
    %2634 = vmatpush1.bf16.msra.mxu0 %v2603
    %2635 = vmatprep.subr.bf16.mxu0 0
    %2636 = vmatpush2.bf16.msra.mxu0 0
    %2637 = vmatprep.subr.bf16.mxu0 0
    %2638 = vmatpush2.bf16.msra.mxu0 0
    %2639 = vmatprep.subr.bf16.mxu0 0
    %2640 = vmatpush2.bf16.msra.mxu0 0
    %2641 = vmatprep.subr.bf16.mxu0 0
    %2642 = vmatpush2.bf16.msra.mxu0 0
    %2643 = vmatprep.subr.bf16.mxu0 0
    %2644 = vmatpush2.bf16.msra.mxu0 0
    %2645 = vmatprep.subr.bf16.mxu0 0
    %2646 = vmatpush2.bf16.msra.mxu0 0
    %2647 = vmatprep.subr.bf16.mxu0 0
    %2648 = vmatpush2.bf16.msra.mxu0 0
    %2649 = vmatprep.subr.bf16.mxu0 0
    %2650 = vmatpush2.bf16.msra.mxu0 0
    %2651 = vmatprep.mubr.bf16.mxu0 0
    %2652 = vmatmul.mubr.bf16.gmra.mxu0 %v2560
    %v2653 = vpop.f32.mrf.mxu0
    %v2654 = vadd.f32 0.0, %v2653
    %v2655 = vpop.f32.mrf.mxu0
    %v2656 = vpop.f32.mrf.mxu0
    %v2657 = vadd.f32 0.0, %v2656
    %v2658 = vpop.f32.mrf.mxu0
    %2659 = vmatprep.mubr.bf16.mxu0 0
    %2660 = vmatmul.mubr.bf16.gmra.mxu0 %v2562
    %v2661 = vpop.f32.mrf.mxu0
    %v2662 = vpop.f32.mrf.mxu0
    %v2663 = vpop.f32.mrf.mxu0
    %v2664 = vpop.f32.mrf.mxu0
    %2665 = vmatprep.mubr.bf16.mxu0 0
    %2666 = vmatmul.mubr.bf16.gmra.mxu0 %v2564
    %v2667 = vpop.f32.mrf.mxu0
    %v2668 = vadd.f32 0.0, %v2667
    %v2669 = vpop.f32.mrf.mxu0
    %v2670 = vpop.f32.mrf.mxu0
    %v2671 = vadd.f32 0.0, %v2670
    %v2672 = vpop.f32.mrf.mxu0
    %2673 = vmatprep.mubr.bf16.mxu0 0
    %2674 = vmatmul.mubr.bf16.gmra.mxu0 %v2566
    %v2675 = vpop.f32.mrf.mxu0
    %v2676 = vpop.f32.mrf.mxu0
    %v2677 = vpop.f32.mrf.mxu0
    %v2678 = vpop.f32.mrf.mxu0
    %2679 = vdwg.mxu0
    %v2680 = vadd.f32 %v2528, %v2654
    %v2681 = vadd.f32 %v2529, %v2657
    %v2682 = vadd.f32 %v2530, %v2668
    %v2683 = vadd.f32 %v2531, %v2671
    %v2684 = vld [vmem:[%s8] sm:$0x1]
    %v2686 = vlaneseq
    %v2687 = vshrl.u32 %v2686, 7
    %v2688 = vsub.s32 0, %v2687
    %v2689 = vrot.slane %v2684, %v2688
    %v2691 = vmul.f32 %v2680, %v2689
    %v2692 = vmul.f32 %v2681, %v2689
    %v2693 = vmul.f32 %v2682, %v2689
    %v2694 = vmul.f32 %v2683, %v2689
    %v2695 = vld [vmem:[%s9] sm:$0x1]
    %v2697 = vlaneseq
    %v2698 = vshrl.u32 %v2697, 7
    %v2699 = vsub.s32 0, %v2698
    %v2700 = vrot.slane %v2695, %v2699
    %v2702 = vadd.f32 %v2691, %v2700
    %v2703 = vadd.f32 %v2692, %v2700
    %v2704 = vadd.f32 %v2693, %v2700
    %v2705 = vadd.f32 %v2694, %v2700
    %vm2706 = vcmp.ge.f32.partialorder %v2702, 0.0
    %vm2707 = vcmp.ge.f32.partialorder %v2703, 0.0
    %vm2708 = vcmp.ge.f32.partialorder %v2704, 0.0
    %vm2709 = vcmp.ge.f32.partialorder %v2705, 0.0
    %v2710 = vmul.f32 %v2702, 0.01
    %v2711 = vmul.f32 %v2703, 0.01
    %v2712 = vmul.f32 %v2704, 0.01
    %v2713 = vmul.f32 %v2705, 0.01
    %v2714 = vsel %vm2706, %v2702, %v2710
    %v2715 = vsel %vm2707, %v2703, %v2711
    %v2716 = vsel %vm2708, %v2704, %v2712
    %v2717 = vsel %vm2709, %v2705, %v2713
    %2718 = vst [vmem:[#allocation2 + $0x10] sm:$0xff] %v2714
    %2719 = vst [vmem:[#allocation2 + $0x20] sm:$0xff] %v2715
    %2720 = vst [vmem:[#allocation2 + $0x50] sm:$0xff] %v2716
    %2721 = vst [vmem:[#allocation2 + $0x60] sm:$0xff] %v2717
    %v2722 = vld [vmem:[#allocation2] sm:$0xc0]
    %v2723 = vld [vmem:[#allocation2 + $0x10] sm:$0xff]
    %v2724 = vld [vmem:[#allocation2 + $0x20] sm:$0xff]
    %v2725 = vld [vmem:[#allocation2 + $0x30] sm:$0xff]
    %v2726 = vld [vmem:[#allocation2 + $0x40] sm:$0xff]
    %v2727 = vld [vmem:[#allocation2 + $0x50] sm:$0xff]
    %v2728 = vld [vmem:[#allocation2 + $0x60] sm:$0xff]
    %v2729 = vld [vmem:[#allocation2 + $0x70] sm:$0xff]
    %v2730 = vld [vmem:[#allocation2 + $0x80] sm:$0x3f]
    %v2731 = vpack.c.bf16 %v2723, %v2722
    %v2732 = vpack.c.bf16 %v2725, %v2724
    %v2733 = vpack.c.bf16 %v2727, %v2726
    %v2734 = vpack.c.bf16 %v2729, %v2728
    %v2735 = vpack.c.bf16 %v2730, %v2730
    %v2736 = vld [vmem:[#allocation11] sm:$0xf]
    %v2737 = vld [vmem:[#allocation11 + $0x4] sm:$0xf]
    %v2738 = vld [vmem:[#allocation11 + $0x8] sm:$0xf]
    %v2739 = vld [vmem:[#allocation11 + $0xc] sm:$0xf]
    %v2740 = vld [vmem:[#allocation11 + $0x10] sm:$0xf]
    %v2741 = vld [vmem:[#allocation11 + $0x14] sm:$0xf]
    %v2742 = vld [vmem:[#allocation11 + $0x18] sm:$0xf]
    %v2743 = vld [vmem:[#allocation11 + $0x1c] sm:$0xf]
    %v2744 = vld [vmem:[#allocation11 + $0x20] sm:$0xf]
    %v2745 = vld [vmem:[#allocation11 + $0x24] sm:$0xf]
    %v2746 = vld [vmem:[#allocation11 + $0x28] sm:$0xf]
    %v2747 = vld [vmem:[#allocation11 + $0x2c] sm:$0xf]
    %v2748 = vld [vmem:[#allocation11 + $0x30] sm:$0xf]
    %v2749 = vld [vmem:[#allocation11 + $0x34] sm:$0xf]
    %v2750 = vld [vmem:[#allocation11 + $0x38] sm:$0xf]
    %v2751 = vld [vmem:[#allocation11 + $0x3c] sm:$0xf]
    %v2752 = vld [vmem:[#allocation2] sm:$0x80]
    %v2753 = vld [vmem:[#allocation2 + $0x80] sm:$0x7f]
    %v2754 = vpack.c.bf16 %v2723, %v2752
    %v2755 = vpack.c.bf16 %v2753, %v2753
    %s2756 = scalar_lea.vmem [#allocation11], 64
    %v2757 = vld [vmem:[%s2756] sm:$0xf]
    %v2758 = vld [vmem:[%s2756 + $0x4] sm:$0xf]
    %v2759 = vld [vmem:[%s2756 + $0x8] sm:$0xf]
    %v2760 = vld [vmem:[%s2756 + $0xc] sm:$0xf]
    %v2761 = vld [vmem:[%s2756 + $0x10] sm:$0xf]
    %v2762 = vld [vmem:[%s2756 + $0x14] sm:$0xf]
    %v2763 = vld [vmem:[%s2756 + $0x18] sm:$0xf]
    %v2764 = vld [vmem:[%s2756 + $0x1c] sm:$0xf]
    %v2765 = vld [vmem:[%s2756 + $0x20] sm:$0xf]
    %v2766 = vld [vmem:[%s2756 + $0x24] sm:$0xf]
    %v2767 = vld [vmem:[%s2756 + $0x28] sm:$0xf]
    %v2768 = vld [vmem:[%s2756 + $0x2c] sm:$0xf]
    %v2769 = vld [vmem:[%s2756 + $0x30] sm:$0xf]
    %v2770 = vld [vmem:[%s2756 + $0x34] sm:$0xf]
    %v2771 = vld [vmem:[%s2756 + $0x38] sm:$0xf]
    %v2772 = vld [vmem:[%s2756 + $0x3c] sm:$0xf]
    %v2774 = vshrl.u32 %v2754, 16
    %v2776 = vrot.slane %v2774, 3
    %v2777 = vshll.u32 %v2754, 16
    %v2779 = vrot.slane %v2777, 4
    %v2780 = vor.u32 %v2776, %v2779
    %v2782 = vshrl.u32 %v2732, 16
    %v2784 = vrot.slane %v2782, 3
    %v2785 = vshll.u32 %v2732, 16
    %v2787 = vrot.slane %v2785, 4
    %v2788 = vor.u32 %v2784, %v2787
    %v2789 = vsel %vm237, %v2780, %v2788
    %v2791 = vshrl.u32 %v2733, 16
    %v2793 = vrot.slane %v2791, 3
    %v2794 = vshll.u32 %v2733, 16
    %v2796 = vrot.slane %v2794, 4
    %v2797 = vor.u32 %v2793, %v2796
    %v2798 = vsel %vm237, %v2788, %v2797
    %v2800 = vshrl.u32 %v2734, 16
    %v2802 = vrot.slane %v2800, 3
    %v2803 = vshll.u32 %v2734, 16
    %v2805 = vrot.slane %v2803, 4
    %v2806 = vor.u32 %v2802, %v2805
    %v2807 = vsel %vm237, %v2797, %v2806
    %v2809 = vshrl.u32 %v2755, 16
    %v2811 = vrot.slane %v2809, 3
    %v2812 = vshll.u32 %v2755, 16
    %v2814 = vrot.slane %v2812, 4
    %v2815 = vor.u32 %v2811, %v2814
    %v2816 = vsel %vm237, %v2806, %v2815
    %v2837 = vunpack.c.l.b16 %v2757
    %v2838 = vunpack.c.l.b16 %v2758
    %v2839 = vunpack.c.l.b16 %v2759
    %v2840 = vunpack.c.l.b16 %v2760
    %v2841 = vunpack.c.l.b16 %v2761
    %v2842 = vunpack.c.l.b16 %v2762
    %v2843 = vunpack.c.l.b16 %v2763
    %v2844 = vunpack.c.l.b16 %v2764
    %v2845 = vunpack.c.l.b16 %v2765
    %v2846 = vunpack.c.l.b16 %v2766
    %v2847 = vunpack.c.l.b16 %v2767
    %v2848 = vunpack.c.l.b16 %v2768
    %v2849 = vunpack.c.l.b16 %v2769
    %v2850 = vunpack.c.l.b16 %v2770
    %v2851 = vunpack.c.l.b16 %v2771
    %v2852 = vunpack.c.l.b16 %v2772
    %v2853 = vpack.c.b16 %v2838, %v2837
    %v2854 = vpack.c.b16 %v2840, %v2839
    %v2855 = vpack.c.b16 %v2842, %v2841
    %v2856 = vpack.c.b16 %v2844, %v2843
    %v2857 = vpack.c.b16 %v2846, %v2845
    %v2858 = vpack.c.b16 %v2848, %v2847
    %v2859 = vpack.c.b16 %v2850, %v2849
    %v2860 = vpack.c.b16 %v2852, %v2851
    %2869 = vmatprep.subr.bf16.mxu0 0
    %2870 = vmatpush1.bf16.msra.mxu0 %v2860
    %2871 = vmatprep.subr.bf16.mxu0 0
    %2872 = vmatpush1.bf16.msra.mxu0 %v2859
    %2873 = vmatprep.subr.bf16.mxu0 0
    %2874 = vmatpush1.bf16.msra.mxu0 %v2858
    %2875 = vmatprep.subr.bf16.mxu0 0
    %2876 = vmatpush1.bf16.msra.mxu0 %v2857
    %2877 = vmatprep.subr.bf16.mxu0 0
    %2878 = vmatpush1.bf16.msra.mxu0 %v2856
    %2879 = vmatprep.subr.bf16.mxu0 0
    %2880 = vmatpush1.bf16.msra.mxu0 %v2855
    %2881 = vmatprep.subr.bf16.mxu0 0
    %2882 = vmatpush1.bf16.msra.mxu0 %v2854
    %2883 = vmatprep.subr.bf16.mxu0 0
    %2884 = vmatpush1.bf16.msra.mxu0 %v2853
    %2885 = vmatprep.subr.bf16.mxu0 0
    %2886 = vmatpush2.bf16.msra.mxu0 0
    %2887 = vmatprep.subr.bf16.mxu0 0
    %2888 = vmatpush2.bf16.msra.mxu0 0
    %2889 = vmatprep.subr.bf16.mxu0 0
    %2890 = vmatpush2.bf16.msra.mxu0 0
    %2891 = vmatprep.subr.bf16.mxu0 0
    %2892 = vmatpush2.bf16.msra.mxu0 0
    %2893 = vmatprep.subr.bf16.mxu0 0
    %2894 = vmatpush2.bf16.msra.mxu0 0
    %2895 = vmatprep.subr.bf16.mxu0 0
    %2896 = vmatpush2.bf16.msra.mxu0 0
    %2897 = vmatprep.subr.bf16.mxu0 0
    %2898 = vmatpush2.bf16.msra.mxu0 0
    %2899 = vmatprep.subr.bf16.mxu0 0
    %2900 = vmatpush2.bf16.msra.mxu0 0
    %2901 = vmatprep.mubr.bf16.mxu0 0
    %2902 = vmatmul.mubr.bf16.gmra.mxu0 %v2789
    %v2903 = vpop.f32.mrf.mxu0
    %v2904 = vadd.f32 0.0, %v2903
    %v2905 = vpop.f32.mrf.mxu0
    %v2906 = vpop.f32.mrf.mxu0
    %v2907 = vadd.f32 0.0, %v2906
    %v2908 = vpop.f32.mrf.mxu0
    %2909 = vmatprep.mubr.bf16.mxu0 0
    %2910 = vmatmul.mubr.bf16.gmra.mxu0 %v2798
    %v2911 = vpop.f32.mrf.mxu0
    %v2912 = vpop.f32.mrf.mxu0
    %v2913 = vpop.f32.mrf.mxu0
    %v2914 = vpop.f32.mrf.mxu0
    %2915 = vmatprep.mubr.bf16.mxu0 0
    %2916 = vmatmul.mubr.bf16.gmra.mxu0 %v2807
    %v2917 = vpop.f32.mrf.mxu0
    %v2918 = vadd.f32 0.0, %v2917
    %v2919 = vpop.f32.mrf.mxu0
    %v2920 = vpop.f32.mrf.mxu0
    %v2921 = vadd.f32 0.0, %v2920
    %v2922 = vpop.f32.mrf.mxu0
    %2923 = vmatprep.mubr.bf16.mxu0 0
    %2924 = vmatmul.mubr.bf16.gmra.mxu0 %v2816
    %v2925 = vpop.f32.mrf.mxu0
    %v2926 = vpop.f32.mrf.mxu0
    %v2927 = vpop.f32.mrf.mxu0
    %v2928 = vpop.f32.mrf.mxu0
    %2929 = vdwg.mxu0
    %v2935 = vrot.slane %v2731, 3
    %v2936 = vrot.slane %v2732, 3
    %v2937 = vsel %vm400, %v2935, %v2936
    %v2938 = vrot.slane %v2733, 3
    %v2939 = vsel %vm400, %v2936, %v2938
    %v2940 = vrot.slane %v2734, 3
    %v2941 = vsel %vm400, %v2938, %v2940
    %v2942 = vrot.slane %v2735, 3
    %v2943 = vsel %vm400, %v2940, %v2942
    %v2964 = vunpack.c.l.b16 %v2736
    %v2965 = vunpack.c.l.b16 %v2737
    %v2966 = vunpack.c.l.b16 %v2738
    %v2967 = vunpack.c.l.b16 %v2739
    %v2968 = vunpack.c.l.b16 %v2740
    %v2969 = vunpack.c.l.b16 %v2741
    %v2970 = vunpack.c.l.b16 %v2742
    %v2971 = vunpack.c.l.b16 %v2743
    %v2972 = vunpack.c.l.b16 %v2744
    %v2973 = vunpack.c.l.b16 %v2745
    %v2974 = vunpack.c.l.b16 %v2746
    %v2975 = vunpack.c.l.b16 %v2747
    %v2976 = vunpack.c.l.b16 %v2748
    %v2977 = vunpack.c.l.b16 %v2749
    %v2978 = vunpack.c.l.b16 %v2750
    %v2979 = vunpack.c.l.b16 %v2751
    %v2980 = vpack.c.b16 %v2965, %v2964
    %v2981 = vpack.c.b16 %v2967, %v2966
    %v2982 = vpack.c.b16 %v2969, %v2968
    %v2983 = vpack.c.b16 %v2971, %v2970
    %v2984 = vpack.c.b16 %v2973, %v2972
    %v2985 = vpack.c.b16 %v2975, %v2974
    %v2986 = vpack.c.b16 %v2977, %v2976
    %v2987 = vpack.c.b16 %v2979, %v2978
    %2996 = vmatprep.subr.bf16.mxu0 0
    %2997 = vmatpush1.bf16.msra.mxu0 %v2987
    %2998 = vmatprep.subr.bf16.mxu0 0
    %2999 = vmatpush1.bf16.msra.mxu0 %v2986
    %3000 = vmatprep.subr.bf16.mxu0 0
    %3001 = vmatpush1.bf16.msra.mxu0 %v2985
    %3002 = vmatprep.subr.bf16.mxu0 0
    %3003 = vmatpush1.bf16.msra.mxu0 %v2984
    %3004 = vmatprep.subr.bf16.mxu0 0
    %3005 = vmatpush1.bf16.msra.mxu0 %v2983
    %3006 = vmatprep.subr.bf16.mxu0 0
    %3007 = vmatpush1.bf16.msra.mxu0 %v2982
    %3008 = vmatprep.subr.bf16.mxu0 0
    %3009 = vmatpush1.bf16.msra.mxu0 %v2981
    %3010 = vmatprep.subr.bf16.mxu0 0
    %3011 = vmatpush1.bf16.msra.mxu0 %v2980
    %3012 = vmatprep.subr.bf16.mxu0 0
    %3013 = vmatpush2.bf16.msra.mxu0 0
    %3014 = vmatprep.subr.bf16.mxu0 0
    %3015 = vmatpush2.bf16.msra.mxu0 0
    %3016 = vmatprep.subr.bf16.mxu0 0
    %3017 = vmatpush2.bf16.msra.mxu0 0
    %3018 = vmatprep.subr.bf16.mxu0 0
    %3019 = vmatpush2.bf16.msra.mxu0 0
    %3020 = vmatprep.subr.bf16.mxu0 0
    %3021 = vmatpush2.bf16.msra.mxu0 0
    %3022 = vmatprep.subr.bf16.mxu0 0
    %3023 = vmatpush2.bf16.msra.mxu0 0
    %3024 = vmatprep.subr.bf16.mxu0 0
    %3025 = vmatpush2.bf16.msra.mxu0 0
    %3026 = vmatprep.subr.bf16.mxu0 0
    %3027 = vmatpush2.bf16.msra.mxu0 0
    %3028 = vmatprep.mubr.bf16.mxu0 0
    %3029 = vmatmul.mubr.bf16.gmra.mxu0 %v2937
    %v3030 = vpop.f32.mrf.mxu0
    %v3031 = vadd.f32 %v2904, %v3030
    %v3032 = vpop.f32.mrf.mxu0
    %v3033 = vpop.f32.mrf.mxu0
    %v3034 = vadd.f32 %v2907, %v3033
    %v3035 = vpop.f32.mrf.mxu0
    %3036 = vmatprep.mubr.bf16.mxu0 0
    %3037 = vmatmul.mubr.bf16.gmra.mxu0 %v2939
    %v3038 = vpop.f32.mrf.mxu0
    %v3039 = vpop.f32.mrf.mxu0
    %v3040 = vpop.f32.mrf.mxu0
    %v3041 = vpop.f32.mrf.mxu0
    %3042 = vmatprep.mubr.bf16.mxu0 0
    %3043 = vmatmul.mubr.bf16.gmra.mxu0 %v2941
    %v3044 = vpop.f32.mrf.mxu0
    %v3045 = vadd.f32 %v2918, %v3044
    %v3046 = vpop.f32.mrf.mxu0
    %v3047 = vpop.f32.mrf.mxu0
    %v3048 = vadd.f32 %v2921, %v3047
    %v3049 = vpop.f32.mrf.mxu0
    %3050 = vmatprep.mubr.bf16.mxu0 0
    %3051 = vmatmul.mubr.bf16.gmra.mxu0 %v2943
    %v3052 = vpop.f32.mrf.mxu0
    %v3053 = vpop.f32.mrf.mxu0
    %v3054 = vpop.f32.mrf.mxu0
    %v3055 = vpop.f32.mrf.mxu0
    %3056 = vdwg.mxu0
    %v3057 = vld [vmem:[#allocation2 + $0x80] sm:$0xff]
    %v3058 = vpack.c.bf16 %v2724, %v2723
    %v3059 = vpack.c.bf16 %v2726, %v2725
    %v3060 = vpack.c.bf16 %v2728, %v2727
    %v3061 = vpack.c.bf16 %v3057, %v2729
    %s3062 = scalar_lea.vmem [#allocation11], 128
    %v3063 = vld [vmem:[%s3062] sm:$0xf]
    %v3064 = vld [vmem:[%s3062 + $0x4] sm:$0xf]
    %v3065 = vld [vmem:[%s3062 + $0x8] sm:$0xf]
    %v3066 = vld [vmem:[%s3062 + $0xc] sm:$0xf]
    %v3067 = vld [vmem:[%s3062 + $0x10] sm:$0xf]
    %v3068 = vld [vmem:[%s3062 + $0x14] sm:$0xf]
    %v3069 = vld [vmem:[%s3062 + $0x18] sm:$0xf]
    %v3070 = vld [vmem:[%s3062 + $0x1c] sm:$0xf]
    %v3071 = vld [vmem:[%s3062 + $0x20] sm:$0xf]
    %v3072 = vld [vmem:[%s3062 + $0x24] sm:$0xf]
    %v3073 = vld [vmem:[%s3062 + $0x28] sm:$0xf]
    %v3074 = vld [vmem:[%s3062 + $0x2c] sm:$0xf]
    %v3075 = vld [vmem:[%s3062 + $0x30] sm:$0xf]
    %v3076 = vld [vmem:[%s3062 + $0x34] sm:$0xf]
    %v3077 = vld [vmem:[%s3062 + $0x38] sm:$0xf]
    %v3078 = vld [vmem:[%s3062 + $0x3c] sm:$0xf]
    %v3095 = vunpack.c.l.b16 %v3063
    %v3096 = vunpack.c.l.b16 %v3064
    %v3097 = vunpack.c.l.b16 %v3065
    %v3098 = vunpack.c.l.b16 %v3066
    %v3099 = vunpack.c.l.b16 %v3067
    %v3100 = vunpack.c.l.b16 %v3068
    %v3101 = vunpack.c.l.b16 %v3069
    %v3102 = vunpack.c.l.b16 %v3070
    %v3103 = vunpack.c.l.b16 %v3071
    %v3104 = vunpack.c.l.b16 %v3072
    %v3105 = vunpack.c.l.b16 %v3073
    %v3106 = vunpack.c.l.b16 %v3074
    %v3107 = vunpack.c.l.b16 %v3075
    %v3108 = vunpack.c.l.b16 %v3076
    %v3109 = vunpack.c.l.b16 %v3077
    %v3110 = vunpack.c.l.b16 %v3078
    %v3111 = vpack.c.b16 %v3096, %v3095
    %v3112 = vpack.c.b16 %v3098, %v3097
    %v3113 = vpack.c.b16 %v3100, %v3099
    %v3114 = vpack.c.b16 %v3102, %v3101
    %v3115 = vpack.c.b16 %v3104, %v3103
    %v3116 = vpack.c.b16 %v3106, %v3105
    %v3117 = vpack.c.b16 %v3108, %v3107
    %v3118 = vpack.c.b16 %v3110, %v3109
    %3127 = vmatprep.subr.bf16.mxu0 0
    %3128 = vmatpush1.bf16.msra.mxu0 %v3118
    %3129 = vmatprep.subr.bf16.mxu0 0
    %3130 = vmatpush1.bf16.msra.mxu0 %v3117
    %3131 = vmatprep.subr.bf16.mxu0 0
    %3132 = vmatpush1.bf16.msra.mxu0 %v3116
    %3133 = vmatprep.subr.bf16.mxu0 0
    %3134 = vmatpush1.bf16.msra.mxu0 %v3115
    %3135 = vmatprep.subr.bf16.mxu0 0
    %3136 = vmatpush1.bf16.msra.mxu0 %v3114
    %3137 = vmatprep.subr.bf16.mxu0 0
    %3138 = vmatpush1.bf16.msra.mxu0 %v3113
    %3139 = vmatprep.subr.bf16.mxu0 0
    %3140 = vmatpush1.bf16.msra.mxu0 %v3112
    %3141 = vmatprep.subr.bf16.mxu0 0
    %3142 = vmatpush1.bf16.msra.mxu0 %v3111
    %3143 = vmatprep.subr.bf16.mxu0 0
    %3144 = vmatpush2.bf16.msra.mxu0 0
    %3145 = vmatprep.subr.bf16.mxu0 0
    %3146 = vmatpush2.bf16.msra.mxu0 0
    %3147 = vmatprep.subr.bf16.mxu0 0
    %3148 = vmatpush2.bf16.msra.mxu0 0
    %3149 = vmatprep.subr.bf16.mxu0 0
    %3150 = vmatpush2.bf16.msra.mxu0 0
    %3151 = vmatprep.subr.bf16.mxu0 0
    %3152 = vmatpush2.bf16.msra.mxu0 0
    %3153 = vmatprep.subr.bf16.mxu0 0
    %3154 = vmatpush2.bf16.msra.mxu0 0
    %3155 = vmatprep.subr.bf16.mxu0 0
    %3156 = vmatpush2.bf16.msra.mxu0 0
    %3157 = vmatprep.subr.bf16.mxu0 0
    %3158 = vmatpush2.bf16.msra.mxu0 0
    %3159 = vmatprep.mubr.bf16.mxu0 0
    %3160 = vmatmul.mubr.bf16.gmra.mxu0 %v3058
    %v3161 = vpop.f32.mrf.mxu0
    %v3162 = vadd.f32 0.0, %v3161
    %v3163 = vpop.f32.mrf.mxu0
    %v3164 = vpop.f32.mrf.mxu0
    %v3165 = vadd.f32 0.0, %v3164
    %v3166 = vpop.f32.mrf.mxu0
    %3167 = vmatprep.mubr.bf16.mxu0 0
    %3168 = vmatmul.mubr.bf16.gmra.mxu0 %v3059
    %v3169 = vpop.f32.mrf.mxu0
    %v3170 = vpop.f32.mrf.mxu0
    %v3171 = vpop.f32.mrf.mxu0
    %v3172 = vpop.f32.mrf.mxu0
    %3173 = vmatprep.mubr.bf16.mxu0 0
    %3174 = vmatmul.mubr.bf16.gmra.mxu0 %v3060
    %v3175 = vpop.f32.mrf.mxu0
    %v3176 = vadd.f32 0.0, %v3175
    %v3177 = vpop.f32.mrf.mxu0
    %v3178 = vpop.f32.mrf.mxu0
    %v3179 = vadd.f32 0.0, %v3178
    %v3180 = vpop.f32.mrf.mxu0
    %3181 = vmatprep.mubr.bf16.mxu0 0
    %3182 = vmatmul.mubr.bf16.gmra.mxu0 %v3061
    %v3183 = vpop.f32.mrf.mxu0
    %v3184 = vpop.f32.mrf.mxu0
    %v3185 = vpop.f32.mrf.mxu0
    %v3186 = vpop.f32.mrf.mxu0
    %3187 = vdwg.mxu0
    %v3188 = vadd.f32 %v3031, %v3162
    %v3189 = vadd.f32 %v3034, %v3165
    %v3190 = vadd.f32 %v3045, %v3176
    %v3191 = vadd.f32 %v3048, %v3179
    %v3192 = vld [vmem:[#allocation2 + $0x10] sm:$0xfe]
    %v3193 = vld [vmem:[#allocation2 + $0x20] sm:$0xff]
    %v3194 = vld [vmem:[#allocation2 + $0x30] sm:$0xff]
    %v3195 = vld [vmem:[#allocation2 + $0x40] sm:$0xff]
    %v3196 = vld [vmem:[#allocation2 + $0x50] sm:$0xff]
    %v3197 = vld [vmem:[#allocation2 + $0x60] sm:$0xff]
    %v3198 = vld [vmem:[#allocation2 + $0x70] sm:$0xff]
    %v3199 = vld [vmem:[#allocation2 + $0x80] sm:$0xff]
    %v3200 = vld [vmem:[#allocation2 + $0x90] sm:$0x1]
    %v3201 = vpack.c.bf16 %v3193, %v3192
    %v3202 = vpack.c.bf16 %v3195, %v3194
    %v3203 = vpack.c.bf16 %v3197, %v3196
    %v3204 = vpack.c.bf16 %v3199, %v3198
    %v3205 = vpack.c.bf16 %v3200, %v3200
    %s3206 = scalar_lea.vmem [#allocation11], 192
    %v3207 = vld [vmem:[%s3206] sm:$0xf]
    %v3208 = vld [vmem:[%s3206 + $0x4] sm:$0xf]
    %v3209 = vld [vmem:[%s3206 + $0x8] sm:$0xf]
    %v3210 = vld [vmem:[%s3206 + $0xc] sm:$0xf]
    %v3211 = vld [vmem:[%s3206 + $0x10] sm:$0xf]
    %v3212 = vld [vmem:[%s3206 + $0x14] sm:$0xf]
    %v3213 = vld [vmem:[%s3206 + $0x18] sm:$0xf]
    %v3214 = vld [vmem:[%s3206 + $0x1c] sm:$0xf]
    %v3215 = vld [vmem:[%s3206 + $0x20] sm:$0xf]
    %v3216 = vld [vmem:[%s3206 + $0x24] sm:$0xf]
    %v3217 = vld [vmem:[%s3206 + $0x28] sm:$0xf]
    %v3218 = vld [vmem:[%s3206 + $0x2c] sm:$0xf]
    %v3219 = vld [vmem:[%s3206 + $0x30] sm:$0xf]
    %v3220 = vld [vmem:[%s3206 + $0x34] sm:$0xf]
    %v3221 = vld [vmem:[%s3206 + $0x38] sm:$0xf]
    %v3222 = vld [vmem:[%s3206 + $0x3c] sm:$0xf]
    %v3224 = vshrl.u32 %v3201, 16
    %v3226 = vshll.u32 %v3201, 16
    %v3228 = vrot.slane %v3226, 1
    %v3229 = vor.u32 %v3224, %v3228
    %v3231 = vshll.u32 %v3202, 16
    %v3233 = vrot.slane %v3231, 1
    %v3234 = vsel %vm689, %v3229, %v3233
    %v3235 = vshrl.u32 %v3202, 16
    %v3237 = vor.u32 %v3235, %v3233
    %v3239 = vshll.u32 %v3203, 16
    %v3241 = vrot.slane %v3239, 1
    %v3242 = vsel %vm689, %v3237, %v3241
    %v3243 = vshrl.u32 %v3203, 16
    %v3245 = vor.u32 %v3243, %v3241
    %v3247 = vshll.u32 %v3204, 16
    %v3249 = vrot.slane %v3247, 1
    %v3250 = vsel %vm689, %v3245, %v3249
    %v3251 = vshrl.u32 %v3204, 16
    %v3253 = vor.u32 %v3251, %v3249
    %v3255 = vshll.u32 %v3205, 16
    %v3257 = vrot.slane %v3255, 1
    %v3258 = vsel %vm689, %v3253, %v3257
    %v3279 = vunpack.c.l.b16 %v3207
    %v3280 = vunpack.c.l.b16 %v3208
    %v3281 = vunpack.c.l.b16 %v3209
    %v3282 = vunpack.c.l.b16 %v3210
    %v3283 = vunpack.c.l.b16 %v3211
    %v3284 = vunpack.c.l.b16 %v3212
    %v3285 = vunpack.c.l.b16 %v3213
    %v3286 = vunpack.c.l.b16 %v3214
    %v3287 = vunpack.c.l.b16 %v3215
    %v3288 = vunpack.c.l.b16 %v3216
    %v3289 = vunpack.c.l.b16 %v3217
    %v3290 = vunpack.c.l.b16 %v3218
    %v3291 = vunpack.c.l.b16 %v3219
    %v3292 = vunpack.c.l.b16 %v3220
    %v3293 = vunpack.c.l.b16 %v3221
    %v3294 = vunpack.c.l.b16 %v3222
    %v3295 = vpack.c.b16 %v3280, %v3279
    %v3296 = vpack.c.b16 %v3282, %v3281
    %v3297 = vpack.c.b16 %v3284, %v3283
    %v3298 = vpack.c.b16 %v3286, %v3285
    %v3299 = vpack.c.b16 %v3288, %v3287
    %v3300 = vpack.c.b16 %v3290, %v3289
    %v3301 = vpack.c.b16 %v3292, %v3291
    %v3302 = vpack.c.b16 %v3294, %v3293
    %3311 = vmatprep.subr.bf16.mxu0 0
    %3312 = vmatpush1.bf16.msra.mxu0 %v3302
    %3313 = vmatprep.subr.bf16.mxu0 0
    %3314 = vmatpush1.bf16.msra.mxu0 %v3301
    %3315 = vmatprep.subr.bf16.mxu0 0
    %3316 = vmatpush1.bf16.msra.mxu0 %v3300
    %3317 = vmatprep.subr.bf16.mxu0 0
    %3318 = vmatpush1.bf16.msra.mxu0 %v3299
    %3319 = vmatprep.subr.bf16.mxu0 0
    %3320 = vmatpush1.bf16.msra.mxu0 %v3298
    %3321 = vmatprep.subr.bf16.mxu0 0
    %3322 = vmatpush1.bf16.msra.mxu0 %v3297
    %3323 = vmatprep.subr.bf16.mxu0 0
    %3324 = vmatpush1.bf16.msra.mxu0 %v3296
    %3325 = vmatprep.subr.bf16.mxu0 0
    %3326 = vmatpush1.bf16.msra.mxu0 %v3295
    %3327 = vmatprep.subr.bf16.mxu0 0
    %3328 = vmatpush2.bf16.msra.mxu0 0
    %3329 = vmatprep.subr.bf16.mxu0 0
    %3330 = vmatpush2.bf16.msra.mxu0 0
    %3331 = vmatprep.subr.bf16.mxu0 0
    %3332 = vmatpush2.bf16.msra.mxu0 0
    %3333 = vmatprep.subr.bf16.mxu0 0
    %3334 = vmatpush2.bf16.msra.mxu0 0
    %3335 = vmatprep.subr.bf16.mxu0 0
    %3336 = vmatpush2.bf16.msra.mxu0 0
    %3337 = vmatprep.subr.bf16.mxu0 0
    %3338 = vmatpush2.bf16.msra.mxu0 0
    %3339 = vmatprep.subr.bf16.mxu0 0
    %3340 = vmatpush2.bf16.msra.mxu0 0
    %3341 = vmatprep.subr.bf16.mxu0 0
    %3342 = vmatpush2.bf16.msra.mxu0 0
    %3343 = vmatprep.mubr.bf16.mxu0 0
    %3344 = vmatmul.mubr.bf16.gmra.mxu0 %v3234
    %v3345 = vpop.f32.mrf.mxu0
    %v3346 = vadd.f32 0.0, %v3345
    %v3347 = vpop.f32.mrf.mxu0
    %v3348 = vpop.f32.mrf.mxu0
    %v3349 = vadd.f32 0.0, %v3348
    %v3350 = vpop.f32.mrf.mxu0
    %3351 = vmatprep.mubr.bf16.mxu0 0
    %3352 = vmatmul.mubr.bf16.gmra.mxu0 %v3242
    %v3353 = vpop.f32.mrf.mxu0
    %v3354 = vpop.f32.mrf.mxu0
    %v3355 = vpop.f32.mrf.mxu0
    %v3356 = vpop.f32.mrf.mxu0
    %3357 = vmatprep.mubr.bf16.mxu0 0
    %3358 = vmatmul.mubr.bf16.gmra.mxu0 %v3250
    %v3359 = vpop.f32.mrf.mxu0
    %v3360 = vadd.f32 0.0, %v3359
    %v3361 = vpop.f32.mrf.mxu0
    %v3362 = vpop.f32.mrf.mxu0
    %v3363 = vadd.f32 0.0, %v3362
    %v3364 = vpop.f32.mrf.mxu0
    %3365 = vmatprep.mubr.bf16.mxu0 0
    %3366 = vmatmul.mubr.bf16.gmra.mxu0 %v3258
    %v3367 = vpop.f32.mrf.mxu0
    %v3368 = vpop.f32.mrf.mxu0
    %v3369 = vpop.f32.mrf.mxu0
    %v3370 = vpop.f32.mrf.mxu0
    %3371 = vdwg.mxu0
    %v3372 = vadd.f32 %v3188, %v3346
    %v3373 = vadd.f32 %v3189, %v3349
    %v3374 = vadd.f32 %v3190, %v3360
    %v3375 = vadd.f32 %v3191, %v3363
    %v3376 = vld [vmem:[#allocation2 + $0x10] sm:$0xfc]
    %v3377 = vld [vmem:[#allocation2 + $0x90] sm:$0x3]
    %v3378 = vpack.c.bf16 %v3193, %v3376
    %v3379 = vpack.c.bf16 %v3377, %v3377
    %s3380 = scalar_lea.vmem [#allocation11], 256
    %v3381 = vld [vmem:[%s3380] sm:$0xf]
    %v3382 = vld [vmem:[%s3380 + $0x4] sm:$0xf]
    %v3383 = vld [vmem:[%s3380 + $0x8] sm:$0xf]
    %v3384 = vld [vmem:[%s3380 + $0xc] sm:$0xf]
    %v3385 = vld [vmem:[%s3380 + $0x10] sm:$0xf]
    %v3386 = vld [vmem:[%s3380 + $0x14] sm:$0xf]
    %v3387 = vld [vmem:[%s3380 + $0x18] sm:$0xf]
    %v3388 = vld [vmem:[%s3380 + $0x1c] sm:$0xf]
    %v3389 = vld [vmem:[%s3380 + $0x20] sm:$0xf]
    %v3390 = vld [vmem:[%s3380 + $0x24] sm:$0xf]
    %v3391 = vld [vmem:[%s3380 + $0x28] sm:$0xf]
    %v3392 = vld [vmem:[%s3380 + $0x2c] sm:$0xf]
    %v3393 = vld [vmem:[%s3380 + $0x30] sm:$0xf]
    %v3394 = vld [vmem:[%s3380 + $0x34] sm:$0xf]
    %v3395 = vld [vmem:[%s3380 + $0x38] sm:$0xf]
    %v3396 = vld [vmem:[%s3380 + $0x3c] sm:$0xf]
    %v3402 = vrot.slane %v3378, 1
    %v3403 = vrot.slane %v3202, 1
    %v3404 = vsel %vm869, %v3402, %v3403
    %v3405 = vrot.slane %v3203, 1
    %v3406 = vsel %vm869, %v3403, %v3405
    %v3407 = vrot.slane %v3204, 1
    %v3408 = vsel %vm869, %v3405, %v3407
    %v3409 = vrot.slane %v3379, 1
    %v3410 = vsel %vm869, %v3407, %v3409
    %v3431 = vunpack.c.l.b16 %v3381
    %v3432 = vunpack.c.l.b16 %v3382
    %v3433 = vunpack.c.l.b16 %v3383
    %v3434 = vunpack.c.l.b16 %v3384
    %v3435 = vunpack.c.l.b16 %v3385
    %v3436 = vunpack.c.l.b16 %v3386
    %v3437 = vunpack.c.l.b16 %v3387
    %v3438 = vunpack.c.l.b16 %v3388
    %v3439 = vunpack.c.l.b16 %v3389
    %v3440 = vunpack.c.l.b16 %v3390
    %v3441 = vunpack.c.l.b16 %v3391
    %v3442 = vunpack.c.l.b16 %v3392
    %v3443 = vunpack.c.l.b16 %v3393
    %v3444 = vunpack.c.l.b16 %v3394
    %v3445 = vunpack.c.l.b16 %v3395
    %v3446 = vunpack.c.l.b16 %v3396
    %v3447 = vpack.c.b16 %v3432, %v3431
    %v3448 = vpack.c.b16 %v3434, %v3433
    %v3449 = vpack.c.b16 %v3436, %v3435
    %v3450 = vpack.c.b16 %v3438, %v3437
    %v3451 = vpack.c.b16 %v3440, %v3439
    %v3452 = vpack.c.b16 %v3442, %v3441
    %v3453 = vpack.c.b16 %v3444, %v3443
    %v3454 = vpack.c.b16 %v3446, %v3445
    %3463 = vmatprep.subr.bf16.mxu0 0
    %3464 = vmatpush1.bf16.msra.mxu0 %v3454
    %3465 = vmatprep.subr.bf16.mxu0 0
    %3466 = vmatpush1.bf16.msra.mxu0 %v3453
    %3467 = vmatprep.subr.bf16.mxu0 0
    %3468 = vmatpush1.bf16.msra.mxu0 %v3452
    %3469 = vmatprep.subr.bf16.mxu0 0
    %3470 = vmatpush1.bf16.msra.mxu0 %v3451
    %3471 = vmatprep.subr.bf16.mxu0 0
    %3472 = vmatpush1.bf16.msra.mxu0 %v3450
    %3473 = vmatprep.subr.bf16.mxu0 0
    %3474 = vmatpush1.bf16.msra.mxu0 %v3449
    %3475 = vmatprep.subr.bf16.mxu0 0
    %3476 = vmatpush1.bf16.msra.mxu0 %v3448
    %3477 = vmatprep.subr.bf16.mxu0 0
    %3478 = vmatpush1.bf16.msra.mxu0 %v3447
    %3479 = vmatprep.subr.bf16.mxu0 0
    %3480 = vmatpush2.bf16.msra.mxu0 0
    %3481 = vmatprep.subr.bf16.mxu0 0
    %3482 = vmatpush2.bf16.msra.mxu0 0
    %3483 = vmatprep.subr.bf16.mxu0 0
    %3484 = vmatpush2.bf16.msra.mxu0 0
    %3485 = vmatprep.subr.bf16.mxu0 0
    %3486 = vmatpush2.bf16.msra.mxu0 0
    %3487 = vmatprep.subr.bf16.mxu0 0
    %3488 = vmatpush2.bf16.msra.mxu0 0
    %3489 = vmatprep.subr.bf16.mxu0 0
    %3490 = vmatpush2.bf16.msra.mxu0 0
    %3491 = vmatprep.subr.bf16.mxu0 0
    %3492 = vmatpush2.bf16.msra.mxu0 0
    %3493 = vmatprep.subr.bf16.mxu0 0
    %3494 = vmatpush2.bf16.msra.mxu0 0
    %3495 = vmatprep.mubr.bf16.mxu0 0
    %3496 = vmatmul.mubr.bf16.gmra.mxu0 %v3404
    %v3497 = vpop.f32.mrf.mxu0
    %v3498 = vadd.f32 0.0, %v3497
    %v3499 = vpop.f32.mrf.mxu0
    %v3500 = vpop.f32.mrf.mxu0
    %v3501 = vadd.f32 0.0, %v3500
    %v3502 = vpop.f32.mrf.mxu0
    %3503 = vmatprep.mubr.bf16.mxu0 0
    %3504 = vmatmul.mubr.bf16.gmra.mxu0 %v3406
    %v3505 = vpop.f32.mrf.mxu0
    %v3506 = vpop.f32.mrf.mxu0
    %v3507 = vpop.f32.mrf.mxu0
    %v3508 = vpop.f32.mrf.mxu0
    %3509 = vmatprep.mubr.bf16.mxu0 0
    %3510 = vmatmul.mubr.bf16.gmra.mxu0 %v3408
    %v3511 = vpop.f32.mrf.mxu0
    %v3512 = vadd.f32 0.0, %v3511
    %v3513 = vpop.f32.mrf.mxu0
    %v3514 = vpop.f32.mrf.mxu0
    %v3515 = vadd.f32 0.0, %v3514
    %v3516 = vpop.f32.mrf.mxu0
    %3517 = vmatprep.mubr.bf16.mxu0 0
    %3518 = vmatmul.mubr.bf16.gmra.mxu0 %v3410
    %v3519 = vpop.f32.mrf.mxu0
    %v3520 = vpop.f32.mrf.mxu0
    %v3521 = vpop.f32.mrf.mxu0
    %v3522 = vpop.f32.mrf.mxu0
    %3523 = vdwg.mxu0
    %v3524 = vadd.f32 %v3372, %v3498
    %v3525 = vadd.f32 %v3373, %v3501
    %v3526 = vadd.f32 %v3374, %v3512
    %v3527 = vadd.f32 %v3375, %v3515
    %v3528 = vld [vmem:[%s11] sm:$0x1]
    %v3530 = vlaneseq
    %v3531 = vshrl.u32 %v3530, 7
    %v3532 = vsub.s32 0, %v3531
    %v3533 = vrot.slane %v3528, %v3532
    %v3535 = vmul.f32 %v3524, %v3533
    %v3536 = vmul.f32 %v3525, %v3533
    %v3537 = vmul.f32 %v3526, %v3533
    %v3538 = vmul.f32 %v3527, %v3533
    %v3539 = vld [vmem:[%s12] sm:$0x1]
    %v3541 = vlaneseq
    %v3542 = vshrl.u32 %v3541, 7
    %v3543 = vsub.s32 0, %v3542
    %v3544 = vrot.slane %v3539, %v3543
    %v3546 = vadd.f32 %v3535, %v3544
    %v3547 = vadd.f32 %v3536, %v3544
    %v3548 = vadd.f32 %v3537, %v3544
    %v3549 = vadd.f32 %v3538, %v3544
    %vm3550 = vcmp.ge.f32.partialorder %v3546, 0.0
    %vm3551 = vcmp.ge.f32.partialorder %v3547, 0.0
    %vm3552 = vcmp.ge.f32.partialorder %v3548, 0.0
    %vm3553 = vcmp.ge.f32.partialorder %v3549, 0.0
    %v3554 = vmul.f32 %v3546, 0.01
    %v3555 = vmul.f32 %v3547, 0.01
    %v3556 = vmul.f32 %v3548, 0.01
    %v3557 = vmul.f32 %v3549, 0.01
    %v3558 = vsel %vm3550, %v3546, %v3554
    %v3559 = vsel %vm3551, %v3547, %v3555
    %v3560 = vsel %vm3552, %v3548, %v3556
    %v3561 = vsel %vm3553, %v3549, %v3557
    %3562 = vst [vmem:[#allocation2 + $0x10] sm:$0xff] %v3558
    %3563 = vst [vmem:[#allocation2 + $0x20] sm:$0xff] %v3559
    %3564 = vst [vmem:[#allocation2 + $0x50] sm:$0xff] %v3560
    %3565 = vst [vmem:[#allocation2 + $0x60] sm:$0xff] %v3561
    %s3566 = smul.u32 4, 5
    %s3567 = smul.u32 %s3566, 16
    %s3568 = smul.u32 %s3567, 2
    %s3569 = sshll.u32 %s3568, 4
    %3570 = dma.done [#allocation5], %s3569
    %v3571 = vld [vmem:[#allocation2] sm:$0xc0]
    %v3572 = vld [vmem:[#allocation2 + $0x10] sm:$0xff]
    %v3573 = vld [vmem:[#allocation2 + $0x20] sm:$0xff]
    %v3574 = vld [vmem:[#allocation2 + $0x30] sm:$0xff]
    %v3575 = vld [vmem:[#allocation2 + $0x40] sm:$0xff]
    %v3576 = vld [vmem:[#allocation2 + $0x50] sm:$0xff]
    %v3577 = vld [vmem:[#allocation2 + $0x60] sm:$0xff]
    %v3578 = vld [vmem:[#allocation2 + $0x70] sm:$0xff]
    %v3579 = vld [vmem:[#allocation2 + $0x80] sm:$0x3f]
    %v3580 = vpack.c.bf16 %v3572, %v3571
    %v3581 = vpack.c.bf16 %v3574, %v3573
    %v3582 = vpack.c.bf16 %v3576, %v3575
    %v3583 = vpack.c.bf16 %v3578, %v3577
    %v3584 = vpack.c.bf16 %v3579, %v3579
    %v3585 = vld [vmem:[#allocation3] sm:$0xff]
    %v3586 = vld [vmem:[#allocation3 + $0x8] sm:$0xff]
    %v3587 = vld [vmem:[#allocation3 + $0x10] sm:$0xff]
    %v3588 = vld [vmem:[#allocation3 + $0x18] sm:$0xff]
    %v3589 = vld [vmem:[#allocation3 + $0x20] sm:$0xff]
    %v3590 = vld [vmem:[#allocation3 + $0x28] sm:$0xff]
    %v3591 = vld [vmem:[#allocation3 + $0x30] sm:$0xff]
    %v3592 = vld [vmem:[#allocation3 + $0x38] sm:$0xff]
    %v3593 = vld [vmem:[#allocation3 + $0x40] sm:$0xff]
    %v3594 = vld [vmem:[#allocation3 + $0x48] sm:$0xff]
    %v3595 = vld [vmem:[#allocation3 + $0x50] sm:$0xff]
    %v3596 = vld [vmem:[#allocation3 + $0x58] sm:$0xff]
    %v3597 = vld [vmem:[#allocation3 + $0x60] sm:$0xff]
    %v3598 = vld [vmem:[#allocation3 + $0x68] sm:$0xff]
    %v3599 = vld [vmem:[#allocation3 + $0x70] sm:$0xff]
    %v3600 = vld [vmem:[#allocation3 + $0x78] sm:$0xff]
    %v3601 = vld [vmem:[#allocation2] sm:$0x80]
    %v3602 = vld [vmem:[#allocation2 + $0x80] sm:$0x7f]
    %v3603 = vpack.c.bf16 %v3572, %v3601
    %v3604 = vpack.c.bf16 %v3602, %v3602
    %s3605 = scalar_lea.vmem [#allocation3], 128
    %v3606 = vld [vmem:[%s3605] sm:$0xff]
    %v3607 = vld [vmem:[%s3605 + $0x8] sm:$0xff]
    %v3608 = vld [vmem:[%s3605 + $0x10] sm:$0xff]
    %v3609 = vld [vmem:[%s3605 + $0x18] sm:$0xff]
    %v3610 = vld [vmem:[%s3605 + $0x20] sm:$0xff]
    %v3611 = vld [vmem:[%s3605 + $0x28] sm:$0xff]
    %v3612 = vld [vmem:[%s3605 + $0x30] sm:$0xff]
    %v3613 = vld [vmem:[%s3605 + $0x38] sm:$0xff]
    %v3614 = vld [vmem:[%s3605 + $0x40] sm:$0xff]
    %v3615 = vld [vmem:[%s3605 + $0x48] sm:$0xff]
    %v3616 = vld [vmem:[%s3605 + $0x50] sm:$0xff]
    %v3617 = vld [vmem:[%s3605 + $0x58] sm:$0xff]
    %v3618 = vld [vmem:[%s3605 + $0x60] sm:$0xff]
    %v3619 = vld [vmem:[%s3605 + $0x68] sm:$0xff]
    %v3620 = vld [vmem:[%s3605 + $0x70] sm:$0xff]
    %v3621 = vld [vmem:[%s3605 + $0x78] sm:$0xff]
    %v3623 = vshrl.u32 %v3603, 16
    %v3625 = vrot.slane %v3623, 3
    %v3626 = vshll.u32 %v3603, 16
    %v3628 = vrot.slane %v3626, 4
    %v3629 = vor.u32 %v3625, %v3628
    %v3631 = vshrl.u32 %v3581, 16
    %v3633 = vrot.slane %v3631, 3
    %v3634 = vshll.u32 %v3581, 16
    %v3636 = vrot.slane %v3634, 4
    %v3637 = vor.u32 %v3633, %v3636
    %v3638 = vsel %vm237, %v3629, %v3637
    %v3640 = vshrl.u32 %v3582, 16
    %v3642 = vrot.slane %v3640, 3
    %v3643 = vshll.u32 %v3582, 16
    %v3645 = vrot.slane %v3643, 4
    %v3646 = vor.u32 %v3642, %v3645
    %v3647 = vsel %vm237, %v3637, %v3646
    %v3649 = vshrl.u32 %v3583, 16
    %v3651 = vrot.slane %v3649, 3
    %v3652 = vshll.u32 %v3583, 16
    %v3654 = vrot.slane %v3652, 4
    %v3655 = vor.u32 %v3651, %v3654
    %v3656 = vsel %vm237, %v3646, %v3655
    %v3658 = vshrl.u32 %v3604, 16
    %v3660 = vrot.slane %v3658, 3
    %v3661 = vshll.u32 %v3604, 16
    %v3663 = vrot.slane %v3661, 4
    %v3664 = vor.u32 %v3660, %v3663
    %v3665 = vsel %vm237, %v3655, %v3664
    %v3686 = vunpack.c.l.b16 %v3606
    %v3687 = vunpack.c.h.b16 %v3606
    %v3688 = vunpack.c.l.b16 %v3607
    %v3689 = vunpack.c.h.b16 %v3607
    %v3690 = vunpack.c.l.b16 %v3608
    %v3691 = vunpack.c.h.b16 %v3608
    %v3692 = vunpack.c.l.b16 %v3609
    %v3693 = vunpack.c.h.b16 %v3609
    %v3694 = vunpack.c.l.b16 %v3610
    %v3695 = vunpack.c.h.b16 %v3610
    %v3696 = vunpack.c.l.b16 %v3611
    %v3697 = vunpack.c.h.b16 %v3611
    %v3698 = vunpack.c.l.b16 %v3612
    %v3699 = vunpack.c.h.b16 %v3612
    %v3700 = vunpack.c.l.b16 %v3613
    %v3701 = vunpack.c.h.b16 %v3613
    %v3702 = vunpack.c.l.b16 %v3614
    %v3703 = vunpack.c.h.b16 %v3614
    %v3704 = vunpack.c.l.b16 %v3615
    %v3705 = vunpack.c.h.b16 %v3615
    %v3706 = vunpack.c.l.b16 %v3616
    %v3707 = vunpack.c.h.b16 %v3616
    %v3708 = vunpack.c.l.b16 %v3617
    %v3709 = vunpack.c.h.b16 %v3617
    %v3710 = vunpack.c.l.b16 %v3618
    %v3711 = vunpack.c.h.b16 %v3618
    %v3712 = vunpack.c.l.b16 %v3619
    %v3713 = vunpack.c.h.b16 %v3619
    %v3714 = vunpack.c.l.b16 %v3620
    %v3715 = vunpack.c.h.b16 %v3620
    %v3716 = vunpack.c.l.b16 %v3621
    %v3717 = vunpack.c.h.b16 %v3621
    %v3718 = vpack.c.b16 %v3688, %v3686
    %v3719 = vpack.c.b16 %v3689, %v3687
    %v3720 = vpack.c.b16 %v3692, %v3690
    %v3721 = vpack.c.b16 %v3693, %v3691
    %v3722 = vpack.c.b16 %v3696, %v3694
    %v3723 = vpack.c.b16 %v3697, %v3695
    %v3724 = vpack.c.b16 %v3700, %v3698
    %v3725 = vpack.c.b16 %v3701, %v3699
    %v3726 = vpack.c.b16 %v3704, %v3702
    %v3727 = vpack.c.b16 %v3705, %v3703
    %v3728 = vpack.c.b16 %v3708, %v3706
    %v3729 = vpack.c.b16 %v3709, %v3707
    %v3730 = vpack.c.b16 %v3712, %v3710
    %v3731 = vpack.c.b16 %v3713, %v3711
    %v3732 = vpack.c.b16 %v3716, %v3714
    %v3733 = vpack.c.b16 %v3717, %v3715
    %3750 = vmatprep.subr.bf16.mxu0 %v3733
    %3751 = vmatpush1.bf16.msra.mxu0 %v3732
    %3752 = vmatprep.subr.bf16.mxu0 %v3731
    %3753 = vmatpush1.bf16.msra.mxu0 %v3730
    %3754 = vmatprep.subr.bf16.mxu0 %v3729
    %3755 = vmatpush1.bf16.msra.mxu0 %v3728
    %3756 = vmatprep.subr.bf16.mxu0 %v3727
    %3757 = vmatpush1.bf16.msra.mxu0 %v3726
    %3758 = vmatprep.subr.bf16.mxu0 %v3725
    %3759 = vmatpush1.bf16.msra.mxu0 %v3724
    %3760 = vmatprep.subr.bf16.mxu0 %v3723
    %3761 = vmatpush1.bf16.msra.mxu0 %v3722
    %3762 = vmatprep.subr.bf16.mxu0 %v3721
    %3763 = vmatpush1.bf16.msra.mxu0 %v3720
    %3764 = vmatprep.subr.bf16.mxu0 %v3719
    %3765 = vmatpush1.bf16.msra.mxu0 %v3718
    %3766 = vmatprep.subr.bf16.mxu0 0
    %3767 = vmatpush2.bf16.msra.mxu0 0
    %3768 = vmatprep.subr.bf16.mxu0 0
    %3769 = vmatpush2.bf16.msra.mxu0 0
    %3770 = vmatprep.subr.bf16.mxu0 0
    %3771 = vmatpush2.bf16.msra.mxu0 0
    %3772 = vmatprep.subr.bf16.mxu0 0
    %3773 = vmatpush2.bf16.msra.mxu0 0
    %3774 = vmatprep.subr.bf16.mxu0 0
    %3775 = vmatpush2.bf16.msra.mxu0 0
    %3776 = vmatprep.subr.bf16.mxu0 0
    %3777 = vmatpush2.bf16.msra.mxu0 0
    %3778 = vmatprep.subr.bf16.mxu0 0
    %3779 = vmatpush2.bf16.msra.mxu0 0
    %3780 = vmatprep.subr.bf16.mxu0 0
    %3781 = vmatpush2.bf16.msra.mxu0 0
    %3782 = vmatprep.mubr.bf16.mxu0 0
    %3783 = vmatmul.mubr.bf16.gmra.mxu0 %v3638
    %v3784 = vpop.f32.mrf.mxu0
    %v3785 = vadd.f32 0.0, %v3784
    %v3786 = vpop.f32.mrf.mxu0
    %v3787 = vadd.f32 0.0, %v3786
    %v3788 = vpop.f32.mrf.mxu0
    %v3789 = vadd.f32 0.0, %v3788
    %v3790 = vpop.f32.mrf.mxu0
    %v3791 = vadd.f32 0.0, %v3790
    %3792 = vmatprep.mubr.bf16.mxu0 0
    %3793 = vmatmul.mubr.bf16.gmra.mxu0 %v3647
    %v3794 = vpop.f32.mrf.mxu0
    %v3795 = vpop.f32.mrf.mxu0
    %v3796 = vpop.f32.mrf.mxu0
    %v3797 = vpop.f32.mrf.mxu0
    %3798 = vmatprep.mubr.bf16.mxu0 0
    %3799 = vmatmul.mubr.bf16.gmra.mxu0 %v3656
    %v3800 = vpop.f32.mrf.mxu0
    %v3801 = vadd.f32 0.0, %v3800
    %v3802 = vpop.f32.mrf.mxu0
    %v3803 = vadd.f32 0.0, %v3802
    %v3804 = vpop.f32.mrf.mxu0
    %v3805 = vadd.f32 0.0, %v3804
    %v3806 = vpop.f32.mrf.mxu0
    %v3807 = vadd.f32 0.0, %v3806
    %3808 = vmatprep.mubr.bf16.mxu0 0
    %3809 = vmatmul.mubr.bf16.gmra.mxu0 %v3665
    %v3810 = vpop.f32.mrf.mxu0
    %v3811 = vpop.f32.mrf.mxu0
    %v3812 = vpop.f32.mrf.mxu0
    %v3813 = vpop.f32.mrf.mxu0
    %3814 = vdwg.mxu0
    %v3820 = vrot.slane %v3580, 3
    %v3821 = vrot.slane %v3581, 3
    %v3822 = vsel %vm400, %v3820, %v3821
    %v3823 = vrot.slane %v3582, 3
    %v3824 = vsel %vm400, %v3821, %v3823
    %v3825 = vrot.slane %v3583, 3
    %v3826 = vsel %vm400, %v3823, %v3825
    %v3827 = vrot.slane %v3584, 3
    %v3828 = vsel %vm400, %v3825, %v3827
    %v3849 = vunpack.c.l.b16 %v3585
    %v3850 = vunpack.c.h.b16 %v3585
    %v3851 = vunpack.c.l.b16 %v3586
    %v3852 = vunpack.c.h.b16 %v3586
    %v3853 = vunpack.c.l.b16 %v3587
    %v3854 = vunpack.c.h.b16 %v3587
    %v3855 = vunpack.c.l.b16 %v3588
    %v3856 = vunpack.c.h.b16 %v3588
    %v3857 = vunpack.c.l.b16 %v3589
    %v3858 = vunpack.c.h.b16 %v3589
    %v3859 = vunpack.c.l.b16 %v3590
    %v3860 = vunpack.c.h.b16 %v3590
    %v3861 = vunpack.c.l.b16 %v3591
    %v3862 = vunpack.c.h.b16 %v3591
    %v3863 = vunpack.c.l.b16 %v3592
    %v3864 = vunpack.c.h.b16 %v3592
    %v3865 = vunpack.c.l.b16 %v3593
    %v3866 = vunpack.c.h.b16 %v3593
    %v3867 = vunpack.c.l.b16 %v3594
    %v3868 = vunpack.c.h.b16 %v3594
    %v3869 = vunpack.c.l.b16 %v3595
    %v3870 = vunpack.c.h.b16 %v3595
    %v3871 = vunpack.c.l.b16 %v3596
    %v3872 = vunpack.c.h.b16 %v3596
    %v3873 = vunpack.c.l.b16 %v3597
    %v3874 = vunpack.c.h.b16 %v3597
    %v3875 = vunpack.c.l.b16 %v3598
    %v3876 = vunpack.c.h.b16 %v3598
    %v3877 = vunpack.c.l.b16 %v3599
    %v3878 = vunpack.c.h.b16 %v3599
    %v3879 = vunpack.c.l.b16 %v3600
    %v3880 = vunpack.c.h.b16 %v3600
    %v3881 = vpack.c.b16 %v3851, %v3849
    %v3882 = vpack.c.b16 %v3852, %v3850
    %v3883 = vpack.c.b16 %v3855, %v3853
    %v3884 = vpack.c.b16 %v3856, %v3854
    %v3885 = vpack.c.b16 %v3859, %v3857
    %v3886 = vpack.c.b16 %v3860, %v3858
    %v3887 = vpack.c.b16 %v3863, %v3861
    %v3888 = vpack.c.b16 %v3864, %v3862
    %v3889 = vpack.c.b16 %v3867, %v3865
    %v3890 = vpack.c.b16 %v3868, %v3866
    %v3891 = vpack.c.b16 %v3871, %v3869
    %v3892 = vpack.c.b16 %v3872, %v3870
    %v3893 = vpack.c.b16 %v3875, %v3873
    %v3894 = vpack.c.b16 %v3876, %v3874
    %v3895 = vpack.c.b16 %v3879, %v3877
    %v3896 = vpack.c.b16 %v3880, %v3878
    %3913 = vmatprep.subr.bf16.mxu0 %v3896
    %3914 = vmatpush1.bf16.msra.mxu0 %v3895
    %3915 = vmatprep.subr.bf16.mxu0 %v3894
    %3916 = vmatpush1.bf16.msra.mxu0 %v3893
    %3917 = vmatprep.subr.bf16.mxu0 %v3892
    %3918 = vmatpush1.bf16.msra.mxu0 %v3891
    %3919 = vmatprep.subr.bf16.mxu0 %v3890
    %3920 = vmatpush1.bf16.msra.mxu0 %v3889
    %3921 = vmatprep.subr.bf16.mxu0 %v3888
    %3922 = vmatpush1.bf16.msra.mxu0 %v3887
    %3923 = vmatprep.subr.bf16.mxu0 %v3886
    %3924 = vmatpush1.bf16.msra.mxu0 %v3885
    %3925 = vmatprep.subr.bf16.mxu0 %v3884
    %3926 = vmatpush1.bf16.msra.mxu0 %v3883
    %3927 = vmatprep.subr.bf16.mxu0 %v3882
    %3928 = vmatpush1.bf16.msra.mxu0 %v3881
    %3929 = vmatprep.subr.bf16.mxu0 0
    %3930 = vmatpush2.bf16.msra.mxu0 0
    %3931 = vmatprep.subr.bf16.mxu0 0
    %3932 = vmatpush2.bf16.msra.mxu0 0
    %3933 = vmatprep.subr.bf16.mxu0 0
    %3934 = vmatpush2.bf16.msra.mxu0 0
    %3935 = vmatprep.subr.bf16.mxu0 0
    %3936 = vmatpush2.bf16.msra.mxu0 0
    %3937 = vmatprep.subr.bf16.mxu0 0
    %3938 = vmatpush2.bf16.msra.mxu0 0
    %3939 = vmatprep.subr.bf16.mxu0 0
    %3940 = vmatpush2.bf16.msra.mxu0 0
    %3941 = vmatprep.subr.bf16.mxu0 0
    %3942 = vmatpush2.bf16.msra.mxu0 0
    %3943 = vmatprep.subr.bf16.mxu0 0
    %3944 = vmatpush2.bf16.msra.mxu0 0
    %3945 = vmatprep.mubr.bf16.mxu0 0
    %3946 = vmatmul.mubr.bf16.gmra.mxu0 %v3822
    %v3947 = vpop.f32.mrf.mxu0
    %v3948 = vadd.f32 %v3785, %v3947
    %v3949 = vpop.f32.mrf.mxu0
    %v3950 = vadd.f32 %v3787, %v3949
    %v3951 = vpop.f32.mrf.mxu0
    %v3952 = vadd.f32 %v3789, %v3951
    %v3953 = vpop.f32.mrf.mxu0
    %v3954 = vadd.f32 %v3791, %v3953
    %3955 = vmatprep.mubr.bf16.mxu0 0
    %3956 = vmatmul.mubr.bf16.gmra.mxu0 %v3824
    %v3957 = vpop.f32.mrf.mxu0
    %v3958 = vpop.f32.mrf.mxu0
    %v3959 = vpop.f32.mrf.mxu0
    %v3960 = vpop.f32.mrf.mxu0
    %3961 = vmatprep.mubr.bf16.mxu0 0
    %3962 = vmatmul.mubr.bf16.gmra.mxu0 %v3826
    %v3963 = vpop.f32.mrf.mxu0
    %v3964 = vadd.f32 %v3801, %v3963
    %v3965 = vpop.f32.mrf.mxu0
    %v3966 = vadd.f32 %v3803, %v3965
    %v3967 = vpop.f32.mrf.mxu0
    %v3968 = vadd.f32 %v3805, %v3967
    %v3969 = vpop.f32.mrf.mxu0
    %v3970 = vadd.f32 %v3807, %v3969
    %3971 = vmatprep.mubr.bf16.mxu0 0
    %3972 = vmatmul.mubr.bf16.gmra.mxu0 %v3828
    %v3973 = vpop.f32.mrf.mxu0
    %v3974 = vpop.f32.mrf.mxu0
    %v3975 = vpop.f32.mrf.mxu0
    %v3976 = vpop.f32.mrf.mxu0
    %3977 = vdwg.mxu0
    %v3978 = vld [vmem:[#allocation2 + $0x80] sm:$0xff]
    %v3979 = vpack.c.bf16 %v3573, %v3572
    %v3980 = vpack.c.bf16 %v3575, %v3574
    %v3981 = vpack.c.bf16 %v3577, %v3576
    %v3982 = vpack.c.bf16 %v3978, %v3578
    %s3983 = scalar_lea.vmem [#allocation3], 256
    %v3984 = vld [vmem:[%s3983] sm:$0xff]
    %v3985 = vld [vmem:[%s3983 + $0x8] sm:$0xff]
    %v3986 = vld [vmem:[%s3983 + $0x10] sm:$0xff]
    %v3987 = vld [vmem:[%s3983 + $0x18] sm:$0xff]
    %v3988 = vld [vmem:[%s3983 + $0x20] sm:$0xff]
    %v3989 = vld [vmem:[%s3983 + $0x28] sm:$0xff]
    %v3990 = vld [vmem:[%s3983 + $0x30] sm:$0xff]
    %v3991 = vld [vmem:[%s3983 + $0x38] sm:$0xff]
    %v3992 = vld [vmem:[%s3983 + $0x40] sm:$0xff]
    %v3993 = vld [vmem:[%s3983 + $0x48] sm:$0xff]
    %v3994 = vld [vmem:[%s3983 + $0x50] sm:$0xff]
    %v3995 = vld [vmem:[%s3983 + $0x58] sm:$0xff]
    %v3996 = vld [vmem:[%s3983 + $0x60] sm:$0xff]
    %v3997 = vld [vmem:[%s3983 + $0x68] sm:$0xff]
    %v3998 = vld [vmem:[%s3983 + $0x70] sm:$0xff]
    %v3999 = vld [vmem:[%s3983 + $0x78] sm:$0xff]
    %v4016 = vunpack.c.l.b16 %v3984
    %v4017 = vunpack.c.h.b16 %v3984
    %v4018 = vunpack.c.l.b16 %v3985
    %v4019 = vunpack.c.h.b16 %v3985
    %v4020 = vunpack.c.l.b16 %v3986
    %v4021 = vunpack.c.h.b16 %v3986
    %v4022 = vunpack.c.l.b16 %v3987
    %v4023 = vunpack.c.h.b16 %v3987
    %v4024 = vunpack.c.l.b16 %v3988
    %v4025 = vunpack.c.h.b16 %v3988
    %v4026 = vunpack.c.l.b16 %v3989
    %v4027 = vunpack.c.h.b16 %v3989
    %v4028 = vunpack.c.l.b16 %v3990
    %v4029 = vunpack.c.h.b16 %v3990
    %v4030 = vunpack.c.l.b16 %v3991
    %v4031 = vunpack.c.h.b16 %v3991
    %v4032 = vunpack.c.l.b16 %v3992
    %v4033 = vunpack.c.h.b16 %v3992
    %v4034 = vunpack.c.l.b16 %v3993
    %v4035 = vunpack.c.h.b16 %v3993
    %v4036 = vunpack.c.l.b16 %v3994
    %v4037 = vunpack.c.h.b16 %v3994
    %v4038 = vunpack.c.l.b16 %v3995
    %v4039 = vunpack.c.h.b16 %v3995
    %v4040 = vunpack.c.l.b16 %v3996
    %v4041 = vunpack.c.h.b16 %v3996
    %v4042 = vunpack.c.l.b16 %v3997
    %v4043 = vunpack.c.h.b16 %v3997
    %v4044 = vunpack.c.l.b16 %v3998
    %v4045 = vunpack.c.h.b16 %v3998
    %v4046 = vunpack.c.l.b16 %v3999
    %v4047 = vunpack.c.h.b16 %v3999
    %v4048 = vpack.c.b16 %v4018, %v4016
    %v4049 = vpack.c.b16 %v4019, %v4017
    %v4050 = vpack.c.b16 %v4022, %v4020
    %v4051 = vpack.c.b16 %v4023, %v4021
    %v4052 = vpack.c.b16 %v4026, %v4024
    %v4053 = vpack.c.b16 %v4027, %v4025
    %v4054 = vpack.c.b16 %v4030, %v4028
    %v4055 = vpack.c.b16 %v4031, %v4029
    %v4056 = vpack.c.b16 %v4034, %v4032
    %v4057 = vpack.c.b16 %v4035, %v4033
    %v4058 = vpack.c.b16 %v4038, %v4036
    %v4059 = vpack.c.b16 %v4039, %v4037
    %v4060 = vpack.c.b16 %v4042, %v4040
    %v4061 = vpack.c.b16 %v4043, %v4041
    %v4062 = vpack.c.b16 %v4046, %v4044
    %v4063 = vpack.c.b16 %v4047, %v4045
    %4080 = vmatprep.subr.bf16.mxu0 %v4063
    %4081 = vmatpush1.bf16.msra.mxu0 %v4062
    %4082 = vmatprep.subr.bf16.mxu0 %v4061
    %4083 = vmatpush1.bf16.msra.mxu0 %v4060
    %4084 = vmatprep.subr.bf16.mxu0 %v4059
    %4085 = vmatpush1.bf16.msra.mxu0 %v4058
    %4086 = vmatprep.subr.bf16.mxu0 %v4057
    %4087 = vmatpush1.bf16.msra.mxu0 %v4056
    %4088 = vmatprep.subr.bf16.mxu0 %v4055
    %4089 = vmatpush1.bf16.msra.mxu0 %v4054
    %4090 = vmatprep.subr.bf16.mxu0 %v4053
    %4091 = vmatpush1.bf16.msra.mxu0 %v4052
    %4092 = vmatprep.subr.bf16.mxu0 %v4051
    %4093 = vmatpush1.bf16.msra.mxu0 %v4050
    %4094 = vmatprep.subr.bf16.mxu0 %v4049
    %4095 = vmatpush1.bf16.msra.mxu0 %v4048
    %4096 = vmatprep.subr.bf16.mxu0 0
    %4097 = vmatpush2.bf16.msra.mxu0 0
    %4098 = vmatprep.subr.bf16.mxu0 0
    %4099 = vmatpush2.bf16.msra.mxu0 0
    %4100 = vmatprep.subr.bf16.mxu0 0
    %4101 = vmatpush2.bf16.msra.mxu0 0
    %4102 = vmatprep.subr.bf16.mxu0 0
    %4103 = vmatpush2.bf16.msra.mxu0 0
    %4104 = vmatprep.subr.bf16.mxu0 0
    %4105 = vmatpush2.bf16.msra.mxu0 0
    %4106 = vmatprep.subr.bf16.mxu0 0
    %4107 = vmatpush2.bf16.msra.mxu0 0
    %4108 = vmatprep.subr.bf16.mxu0 0
    %4109 = vmatpush2.bf16.msra.mxu0 0
    %4110 = vmatprep.subr.bf16.mxu0 0
    %4111 = vmatpush2.bf16.msra.mxu0 0
    %4112 = vmatprep.mubr.bf16.mxu0 0
    %4113 = vmatmul.mubr.bf16.gmra.mxu0 %v3979
    %v4114 = vpop.f32.mrf.mxu0
    %v4115 = vadd.f32 0.0, %v4114
    %v4116 = vpop.f32.mrf.mxu0
    %v4117 = vadd.f32 0.0, %v4116
    %v4118 = vpop.f32.mrf.mxu0
    %v4119 = vadd.f32 0.0, %v4118
    %v4120 = vpop.f32.mrf.mxu0
    %v4121 = vadd.f32 0.0, %v4120
    %4122 = vmatprep.mubr.bf16.mxu0 0
    %4123 = vmatmul.mubr.bf16.gmra.mxu0 %v3980
    %v4124 = vpop.f32.mrf.mxu0
    %v4125 = vpop.f32.mrf.mxu0
    %v4126 = vpop.f32.mrf.mxu0
    %v4127 = vpop.f32.mrf.mxu0
    %4128 = vmatprep.mubr.bf16.mxu0 0
    %4129 = vmatmul.mubr.bf16.gmra.mxu0 %v3981
    %v4130 = vpop.f32.mrf.mxu0
    %v4131 = vadd.f32 0.0, %v4130
    %v4132 = vpop.f32.mrf.mxu0
    %v4133 = vadd.f32 0.0, %v4132
    %v4134 = vpop.f32.mrf.mxu0
    %v4135 = vadd.f32 0.0, %v4134
    %v4136 = vpop.f32.mrf.mxu0
    %v4137 = vadd.f32 0.0, %v4136
    %4138 = vmatprep.mubr.bf16.mxu0 0
    %4139 = vmatmul.mubr.bf16.gmra.mxu0 %v3982
    %v4140 = vpop.f32.mrf.mxu0
    %v4141 = vpop.f32.mrf.mxu0
    %v4142 = vpop.f32.mrf.mxu0
    %v4143 = vpop.f32.mrf.mxu0
    %4144 = vdwg.mxu0
    %v4145 = vadd.f32 %v3948, %v4115
    %v4146 = vadd.f32 %v3950, %v4117
    %v4147 = vadd.f32 %v3952, %v4119
    %v4148 = vadd.f32 %v3954, %v4121
    %v4149 = vadd.f32 %v3964, %v4131
    %v4150 = vadd.f32 %v3966, %v4133
    %v4151 = vadd.f32 %v3968, %v4135
    %v4152 = vadd.f32 %v3970, %v4137
    %v4153 = vld [vmem:[#allocation2 + $0x10] sm:$0xfe]
    %v4154 = vld [vmem:[#allocation2 + $0x20] sm:$0xff]
    %v4155 = vld [vmem:[#allocation2 + $0x30] sm:$0xff]
    %v4156 = vld [vmem:[#allocation2 + $0x40] sm:$0xff]
    %v4157 = vld [vmem:[#allocation2 + $0x50] sm:$0xff]
    %v4158 = vld [vmem:[#allocation2 + $0x60] sm:$0xff]
    %v4159 = vld [vmem:[#allocation2 + $0x70] sm:$0xff]
    %v4160 = vld [vmem:[#allocation2 + $0x80] sm:$0xff]
    %v4161 = vld [vmem:[#allocation2 + $0x90] sm:$0x1]
    %v4162 = vpack.c.bf16 %v4154, %v4153
    %v4163 = vpack.c.bf16 %v4156, %v4155
    %v4164 = vpack.c.bf16 %v4158, %v4157
    %v4165 = vpack.c.bf16 %v4160, %v4159
    %v4166 = vpack.c.bf16 %v4161, %v4161
    %s4167 = scalar_lea.vmem [#allocation3], 384
    %v4168 = vld [vmem:[%s4167] sm:$0xff]
    %v4169 = vld [vmem:[%s4167 + $0x8] sm:$0xff]
    %v4170 = vld [vmem:[%s4167 + $0x10] sm:$0xff]
    %v4171 = vld [vmem:[%s4167 + $0x18] sm:$0xff]
    %v4172 = vld [vmem:[%s4167 + $0x20] sm:$0xff]
    %v4173 = vld [vmem:[%s4167 + $0x28] sm:$0xff]
    %v4174 = vld [vmem:[%s4167 + $0x30] sm:$0xff]
    %v4175 = vld [vmem:[%s4167 + $0x38] sm:$0xff]
    %v4176 = vld [vmem:[%s4167 + $0x40] sm:$0xff]
    %v4177 = vld [vmem:[%s4167 + $0x48] sm:$0xff]
    %v4178 = vld [vmem:[%s4167 + $0x50] sm:$0xff]
    %v4179 = vld [vmem:[%s4167 + $0x58] sm:$0xff]
    %v4180 = vld [vmem:[%s4167 + $0x60] sm:$0xff]
    %v4181 = vld [vmem:[%s4167 + $0x68] sm:$0xff]
    %v4182 = vld [vmem:[%s4167 + $0x70] sm:$0xff]
    %v4183 = vld [vmem:[%s4167 + $0x78] sm:$0xff]
    %v4185 = vshrl.u32 %v4162, 16
    %v4187 = vshll.u32 %v4162, 16
    %v4189 = vrot.slane %v4187, 1
    %v4190 = vor.u32 %v4185, %v4189
    %v4192 = vshll.u32 %v4163, 16
    %v4194 = vrot.slane %v4192, 1
    %v4195 = vsel %vm689, %v4190, %v4194
    %v4196 = vshrl.u32 %v4163, 16
    %v4198 = vor.u32 %v4196, %v4194
    %v4200 = vshll.u32 %v4164, 16
    %v4202 = vrot.slane %v4200, 1
    %v4203 = vsel %vm689, %v4198, %v4202
    %v4204 = vshrl.u32 %v4164, 16
    %v4206 = vor.u32 %v4204, %v4202
    %v4208 = vshll.u32 %v4165, 16
    %v4210 = vrot.slane %v4208, 1
    %v4211 = vsel %vm689, %v4206, %v4210
    %v4212 = vshrl.u32 %v4165, 16
    %v4214 = vor.u32 %v4212, %v4210
    %v4216 = vshll.u32 %v4166, 16
    %v4218 = vrot.slane %v4216, 1
    %v4219 = vsel %vm689, %v4214, %v4218
    %v4240 = vunpack.c.l.b16 %v4168
    %v4241 = vunpack.c.h.b16 %v4168
    %v4242 = vunpack.c.l.b16 %v4169
    %v4243 = vunpack.c.h.b16 %v4169
    %v4244 = vunpack.c.l.b16 %v4170
    %v4245 = vunpack.c.h.b16 %v4170
    %v4246 = vunpack.c.l.b16 %v4171
    %v4247 = vunpack.c.h.b16 %v4171
    %v4248 = vunpack.c.l.b16 %v4172
    %v4249 = vunpack.c.h.b16 %v4172
    %v4250 = vunpack.c.l.b16 %v4173
    %v4251 = vunpack.c.h.b16 %v4173
    %v4252 = vunpack.c.l.b16 %v4174
    %v4253 = vunpack.c.h.b16 %v4174
    %v4254 = vunpack.c.l.b16 %v4175
    %v4255 = vunpack.c.h.b16 %v4175
    %v4256 = vunpack.c.l.b16 %v4176
    %v4257 = vunpack.c.h.b16 %v4176
    %v4258 = vunpack.c.l.b16 %v4177
    %v4259 = vunpack.c.h.b16 %v4177
    %v4260 = vunpack.c.l.b16 %v4178
    %v4261 = vunpack.c.h.b16 %v4178
    %v4262 = vunpack.c.l.b16 %v4179
    %v4263 = vunpack.c.h.b16 %v4179
    %v4264 = vunpack.c.l.b16 %v4180
    %v4265 = vunpack.c.h.b16 %v4180
    %v4266 = vunpack.c.l.b16 %v4181
    %v4267 = vunpack.c.h.b16 %v4181
    %v4268 = vunpack.c.l.b16 %v4182
    %v4269 = vunpack.c.h.b16 %v4182
    %v4270 = vunpack.c.l.b16 %v4183
    %v4271 = vunpack.c.h.b16 %v4183
    %v4272 = vpack.c.b16 %v4242, %v4240
    %v4273 = vpack.c.b16 %v4243, %v4241
    %v4274 = vpack.c.b16 %v4246, %v4244
    %v4275 = vpack.c.b16 %v4247, %v4245
    %v4276 = vpack.c.b16 %v4250, %v4248
    %v4277 = vpack.c.b16 %v4251, %v4249
    %v4278 = vpack.c.b16 %v4254, %v4252
    %v4279 = vpack.c.b16 %v4255, %v4253
    %v4280 = vpack.c.b16 %v4258, %v4256
    %v4281 = vpack.c.b16 %v4259, %v4257
    %v4282 = vpack.c.b16 %v4262, %v4260
    %v4283 = vpack.c.b16 %v4263, %v4261
    %v4284 = vpack.c.b16 %v4266, %v4264
    %v4285 = vpack.c.b16 %v4267, %v4265
    %v4286 = vpack.c.b16 %v4270, %v4268
    %v4287 = vpack.c.b16 %v4271, %v4269
    %4304 = vmatprep.subr.bf16.mxu0 %v4287
    %4305 = vmatpush1.bf16.msra.mxu0 %v4286
    %4306 = vmatprep.subr.bf16.mxu0 %v4285
    %4307 = vmatpush1.bf16.msra.mxu0 %v4284
    %4308 = vmatprep.subr.bf16.mxu0 %v4283
    %4309 = vmatpush1.bf16.msra.mxu0 %v4282
    %4310 = vmatprep.subr.bf16.mxu0 %v4281
    %4311 = vmatpush1.bf16.msra.mxu0 %v4280
    %4312 = vmatprep.subr.bf16.mxu0 %v4279
    %4313 = vmatpush1.bf16.msra.mxu0 %v4278
    %4314 = vmatprep.subr.bf16.mxu0 %v4277
    %4315 = vmatpush1.bf16.msra.mxu0 %v4276
    %4316 = vmatprep.subr.bf16.mxu0 %v4275
    %4317 = vmatpush1.bf16.msra.mxu0 %v4274
    %4318 = vmatprep.subr.bf16.mxu0 %v4273
    %4319 = vmatpush1.bf16.msra.mxu0 %v4272
    %4320 = vmatprep.subr.bf16.mxu0 0
    %4321 = vmatpush2.bf16.msra.mxu0 0
    %4322 = vmatprep.subr.bf16.mxu0 0
    %4323 = vmatpush2.bf16.msra.mxu0 0
    %4324 = vmatprep.subr.bf16.mxu0 0
    %4325 = vmatpush2.bf16.msra.mxu0 0
    %4326 = vmatprep.subr.bf16.mxu0 0
    %4327 = vmatpush2.bf16.msra.mxu0 0
    %4328 = vmatprep.subr.bf16.mxu0 0
    %4329 = vmatpush2.bf16.msra.mxu0 0
    %4330 = vmatprep.subr.bf16.mxu0 0
    %4331 = vmatpush2.bf16.msra.mxu0 0
    %4332 = vmatprep.subr.bf16.mxu0 0
    %4333 = vmatpush2.bf16.msra.mxu0 0
    %4334 = vmatprep.subr.bf16.mxu0 0
    %4335 = vmatpush2.bf16.msra.mxu0 0
    %4336 = vmatprep.mubr.bf16.mxu0 0
    %4337 = vmatmul.mubr.bf16.gmra.mxu0 %v4195
    %v4338 = vpop.f32.mrf.mxu0
    %v4339 = vadd.f32 0.0, %v4338
    %v4340 = vpop.f32.mrf.mxu0
    %v4341 = vadd.f32 0.0, %v4340
    %v4342 = vpop.f32.mrf.mxu0
    %v4343 = vadd.f32 0.0, %v4342
    %v4344 = vpop.f32.mrf.mxu0
    %v4345 = vadd.f32 0.0, %v4344
    %4346 = vmatprep.mubr.bf16.mxu0 0
    %4347 = vmatmul.mubr.bf16.gmra.mxu0 %v4203
    %v4348 = vpop.f32.mrf.mxu0
    %v4349 = vpop.f32.mrf.mxu0
    %v4350 = vpop.f32.mrf.mxu0
    %v4351 = vpop.f32.mrf.mxu0
    %4352 = vmatprep.mubr.bf16.mxu0 0
    %4353 = vmatmul.mubr.bf16.gmra.mxu0 %v4211
    %v4354 = vpop.f32.mrf.mxu0
    %v4355 = vadd.f32 0.0, %v4354
    %v4356 = vpop.f32.mrf.mxu0
    %v4357 = vadd.f32 0.0, %v4356
    %v4358 = vpop.f32.mrf.mxu0
    %v4359 = vadd.f32 0.0, %v4358
    %v4360 = vpop.f32.mrf.mxu0
    %v4361 = vadd.f32 0.0, %v4360
    %4362 = vmatprep.mubr.bf16.mxu0 0
    %4363 = vmatmul.mubr.bf16.gmra.mxu0 %v4219
    %v4364 = vpop.f32.mrf.mxu0
    %v4365 = vpop.f32.mrf.mxu0
    %v4366 = vpop.f32.mrf.mxu0
    %v4367 = vpop.f32.mrf.mxu0
    %4368 = vdwg.mxu0
    %v4369 = vadd.f32 %v4145, %v4339
    %v4370 = vadd.f32 %v4146, %v4341
    %v4371 = vadd.f32 %v4147, %v4343
    %v4372 = vadd.f32 %v4148, %v4345
    %v4373 = vadd.f32 %v4149, %v4355
    %v4374 = vadd.f32 %v4150, %v4357
    %v4375 = vadd.f32 %v4151, %v4359
    %v4376 = vadd.f32 %v4152, %v4361
    %v4377 = vld [vmem:[#allocation2 + $0x10] sm:$0xfc]
    %v4378 = vld [vmem:[#allocation2 + $0x90] sm:$0x3]
    %v4379 = vpack.c.bf16 %v4154, %v4377
    %v4380 = vpack.c.bf16 %v4378, %v4378
    %s4381 = scalar_lea.vmem [#allocation3], 512
    %v4382 = vld [vmem:[%s4381] sm:$0xff]
    %v4383 = vld [vmem:[%s4381 + $0x8] sm:$0xff]
    %v4384 = vld [vmem:[%s4381 + $0x10] sm:$0xff]
    %v4385 = vld [vmem:[%s4381 + $0x18] sm:$0xff]
    %v4386 = vld [vmem:[%s4381 + $0x20] sm:$0xff]
    %v4387 = vld [vmem:[%s4381 + $0x28] sm:$0xff]
    %v4388 = vld [vmem:[%s4381 + $0x30] sm:$0xff]
    %v4389 = vld [vmem:[%s4381 + $0x38] sm:$0xff]
    %v4390 = vld [vmem:[%s4381 + $0x40] sm:$0xff]
    %v4391 = vld [vmem:[%s4381 + $0x48] sm:$0xff]
    %v4392 = vld [vmem:[%s4381 + $0x50] sm:$0xff]
    %v4393 = vld [vmem:[%s4381 + $0x58] sm:$0xff]
    %v4394 = vld [vmem:[%s4381 + $0x60] sm:$0xff]
    %v4395 = vld [vmem:[%s4381 + $0x68] sm:$0xff]
    %v4396 = vld [vmem:[%s4381 + $0x70] sm:$0xff]
    %v4397 = vld [vmem:[%s4381 + $0x78] sm:$0xff]
    %v4403 = vrot.slane %v4379, 1
    %v4404 = vrot.slane %v4163, 1
    %v4405 = vsel %vm869, %v4403, %v4404
    %v4406 = vrot.slane %v4164, 1
    %v4407 = vsel %vm869, %v4404, %v4406
    %v4408 = vrot.slane %v4165, 1
    %v4409 = vsel %vm869, %v4406, %v4408
    %v4410 = vrot.slane %v4380, 1
    %v4411 = vsel %vm869, %v4408, %v4410
    %v4432 = vunpack.c.l.b16 %v4382
    %v4433 = vunpack.c.h.b16 %v4382
    %v4434 = vunpack.c.l.b16 %v4383
    %v4435 = vunpack.c.h.b16 %v4383
    %v4436 = vunpack.c.l.b16 %v4384
    %v4437 = vunpack.c.h.b16 %v4384
    %v4438 = vunpack.c.l.b16 %v4385
    %v4439 = vunpack.c.h.b16 %v4385
    %v4440 = vunpack.c.l.b16 %v4386
    %v4441 = vunpack.c.h.b16 %v4386
    %v4442 = vunpack.c.l.b16 %v4387
    %v4443 = vunpack.c.h.b16 %v4387
    %v4444 = vunpack.c.l.b16 %v4388
    %v4445 = vunpack.c.h.b16 %v4388
    %v4446 = vunpack.c.l.b16 %v4389
    %v4447 = vunpack.c.h.b16 %v4389
    %v4448 = vunpack.c.l.b16 %v4390
    %v4449 = vunpack.c.h.b16 %v4390
    %v4450 = vunpack.c.l.b16 %v4391
    %v4451 = vunpack.c.h.b16 %v4391
    %v4452 = vunpack.c.l.b16 %v4392
    %v4453 = vunpack.c.h.b16 %v4392
    %v4454 = vunpack.c.l.b16 %v4393
    %v4455 = vunpack.c.h.b16 %v4393
    %v4456 = vunpack.c.l.b16 %v4394
    %v4457 = vunpack.c.h.b16 %v4394
    %v4458 = vunpack.c.l.b16 %v4395
    %v4459 = vunpack.c.h.b16 %v4395
    %v4460 = vunpack.c.l.b16 %v4396
    %v4461 = vunpack.c.h.b16 %v4396
    %v4462 = vunpack.c.l.b16 %v4397
    %v4463 = vunpack.c.h.b16 %v4397
    %v4464 = vpack.c.b16 %v4434, %v4432
    %v4465 = vpack.c.b16 %v4435, %v4433
    %v4466 = vpack.c.b16 %v4438, %v4436
    %v4467 = vpack.c.b16 %v4439, %v4437
    %v4468 = vpack.c.b16 %v4442, %v4440
    %v4469 = vpack.c.b16 %v4443, %v4441
    %v4470 = vpack.c.b16 %v4446, %v4444
    %v4471 = vpack.c.b16 %v4447, %v4445
    %v4472 = vpack.c.b16 %v4450, %v4448
    %v4473 = vpack.c.b16 %v4451, %v4449
    %v4474 = vpack.c.b16 %v4454, %v4452
    %v4475 = vpack.c.b16 %v4455, %v4453
    %v4476 = vpack.c.b16 %v4458, %v4456
    %v4477 = vpack.c.b16 %v4459, %v4457
    %v4478 = vpack.c.b16 %v4462, %v4460
    %v4479 = vpack.c.b16 %v4463, %v4461
    %4496 = vmatprep.subr.bf16.mxu0 %v4479
    %4497 = vmatpush1.bf16.msra.mxu0 %v4478
    %4498 = vmatprep.subr.bf16.mxu0 %v4477
    %4499 = vmatpush1.bf16.msra.mxu0 %v4476
    %4500 = vmatprep.subr.bf16.mxu0 %v4475
    %4501 = vmatpush1.bf16.msra.mxu0 %v4474
    %4502 = vmatprep.subr.bf16.mxu0 %v4473
    %4503 = vmatpush1.bf16.msra.mxu0 %v4472
    %4504 = vmatprep.subr.bf16.mxu0 %v4471
    %4505 = vmatpush1.bf16.msra.mxu0 %v4470
    %4506 = vmatprep.subr.bf16.mxu0 %v4469
    %4507 = vmatpush1.bf16.msra.mxu0 %v4468
    %4508 = vmatprep.subr.bf16.mxu0 %v4467
    %4509 = vmatpush1.bf16.msra.mxu0 %v4466
    %4510 = vmatprep.subr.bf16.mxu0 %v4465
    %4511 = vmatpush1.bf16.msra.mxu0 %v4464
    %4512 = vmatprep.subr.bf16.mxu0 0
    %4513 = vmatpush2.bf16.msra.mxu0 0
    %4514 = vmatprep.subr.bf16.mxu0 0
    %4515 = vmatpush2.bf16.msra.mxu0 0
    %4516 = vmatprep.subr.bf16.mxu0 0
    %4517 = vmatpush2.bf16.msra.mxu0 0
    %4518 = vmatprep.subr.bf16.mxu0 0
    %4519 = vmatpush2.bf16.msra.mxu0 0
    %4520 = vmatprep.subr.bf16.mxu0 0
    %4521 = vmatpush2.bf16.msra.mxu0 0
    %4522 = vmatprep.subr.bf16.mxu0 0
    %4523 = vmatpush2.bf16.msra.mxu0 0
    %4524 = vmatprep.subr.bf16.mxu0 0
    %4525 = vmatpush2.bf16.msra.mxu0 0
    %4526 = vmatprep.subr.bf16.mxu0 0
    %4527 = vmatpush2.bf16.msra.mxu0 0
    %4528 = vmatprep.mubr.bf16.mxu0 0
    %4529 = vmatmul.mubr.bf16.gmra.mxu0 %v4405
    %v4530 = vpop.f32.mrf.mxu0
    %v4531 = vadd.f32 0.0, %v4530
    %v4532 = vpop.f32.mrf.mxu0
    %v4533 = vadd.f32 0.0, %v4532
    %v4534 = vpop.f32.mrf.mxu0
    %v4535 = vadd.f32 0.0, %v4534
    %v4536 = vpop.f32.mrf.mxu0
    %v4537 = vadd.f32 0.0, %v4536
    %4538 = vmatprep.mubr.bf16.mxu0 0
    %4539 = vmatmul.mubr.bf16.gmra.mxu0 %v4407
    %v4540 = vpop.f32.mrf.mxu0
    %v4541 = vpop.f32.mrf.mxu0
    %v4542 = vpop.f32.mrf.mxu0
    %v4543 = vpop.f32.mrf.mxu0
    %4544 = vmatprep.mubr.bf16.mxu0 0
    %4545 = vmatmul.mubr.bf16.gmra.mxu0 %v4409
    %v4546 = vpop.f32.mrf.mxu0
    %v4547 = vadd.f32 0.0, %v4546
    %v4548 = vpop.f32.mrf.mxu0
    %v4549 = vadd.f32 0.0, %v4548
    %v4550 = vpop.f32.mrf.mxu0
    %v4551 = vadd.f32 0.0, %v4550
    %v4552 = vpop.f32.mrf.mxu0
    %v4553 = vadd.f32 0.0, %v4552
    %4554 = vmatprep.mubr.bf16.mxu0 0
    %4555 = vmatmul.mubr.bf16.gmra.mxu0 %v4411
    %v4556 = vpop.f32.mrf.mxu0
    %v4557 = vpop.f32.mrf.mxu0
    %v4558 = vpop.f32.mrf.mxu0
    %v4559 = vpop.f32.mrf.mxu0
    %4560 = vdwg.mxu0
    %v4561 = vadd.f32 %v4369, %v4531
    %v4562 = vadd.f32 %v4370, %v4533
    %v4563 = vadd.f32 %v4371, %v4535
    %v4564 = vadd.f32 %v4372, %v4537
    %v4565 = vadd.f32 %v4373, %v4547
    %v4566 = vadd.f32 %v4374, %v4549
    %v4567 = vadd.f32 %v4375, %v4551
    %v4568 = vadd.f32 %v4376, %v4553
    %v4569 = vld [vmem:[%s14] sm:$0x3]
    %v4571 = vlaneseq
    %v4572 = vshrl.u32 %v4571, 7
    %v4573 = vsub.s32 0, %v4572
    %v4574 = vrot.slane %v4569, %v4573
    %v4575 = vlaneseq
    %v4576 = vshrl.u32 %v4575, 7
    %v4577 = vsub.s32 1, %v4576
    %v4578 = vrot.slane %v4569, %v4577
    %v4581 = vmul.f32 %v4561, %v4574
    %v4582 = vmul.f32 %v4562, %v4578
    %v4583 = vmul.f32 %v4563, %v4574
    %v4584 = vmul.f32 %v4564, %v4578
    %v4585 = vmul.f32 %v4565, %v4574
    %v4586 = vmul.f32 %v4566, %v4578
    %v4587 = vmul.f32 %v4567, %v4574
    %v4588 = vmul.f32 %v4568, %v4578
    %v4589 = vld [vmem:[%s15] sm:$0x3]
    %v4591 = vlaneseq
    %v4592 = vshrl.u32 %v4591, 7
    %v4593 = vsub.s32 0, %v4592
    %v4594 = vrot.slane %v4589, %v4593
    %v4595 = vlaneseq
    %v4596 = vshrl.u32 %v4595, 7
    %v4597 = vsub.s32 1, %v4596
    %v4598 = vrot.slane %v4589, %v4597
    %v4601 = vadd.f32 %v4581, %v4594
    %v4602 = vadd.f32 %v4582, %v4598
    %v4603 = vadd.f32 %v4583, %v4594
    %v4604 = vadd.f32 %v4584, %v4598
    %v4605 = vadd.f32 %v4585, %v4594
    %v4606 = vadd.f32 %v4586, %v4598
    %v4607 = vadd.f32 %v4587, %v4594
    %v4608 = vadd.f32 %v4588, %v4598
    %vm4609 = vcmp.ge.f32.partialorder %v4601, 0.0
    %vm4610 = vcmp.ge.f32.partialorder %v4602, 0.0
    %vm4611 = vcmp.ge.f32.partialorder %v4603, 0.0
    %vm4612 = vcmp.ge.f32.partialorder %v4604, 0.0
    %vm4613 = vcmp.ge.f32.partialorder %v4605, 0.0
    %vm4614 = vcmp.ge.f32.partialorder %v4606, 0.0
    %vm4615 = vcmp.ge.f32.partialorder %v4607, 0.0
    %vm4616 = vcmp.ge.f32.partialorder %v4608, 0.0
    %v4617 = vmul.f32 %v4601, 0.01
    %v4618 = vmul.f32 %v4602, 0.01
    %v4619 = vmul.f32 %v4603, 0.01
    %v4620 = vmul.f32 %v4604, 0.01
    %v4621 = vmul.f32 %v4605, 0.01
    %v4622 = vmul.f32 %v4606, 0.01
    %v4623 = vmul.f32 %v4607, 0.01
    %v4624 = vmul.f32 %v4608, 0.01
    %v4625 = vsel %vm4609, %v4601, %v4617
    %v4626 = vsel %vm4610, %v4602, %v4618
    %v4627 = vsel %vm4611, %v4603, %v4619
    %v4628 = vsel %vm4612, %v4604, %v4620
    %v4629 = vsel %vm4613, %v4605, %v4621
    %v4630 = vsel %vm4614, %v4606, %v4622
    %v4631 = vsel %vm4615, %v4607, %v4623
    %v4632 = vsel %vm4616, %v4608, %v4624
    %4633 = vst [vmem:[#allocation2 + $0x10] sm:$0xff] %v4625
    %4634 = vst [vmem:[#allocation2 + $0x18] sm:$0xff] %v4626
    %4635 = vst [vmem:[#allocation2 + $0x20] sm:$0xff] %v4627
    %4636 = vst [vmem:[#allocation2 + $0x28] sm:$0xff] %v4628
    %4637 = vst [vmem:[#allocation2 + $0x50] sm:$0xff] %v4629
    %4638 = vst [vmem:[#allocation2 + $0x58] sm:$0xff] %v4630
    %4639 = vst [vmem:[#allocation2 + $0x60] sm:$0xff] %v4631
    %4640 = vst [vmem:[#allocation2 + $0x68] sm:$0xff] %v4632
    %s4641 = smul.u32 %s3566, 32
    %s4642 = smul.u32 %s4641, 2
    %s4643 = sshll.u32 %s4642, 4
    %4644 = dma.done %s144, %s4643
    %v4645 = vld [vmem:[#allocation2] sm:$0xc0]
    %v4646 = vld [vmem:[#allocation2 + $0x8] sm:$0xc0]
    %v4647 = vld [vmem:[#allocation2 + $0x10] sm:$0xff]
    %v4648 = vld [vmem:[#allocation2 + $0x18] sm:$0xff]
    %v4649 = vld [vmem:[#allocation2 + $0x20] sm:$0xff]
    %v4650 = vld [vmem:[#allocation2 + $0x28] sm:$0xff]
    %v4651 = vld [vmem:[#allocation2 + $0x30] sm:$0xff]
    %v4652 = vld [vmem:[#allocation2 + $0x38] sm:$0xff]
    %v4653 = vld [vmem:[#allocation2 + $0x40] sm:$0xff]
    %v4654 = vld [vmem:[#allocation2 + $0x48] sm:$0xff]
    %v4655 = vld [vmem:[#allocation2 + $0x50] sm:$0xff]
    %v4656 = vld [vmem:[#allocation2 + $0x58] sm:$0xff]
    %v4657 = vld [vmem:[#allocation2 + $0x60] sm:$0xff]
    %v4658 = vld [vmem:[#allocation2 + $0x68] sm:$0xff]
    %v4659 = vld [vmem:[#allocation2 + $0x70] sm:$0xff]
    %v4660 = vld [vmem:[#allocation2 + $0x78] sm:$0xff]
    %v4661 = vld [vmem:[#allocation2 + $0x80] sm:$0x3f]
    %v4662 = vld [vmem:[#allocation2 + $0x88] sm:$0x3f]
    %v4663 = vpack.c.bf16 %v4647, %v4645
    %v4664 = vpack.c.bf16 %v4648, %v4646
    %v4665 = vpack.c.bf16 %v4651, %v4649
    %v4666 = vpack.c.bf16 %v4652, %v4650
    %v4667 = vpack.c.bf16 %v4655, %v4653
    %v4668 = vpack.c.bf16 %v4656, %v4654
    %v4669 = vpack.c.bf16 %v4659, %v4657
    %v4670 = vpack.c.bf16 %v4660, %v4658
    %v4671 = vpack.c.bf16 %v4661, %v4661
    %v4672 = vpack.c.bf16 %v4662, %v4662
    %v4673 = vld [vmem:[#allocation4] sm:$0xff]
    %v4674 = vld [vmem:[#allocation4 + $0x8] sm:$0xff]
    %v4675 = vld [vmem:[#allocation4 + $0x10] sm:$0xff]
    %v4676 = vld [vmem:[#allocation4 + $0x18] sm:$0xff]
    %v4677 = vld [vmem:[#allocation4 + $0x20] sm:$0xff]
    %v4678 = vld [vmem:[#allocation4 + $0x28] sm:$0xff]
    %v4679 = vld [vmem:[#allocation4 + $0x30] sm:$0xff]
    %v4680 = vld [vmem:[#allocation4 + $0x38] sm:$0xff]
    %v4681 = vld [vmem:[#allocation4 + $0x40] sm:$0xff]
    %v4682 = vld [vmem:[#allocation4 + $0x48] sm:$0xff]
    %v4683 = vld [vmem:[#allocation4 + $0x50] sm:$0xff]
    %v4684 = vld [vmem:[#allocation4 + $0x58] sm:$0xff]
    %v4685 = vld [vmem:[#allocation4 + $0x60] sm:$0xff]
    %v4686 = vld [vmem:[#allocation4 + $0x68] sm:$0xff]
    %v4687 = vld [vmem:[#allocation4 + $0x70] sm:$0xff]
    %v4688 = vld [vmem:[#allocation4 + $0x78] sm:$0xff]
    %v4689 = vld [vmem:[#allocation4 + $0x80] sm:$0xff]
    %v4690 = vld [vmem:[#allocation4 + $0x88] sm:$0xff]
    %v4691 = vld [vmem:[#allocation4 + $0x90] sm:$0xff]
    %v4692 = vld [vmem:[#allocation4 + $0x98] sm:$0xff]
    %v4693 = vld [vmem:[#allocation4 + $0xa0] sm:$0xff]
    %v4694 = vld [vmem:[#allocation4 + $0xa8] sm:$0xff]
    %v4695 = vld [vmem:[#allocation4 + $0xb0] sm:$0xff]
    %v4696 = vld [vmem:[#allocation4 + $0xb8] sm:$0xff]
    %v4697 = vld [vmem:[#allocation4 + $0xc0] sm:$0xff]
    %v4698 = vld [vmem:[#allocation4 + $0xc8] sm:$0xff]
    %v4699 = vld [vmem:[#allocation4 + $0xd0] sm:$0xff]
    %v4700 = vld [vmem:[#allocation4 + $0xd8] sm:$0xff]
    %v4701 = vld [vmem:[#allocation4 + $0xe0] sm:$0xff]
    %v4702 = vld [vmem:[#allocation4 + $0xe8] sm:$0xff]
    %v4703 = vld [vmem:[#allocation4 + $0xf0] sm:$0xff]
    %v4704 = vld [vmem:[#allocation4 + $0xf8] sm:$0xff]
    %v4705 = vld [vmem:[#allocation2] sm:$0x80]
    %v4706 = vld [vmem:[#allocation2 + $0x8] sm:$0x80]
    %v4707 = vld [vmem:[#allocation2 + $0x80] sm:$0x7f]
    %v4708 = vld [vmem:[#allocation2 + $0x88] sm:$0x7f]
    %v4709 = vpack.c.bf16 %v4647, %v4705
    %v4710 = vpack.c.bf16 %v4648, %v4706
    %v4711 = vpack.c.bf16 %v4707, %v4707
    %v4712 = vpack.c.bf16 %v4708, %v4708
    %s4713 = scalar_lea.vmem [#allocation4], 256
    %v4714 = vld [vmem:[%s4713] sm:$0xff]
    %v4715 = vld [vmem:[%s4713 + $0x8] sm:$0xff]
    %v4716 = vld [vmem:[%s4713 + $0x10] sm:$0xff]
    %v4717 = vld [vmem:[%s4713 + $0x18] sm:$0xff]
    %v4718 = vld [vmem:[%s4713 + $0x20] sm:$0xff]
    %v4719 = vld [vmem:[%s4713 + $0x28] sm:$0xff]
    %v4720 = vld [vmem:[%s4713 + $0x30] sm:$0xff]
    %v4721 = vld [vmem:[%s4713 + $0x38] sm:$0xff]
    %v4722 = vld [vmem:[%s4713 + $0x40] sm:$0xff]
    %v4723 = vld [vmem:[%s4713 + $0x48] sm:$0xff]
    %v4724 = vld [vmem:[%s4713 + $0x50] sm:$0xff]
    %v4725 = vld [vmem:[%s4713 + $0x58] sm:$0xff]
    %v4726 = vld [vmem:[%s4713 + $0x60] sm:$0xff]
    %v4727 = vld [vmem:[%s4713 + $0x68] sm:$0xff]
    %v4728 = vld [vmem:[%s4713 + $0x70] sm:$0xff]
    %v4729 = vld [vmem:[%s4713 + $0x78] sm:$0xff]
    %v4730 = vld [vmem:[%s4713 + $0x80] sm:$0xff]
    %v4731 = vld [vmem:[%s4713 + $0x88] sm:$0xff]
    %v4732 = vld [vmem:[%s4713 + $0x90] sm:$0xff]
    %v4733 = vld [vmem:[%s4713 + $0x98] sm:$0xff]
    %v4734 = vld [vmem:[%s4713 + $0xa0] sm:$0xff]
    %v4735 = vld [vmem:[%s4713 + $0xa8] sm:$0xff]
    %v4736 = vld [vmem:[%s4713 + $0xb0] sm:$0xff]
    %v4737 = vld [vmem:[%s4713 + $0xb8] sm:$0xff]
    %v4738 = vld [vmem:[%s4713 + $0xc0] sm:$0xff]
    %v4739 = vld [vmem:[%s4713 + $0xc8] sm:$0xff]
    %v4740 = vld [vmem:[%s4713 + $0xd0] sm:$0xff]
    %v4741 = vld [vmem:[%s4713 + $0xd8] sm:$0xff]
    %v4742 = vld [vmem:[%s4713 + $0xe0] sm:$0xff]
    %v4743 = vld [vmem:[%s4713 + $0xe8] sm:$0xff]
    %v4744 = vld [vmem:[%s4713 + $0xf0] sm:$0xff]
    %v4745 = vld [vmem:[%s4713 + $0xf8] sm:$0xff]
    %v4747 = vshrl.u32 %v4709, 16
    %v4749 = vrot.slane %v4747, 3
    %v4750 = vshll.u32 %v4709, 16
    %v4752 = vrot.slane %v4750, 4
    %v4753 = vor.u32 %v4749, %v4752
    %v4755 = vshrl.u32 %v4665, 16
    %v4757 = vrot.slane %v4755, 3
    %v4758 = vshll.u32 %v4665, 16
    %v4760 = vrot.slane %v4758, 4
    %v4761 = vor.u32 %v4757, %v4760
    %v4762 = vsel %vm237, %v4753, %v4761
    %v4764 = vshrl.u32 %v4710, 16
    %v4766 = vrot.slane %v4764, 3
    %v4767 = vshll.u32 %v4710, 16
    %v4769 = vrot.slane %v4767, 4
    %v4770 = vor.u32 %v4766, %v4769
    %v4772 = vshrl.u32 %v4666, 16
    %v4774 = vrot.slane %v4772, 3
    %v4775 = vshll.u32 %v4666, 16
    %v4777 = vrot.slane %v4775, 4
    %v4778 = vor.u32 %v4774, %v4777
    %v4779 = vsel %vm237, %v4770, %v4778
    %v4781 = vshrl.u32 %v4667, 16
    %v4783 = vrot.slane %v4781, 3
    %v4784 = vshll.u32 %v4667, 16
    %v4786 = vrot.slane %v4784, 4
    %v4787 = vor.u32 %v4783, %v4786
    %v4788 = vsel %vm237, %v4761, %v4787
    %v4790 = vshrl.u32 %v4668, 16
    %v4792 = vrot.slane %v4790, 3
    %v4793 = vshll.u32 %v4668, 16
    %v4795 = vrot.slane %v4793, 4
    %v4796 = vor.u32 %v4792, %v4795
    %v4797 = vsel %vm237, %v4778, %v4796
    %v4799 = vshrl.u32 %v4669, 16
    %v4801 = vrot.slane %v4799, 3
    %v4802 = vshll.u32 %v4669, 16
    %v4804 = vrot.slane %v4802, 4
    %v4805 = vor.u32 %v4801, %v4804
    %v4806 = vsel %vm237, %v4787, %v4805
    %v4808 = vshrl.u32 %v4670, 16
    %v4810 = vrot.slane %v4808, 3
    %v4811 = vshll.u32 %v4670, 16
    %v4813 = vrot.slane %v4811, 4
    %v4814 = vor.u32 %v4810, %v4813
    %v4815 = vsel %vm237, %v4796, %v4814
    %v4817 = vshrl.u32 %v4711, 16
    %v4819 = vrot.slane %v4817, 3
    %v4820 = vshll.u32 %v4711, 16
    %v4822 = vrot.slane %v4820, 4
    %v4823 = vor.u32 %v4819, %v4822
    %v4824 = vsel %vm237, %v4805, %v4823
    %v4826 = vshrl.u32 %v4712, 16
    %v4828 = vrot.slane %v4826, 3
    %v4829 = vshll.u32 %v4712, 16
    %v4831 = vrot.slane %v4829, 4
    %v4832 = vor.u32 %v4828, %v4831
    %v4833 = vsel %vm237, %v4814, %v4832
    %v4874 = vunpack.c.l.b16 %v4714
    %v4875 = vunpack.c.h.b16 %v4714
    %v4876 = vunpack.c.l.b16 %v4715
    %v4877 = vunpack.c.h.b16 %v4715
    %v4878 = vunpack.c.l.b16 %v4716
    %v4879 = vunpack.c.h.b16 %v4716
    %v4880 = vunpack.c.l.b16 %v4717
    %v4881 = vunpack.c.h.b16 %v4717
    %v4882 = vunpack.c.l.b16 %v4718
    %v4883 = vunpack.c.h.b16 %v4718
    %v4884 = vunpack.c.l.b16 %v4719
    %v4885 = vunpack.c.h.b16 %v4719
    %v4886 = vunpack.c.l.b16 %v4720
    %v4887 = vunpack.c.h.b16 %v4720
    %v4888 = vunpack.c.l.b16 %v4721
    %v4889 = vunpack.c.h.b16 %v4721
    %v4890 = vunpack.c.l.b16 %v4722
    %v4891 = vunpack.c.h.b16 %v4722
    %v4892 = vunpack.c.l.b16 %v4723
    %v4893 = vunpack.c.h.b16 %v4723
    %v4894 = vunpack.c.l.b16 %v4724
    %v4895 = vunpack.c.h.b16 %v4724
    %v4896 = vunpack.c.l.b16 %v4725
    %v4897 = vunpack.c.h.b16 %v4725
    %v4898 = vunpack.c.l.b16 %v4726
    %v4899 = vunpack.c.h.b16 %v4726
    %v4900 = vunpack.c.l.b16 %v4727
    %v4901 = vunpack.c.h.b16 %v4727
    %v4902 = vunpack.c.l.b16 %v4728
    %v4903 = vunpack.c.h.b16 %v4728
    %v4904 = vunpack.c.l.b16 %v4729
    %v4905 = vunpack.c.h.b16 %v4729
    %v4906 = vunpack.c.l.b16 %v4730
    %v4907 = vunpack.c.h.b16 %v4730
    %v4908 = vunpack.c.l.b16 %v4731
    %v4909 = vunpack.c.h.b16 %v4731
    %v4910 = vunpack.c.l.b16 %v4732
    %v4911 = vunpack.c.h.b16 %v4732
    %v4912 = vunpack.c.l.b16 %v4733
    %v4913 = vunpack.c.h.b16 %v4733
    %v4914 = vunpack.c.l.b16 %v4734
    %v4915 = vunpack.c.h.b16 %v4734
    %v4916 = vunpack.c.l.b16 %v4735
    %v4917 = vunpack.c.h.b16 %v4735
    %v4918 = vunpack.c.l.b16 %v4736
    %v4919 = vunpack.c.h.b16 %v4736
    %v4920 = vunpack.c.l.b16 %v4737
    %v4921 = vunpack.c.h.b16 %v4737
    %v4922 = vunpack.c.l.b16 %v4738
    %v4923 = vunpack.c.h.b16 %v4738
    %v4924 = vunpack.c.l.b16 %v4739
    %v4925 = vunpack.c.h.b16 %v4739
    %v4926 = vunpack.c.l.b16 %v4740
    %v4927 = vunpack.c.h.b16 %v4740
    %v4928 = vunpack.c.l.b16 %v4741
    %v4929 = vunpack.c.h.b16 %v4741
    %v4930 = vunpack.c.l.b16 %v4742
    %v4931 = vunpack.c.h.b16 %v4742
    %v4932 = vunpack.c.l.b16 %v4743
    %v4933 = vunpack.c.h.b16 %v4743
    %v4934 = vunpack.c.l.b16 %v4744
    %v4935 = vunpack.c.h.b16 %v4744
    %v4936 = vunpack.c.l.b16 %v4745
    %v4937 = vunpack.c.h.b16 %v4745
    %v4938 = vpack.c.b16 %v4876, %v4874
    %v4939 = vpack.c.b16 %v4877, %v4875
    %v4940 = vpack.c.b16 %v4880, %v4878
    %v4941 = vpack.c.b16 %v4881, %v4879
    %v4942 = vpack.c.b16 %v4884, %v4882
    %v4943 = vpack.c.b16 %v4885, %v4883
    %v4944 = vpack.c.b16 %v4888, %v4886
    %v4945 = vpack.c.b16 %v4889, %v4887
    %v4946 = vpack.c.b16 %v4892, %v4890
    %v4947 = vpack.c.b16 %v4893, %v4891
    %v4948 = vpack.c.b16 %v4896, %v4894
    %v4949 = vpack.c.b16 %v4897, %v4895
    %v4950 = vpack.c.b16 %v4900, %v4898
    %v4951 = vpack.c.b16 %v4901, %v4899
    %v4952 = vpack.c.b16 %v4904, %v4902
    %v4953 = vpack.c.b16 %v4905, %v4903
    %v4954 = vpack.c.b16 %v4908, %v4906
    %v4955 = vpack.c.b16 %v4909, %v4907
    %v4956 = vpack.c.b16 %v4912, %v4910
    %v4957 = vpack.c.b16 %v4913, %v4911
    %v4958 = vpack.c.b16 %v4916, %v4914
    %v4959 = vpack.c.b16 %v4917, %v4915
    %v4960 = vpack.c.b16 %v4920, %v4918
    %v4961 = vpack.c.b16 %v4921, %v4919
    %v4962 = vpack.c.b16 %v4924, %v4922
    %v4963 = vpack.c.b16 %v4925, %v4923
    %v4964 = vpack.c.b16 %v4928, %v4926
    %v4965 = vpack.c.b16 %v4929, %v4927
    %v4966 = vpack.c.b16 %v4932, %v4930
    %v4967 = vpack.c.b16 %v4933, %v4931
    %v4968 = vpack.c.b16 %v4936, %v4934
    %v4969 = vpack.c.b16 %v4937, %v4935
    %5002 = vmatprep.subr.bf16.mxu0 %v4953
    %5003 = vmatpush1.bf16.msra.mxu0 %v4952
    %5004 = vmatprep.subr.bf16.mxu0 %v4951
    %5005 = vmatpush1.bf16.msra.mxu0 %v4950
    %5006 = vmatprep.subr.bf16.mxu0 %v4949
    %5007 = vmatpush1.bf16.msra.mxu0 %v4948
    %5008 = vmatprep.subr.bf16.mxu0 %v4947
    %5009 = vmatpush1.bf16.msra.mxu0 %v4946
    %5010 = vmatprep.subr.bf16.mxu0 %v4945
    %5011 = vmatpush1.bf16.msra.mxu0 %v4944
    %5012 = vmatprep.subr.bf16.mxu0 %v4943
    %5013 = vmatpush1.bf16.msra.mxu0 %v4942
    %5014 = vmatprep.subr.bf16.mxu0 %v4941
    %5015 = vmatpush1.bf16.msra.mxu0 %v4940
    %5016 = vmatprep.subr.bf16.mxu0 %v4939
    %5017 = vmatpush1.bf16.msra.mxu0 %v4938
    %5018 = vmatprep.subr.bf16.mxu0 %v4969
    %5019 = vmatpush2.bf16.msra.mxu0 %v4968
    %5020 = vmatprep.subr.bf16.mxu0 %v4967
    %5021 = vmatpush2.bf16.msra.mxu0 %v4966
    %5022 = vmatprep.subr.bf16.mxu0 %v4965
    %5023 = vmatpush2.bf16.msra.mxu0 %v4964
    %5024 = vmatprep.subr.bf16.mxu0 %v4963
    %5025 = vmatpush2.bf16.msra.mxu0 %v4962
    %5026 = vmatprep.subr.bf16.mxu0 %v4961
    %5027 = vmatpush2.bf16.msra.mxu0 %v4960
    %5028 = vmatprep.subr.bf16.mxu0 %v4959
    %5029 = vmatpush2.bf16.msra.mxu0 %v4958
    %5030 = vmatprep.subr.bf16.mxu0 %v4957
    %5031 = vmatpush2.bf16.msra.mxu0 %v4956
    %5032 = vmatprep.subr.bf16.mxu0 %v4955
    %5033 = vmatpush2.bf16.msra.mxu0 %v4954
    %5034 = vmatprep.mubr.bf16.mxu0 %v4779
    %5035 = vmatmul.mubr.bf16.gmra.mxu0 %v4762
    %v5036 = vpop.f32.mrf.mxu0
    %v5037 = vadd.f32 0.0, %v5036
    %v5038 = vpop.f32.mrf.mxu0
    %v5039 = vadd.f32 0.0, %v5038
    %v5040 = vpop.f32.mrf.mxu0
    %v5041 = vadd.f32 0.0, %v5040
    %v5042 = vpop.f32.mrf.mxu0
    %v5043 = vadd.f32 0.0, %v5042
    %5044 = vmatprep.mubr.bf16.mxu0 %v4797
    %5045 = vmatmul.mubr.bf16.gmra.mxu0 %v4788
    %v5046 = vpop.f32.mrf.mxu0
    %v5047 = vpop.f32.mrf.mxu0
    %v5048 = vpop.f32.mrf.mxu0
    %v5049 = vpop.f32.mrf.mxu0
    %5050 = vmatprep.mubr.bf16.mxu0 %v4815
    %5051 = vmatmul.mubr.bf16.gmra.mxu0 %v4806
    %v5052 = vpop.f32.mrf.mxu0
    %v5053 = vadd.f32 0.0, %v5052
    %v5054 = vpop.f32.mrf.mxu0
    %v5055 = vadd.f32 0.0, %v5054
    %v5056 = vpop.f32.mrf.mxu0
    %v5057 = vadd.f32 0.0, %v5056
    %v5058 = vpop.f32.mrf.mxu0
    %v5059 = vadd.f32 0.0, %v5058
    %5060 = vmatprep.mubr.bf16.mxu0 %v4833
    %5061 = vmatmul.mubr.bf16.gmra.mxu0 %v4824
    %v5062 = vpop.f32.mrf.mxu0
    %v5063 = vpop.f32.mrf.mxu0
    %v5064 = vpop.f32.mrf.mxu0
    %v5065 = vpop.f32.mrf.mxu0
    %5066 = vdwg.mxu0
    %v5077 = vrot.slane %v4663, 3
    %v5078 = vrot.slane %v4665, 3
    %v5079 = vsel %vm400, %v5077, %v5078
    %v5080 = vrot.slane %v4664, 3
    %v5081 = vrot.slane %v4666, 3
    %v5082 = vsel %vm400, %v5080, %v5081
    %v5083 = vrot.slane %v4667, 3
    %v5084 = vsel %vm400, %v5078, %v5083
    %v5085 = vrot.slane %v4668, 3
    %v5086 = vsel %vm400, %v5081, %v5085
    %v5087 = vrot.slane %v4669, 3
    %v5088 = vsel %vm400, %v5083, %v5087
    %v5089 = vrot.slane %v4670, 3
    %v5090 = vsel %vm400, %v5085, %v5089
    %v5091 = vrot.slane %v4671, 3
    %v5092 = vsel %vm400, %v5087, %v5091
    %v5093 = vrot.slane %v4672, 3
    %v5094 = vsel %vm400, %v5089, %v5093
    %v5135 = vunpack.c.l.b16 %v4673
    %v5136 = vunpack.c.h.b16 %v4673
    %v5137 = vunpack.c.l.b16 %v4674
    %v5138 = vunpack.c.h.b16 %v4674
    %v5139 = vunpack.c.l.b16 %v4675
    %v5140 = vunpack.c.h.b16 %v4675
    %v5141 = vunpack.c.l.b16 %v4676
    %v5142 = vunpack.c.h.b16 %v4676
    %v5143 = vunpack.c.l.b16 %v4677
    %v5144 = vunpack.c.h.b16 %v4677
    %v5145 = vunpack.c.l.b16 %v4678
    %v5146 = vunpack.c.h.b16 %v4678
    %v5147 = vunpack.c.l.b16 %v4679
    %v5148 = vunpack.c.h.b16 %v4679
    %v5149 = vunpack.c.l.b16 %v4680
    %v5150 = vunpack.c.h.b16 %v4680
    %v5151 = vunpack.c.l.b16 %v4681
    %v5152 = vunpack.c.h.b16 %v4681
    %v5153 = vunpack.c.l.b16 %v4682
    %v5154 = vunpack.c.h.b16 %v4682
    %v5155 = vunpack.c.l.b16 %v4683
    %v5156 = vunpack.c.h.b16 %v4683
    %v5157 = vunpack.c.l.b16 %v4684
    %v5158 = vunpack.c.h.b16 %v4684
    %v5159 = vunpack.c.l.b16 %v4685
    %v5160 = vunpack.c.h.b16 %v4685
    %v5161 = vunpack.c.l.b16 %v4686
    %v5162 = vunpack.c.h.b16 %v4686
    %v5163 = vunpack.c.l.b16 %v4687
    %v5164 = vunpack.c.h.b16 %v4687
    %v5165 = vunpack.c.l.b16 %v4688
    %v5166 = vunpack.c.h.b16 %v4688
    %v5167 = vunpack.c.l.b16 %v4689
    %v5168 = vunpack.c.h.b16 %v4689
    %v5169 = vunpack.c.l.b16 %v4690
    %v5170 = vunpack.c.h.b16 %v4690
    %v5171 = vunpack.c.l.b16 %v4691
    %v5172 = vunpack.c.h.b16 %v4691
    %v5173 = vunpack.c.l.b16 %v4692
    %v5174 = vunpack.c.h.b16 %v4692
    %v5175 = vunpack.c.l.b16 %v4693
    %v5176 = vunpack.c.h.b16 %v4693
    %v5177 = vunpack.c.l.b16 %v4694
    %v5178 = vunpack.c.h.b16 %v4694
    %v5179 = vunpack.c.l.b16 %v4695
    %v5180 = vunpack.c.h.b16 %v4695
    %v5181 = vunpack.c.l.b16 %v4696
    %v5182 = vunpack.c.h.b16 %v4696
    %v5183 = vunpack.c.l.b16 %v4697
    %v5184 = vunpack.c.h.b16 %v4697
    %v5185 = vunpack.c.l.b16 %v4698
    %v5186 = vunpack.c.h.b16 %v4698
    %v5187 = vunpack.c.l.b16 %v4699
    %v5188 = vunpack.c.h.b16 %v4699
    %v5189 = vunpack.c.l.b16 %v4700
    %v5190 = vunpack.c.h.b16 %v4700
    %v5191 = vunpack.c.l.b16 %v4701
    %v5192 = vunpack.c.h.b16 %v4701
    %v5193 = vunpack.c.l.b16 %v4702
    %v5194 = vunpack.c.h.b16 %v4702
    %v5195 = vunpack.c.l.b16 %v4703
    %v5196 = vunpack.c.h.b16 %v4703
    %v5197 = vunpack.c.l.b16 %v4704
    %v5198 = vunpack.c.h.b16 %v4704
    %v5199 = vpack.c.b16 %v5137, %v5135
    %v5200 = vpack.c.b16 %v5138, %v5136
    %v5201 = vpack.c.b16 %v5141, %v5139
    %v5202 = vpack.c.b16 %v5142, %v5140
    %v5203 = vpack.c.b16 %v5145, %v5143
    %v5204 = vpack.c.b16 %v5146, %v5144
    %v5205 = vpack.c.b16 %v5149, %v5147
    %v5206 = vpack.c.b16 %v5150, %v5148
    %v5207 = vpack.c.b16 %v5153, %v5151
    %v5208 = vpack.c.b16 %v5154, %v5152
    %v5209 = vpack.c.b16 %v5157, %v5155
    %v5210 = vpack.c.b16 %v5158, %v5156
    %v5211 = vpack.c.b16 %v5161, %v5159
    %v5212 = vpack.c.b16 %v5162, %v5160
    %v5213 = vpack.c.b16 %v5165, %v5163
    %v5214 = vpack.c.b16 %v5166, %v5164
    %v5215 = vpack.c.b16 %v5169, %v5167
    %v5216 = vpack.c.b16 %v5170, %v5168
    %v5217 = vpack.c.b16 %v5173, %v5171
    %v5218 = vpack.c.b16 %v5174, %v5172
    %v5219 = vpack.c.b16 %v5177, %v5175
    %v5220 = vpack.c.b16 %v5178, %v5176
    %v5221 = vpack.c.b16 %v5181, %v5179
    %v5222 = vpack.c.b16 %v5182, %v5180
    %v5223 = vpack.c.b16 %v5185, %v5183
    %v5224 = vpack.c.b16 %v5186, %v5184
    %v5225 = vpack.c.b16 %v5189, %v5187
    %v5226 = vpack.c.b16 %v5190, %v5188
    %v5227 = vpack.c.b16 %v5193, %v5191
    %v5228 = vpack.c.b16 %v5194, %v5192
    %v5229 = vpack.c.b16 %v5197, %v5195
    %v5230 = vpack.c.b16 %v5198, %v5196
    %5263 = vmatprep.subr.bf16.mxu0 %v5214
    %5264 = vmatpush1.bf16.msra.mxu0 %v5213
    %5265 = vmatprep.subr.bf16.mxu0 %v5212
    %5266 = vmatpush1.bf16.msra.mxu0 %v5211
    %5267 = vmatprep.subr.bf16.mxu0 %v5210
    %5268 = vmatpush1.bf16.msra.mxu0 %v5209
    %5269 = vmatprep.subr.bf16.mxu0 %v5208
    %5270 = vmatpush1.bf16.msra.mxu0 %v5207
    %5271 = vmatprep.subr.bf16.mxu0 %v5206
    %5272 = vmatpush1.bf16.msra.mxu0 %v5205
    %5273 = vmatprep.subr.bf16.mxu0 %v5204
    %5274 = vmatpush1.bf16.msra.mxu0 %v5203
    %5275 = vmatprep.subr.bf16.mxu0 %v5202
    %5276 = vmatpush1.bf16.msra.mxu0 %v5201
    %5277 = vmatprep.subr.bf16.mxu0 %v5200
    %5278 = vmatpush1.bf16.msra.mxu0 %v5199
    %5279 = vmatprep.subr.bf16.mxu0 %v5230
    %5280 = vmatpush2.bf16.msra.mxu0 %v5229
    %5281 = vmatprep.subr.bf16.mxu0 %v5228
    %5282 = vmatpush2.bf16.msra.mxu0 %v5227
    %5283 = vmatprep.subr.bf16.mxu0 %v5226
    %5284 = vmatpush2.bf16.msra.mxu0 %v5225
    %5285 = vmatprep.subr.bf16.mxu0 %v5224
    %5286 = vmatpush2.bf16.msra.mxu0 %v5223
    %5287 = vmatprep.subr.bf16.mxu0 %v5222
    %5288 = vmatpush2.bf16.msra.mxu0 %v5221
    %5289 = vmatprep.subr.bf16.mxu0 %v5220
    %5290 = vmatpush2.bf16.msra.mxu0 %v5219
    %5291 = vmatprep.subr.bf16.mxu0 %v5218
    %5292 = vmatpush2.bf16.msra.mxu0 %v5217
    %5293 = vmatprep.subr.bf16.mxu0 %v5216
    %5294 = vmatpush2.bf16.msra.mxu0 %v5215
    %5295 = vmatprep.mubr.bf16.mxu0 %v5082
    %5296 = vmatmul.mubr.bf16.gmra.mxu0 %v5079
    %v5297 = vpop.f32.mrf.mxu0
    %v5298 = vadd.f32 %v5037, %v5297
    %v5299 = vpop.f32.mrf.mxu0
    %v5300 = vadd.f32 %v5039, %v5299
    %v5301 = vpop.f32.mrf.mxu0
    %v5302 = vadd.f32 %v5041, %v5301
    %v5303 = vpop.f32.mrf.mxu0
    %v5304 = vadd.f32 %v5043, %v5303
    %5305 = vmatprep.mubr.bf16.mxu0 %v5086
    %5306 = vmatmul.mubr.bf16.gmra.mxu0 %v5084
    %v5307 = vpop.f32.mrf.mxu0
    %v5308 = vpop.f32.mrf.mxu0
    %v5309 = vpop.f32.mrf.mxu0
    %v5310 = vpop.f32.mrf.mxu0
    %5311 = vmatprep.mubr.bf16.mxu0 %v5090
    %5312 = vmatmul.mubr.bf16.gmra.mxu0 %v5088
    %v5313 = vpop.f32.mrf.mxu0
    %v5314 = vadd.f32 %v5053, %v5313
    %v5315 = vpop.f32.mrf.mxu0
    %v5316 = vadd.f32 %v5055, %v5315
    %v5317 = vpop.f32.mrf.mxu0
    %v5318 = vadd.f32 %v5057, %v5317
    %v5319 = vpop.f32.mrf.mxu0
    %v5320 = vadd.f32 %v5059, %v5319
    %5321 = vmatprep.mubr.bf16.mxu0 %v5094
    %5322 = vmatmul.mubr.bf16.gmra.mxu0 %v5092
    %v5323 = vpop.f32.mrf.mxu0
    %v5324 = vpop.f32.mrf.mxu0
    %v5325 = vpop.f32.mrf.mxu0
    %v5326 = vpop.f32.mrf.mxu0
    %5327 = vdwg.mxu0
    %v5328 = vld [vmem:[#allocation2 + $0x80] sm:$0xff]
    %v5329 = vld [vmem:[#allocation2 + $0x88] sm:$0xff]
    %v5330 = vpack.c.bf16 %v4649, %v4647
    %v5331 = vpack.c.bf16 %v4650, %v4648
    %v5332 = vpack.c.bf16 %v4653, %v4651
    %v5333 = vpack.c.bf16 %v4654, %v4652
    %v5334 = vpack.c.bf16 %v4657, %v4655
    %v5335 = vpack.c.bf16 %v4658, %v4656
    %v5336 = vpack.c.bf16 %v5328, %v4659
    %v5337 = vpack.c.bf16 %v5329, %v4660
    %s5338 = scalar_lea.vmem [#allocation4], 512
    %v5339 = vld [vmem:[%s5338] sm:$0xff]
    %v5340 = vld [vmem:[%s5338 + $0x8] sm:$0xff]
    %v5341 = vld [vmem:[%s5338 + $0x10] sm:$0xff]
    %v5342 = vld [vmem:[%s5338 + $0x18] sm:$0xff]
    %v5343 = vld [vmem:[%s5338 + $0x20] sm:$0xff]
    %v5344 = vld [vmem:[%s5338 + $0x28] sm:$0xff]
    %v5345 = vld [vmem:[%s5338 + $0x30] sm:$0xff]
    %v5346 = vld [vmem:[%s5338 + $0x38] sm:$0xff]
    %v5347 = vld [vmem:[%s5338 + $0x40] sm:$0xff]
    %v5348 = vld [vmem:[%s5338 + $0x48] sm:$0xff]
    %v5349 = vld [vmem:[%s5338 + $0x50] sm:$0xff]
    %v5350 = vld [vmem:[%s5338 + $0x58] sm:$0xff]
    %v5351 = vld [vmem:[%s5338 + $0x60] sm:$0xff]
    %v5352 = vld [vmem:[%s5338 + $0x68] sm:$0xff]
    %v5353 = vld [vmem:[%s5338 + $0x70] sm:$0xff]
    %v5354 = vld [vmem:[%s5338 + $0x78] sm:$0xff]
    %v5355 = vld [vmem:[%s5338 + $0x80] sm:$0xff]
    %v5356 = vld [vmem:[%s5338 + $0x88] sm:$0xff]
    %v5357 = vld [vmem:[%s5338 + $0x90] sm:$0xff]
    %v5358 = vld [vmem:[%s5338 + $0x98] sm:$0xff]
    %v5359 = vld [vmem:[%s5338 + $0xa0] sm:$0xff]
    %v5360 = vld [vmem:[%s5338 + $0xa8] sm:$0xff]
    %v5361 = vld [vmem:[%s5338 + $0xb0] sm:$0xff]
    %v5362 = vld [vmem:[%s5338 + $0xb8] sm:$0xff]
    %v5363 = vld [vmem:[%s5338 + $0xc0] sm:$0xff]
    %v5364 = vld [vmem:[%s5338 + $0xc8] sm:$0xff]
    %v5365 = vld [vmem:[%s5338 + $0xd0] sm:$0xff]
    %v5366 = vld [vmem:[%s5338 + $0xd8] sm:$0xff]
    %v5367 = vld [vmem:[%s5338 + $0xe0] sm:$0xff]
    %v5368 = vld [vmem:[%s5338 + $0xe8] sm:$0xff]
    %v5369 = vld [vmem:[%s5338 + $0xf0] sm:$0xff]
    %v5370 = vld [vmem:[%s5338 + $0xf8] sm:$0xff]
    %v5403 = vunpack.c.l.b16 %v5339
    %v5404 = vunpack.c.h.b16 %v5339
    %v5405 = vunpack.c.l.b16 %v5340
    %v5406 = vunpack.c.h.b16 %v5340
    %v5407 = vunpack.c.l.b16 %v5341
    %v5408 = vunpack.c.h.b16 %v5341
    %v5409 = vunpack.c.l.b16 %v5342
    %v5410 = vunpack.c.h.b16 %v5342
    %v5411 = vunpack.c.l.b16 %v5343
    %v5412 = vunpack.c.h.b16 %v5343
    %v5413 = vunpack.c.l.b16 %v5344
    %v5414 = vunpack.c.h.b16 %v5344
    %v5415 = vunpack.c.l.b16 %v5345
    %v5416 = vunpack.c.h.b16 %v5345
    %v5417 = vunpack.c.l.b16 %v5346
    %v5418 = vunpack.c.h.b16 %v5346
    %v5419 = vunpack.c.l.b16 %v5347
    %v5420 = vunpack.c.h.b16 %v5347
    %v5421 = vunpack.c.l.b16 %v5348
    %v5422 = vunpack.c.h.b16 %v5348
    %v5423 = vunpack.c.l.b16 %v5349
    %v5424 = vunpack.c.h.b16 %v5349
    %v5425 = vunpack.c.l.b16 %v5350
    %v5426 = vunpack.c.h.b16 %v5350
    %v5427 = vunpack.c.l.b16 %v5351
    %v5428 = vunpack.c.h.b16 %v5351
    %v5429 = vunpack.c.l.b16 %v5352
    %v5430 = vunpack.c.h.b16 %v5352
    %v5431 = vunpack.c.l.b16 %v5353
    %v5432 = vunpack.c.h.b16 %v5353
    %v5433 = vunpack.c.l.b16 %v5354
    %v5434 = vunpack.c.h.b16 %v5354
    %v5435 = vunpack.c.l.b16 %v5355
    %v5436 = vunpack.c.h.b16 %v5355
    %v5437 = vunpack.c.l.b16 %v5356
    %v5438 = vunpack.c.h.b16 %v5356
    %v5439 = vunpack.c.l.b16 %v5357
    %v5440 = vunpack.c.h.b16 %v5357
    %v5441 = vunpack.c.l.b16 %v5358
    %v5442 = vunpack.c.h.b16 %v5358
    %v5443 = vunpack.c.l.b16 %v5359
    %v5444 = vunpack.c.h.b16 %v5359
    %v5445 = vunpack.c.l.b16 %v5360
    %v5446 = vunpack.c.h.b16 %v5360
    %v5447 = vunpack.c.l.b16 %v5361
    %v5448 = vunpack.c.h.b16 %v5361
    %v5449 = vunpack.c.l.b16 %v5362
    %v5450 = vunpack.c.h.b16 %v5362
    %v5451 = vunpack.c.l.b16 %v5363
    %v5452 = vunpack.c.h.b16 %v5363
    %v5453 = vunpack.c.l.b16 %v5364
    %v5454 = vunpack.c.h.b16 %v5364
    %v5455 = vunpack.c.l.b16 %v5365
    %v5456 = vunpack.c.h.b16 %v5365
    %v5457 = vunpack.c.l.b16 %v5366
    %v5458 = vunpack.c.h.b16 %v5366
    %v5459 = vunpack.c.l.b16 %v5367
    %v5460 = vunpack.c.h.b16 %v5367
    %v5461 = vunpack.c.l.b16 %v5368
    %v5462 = vunpack.c.h.b16 %v5368
    %v5463 = vunpack.c.l.b16 %v5369
    %v5464 = vunpack.c.h.b16 %v5369
    %v5465 = vunpack.c.l.b16 %v5370
    %v5466 = vunpack.c.h.b16 %v5370
    %v5467 = vpack.c.b16 %v5405, %v5403
    %v5468 = vpack.c.b16 %v5406, %v5404
    %v5469 = vpack.c.b16 %v5409, %v5407
    %v5470 = vpack.c.b16 %v5410, %v5408
    %v5471 = vpack.c.b16 %v5413, %v5411
    %v5472 = vpack.c.b16 %v5414, %v5412
    %v5473 = vpack.c.b16 %v5417, %v5415
    %v5474 = vpack.c.b16 %v5418, %v5416
    %v5475 = vpack.c.b16 %v5421, %v5419
    %v5476 = vpack.c.b16 %v5422, %v5420
    %v5477 = vpack.c.b16 %v5425, %v5423
    %v5478 = vpack.c.b16 %v5426, %v5424
    %v5479 = vpack.c.b16 %v5429, %v5427
    %v5480 = vpack.c.b16 %v5430, %v5428
    %v5481 = vpack.c.b16 %v5433, %v5431
    %v5482 = vpack.c.b16 %v5434, %v5432
    %v5483 = vpack.c.b16 %v5437, %v5435
    %v5484 = vpack.c.b16 %v5438, %v5436
    %v5485 = vpack.c.b16 %v5441, %v5439
    %v5486 = vpack.c.b16 %v5442, %v5440
    %v5487 = vpack.c.b16 %v5445, %v5443
    %v5488 = vpack.c.b16 %v5446, %v5444
    %v5489 = vpack.c.b16 %v5449, %v5447
    %v5490 = vpack.c.b16 %v5450, %v5448
    %v5491 = vpack.c.b16 %v5453, %v5451
    %v5492 = vpack.c.b16 %v5454, %v5452
    %v5493 = vpack.c.b16 %v5457, %v5455
    %v5494 = vpack.c.b16 %v5458, %v5456
    %v5495 = vpack.c.b16 %v5461, %v5459
    %v5496 = vpack.c.b16 %v5462, %v5460
    %v5497 = vpack.c.b16 %v5465, %v5463
    %v5498 = vpack.c.b16 %v5466, %v5464
    %5531 = vmatprep.subr.bf16.mxu0 %v5482
    %5532 = vmatpush1.bf16.msra.mxu0 %v5481
    %5533 = vmatprep.subr.bf16.mxu0 %v5480
    %5534 = vmatpush1.bf16.msra.mxu0 %v5479
    %5535 = vmatprep.subr.bf16.mxu0 %v5478
    %5536 = vmatpush1.bf16.msra.mxu0 %v5477
    %5537 = vmatprep.subr.bf16.mxu0 %v5476
    %5538 = vmatpush1.bf16.msra.mxu0 %v5475
    %5539 = vmatprep.subr.bf16.mxu0 %v5474
    %5540 = vmatpush1.bf16.msra.mxu0 %v5473
    %5541 = vmatprep.subr.bf16.mxu0 %v5472
    %5542 = vmatpush1.bf16.msra.mxu0 %v5471
    %5543 = vmatprep.subr.bf16.mxu0 %v5470
    %5544 = vmatpush1.bf16.msra.mxu0 %v5469
    %5545 = vmatprep.subr.bf16.mxu0 %v5468
    %5546 = vmatpush1.bf16.msra.mxu0 %v5467
    %5547 = vmatprep.subr.bf16.mxu0 %v5498
    %5548 = vmatpush2.bf16.msra.mxu0 %v5497
    %5549 = vmatprep.subr.bf16.mxu0 %v5496
    %5550 = vmatpush2.bf16.msra.mxu0 %v5495
    %5551 = vmatprep.subr.bf16.mxu0 %v5494
    %5552 = vmatpush2.bf16.msra.mxu0 %v5493
    %5553 = vmatprep.subr.bf16.mxu0 %v5492
    %5554 = vmatpush2.bf16.msra.mxu0 %v5491
    %5555 = vmatprep.subr.bf16.mxu0 %v5490
    %5556 = vmatpush2.bf16.msra.mxu0 %v5489
    %5557 = vmatprep.subr.bf16.mxu0 %v5488
    %5558 = vmatpush2.bf16.msra.mxu0 %v5487
    %5559 = vmatprep.subr.bf16.mxu0 %v5486
    %5560 = vmatpush2.bf16.msra.mxu0 %v5485
    %5561 = vmatprep.subr.bf16.mxu0 %v5484
    %5562 = vmatpush2.bf16.msra.mxu0 %v5483
    %5563 = vmatprep.mubr.bf16.mxu0 %v5331
    %5564 = vmatmul.mubr.bf16.gmra.mxu0 %v5330
    %v5565 = vpop.f32.mrf.mxu0
    %v5566 = vadd.f32 0.0, %v5565
    %v5567 = vpop.f32.mrf.mxu0
    %v5568 = vadd.f32 0.0, %v5567
    %v5569 = vpop.f32.mrf.mxu0
    %v5570 = vadd.f32 0.0, %v5569
    %v5571 = vpop.f32.mrf.mxu0
    %v5572 = vadd.f32 0.0, %v5571
    %5573 = vmatprep.mubr.bf16.mxu0 %v5333
    %5574 = vmatmul.mubr.bf16.gmra.mxu0 %v5332
    %v5575 = vpop.f32.mrf.mxu0
    %v5576 = vpop.f32.mrf.mxu0
    %v5577 = vpop.f32.mrf.mxu0
    %v5578 = vpop.f32.mrf.mxu0
    %5579 = vmatprep.mubr.bf16.mxu0 %v5335
    %5580 = vmatmul.mubr.bf16.gmra.mxu0 %v5334
    %v5581 = vpop.f32.mrf.mxu0
    %v5582 = vadd.f32 0.0, %v5581
    %v5583 = vpop.f32.mrf.mxu0
    %v5584 = vadd.f32 0.0, %v5583
    %v5585 = vpop.f32.mrf.mxu0
    %v5586 = vadd.f32 0.0, %v5585
    %v5587 = vpop.f32.mrf.mxu0
    %v5588 = vadd.f32 0.0, %v5587
    %5589 = vmatprep.mubr.bf16.mxu0 %v5337
    %5590 = vmatmul.mubr.bf16.gmra.mxu0 %v5336
    %v5591 = vpop.f32.mrf.mxu0
    %v5592 = vpop.f32.mrf.mxu0
    %v5593 = vpop.f32.mrf.mxu0
    %v5594 = vpop.f32.mrf.mxu0
    %5595 = vdwg.mxu0
    %v5596 = vadd.f32 %v5298, %v5566
    %v5597 = vadd.f32 %v5300, %v5568
    %v5598 = vadd.f32 %v5302, %v5570
    %v5599 = vadd.f32 %v5304, %v5572
    %v5600 = vadd.f32 %v5314, %v5582
    %v5601 = vadd.f32 %v5316, %v5584
    %v5602 = vadd.f32 %v5318, %v5586
    %v5603 = vadd.f32 %v5320, %v5588
    %v5604 = vld [vmem:[#allocation2 + $0x10] sm:$0xfe]
    %v5605 = vld [vmem:[#allocation2 + $0x18] sm:$0xfe]
    %v5606 = vld [vmem:[#allocation2 + $0x20] sm:$0xff]
    %v5607 = vld [vmem:[#allocation2 + $0x28] sm:$0xff]
    %v5608 = vld [vmem:[#allocation2 + $0x30] sm:$0xff]
    %v5609 = vld [vmem:[#allocation2 + $0x38] sm:$0xff]
    %v5610 = vld [vmem:[#allocation2 + $0x40] sm:$0xff]
    %v5611 = vld [vmem:[#allocation2 + $0x48] sm:$0xff]
    %v5612 = vld [vmem:[#allocation2 + $0x50] sm:$0xff]
    %v5613 = vld [vmem:[#allocation2 + $0x58] sm:$0xff]
    %v5614 = vld [vmem:[#allocation2 + $0x60] sm:$0xff]
    %v5615 = vld [vmem:[#allocation2 + $0x68] sm:$0xff]
    %v5616 = vld [vmem:[#allocation2 + $0x70] sm:$0xff]
    %v5617 = vld [vmem:[#allocation2 + $0x78] sm:$0xff]
    %v5618 = vld [vmem:[#allocation2 + $0x80] sm:$0xff]
    %v5619 = vld [vmem:[#allocation2 + $0x88] sm:$0xff]
    %v5620 = vld [vmem:[#allocation2 + $0x90] sm:$0x1]
    %v5621 = vld [vmem:[#allocation2 + $0x98] sm:$0x1]
    %v5622 = vpack.c.bf16 %v5606, %v5604
    %v5623 = vpack.c.bf16 %v5607, %v5605
    %v5624 = vpack.c.bf16 %v5610, %v5608
    %v5625 = vpack.c.bf16 %v5611, %v5609
    %v5626 = vpack.c.bf16 %v5614, %v5612
    %v5627 = vpack.c.bf16 %v5615, %v5613
    %v5628 = vpack.c.bf16 %v5618, %v5616
    %v5629 = vpack.c.bf16 %v5619, %v5617
    %v5630 = vpack.c.bf16 %v5620, %v5620
    %v5631 = vpack.c.bf16 %v5621, %v5621
    %s5632 = scalar_lea.vmem [#allocation4], 768
    %v5633 = vld [vmem:[%s5632] sm:$0xff]
    %v5634 = vld [vmem:[%s5632 + $0x8] sm:$0xff]
    %v5635 = vld [vmem:[%s5632 + $0x10] sm:$0xff]
    %v5636 = vld [vmem:[%s5632 + $0x18] sm:$0xff]
    %v5637 = vld [vmem:[%s5632 + $0x20] sm:$0xff]
    %v5638 = vld [vmem:[%s5632 + $0x28] sm:$0xff]
    %v5639 = vld [vmem:[%s5632 + $0x30] sm:$0xff]
    %v5640 = vld [vmem:[%s5632 + $0x38] sm:$0xff]
    %v5641 = vld [vmem:[%s5632 + $0x40] sm:$0xff]
    %v5642 = vld [vmem:[%s5632 + $0x48] sm:$0xff]
    %v5643 = vld [vmem:[%s5632 + $0x50] sm:$0xff]
    %v5644 = vld [vmem:[%s5632 + $0x58] sm:$0xff]
    %v5645 = vld [vmem:[%s5632 + $0x60] sm:$0xff]
    %v5646 = vld [vmem:[%s5632 + $0x68] sm:$0xff]
    %v5647 = vld [vmem:[%s5632 + $0x70] sm:$0xff]
    %v5648 = vld [vmem:[%s5632 + $0x78] sm:$0xff]
    %v5649 = vld [vmem:[%s5632 + $0x80] sm:$0xff]
    %v5650 = vld [vmem:[%s5632 + $0x88] sm:$0xff]
    %v5651 = vld [vmem:[%s5632 + $0x90] sm:$0xff]
    %v5652 = vld [vmem:[%s5632 + $0x98] sm:$0xff]
    %v5653 = vld [vmem:[%s5632 + $0xa0] sm:$0xff]
    %v5654 = vld [vmem:[%s5632 + $0xa8] sm:$0xff]
    %v5655 = vld [vmem:[%s5632 + $0xb0] sm:$0xff]
    %v5656 = vld [vmem:[%s5632 + $0xb8] sm:$0xff]
    %v5657 = vld [vmem:[%s5632 + $0xc0] sm:$0xff]
    %v5658 = vld [vmem:[%s5632 + $0xc8] sm:$0xff]
    %v5659 = vld [vmem:[%s5632 + $0xd0] sm:$0xff]
    %v5660 = vld [vmem:[%s5632 + $0xd8] sm:$0xff]
    %v5661 = vld [vmem:[%s5632 + $0xe0] sm:$0xff]
    %v5662 = vld [vmem:[%s5632 + $0xe8] sm:$0xff]
    %v5663 = vld [vmem:[%s5632 + $0xf0] sm:$0xff]
    %v5664 = vld [vmem:[%s5632 + $0xf8] sm:$0xff]
    %v5666 = vshrl.u32 %v5622, 16
    %v5668 = vshll.u32 %v5622, 16
    %v5670 = vrot.slane %v5668, 1
    %v5671 = vor.u32 %v5666, %v5670
    %v5673 = vshll.u32 %v5624, 16
    %v5675 = vrot.slane %v5673, 1
    %v5676 = vsel %vm689, %v5671, %v5675
    %v5678 = vshrl.u32 %v5623, 16
    %v5680 = vshll.u32 %v5623, 16
    %v5682 = vrot.slane %v5680, 1
    %v5683 = vor.u32 %v5678, %v5682
    %v5685 = vshll.u32 %v5625, 16
    %v5687 = vrot.slane %v5685, 1
    %v5688 = vsel %vm689, %v5683, %v5687
    %v5689 = vshrl.u32 %v5624, 16
    %v5691 = vor.u32 %v5689, %v5675
    %v5693 = vshll.u32 %v5626, 16
    %v5695 = vrot.slane %v5693, 1
    %v5696 = vsel %vm689, %v5691, %v5695
    %v5697 = vshrl.u32 %v5625, 16
    %v5699 = vor.u32 %v5697, %v5687
    %v5701 = vshll.u32 %v5627, 16
    %v5703 = vrot.slane %v5701, 1
    %v5704 = vsel %vm689, %v5699, %v5703
    %v5705 = vshrl.u32 %v5626, 16
    %v5707 = vor.u32 %v5705, %v5695
    %v5709 = vshll.u32 %v5628, 16
    %v5711 = vrot.slane %v5709, 1
    %v5712 = vsel %vm689, %v5707, %v5711
    %v5713 = vshrl.u32 %v5627, 16
    %v5715 = vor.u32 %v5713, %v5703
    %v5717 = vshll.u32 %v5629, 16
    %v5719 = vrot.slane %v5717, 1
    %v5720 = vsel %vm689, %v5715, %v5719
    %v5721 = vshrl.u32 %v5628, 16
    %v5723 = vor.u32 %v5721, %v5711
    %v5725 = vshll.u32 %v5630, 16
    %v5727 = vrot.slane %v5725, 1
    %v5728 = vsel %vm689, %v5723, %v5727
    %v5729 = vshrl.u32 %v5629, 16
    %v5731 = vor.u32 %v5729, %v5719
    %v5733 = vshll.u32 %v5631, 16
    %v5735 = vrot.slane %v5733, 1
    %v5736 = vsel %vm689, %v5731, %v5735
    %v5777 = vunpack.c.l.b16 %v5633
    %v5778 = vunpack.c.h.b16 %v5633
    %v5779 = vunpack.c.l.b16 %v5634
    %v5780 = vunpack.c.h.b16 %v5634
    %v5781 = vunpack.c.l.b16 %v5635
    %v5782 = vunpack.c.h.b16 %v5635
    %v5783 = vunpack.c.l.b16 %v5636
    %v5784 = vunpack.c.h.b16 %v5636
    %v5785 = vunpack.c.l.b16 %v5637
    %v5786 = vunpack.c.h.b16 %v5637
    %v5787 = vunpack.c.l.b16 %v5638
    %v5788 = vunpack.c.h.b16 %v5638
    %v5789 = vunpack.c.l.b16 %v5639
    %v5790 = vunpack.c.h.b16 %v5639
    %v5791 = vunpack.c.l.b16 %v5640
    %v5792 = vunpack.c.h.b16 %v5640
    %v5793 = vunpack.c.l.b16 %v5641
    %v5794 = vunpack.c.h.b16 %v5641
    %v5795 = vunpack.c.l.b16 %v5642
    %v5796 = vunpack.c.h.b16 %v5642
    %v5797 = vunpack.c.l.b16 %v5643
    %v5798 = vunpack.c.h.b16 %v5643
    %v5799 = vunpack.c.l.b16 %v5644
    %v5800 = vunpack.c.h.b16 %v5644
    %v5801 = vunpack.c.l.b16 %v5645
    %v5802 = vunpack.c.h.b16 %v5645
    %v5803 = vunpack.c.l.b16 %v5646
    %v5804 = vunpack.c.h.b16 %v5646
    %v5805 = vunpack.c.l.b16 %v5647
    %v5806 = vunpack.c.h.b16 %v5647
    %v5807 = vunpack.c.l.b16 %v5648
    %v5808 = vunpack.c.h.b16 %v5648
    %v5809 = vunpack.c.l.b16 %v5649
    %v5810 = vunpack.c.h.b16 %v5649
    %v5811 = vunpack.c.l.b16 %v5650
    %v5812 = vunpack.c.h.b16 %v5650
    %v5813 = vunpack.c.l.b16 %v5651
    %v5814 = vunpack.c.h.b16 %v5651
    %v5815 = vunpack.c.l.b16 %v5652
    %v5816 = vunpack.c.h.b16 %v5652
    %v5817 = vunpack.c.l.b16 %v5653
    %v5818 = vunpack.c.h.b16 %v5653
    %v5819 = vunpack.c.l.b16 %v5654
    %v5820 = vunpack.c.h.b16 %v5654
    %v5821 = vunpack.c.l.b16 %v5655
    %v5822 = vunpack.c.h.b16 %v5655
    %v5823 = vunpack.c.l.b16 %v5656
    %v5824 = vunpack.c.h.b16 %v5656
    %v5825 = vunpack.c.l.b16 %v5657
    %v5826 = vunpack.c.h.b16 %v5657
    %v5827 = vunpack.c.l.b16 %v5658
    %v5828 = vunpack.c.h.b16 %v5658
    %v5829 = vunpack.c.l.b16 %v5659
    %v5830 = vunpack.c.h.b16 %v5659
    %v5831 = vunpack.c.l.b16 %v5660
    %v5832 = vunpack.c.h.b16 %v5660
    %v5833 = vunpack.c.l.b16 %v5661
    %v5834 = vunpack.c.h.b16 %v5661
    %v5835 = vunpack.c.l.b16 %v5662
    %v5836 = vunpack.c.h.b16 %v5662
    %v5837 = vunpack.c.l.b16 %v5663
    %v5838 = vunpack.c.h.b16 %v5663
    %v5839 = vunpack.c.l.b16 %v5664
    %v5840 = vunpack.c.h.b16 %v5664
    %v5841 = vpack.c.b16 %v5779, %v5777
    %v5842 = vpack.c.b16 %v5780, %v5778
    %v5843 = vpack.c.b16 %v5783, %v5781
    %v5844 = vpack.c.b16 %v5784, %v5782
    %v5845 = vpack.c.b16 %v5787, %v5785
    %v5846 = vpack.c.b16 %v5788, %v5786
    %v5847 = vpack.c.b16 %v5791, %v5789
    %v5848 = vpack.c.b16 %v5792, %v5790
    %v5849 = vpack.c.b16 %v5795, %v5793
    %v5850 = vpack.c.b16 %v5796, %v5794
    %v5851 = vpack.c.b16 %v5799, %v5797
    %v5852 = vpack.c.b16 %v5800, %v5798
    %v5853 = vpack.c.b16 %v5803, %v5801
    %v5854 = vpack.c.b16 %v5804, %v5802
    %v5855 = vpack.c.b16 %v5807, %v5805
    %v5856 = vpack.c.b16 %v5808, %v5806
    %v5857 = vpack.c.b16 %v5811, %v5809
    %v5858 = vpack.c.b16 %v5812, %v5810
    %v5859 = vpack.c.b16 %v5815, %v5813
    %v5860 = vpack.c.b16 %v5816, %v5814
    %v5861 = vpack.c.b16 %v5819, %v5817
    %v5862 = vpack.c.b16 %v5820, %v5818
    %v5863 = vpack.c.b16 %v5823, %v5821
    %v5864 = vpack.c.b16 %v5824, %v5822
    %v5865 = vpack.c.b16 %v5827, %v5825
    %v5866 = vpack.c.b16 %v5828, %v5826
    %v5867 = vpack.c.b16 %v5831, %v5829
    %v5868 = vpack.c.b16 %v5832, %v5830
    %v5869 = vpack.c.b16 %v5835, %v5833
    %v5870 = vpack.c.b16 %v5836, %v5834
    %v5871 = vpack.c.b16 %v5839, %v5837
    %v5872 = vpack.c.b16 %v5840, %v5838
    %5905 = vmatprep.subr.bf16.mxu0 %v5856
    %5906 = vmatpush1.bf16.msra.mxu0 %v5855
    %5907 = vmatprep.subr.bf16.mxu0 %v5854
    %5908 = vmatpush1.bf16.msra.mxu0 %v5853
    %5909 = vmatprep.subr.bf16.mxu0 %v5852
    %5910 = vmatpush1.bf16.msra.mxu0 %v5851
    %5911 = vmatprep.subr.bf16.mxu0 %v5850
    %5912 = vmatpush1.bf16.msra.mxu0 %v5849
    %5913 = vmatprep.subr.bf16.mxu0 %v5848
    %5914 = vmatpush1.bf16.msra.mxu0 %v5847
    %5915 = vmatprep.subr.bf16.mxu0 %v5846
    %5916 = vmatpush1.bf16.msra.mxu0 %v5845
    %5917 = vmatprep.subr.bf16.mxu0 %v5844
    %5918 = vmatpush1.bf16.msra.mxu0 %v5843
    %5919 = vmatprep.subr.bf16.mxu0 %v5842
    %5920 = vmatpush1.bf16.msra.mxu0 %v5841
    %5921 = vmatprep.subr.bf16.mxu0 %v5872
    %5922 = vmatpush2.bf16.msra.mxu0 %v5871
    %5923 = vmatprep.subr.bf16.mxu0 %v5870
    %5924 = vmatpush2.bf16.msra.mxu0 %v5869
    %5925 = vmatprep.subr.bf16.mxu0 %v5868
    %5926 = vmatpush2.bf16.msra.mxu0 %v5867
    %5927 = vmatprep.subr.bf16.mxu0 %v5866
    %5928 = vmatpush2.bf16.msra.mxu0 %v5865
    %5929 = vmatprep.subr.bf16.mxu0 %v5864
    %5930 = vmatpush2.bf16.msra.mxu0 %v5863
    %5931 = vmatprep.subr.bf16.mxu0 %v5862
    %5932 = vmatpush2.bf16.msra.mxu0 %v5861
    %5933 = vmatprep.subr.bf16.mxu0 %v5860
    %5934 = vmatpush2.bf16.msra.mxu0 %v5859
    %5935 = vmatprep.subr.bf16.mxu0 %v5858
    %5936 = vmatpush2.bf16.msra.mxu0 %v5857
    %5937 = vmatprep.mubr.bf16.mxu0 %v5688
    %5938 = vmatmul.mubr.bf16.gmra.mxu0 %v5676
    %v5939 = vpop.f32.mrf.mxu0
    %v5940 = vadd.f32 0.0, %v5939
    %v5941 = vpop.f32.mrf.mxu0
    %v5942 = vadd.f32 0.0, %v5941
    %v5943 = vpop.f32.mrf.mxu0
    %v5944 = vadd.f32 0.0, %v5943
    %v5945 = vpop.f32.mrf.mxu0
    %v5946 = vadd.f32 0.0, %v5945
    %5947 = vmatprep.mubr.bf16.mxu0 %v5704
    %5948 = vmatmul.mubr.bf16.gmra.mxu0 %v5696
    %v5949 = vpop.f32.mrf.mxu0
    %v5950 = vpop.f32.mrf.mxu0
    %v5951 = vpop.f32.mrf.mxu0
    %v5952 = vpop.f32.mrf.mxu0
    %5953 = vmatprep.mubr.bf16.mxu0 %v5720
    %5954 = vmatmul.mubr.bf16.gmra.mxu0 %v5712
    %v5955 = vpop.f32.mrf.mxu0
    %v5956 = vadd.f32 0.0, %v5955
    %v5957 = vpop.f32.mrf.mxu0
    %v5958 = vadd.f32 0.0, %v5957
    %v5959 = vpop.f32.mrf.mxu0
    %v5960 = vadd.f32 0.0, %v5959
    %v5961 = vpop.f32.mrf.mxu0
    %v5962 = vadd.f32 0.0, %v5961
    %5963 = vmatprep.mubr.bf16.mxu0 %v5736
    %5964 = vmatmul.mubr.bf16.gmra.mxu0 %v5728
    %v5965 = vpop.f32.mrf.mxu0
    %v5966 = vpop.f32.mrf.mxu0
    %v5967 = vpop.f32.mrf.mxu0
    %v5968 = vpop.f32.mrf.mxu0
    %5969 = vdwg.mxu0
    %v5970 = vadd.f32 %v5596, %v5940
    %v5971 = vadd.f32 %v5597, %v5942
    %v5972 = vadd.f32 %v5598, %v5944
    %v5973 = vadd.f32 %v5599, %v5946
    %v5974 = vadd.f32 %v5600, %v5956
    %v5975 = vadd.f32 %v5601, %v5958
    %v5976 = vadd.f32 %v5602, %v5960
    %v5977 = vadd.f32 %v5603, %v5962
    %v5978 = vld [vmem:[#allocation2 + $0x10] sm:$0xfc]
    %v5979 = vld [vmem:[#allocation2 + $0x18] sm:$0xfc]
    %v5980 = vld [vmem:[#allocation2 + $0x90] sm:$0x3]
    %v5981 = vld [vmem:[#allocation2 + $0x98] sm:$0x3]
    %v5982 = vpack.c.bf16 %v5606, %v5978
    %v5983 = vpack.c.bf16 %v5607, %v5979
    %v5984 = vpack.c.bf16 %v5980, %v5980
    %v5985 = vpack.c.bf16 %v5981, %v5981
    %s5986 = scalar_lea.vmem [#allocation4], 1024
    %v5987 = vld [vmem:[%s5986] sm:$0xff]
    %v5988 = vld [vmem:[%s5986 + $0x8] sm:$0xff]
    %v5989 = vld [vmem:[%s5986 + $0x10] sm:$0xff]
    %v5990 = vld [vmem:[%s5986 + $0x18] sm:$0xff]
    %v5991 = vld [vmem:[%s5986 + $0x20] sm:$0xff]
    %v5992 = vld [vmem:[%s5986 + $0x28] sm:$0xff]
    %v5993 = vld [vmem:[%s5986 + $0x30] sm:$0xff]
    %v5994 = vld [vmem:[%s5986 + $0x38] sm:$0xff]
    %v5995 = vld [vmem:[%s5986 + $0x40] sm:$0xff]
    %v5996 = vld [vmem:[%s5986 + $0x48] sm:$0xff]
    %v5997 = vld [vmem:[%s5986 + $0x50] sm:$0xff]
    %v5998 = vld [vmem:[%s5986 + $0x58] sm:$0xff]
    %v5999 = vld [vmem:[%s5986 + $0x60] sm:$0xff]
    %v6000 = vld [vmem:[%s5986 + $0x68] sm:$0xff]
    %v6001 = vld [vmem:[%s5986 + $0x70] sm:$0xff]
    %v6002 = vld [vmem:[%s5986 + $0x78] sm:$0xff]
    %v6003 = vld [vmem:[%s5986 + $0x80] sm:$0xff]
    %v6004 = vld [vmem:[%s5986 + $0x88] sm:$0xff]
    %v6005 = vld [vmem:[%s5986 + $0x90] sm:$0xff]
    %v6006 = vld [vmem:[%s5986 + $0x98] sm:$0xff]
    %v6007 = vld [vmem:[%s5986 + $0xa0] sm:$0xff]
    %v6008 = vld [vmem:[%s5986 + $0xa8] sm:$0xff]
    %v6009 = vld [vmem:[%s5986 + $0xb0] sm:$0xff]
    %v6010 = vld [vmem:[%s5986 + $0xb8] sm:$0xff]
    %v6011 = vld [vmem:[%s5986 + $0xc0] sm:$0xff]
    %v6012 = vld [vmem:[%s5986 + $0xc8] sm:$0xff]
    %v6013 = vld [vmem:[%s5986 + $0xd0] sm:$0xff]
    %v6014 = vld [vmem:[%s5986 + $0xd8] sm:$0xff]
    %v6015 = vld [vmem:[%s5986 + $0xe0] sm:$0xff]
    %v6016 = vld [vmem:[%s5986 + $0xe8] sm:$0xff]
    %v6017 = vld [vmem:[%s5986 + $0xf0] sm:$0xff]
    %v6018 = vld [vmem:[%s5986 + $0xf8] sm:$0xff]
    %v6029 = vrot.slane %v5982, 1
    %v6030 = vrot.slane %v5624, 1
    %v6031 = vsel %vm869, %v6029, %v6030
    %v6032 = vrot.slane %v5983, 1
    %v6033 = vrot.slane %v5625, 1
    %v6034 = vsel %vm869, %v6032, %v6033
    %v6035 = vrot.slane %v5626, 1
    %v6036 = vsel %vm869, %v6030, %v6035
    %v6037 = vrot.slane %v5627, 1
    %v6038 = vsel %vm869, %v6033, %v6037
    %v6039 = vrot.slane %v5628, 1
    %v6040 = vsel %vm869, %v6035, %v6039
    %v6041 = vrot.slane %v5629, 1
    %v6042 = vsel %vm869, %v6037, %v6041
    %v6043 = vrot.slane %v5984, 1
    %v6044 = vsel %vm869, %v6039, %v6043
    %v6045 = vrot.slane %v5985, 1
    %v6046 = vsel %vm869, %v6041, %v6045
    %v6087 = vunpack.c.l.b16 %v5987
    %v6088 = vunpack.c.h.b16 %v5987
    %v6089 = vunpack.c.l.b16 %v5988
    %v6090 = vunpack.c.h.b16 %v5988
    %v6091 = vunpack.c.l.b16 %v5989
    %v6092 = vunpack.c.h.b16 %v5989
    %v6093 = vunpack.c.l.b16 %v5990
    %v6094 = vunpack.c.h.b16 %v5990
    %v6095 = vunpack.c.l.b16 %v5991
    %v6096 = vunpack.c.h.b16 %v5991
    %v6097 = vunpack.c.l.b16 %v5992
    %v6098 = vunpack.c.h.b16 %v5992
    %v6099 = vunpack.c.l.b16 %v5993
    %v6100 = vunpack.c.h.b16 %v5993
    %v6101 = vunpack.c.l.b16 %v5994
    %v6102 = vunpack.c.h.b16 %v5994
    %v6103 = vunpack.c.l.b16 %v5995
    %v6104 = vunpack.c.h.b16 %v5995
    %v6105 = vunpack.c.l.b16 %v5996
    %v6106 = vunpack.c.h.b16 %v5996
    %v6107 = vunpack.c.l.b16 %v5997
    %v6108 = vunpack.c.h.b16 %v5997
    %v6109 = vunpack.c.l.b16 %v5998
    %v6110 = vunpack.c.h.b16 %v5998
    %v6111 = vunpack.c.l.b16 %v5999
    %v6112 = vunpack.c.h.b16 %v5999
    %v6113 = vunpack.c.l.b16 %v6000
    %v6114 = vunpack.c.h.b16 %v6000
    %v6115 = vunpack.c.l.b16 %v6001
    %v6116 = vunpack.c.h.b16 %v6001
    %v6117 = vunpack.c.l.b16 %v6002
    %v6118 = vunpack.c.h.b16 %v6002
    %v6119 = vunpack.c.l.b16 %v6003
    %v6120 = vunpack.c.h.b16 %v6003
    %v6121 = vunpack.c.l.b16 %v6004
    %v6122 = vunpack.c.h.b16 %v6004
    %v6123 = vunpack.c.l.b16 %v6005
    %v6124 = vunpack.c.h.b16 %v6005
    %v6125 = vunpack.c.l.b16 %v6006
    %v6126 = vunpack.c.h.b16 %v6006
    %v6127 = vunpack.c.l.b16 %v6007
    %v6128 = vunpack.c.h.b16 %v6007
    %v6129 = vunpack.c.l.b16 %v6008
    %v6130 = vunpack.c.h.b16 %v6008
    %v6131 = vunpack.c.l.b16 %v6009
    %v6132 = vunpack.c.h.b16 %v6009
    %v6133 = vunpack.c.l.b16 %v6010
    %v6134 = vunpack.c.h.b16 %v6010
    %v6135 = vunpack.c.l.b16 %v6011
    %v6136 = vunpack.c.h.b16 %v6011
    %v6137 = vunpack.c.l.b16 %v6012
    %v6138 = vunpack.c.h.b16 %v6012
    %v6139 = vunpack.c.l.b16 %v6013
    %v6140 = vunpack.c.h.b16 %v6013
    %v6141 = vunpack.c.l.b16 %v6014
    %v6142 = vunpack.c.h.b16 %v6014
    %v6143 = vunpack.c.l.b16 %v6015
    %v6144 = vunpack.c.h.b16 %v6015
    %v6145 = vunpack.c.l.b16 %v6016
    %v6146 = vunpack.c.h.b16 %v6016
    %v6147 = vunpack.c.l.b16 %v6017
    %v6148 = vunpack.c.h.b16 %v6017
    %v6149 = vunpack.c.l.b16 %v6018
    %v6150 = vunpack.c.h.b16 %v6018
    %v6151 = vpack.c.b16 %v6089, %v6087
    %v6152 = vpack.c.b16 %v6090, %v6088
    %v6153 = vpack.c.b16 %v6093, %v6091
    %v6154 = vpack.c.b16 %v6094, %v6092
    %v6155 = vpack.c.b16 %v6097, %v6095
    %v6156 = vpack.c.b16 %v6098, %v6096
    %v6157 = vpack.c.b16 %v6101, %v6099
    %v6158 = vpack.c.b16 %v6102, %v6100
    %v6159 = vpack.c.b16 %v6105, %v6103
    %v6160 = vpack.c.b16 %v6106, %v6104
    %v6161 = vpack.c.b16 %v6109, %v6107
    %v6162 = vpack.c.b16 %v6110, %v6108
    %v6163 = vpack.c.b16 %v6113, %v6111
    %v6164 = vpack.c.b16 %v6114, %v6112
    %v6165 = vpack.c.b16 %v6117, %v6115
    %v6166 = vpack.c.b16 %v6118, %v6116
    %v6167 = vpack.c.b16 %v6121, %v6119
    %v6168 = vpack.c.b16 %v6122, %v6120
    %v6169 = vpack.c.b16 %v6125, %v6123
    %v6170 = vpack.c.b16 %v6126, %v6124
    %v6171 = vpack.c.b16 %v6129, %v6127
    %v6172 = vpack.c.b16 %v6130, %v6128
    %v6173 = vpack.c.b16 %v6133, %v6131
    %v6174 = vpack.c.b16 %v6134, %v6132
    %v6175 = vpack.c.b16 %v6137, %v6135
    %v6176 = vpack.c.b16 %v6138, %v6136
    %v6177 = vpack.c.b16 %v6141, %v6139
    %v6178 = vpack.c.b16 %v6142, %v6140
    %v6179 = vpack.c.b16 %v6145, %v6143
    %v6180 = vpack.c.b16 %v6146, %v6144
    %v6181 = vpack.c.b16 %v6149, %v6147
    %v6182 = vpack.c.b16 %v6150, %v6148
    %6215 = vmatprep.subr.bf16.mxu0 %v6166
    %6216 = vmatpush1.bf16.msra.mxu0 %v6165
    %6217 = vmatprep.subr.bf16.mxu0 %v6164
    %6218 = vmatpush1.bf16.msra.mxu0 %v6163
    %6219 = vmatprep.subr.bf16.mxu0 %v6162
    %6220 = vmatpush1.bf16.msra.mxu0 %v6161
    %6221 = vmatprep.subr.bf16.mxu0 %v6160
    %6222 = vmatpush1.bf16.msra.mxu0 %v6159
    %6223 = vmatprep.subr.bf16.mxu0 %v6158
    %6224 = vmatpush1.bf16.msra.mxu0 %v6157
    %6225 = vmatprep.subr.bf16.mxu0 %v6156
    %6226 = vmatpush1.bf16.msra.mxu0 %v6155
    %6227 = vmatprep.subr.bf16.mxu0 %v6154
    %6228 = vmatpush1.bf16.msra.mxu0 %v6153
    %6229 = vmatprep.subr.bf16.mxu0 %v6152
    %6230 = vmatpush1.bf16.msra.mxu0 %v6151
    %6231 = vmatprep.subr.bf16.mxu0 %v6182
    %6232 = vmatpush2.bf16.msra.mxu0 %v6181
    %6233 = vmatprep.subr.bf16.mxu0 %v6180
    %6234 = vmatpush2.bf16.msra.mxu0 %v6179
    %6235 = vmatprep.subr.bf16.mxu0 %v6178
    %6236 = vmatpush2.bf16.msra.mxu0 %v6177
    %6237 = vmatprep.subr.bf16.mxu0 %v6176
    %6238 = vmatpush2.bf16.msra.mxu0 %v6175
    %6239 = vmatprep.subr.bf16.mxu0 %v6174
    %6240 = vmatpush2.bf16.msra.mxu0 %v6173
    %6241 = vmatprep.subr.bf16.mxu0 %v6172
    %6242 = vmatpush2.bf16.msra.mxu0 %v6171
    %6243 = vmatprep.subr.bf16.mxu0 %v6170
    %6244 = vmatpush2.bf16.msra.mxu0 %v6169
    %6245 = vmatprep.subr.bf16.mxu0 %v6168
    %6246 = vmatpush2.bf16.msra.mxu0 %v6167
    %6247 = vmatprep.mubr.bf16.mxu0 %v6034
    %6248 = vmatmul.mubr.bf16.gmra.mxu0 %v6031
    %v6249 = vpop.f32.mrf.mxu0
    %v6250 = vadd.f32 0.0, %v6249
    %v6251 = vpop.f32.mrf.mxu0
    %v6252 = vadd.f32 0.0, %v6251
    %v6253 = vpop.f32.mrf.mxu0
    %v6254 = vadd.f32 0.0, %v6253
    %v6255 = vpop.f32.mrf.mxu0
    %v6256 = vadd.f32 0.0, %v6255
    %6257 = vmatprep.mubr.bf16.mxu0 %v6038
    %6258 = vmatmul.mubr.bf16.gmra.mxu0 %v6036
    %v6259 = vpop.f32.mrf.mxu0
    %v6260 = vpop.f32.mrf.mxu0
    %v6261 = vpop.f32.mrf.mxu0
    %v6262 = vpop.f32.mrf.mxu0
    %6263 = vmatprep.mubr.bf16.mxu0 %v6042
    %6264 = vmatmul.mubr.bf16.gmra.mxu0 %v6040
    %v6265 = vpop.f32.mrf.mxu0
    %v6266 = vadd.f32 0.0, %v6265
    %v6267 = vpop.f32.mrf.mxu0
    %v6268 = vadd.f32 0.0, %v6267
    %v6269 = vpop.f32.mrf.mxu0
    %v6270 = vadd.f32 0.0, %v6269
    %v6271 = vpop.f32.mrf.mxu0
    %v6272 = vadd.f32 0.0, %v6271
    %6273 = vmatprep.mubr.bf16.mxu0 %v6046
    %6274 = vmatmul.mubr.bf16.gmra.mxu0 %v6044
    %v6275 = vpop.f32.mrf.mxu0
    %v6276 = vpop.f32.mrf.mxu0
    %v6277 = vpop.f32.mrf.mxu0
    %v6278 = vpop.f32.mrf.mxu0
    %6279 = vdwg.mxu0
    %v6280 = vadd.f32 %v5970, %v6250
    %v6281 = vadd.f32 %v5971, %v6252
    %v6282 = vadd.f32 %v5972, %v6254
    %v6283 = vadd.f32 %v5973, %v6256
    %v6284 = vadd.f32 %v5974, %v6266
    %v6285 = vadd.f32 %v5975, %v6268
    %v6286 = vadd.f32 %v5976, %v6270
    %v6287 = vadd.f32 %v5977, %v6272
    %v6288 = vld [vmem:[%s17] sm:$0x3]
    %v6290 = vlaneseq
    %v6291 = vshrl.u32 %v6290, 7
    %v6292 = vsub.s32 0, %v6291
    %v6293 = vrot.slane %v6288, %v6292
    %v6294 = vlaneseq
    %v6295 = vshrl.u32 %v6294, 7
    %v6296 = vsub.s32 1, %v6295
    %v6297 = vrot.slane %v6288, %v6296
    %v6300 = vmul.f32 %v6280, %v6293
    %v6301 = vmul.f32 %v6281, %v6297
    %v6302 = vmul.f32 %v6282, %v6293
    %v6303 = vmul.f32 %v6283, %v6297
    %v6304 = vmul.f32 %v6284, %v6293
    %v6305 = vmul.f32 %v6285, %v6297
    %v6306 = vmul.f32 %v6286, %v6293
    %v6307 = vmul.f32 %v6287, %v6297
    %v6308 = vld [vmem:[%s18] sm:$0x3]
    %v6310 = vlaneseq
    %v6311 = vshrl.u32 %v6310, 7
    %v6312 = vsub.s32 0, %v6311
    %v6313 = vrot.slane %v6308, %v6312
    %v6314 = vlaneseq
    %v6315 = vshrl.u32 %v6314, 7
    %v6316 = vsub.s32 1, %v6315
    %v6317 = vrot.slane %v6308, %v6316
    %v6320 = vadd.f32 %v6300, %v6313
    %v6321 = vadd.f32 %v6301, %v6317
    %v6322 = vadd.f32 %v6302, %v6313
    %v6323 = vadd.f32 %v6303, %v6317
    %v6324 = vadd.f32 %v6304, %v6313
    %v6325 = vadd.f32 %v6305, %v6317
    %v6326 = vadd.f32 %v6306, %v6313
    %v6327 = vadd.f32 %v6307, %v6317
    %vm6328 = vcmp.ge.f32.partialorder %v6320, 0.0
    %vm6329 = vcmp.ge.f32.partialorder %v6321, 0.0
    %vm6330 = vcmp.ge.f32.partialorder %v6322, 0.0
    %vm6331 = vcmp.ge.f32.partialorder %v6323, 0.0
    %vm6332 = vcmp.ge.f32.partialorder %v6324, 0.0
    %vm6333 = vcmp.ge.f32.partialorder %v6325, 0.0
    %vm6334 = vcmp.ge.f32.partialorder %v6326, 0.0
    %vm6335 = vcmp.ge.f32.partialorder %v6327, 0.0
    %v6336 = vmul.f32 %v6320, 0.01
    %v6337 = vmul.f32 %v6321, 0.01
    %v6338 = vmul.f32 %v6322, 0.01
    %v6339 = vmul.f32 %v6323, 0.01
    %v6340 = vmul.f32 %v6324, 0.01
    %v6341 = vmul.f32 %v6325, 0.01
    %v6342 = vmul.f32 %v6326, 0.01
    %v6343 = vmul.f32 %v6327, 0.01
    %v6344 = vsel %vm6328, %v6320, %v6336
    %v6345 = vsel %vm6329, %v6321, %v6337
    %v6346 = vsel %vm6330, %v6322, %v6338
    %v6347 = vsel %vm6331, %v6323, %v6339
    %v6348 = vsel %vm6332, %v6324, %v6340
    %v6349 = vsel %vm6333, %v6325, %v6341
    %v6350 = vsel %vm6334, %v6326, %v6342
    %v6351 = vsel %vm6335, %v6327, %v6343
    %v6352 = vadd.f32 %v6344, %v6346
    %v6353 = vrot.slane %v6352, 4
    %v6354 = vadd.f32 %v6352, %v6353
    %v6355 = vrot.slane %v6354, 2
    %v6356 = vadd.f32 %v6354, %v6355
    %v6357 = vrot.slane %v6356, 1
    %v6358 = vadd.f32 %v6356, %v6357
    %v6359 = vadd.f32 %v6345, %v6347
    %v6360 = vrot.slane %v6359, 4
    %v6361 = vadd.f32 %v6359, %v6360
    %v6362 = vrot.slane %v6361, 2
    %v6363 = vadd.f32 %v6361, %v6362
    %v6364 = vrot.slane %v6363, 1
    %v6365 = vadd.f32 %v6363, %v6364
    %v6366 = vmul.f32 %v6358, 0.0625
    %v6367 = vmul.f32 %v6365, 0.0625
    %v6368 = vpack.c.bf16 %v6366, %v6366
    %v6369 = vpack.c.bf16 %v6367, %v6367
    %v6370 = vld [vmem:[#allocation13] sm:$0xf]
    %v6371 = vld [vmem:[#allocation13 + $0x4] sm:$0xf]
    %v6372 = vld [vmem:[#allocation13 + $0x8] sm:$0xf]
    %v6373 = vld [vmem:[#allocation13 + $0xc] sm:$0xf]
    %v6374 = vld [vmem:[#allocation13 + $0x10] sm:$0xf]
    %v6375 = vld [vmem:[#allocation13 + $0x14] sm:$0xf]
    %v6376 = vld [vmem:[#allocation13 + $0x18] sm:$0xf]
    %v6377 = vld [vmem:[#allocation13 + $0x1c] sm:$0xf]
    %v6378 = vld [vmem:[#allocation13 + $0x20] sm:$0xf]
    %v6379 = vld [vmem:[#allocation13 + $0x24] sm:$0xf]
    %v6380 = vld [vmem:[#allocation13 + $0x28] sm:$0xf]
    %v6381 = vld [vmem:[#allocation13 + $0x2c] sm:$0xf]
    %v6382 = vld [vmem:[#allocation13 + $0x30] sm:$0xf]
    %v6383 = vld [vmem:[#allocation13 + $0x34] sm:$0xf]
    %v6384 = vld [vmem:[#allocation13 + $0x38] sm:$0xf]
    %v6385 = vld [vmem:[#allocation13 + $0x3c] sm:$0xf]
    %v6386 = vld [vmem:[#allocation13 + $0x40] sm:$0xf]
    %v6387 = vld [vmem:[#allocation13 + $0x44] sm:$0xf]
    %v6388 = vld [vmem:[#allocation13 + $0x48] sm:$0xf]
    %v6389 = vld [vmem:[#allocation13 + $0x4c] sm:$0xf]
    %v6390 = vld [vmem:[#allocation13 + $0x50] sm:$0xf]
    %v6391 = vld [vmem:[#allocation13 + $0x54] sm:$0xf]
    %v6392 = vld [vmem:[#allocation13 + $0x58] sm:$0xf]
    %v6393 = vld [vmem:[#allocation13 + $0x5c] sm:$0xf]
    %v6394 = vld [vmem:[#allocation13 + $0x60] sm:$0xf]
    %v6395 = vld [vmem:[#allocation13 + $0x64] sm:$0xf]
    %v6396 = vld [vmem:[#allocation13 + $0x68] sm:$0xf]
    %v6397 = vld [vmem:[#allocation13 + $0x6c] sm:$0xf]
    %v6398 = vld [vmem:[#allocation13 + $0x70] sm:$0xf]
    %v6399 = vld [vmem:[#allocation13 + $0x74] sm:$0xf]
    %v6400 = vld [vmem:[#allocation13 + $0x78] sm:$0xf]
    %v6401 = vld [vmem:[#allocation13 + $0x7c] sm:$0xf]
    %v6402 = vld [vmem:[%s20] sm:$0x1]
    %v6435 = vunpack.c.l.b16 %v6370
    %v6436 = vunpack.c.l.b16 %v6371
    %v6437 = vunpack.c.l.b16 %v6372
    %v6438 = vunpack.c.l.b16 %v6373
    %v6439 = vunpack.c.l.b16 %v6374
    %v6440 = vunpack.c.l.b16 %v6375
    %v6441 = vunpack.c.l.b16 %v6376
    %v6442 = vunpack.c.l.b16 %v6377
    %v6443 = vunpack.c.l.b16 %v6378
    %v6444 = vunpack.c.l.b16 %v6379
    %v6445 = vunpack.c.l.b16 %v6380
    %v6446 = vunpack.c.l.b16 %v6381
    %v6447 = vunpack.c.l.b16 %v6382
    %v6448 = vunpack.c.l.b16 %v6383
    %v6449 = vunpack.c.l.b16 %v6384
    %v6450 = vunpack.c.l.b16 %v6385
    %v6451 = vunpack.c.l.b16 %v6386
    %v6452 = vunpack.c.l.b16 %v6387
    %v6453 = vunpack.c.l.b16 %v6388
    %v6454 = vunpack.c.l.b16 %v6389
    %v6455 = vunpack.c.l.b16 %v6390
    %v6456 = vunpack.c.l.b16 %v6391
    %v6457 = vunpack.c.l.b16 %v6392
    %v6458 = vunpack.c.l.b16 %v6393
    %v6459 = vunpack.c.l.b16 %v6394
    %v6460 = vunpack.c.l.b16 %v6395
    %v6461 = vunpack.c.l.b16 %v6396
    %v6462 = vunpack.c.l.b16 %v6397
    %v6463 = vunpack.c.l.b16 %v6398
    %v6464 = vunpack.c.l.b16 %v6399
    %v6465 = vunpack.c.l.b16 %v6400
    %v6466 = vunpack.c.l.b16 %v6401
    %v6467 = vpack.c.b16 %v6436, %v6435
    %v6468 = vpack.c.b16 %v6438, %v6437
    %v6469 = vpack.c.b16 %v6440, %v6439
    %v6470 = vpack.c.b16 %v6442, %v6441
    %v6471 = vpack.c.b16 %v6444, %v6443
    %v6472 = vpack.c.b16 %v6446, %v6445
    %v6473 = vpack.c.b16 %v6448, %v6447
    %v6474 = vpack.c.b16 %v6450, %v6449
    %v6475 = vpack.c.b16 %v6452, %v6451
    %v6476 = vpack.c.b16 %v6454, %v6453
    %v6477 = vpack.c.b16 %v6456, %v6455
    %v6478 = vpack.c.b16 %v6458, %v6457
    %v6479 = vpack.c.b16 %v6460, %v6459
    %v6480 = vpack.c.b16 %v6462, %v6461
    %v6481 = vpack.c.b16 %v6464, %v6463
    %v6482 = vpack.c.b16 %v6466, %v6465
    %6499 = vmatprep.subr.bf16.mxu0 0
    %6500 = vmatpush1.bf16.msra.mxu0 %v6474
    %6501 = vmatprep.subr.bf16.mxu0 0
    %6502 = vmatpush1.bf16.msra.mxu0 %v6473
    %6503 = vmatprep.subr.bf16.mxu0 0
    %6504 = vmatpush1.bf16.msra.mxu0 %v6472
    %6505 = vmatprep.subr.bf16.mxu0 0
    %6506 = vmatpush1.bf16.msra.mxu0 %v6471
    %6507 = vmatprep.subr.bf16.mxu0 0
    %6508 = vmatpush1.bf16.msra.mxu0 %v6470
    %6509 = vmatprep.subr.bf16.mxu0 0
    %6510 = vmatpush1.bf16.msra.mxu0 %v6469
    %6511 = vmatprep.subr.bf16.mxu0 0
    %6512 = vmatpush1.bf16.msra.mxu0 %v6468
    %6513 = vmatprep.subr.bf16.mxu0 0
    %6514 = vmatpush1.bf16.msra.mxu0 %v6467
    %6515 = vmatprep.subr.bf16.mxu0 0
    %6516 = vmatpush2.bf16.msra.mxu0 %v6482
    %6517 = vmatprep.subr.bf16.mxu0 0
    %6518 = vmatpush2.bf16.msra.mxu0 %v6481
    %6519 = vmatprep.subr.bf16.mxu0 0
    %6520 = vmatpush2.bf16.msra.mxu0 %v6480
    %6521 = vmatprep.subr.bf16.mxu0 0
    %6522 = vmatpush2.bf16.msra.mxu0 %v6479
    %6523 = vmatprep.subr.bf16.mxu0 0
    %6524 = vmatpush2.bf16.msra.mxu0 %v6478
    %6525 = vmatprep.subr.bf16.mxu0 0
    %6526 = vmatpush2.bf16.msra.mxu0 %v6477
    %6527 = vmatprep.subr.bf16.mxu0 0
    %6528 = vmatpush2.bf16.msra.mxu0 %v6476
    %6529 = vmatprep.subr.bf16.mxu0 0
    %6530 = vmatpush2.bf16.msra.mxu0 %v6475
    %6531 = vmatprep.mubr.bf16.mxu0 %v6369
    %6532 = vmatmul.mubr.bf16.gmra.mxu0 %v6368
    %v6533 = vpop.f32.mrf.mxu0
    %v6534 = vadd.f32 %v6402, %v6533
    %v6535 = vpop.f32.mrf.mxu0
    %v6536 = vpop.f32.mrf.mxu0
    %v6537 = vpop.f32.mrf.mxu0
    %6538 = vdwg.mxu0
    %6539 = vst [vmem:[%s21] sm:$0x1] %v6534
    %v6540 = vadd.f32 %v6348, %v6350
    %v6541 = vrot.slane %v6540, 4
    %v6542 = vadd.f32 %v6540, %v6541
    %v6543 = vrot.slane %v6542, 2
    %v6544 = vadd.f32 %v6542, %v6543
    %v6545 = vrot.slane %v6544, 1
    %v6546 = vadd.f32 %v6544, %v6545
    %v6547 = vadd.f32 %v6349, %v6351
    %v6548 = vrot.slane %v6547, 4
    %v6549 = vadd.f32 %v6547, %v6548
    %v6550 = vrot.slane %v6549, 2
    %v6551 = vadd.f32 %v6549, %v6550
    %v6552 = vrot.slane %v6551, 1
    %v6553 = vadd.f32 %v6551, %v6552
    %v6554 = vmul.f32 %v6546, 0.0625
    %v6555 = vmul.f32 %v6553, 0.0625
    %v6556 = vpack.c.bf16 %v6554, %v6554
    %v6557 = vpack.c.bf16 %v6555, %v6555
    %v6558 = vld [vmem:[#allocation13] sm:$0xf]
    %v6559 = vld [vmem:[#allocation13 + $0x4] sm:$0xf]
    %v6560 = vld [vmem:[#allocation13 + $0x8] sm:$0xf]
    %v6561 = vld [vmem:[#allocation13 + $0xc] sm:$0xf]
    %v6562 = vld [vmem:[#allocation13 + $0x10] sm:$0xf]
    %v6563 = vld [vmem:[#allocation13 + $0x14] sm:$0xf]
    %v6564 = vld [vmem:[#allocation13 + $0x18] sm:$0xf]
    %v6565 = vld [vmem:[#allocation13 + $0x1c] sm:$0xf]
    %v6566 = vld [vmem:[#allocation13 + $0x20] sm:$0xf]
    %v6567 = vld [vmem:[#allocation13 + $0x24] sm:$0xf]
    %v6568 = vld [vmem:[#allocation13 + $0x28] sm:$0xf]
    %v6569 = vld [vmem:[#allocation13 + $0x2c] sm:$0xf]
    %v6570 = vld [vmem:[#allocation13 + $0x30] sm:$0xf]
    %v6571 = vld [vmem:[#allocation13 + $0x34] sm:$0xf]
    %v6572 = vld [vmem:[#allocation13 + $0x38] sm:$0xf]
    %v6573 = vld [vmem:[#allocation13 + $0x3c] sm:$0xf]
    %v6574 = vld [vmem:[#allocation13 + $0x40] sm:$0xf]
    %v6575 = vld [vmem:[#allocation13 + $0x44] sm:$0xf]
    %v6576 = vld [vmem:[#allocation13 + $0x48] sm:$0xf]
    %v6577 = vld [vmem:[#allocation13 + $0x4c] sm:$0xf]
    %v6578 = vld [vmem:[#allocation13 + $0x50] sm:$0xf]
    %v6579 = vld [vmem:[#allocation13 + $0x54] sm:$0xf]
    %v6580 = vld [vmem:[#allocation13 + $0x58] sm:$0xf]
    %v6581 = vld [vmem:[#allocation13 + $0x5c] sm:$0xf]
    %v6582 = vld [vmem:[#allocation13 + $0x60] sm:$0xf]
    %v6583 = vld [vmem:[#allocation13 + $0x64] sm:$0xf]
    %v6584 = vld [vmem:[#allocation13 + $0x68] sm:$0xf]
    %v6585 = vld [vmem:[#allocation13 + $0x6c] sm:$0xf]
    %v6586 = vld [vmem:[#allocation13 + $0x70] sm:$0xf]
    %v6587 = vld [vmem:[#allocation13 + $0x74] sm:$0xf]
    %v6588 = vld [vmem:[#allocation13 + $0x78] sm:$0xf]
    %v6589 = vld [vmem:[#allocation13 + $0x7c] sm:$0xf]
    %v6590 = vld [vmem:[%s20] sm:$0x1]
    %v6623 = vunpack.c.l.b16 %v6558
    %v6624 = vunpack.c.l.b16 %v6559
    %v6625 = vunpack.c.l.b16 %v6560
    %v6626 = vunpack.c.l.b16 %v6561
    %v6627 = vunpack.c.l.b16 %v6562
    %v6628 = vunpack.c.l.b16 %v6563
    %v6629 = vunpack.c.l.b16 %v6564
    %v6630 = vunpack.c.l.b16 %v6565
    %v6631 = vunpack.c.l.b16 %v6566
    %v6632 = vunpack.c.l.b16 %v6567
    %v6633 = vunpack.c.l.b16 %v6568
    %v6634 = vunpack.c.l.b16 %v6569
    %v6635 = vunpack.c.l.b16 %v6570
    %v6636 = vunpack.c.l.b16 %v6571
    %v6637 = vunpack.c.l.b16 %v6572
    %v6638 = vunpack.c.l.b16 %v6573
    %v6639 = vunpack.c.l.b16 %v6574
    %v6640 = vunpack.c.l.b16 %v6575
    %v6641 = vunpack.c.l.b16 %v6576
    %v6642 = vunpack.c.l.b16 %v6577
    %v6643 = vunpack.c.l.b16 %v6578
    %v6644 = vunpack.c.l.b16 %v6579
    %v6645 = vunpack.c.l.b16 %v6580
    %v6646 = vunpack.c.l.b16 %v6581
    %v6647 = vunpack.c.l.b16 %v6582
    %v6648 = vunpack.c.l.b16 %v6583
    %v6649 = vunpack.c.l.b16 %v6584
    %v6650 = vunpack.c.l.b16 %v6585
    %v6651 = vunpack.c.l.b16 %v6586
    %v6652 = vunpack.c.l.b16 %v6587
    %v6653 = vunpack.c.l.b16 %v6588
    %v6654 = vunpack.c.l.b16 %v6589
    %v6655 = vpack.c.b16 %v6624, %v6623
    %v6656 = vpack.c.b16 %v6626, %v6625
    %v6657 = vpack.c.b16 %v6628, %v6627
    %v6658 = vpack.c.b16 %v6630, %v6629
    %v6659 = vpack.c.b16 %v6632, %v6631
    %v6660 = vpack.c.b16 %v6634, %v6633
    %v6661 = vpack.c.b16 %v6636, %v6635
    %v6662 = vpack.c.b16 %v6638, %v6637
    %v6663 = vpack.c.b16 %v6640, %v6639
    %v6664 = vpack.c.b16 %v6642, %v6641
    %v6665 = vpack.c.b16 %v6644, %v6643
    %v6666 = vpack.c.b16 %v6646, %v6645
    %v6667 = vpack.c.b16 %v6648, %v6647
    %v6668 = vpack.c.b16 %v6650, %v6649
    %v6669 = vpack.c.b16 %v6652, %v6651
    %v6670 = vpack.c.b16 %v6654, %v6653
    %6687 = vmatprep.subr.bf16.mxu0 0
    %6688 = vmatpush1.bf16.msra.mxu0 %v6662
    %6689 = vmatprep.subr.bf16.mxu0 0
    %6690 = vmatpush1.bf16.msra.mxu0 %v6661
    %6691 = vmatprep.subr.bf16.mxu0 0
    %6692 = vmatpush1.bf16.msra.mxu0 %v6660
    %6693 = vmatprep.subr.bf16.mxu0 0
    %6694 = vmatpush1.bf16.msra.mxu0 %v6659
    %6695 = vmatprep.subr.bf16.mxu0 0
    %6696 = vmatpush1.bf16.msra.mxu0 %v6658
    %6697 = vmatprep.subr.bf16.mxu0 0
    %6698 = vmatpush1.bf16.msra.mxu0 %v6657
    %6699 = vmatprep.subr.bf16.mxu0 0
    %6700 = vmatpush1.bf16.msra.mxu0 %v6656
    %6701 = vmatprep.subr.bf16.mxu0 0
    %6702 = vmatpush1.bf16.msra.mxu0 %v6655
    %6703 = vmatprep.subr.bf16.mxu0 0
    %6704 = vmatpush2.bf16.msra.mxu0 %v6670
    %6705 = vmatprep.subr.bf16.mxu0 0
    %6706 = vmatpush2.bf16.msra.mxu0 %v6669
    %6707 = vmatprep.subr.bf16.mxu0 0
    %6708 = vmatpush2.bf16.msra.mxu0 %v6668
    %6709 = vmatprep.subr.bf16.mxu0 0
    %6710 = vmatpush2.bf16.msra.mxu0 %v6667
    %6711 = vmatprep.subr.bf16.mxu0 0
    %6712 = vmatpush2.bf16.msra.mxu0 %v6666
    %6713 = vmatprep.subr.bf16.mxu0 0
    %6714 = vmatpush2.bf16.msra.mxu0 %v6665
    %6715 = vmatprep.subr.bf16.mxu0 0
    %6716 = vmatpush2.bf16.msra.mxu0 %v6664
    %6717 = vmatprep.subr.bf16.mxu0 0
    %6718 = vmatpush2.bf16.msra.mxu0 %v6663
    %6719 = vmatprep.mubr.bf16.mxu0 %v6557
    %6720 = vmatmul.mubr.bf16.gmra.mxu0 %v6556
    %v6721 = vpop.f32.mrf.mxu0
    %v6722 = vadd.f32 %v6590, %v6721
    %v6723 = vpop.f32.mrf.mxu0
    %v6724 = vpop.f32.mrf.mxu0
    %v6725 = vpop.f32.mrf.mxu0
    %6726 = vdwg.mxu0
    %6727 = vst [vmem:[%s21 + $0x1] sm:$0x1] %v6722
    // Predicated region
    $region106: #{forward.1} parent=1 // pred_check
      _
    $region107: #{forward.1} parent=1 // pred_check_branch
      %6729 = sbr.rel (0) target = $region109
    $region108: #{forward.1} parent=1 // pred_region
      _
    $region109: #{forward.1} parent=1 // pred_fallthru
      _
    // Predicated region
    $region110: #{forward.1} parent=1 // pred_check
      _
    $region111: #{forward.1} parent=1 // pred_check_branch
      %6731 = sbr.rel (0) target = $region113
    $region112: #{forward.1} parent=1 // pred_region
      _
    $region113: #{forward.1} parent=1 // pred_fallthru
      _
    %6732 = vsyncpa [#allocation7], 1
    %6733 = vsyncpa [#allocation9], 1
    %6734 = vsyncpa [#allocation12], 1
  %6735 = vsyncmov [#allocation5]
  %s6736 = vpop.sfrf %6735
  %p6737 = scmp.eq.s32.totalorder %s6736, 0
  %p6738 = pneg %p6737
  %6740 = shalt.err (%p6738)
  %s6741 = scalar_lea.sflag [#allocation5], 1
  %6742 = vsyncmov %s6741
  %s6743 = vpop.sfrf %6742
  %p6744 = scmp.eq.s32.totalorder %s6743, 0
  %p6745 = pneg %p6744
  %6747 = shalt.err (%p6745)

</llo_original>
